<compile_context>
chip_gen: v7x
topology: tpu7x:2x2x1
jax: 0.10.0
libtpu: 0.0.40
codegen_flags: <defaults>
</compile_context>

<pallas_src>
import functools

import jax
import jax.numpy as jnp
from jax import lax
from jax.experimental import pallas as pl
from jax.experimental.pallas import tpu as pltpu


def _cdiv(a, b):
    return -(-a // b)


def _upsample_kernel(x_ref, w_ref, b_ref, s0_ref, s1_ref, o_ref, *, w_total):
    # x_ref : (C_in, R, TW)         input rows on dim 1, input cols on lanes
    # w_ref : (4*C_out, C_in)       rows ordered (kw, kh, co)
    # b_ref : (2*C_out, 1)          rows ordered (kh, co)
    # s0_ref: (TW, 2*TW)            0/1 lane scatter  j -> 2j
    # s1_ref: (TW, 2*TW)            0/1 lane scatter  j -> 2j+1
    # o_ref : (C_out, 2*R, 2*TW)    block of the real NCHW output
    c_out = o_ref.shape[0]
    n_rows = x_ref.shape[1]
    tw = x_ref.shape[2]
    two_c = 2 * c_out

    w = w_ref[...]
    b = b_ref[...].astype(jnp.float32)
    s0 = s0_ref[...]
    s1 = s1_ref[...]

    ragged_w = (w_total % tw) != 0
    if ragged_w:
        # Zero out columns past the image edge on the ragged last W tile:
        # un-DMA'd (stale) lanes could be NaN/Inf and 0*NaN would otherwise
        # contaminate valid outputs through the scatter-matmul sum.
        col = lax.broadcasted_iota(jnp.int32, (1, tw), 1)
        valid = w_total - pl.program_id(2) * tw
        col_mask = col < valid

    for r in range(n_rows):  # static unroll (R is kept small by the wrapper)
        x_row = x_ref[:, r, :]                                      # (C_in, TW)
        if ragged_w:
            x_row = jnp.where(col_mask, x_row, jnp.zeros_like(x_row))

        # Channel mixing on the MXU; rows ordered (kw, kh, co).
        a = jnp.dot(w, x_row, preferred_element_type=jnp.float32)   # (4*C_out, TW)

        # Fold the (j, kw) even/odd lane interleave into the MXU (exact).
        c = (jnp.dot(a[:two_c], s0, preferred_element_type=jnp.float32)
             + jnp.dot(a[two_c:], s1, preferred_element_type=jnp.float32))
        c = c + b                                                   # (2*C_out, 2*TW)

        # (i, kh) interleave: output rows 2r (kh=0) and 2r+1 (kh=1).
        o_ref[:, 2 * r, :] = c[:c_out].astype(o_ref.dtype)
        o_ref[:, 2 * r + 1, :] = c[c_out:].astype(o_ref.dtype)


def upsample_forward(x, weight, bias, *, max_tile_w=256,
                     target_block_bytes=4 << 20, max_unrolled_rows=32):
    """ConvTranspose2d(kernel_size=2, stride=2) forward (PyTorch semantics).

    Args:
      x:      (N, C_in, H, W)
      weight: (C_in, C_out, 2, 2)   PyTorch ConvTranspose2d weight layout
      bias:   (C_out,)
    Returns:
      (N, C_out, 2H, 2W)
    """
    N, C_in, H, W = x.shape
    C_out = weight.shape[1]
    dtype = x.dtype
    itemsize = jnp.dtype(dtype).itemsize

    # ---- tiny one-time parameter reshuffles ----------------------------------
    # (C_in, C_out, kh, kw) -> (kw, kh, co, ci) -> (4*C_out, C_in)
    w_cat = jnp.transpose(weight, (3, 2, 1, 0)).reshape(4 * C_out, C_in)
    b2 = jnp.tile(bias.astype(jnp.float32), 2).reshape(2 * C_out, 1)   # rows (kh, co)

    # ---- W tiling (lanes): full width when small, 128-aligned chunks otherwise
    if W <= max_tile_w:
        tw = W
    else:
        tw = max(128, (max_tile_w // 128) * 128)   # ragged last tile handled in-kernel
    n_w = _cdiv(W, tw)

    # 0/1 scatter matrices for the even/odd output-column interleave.
    j = jnp.arange(tw, dtype=jnp.int32)[:, None]
    l = jnp.arange(2 * tw, dtype=jnp.int32)[None, :]
    s0 = (l == 2 * j).astype(jnp.float32)
    s1 = (l == 2 * j + 1).astype(jnp.float32)

    # ---- H tiling (rows/grid step): scale with channel count -----------------
    per_row_bytes = tw * itemsize * (C_in + 4 * C_out)   # in + out, single buffer
    r_rows = int(max(1, min(H, target_block_bytes // per_row_bytes,
                            max_unrolled_rows)))
    if r_rows < H:
        r_rows = max(8, (r_rows // 8) * 8)               # (8,128) block-shape rule
    # v7x has 2 TensorCores: give a single-image call at least 2 grid steps.
    if N == 1 and n_w * _cdiv(H, r_rows) < 2 and H >= 16:
        r_rows = max(8, ((H // 2) // 8) * 8)
    n_h = _cdiv(H, r_rows)
    grid = (N, n_h, n_w)

    # ---- explicit VMEM budget -------------------------------------------------
    resident_bytes = 2 * (w_cat.size * itemsize + b2.size * 4
                          + (s0.size + s1.size) * 4)
    in_block_bytes = C_in * r_rows * tw * itemsize
    out_block_bytes = C_out * (2 * r_rows) * (2 * tw) * itemsize
    vmem_need = resident_bytes + 2 * (in_block_bytes + out_block_bytes)
    try:
        vmem_cap = int(pltpu.get_tpu_info().vmem_capacity_bytes)
    except Exception:
        vmem_cap = 64 * 1024 * 1024            # assume the smallest (v7x per-TC)
    vmem_limit = int(min(max(vmem_need + (4 << 20), 32 << 20),
                         int(0.55 * vmem_cap)))
    vmem_limit = max(vmem_limit, vmem_need + (2 << 20))

    kernel = functools.partial(_upsample_kernel, w_total=W)

    out = pl.pallas_call(
        kernel,
        out_shape=jax.ShapeDtypeStruct((N, C_out, 2 * H, 2 * W), dtype),
        grid=grid,
        in_specs=[
            pl.BlockSpec((None, C_in, r_rows, tw), lambda n, hi, wi: (n, 0, hi, wi)),
            pl.BlockSpec((4 * C_out, C_in), lambda n, hi, wi: (0, 0)),
            pl.BlockSpec((2 * C_out, 1), lambda n, hi, wi: (0, 0)),
            pl.BlockSpec((tw, 2 * tw), lambda n, hi, wi: (0, 0)),
            pl.BlockSpec((tw, 2 * tw), lambda n, hi, wi: (0, 0)),
        ],
        out_specs=pl.BlockSpec((None, C_out, 2 * r_rows, 2 * tw),
                               lambda n, hi, wi: (n, 0, hi, wi)),
        compiler_params=pltpu.CompilerParams(
            dimension_semantics=("parallel", "parallel", "parallel"),
            vmem_limit_bytes=vmem_limit,
        ),
    )(x, w_cat, b2, s0, s1)
    return out


def _reference_conv_transpose(x, weight, bias):
    # Pure-JAX reference implementing the same formula directly.
    N, C_in, H, W = x.shape
    C_out = weight.shape[1]
    y = jnp.einsum("ncij,ckhw->nkijhw", x, weight)   # (N, C_out, H, W, 2, 2)
    y = jnp.transpose(y, (0, 1, 2, 4, 3, 5)).reshape(N, C_out, 2 * H, 2 * W)
    return y + bias[None, :, None, None]


if __name__ == "__main__":
    key = jax.random.PRNGKey(0)
    k_x, k_w, k_b = jax.random.split(key, 3)

    N, C_in, C_out, H, W = 2, 4, 8, 16, 16

    x = jax.random.normal(k_x, (N, C_in, H, W), dtype=jnp.float32)
    weight = jax.random.normal(k_w, (C_in, C_out, 2, 2), dtype=jnp.float32) * 0.1
    bias = jax.random.normal(k_b, (C_out,), dtype=jnp.float32) * 0.1

    out = upsample_forward(x, weight, bias)
    out = jax.block_until_ready(out)

    ref = _reference_conv_transpose(x, weight, bias)
    assert out.shape == (N, C_out, 2 * H, 2 * W), out.shape
    assert jnp.allclose(out, ref, atol=1e-4, rtol=1e-4), "mismatch vs reference"

    print("KERNEL_OK")
</pallas_src>

<mosaic_0001>
module attributes {stable_mosaic.version = 11 : i64} {
  func.func @_upsample_kernel(%arg0: i32, %arg1: i32, %arg2: i32, %arg3: memref<1x4x16x16xf32, #tpu.memory_space<vmem>>, %arg4: memref<32x4xf32, #tpu.memory_space<vmem>>, %arg5: memref<16x1xf32, #tpu.memory_space<vmem>>, %arg6: memref<16x32xf32, #tpu.memory_space<vmem>>, %arg7: memref<16x32xf32, #tpu.memory_space<vmem>>, %arg8: memref<1x8x32x32xf32, #tpu.memory_space<vmem>>) attributes {dimension_semantics = [#tpu.dimension_semantics<parallel>, #tpu.dimension_semantics<parallel>, #tpu.dimension_semantics<parallel>], iteration_bounds = array<i64: 2, 1, 1>, scalar_prefetch = 0 : i64, scratch_operands = 0 : i64, tpu.core_type = #tpu.core_type<tc>, window_params = [{transform_indices = @transform_0, window_bounds = array<i64: 1, 4, 16, 16>}, {pipeline_mode = #tpu.pipeline_mode<synchronous>, transform_indices = @transform_1, window_bounds = array<i64: 32, 4>}, {pipeline_mode = #tpu.pipeline_mode<synchronous>, transform_indices = @transform_2, window_bounds = array<i64: 16, 1>}, {pipeline_mode = #tpu.pipeline_mode<synchronous>, transform_indices = @transform_3, window_bounds = array<i64: 16, 32>}, {pipeline_mode = #tpu.pipeline_mode<synchronous>, transform_indices = @transform_4, window_bounds = array<i64: 16, 32>}, {transform_indices = @transform_5, window_bounds = array<i64: 1, 8, 32, 32>}]} {
    %c0 = arith.constant 0 : index
    %c0_0 = arith.constant 0 : index
    %0 = vector.load %arg4[%c0, %c0_0] : memref<32x4xf32, #tpu.memory_space<vmem>>, vector<32x4xf32>
    %c0_1 = arith.constant 0 : index
    %c0_2 = arith.constant 0 : index
    %1 = vector.load %arg5[%c0_1, %c0_2] : memref<16x1xf32, #tpu.memory_space<vmem>>, vector<16x1xf32>
    %c0_3 = arith.constant 0 : index
    %c0_4 = arith.constant 0 : index
    %2 = vector.load %arg6[%c0_3, %c0_4] : memref<16x32xf32, #tpu.memory_space<vmem>>, vector<16x32xf32>
    %c0_5 = arith.constant 0 : index
    %c0_6 = arith.constant 0 : index
    %3 = vector.load %arg7[%c0_5, %c0_6] : memref<16x32xf32, #tpu.memory_space<vmem>>, vector<16x32xf32>
    %c0_7 = arith.constant 0 : index
    %c0_8 = arith.constant 0 : index
    %c0_9 = arith.constant 0 : index
    %c0_10 = arith.constant 0 : index
    %4 = vector.load %arg3[%c0_7, %c0_8, %c0_9, %c0_10] : memref<1x4x16x16xf32, #tpu.memory_space<vmem>>, vector<1x4x1x16xf32>
    %5 = vector.shape_cast %4 : vector<1x4x1x16xf32> to vector<4x16xf32>
    %cst = arith.constant dense<0.000000e+00> : vector<32x16xf32>
    %6 = tpu.matmul %0, %5, %cst {dimension_numbers = #tpu.dot_dimension_numbers<[1], [0], [0], [1], [0, 0, 1, 1], [], []>} : vector<32x4xf32>, vector<4x16xf32>, vector<32x16xf32> -> vector<32x16xf32>
    %7 = vector.extract_strided_slice %6 {offsets = [0, 0], sizes = [16, 16], strides = [1, 1]} : vector<32x16xf32> to vector<16x16xf32>
    %cst_11 = arith.constant dense<0.000000e+00> : vector<16x32xf32>
    %8 = tpu.matmul %7, %2, %cst_11 {dimension_numbers = #tpu.dot_dimension_numbers<[1], [0], [0], [1], [0, 0, 1, 1], [], []>} : vector<16x16xf32>, vector<16x32xf32>, vector<16x32xf32> -> vector<16x32xf32>
    %9 = vector.extract_strided_slice %6 {offsets = [16, 0], sizes = [16, 16], strides = [1, 1]} : vector<32x16xf32> to vector<16x16xf32>
    %cst_12 = arith.constant dense<0.000000e+00> : vector<16x32xf32>
    %10 = tpu.matmul %9, %3, %cst_12 {dimension_numbers = #tpu.dot_dimension_numbers<[1], [0], [0], [1], [0, 0, 1, 1], [], []>} : vector<16x16xf32>, vector<16x32xf32>, vector<16x32xf32> -> vector<16x32xf32>
    %11 = arith.addf %8, %10 : vector<16x32xf32>
    %12 = vector.broadcast %1 : vector<16x1xf32> to vector<16x32xf32>
    %13 = arith.addf %11, %12 : vector<16x32xf32>
    %14 = vector.extract_strided_slice %13 {offsets = [0, 0], sizes = [8, 32], strides = [1, 1]} : vector<16x32xf32> to vector<8x32xf32>
    %c0_13 = arith.constant 0 : index
    %c0_14 = arith.constant 0 : index
    %c0_15 = arith.constant 0 : index
    %c0_16 = arith.constant 0 : index
    %15 = vector.load %arg8[%c0_13, %c0_14, %c0_15, %c0_16] : memref<1x8x32x32xf32, #tpu.memory_space<vmem>>, vector<1x8x1x32xf32>
    %16 = vector.shape_cast %15 : vector<1x8x1x32xf32> to vector<8x32xf32>
    %17 = vector.shape_cast %14 : vector<8x32xf32> to vector<1x8x1x32xf32>
    tpu.vector_store %arg8[%c0_13, %c0_14, %c0_15, %c0_16], %17 {strides = array<i32>} : memref<1x8x32x32xf32, #tpu.memory_space<vmem>>, vector<1x8x1x32xf32>,
    %18 = vector.extract_strided_slice %13 {offsets = [8, 0], sizes = [8, 32], strides = [1, 1]} : vector<16x32xf32> to vector<8x32xf32>
    %c0_17 = arith.constant 0 : index
    %c0_18 = arith.constant 0 : index
    %c1 = arith.constant 1 : index
    %c0_19 = arith.constant 0 : index
    %19 = vector.load %arg8[%c0_17, %c0_18, %c1, %c0_19] : memref<1x8x32x32xf32, #tpu.memory_space<vmem>>, vector<1x8x1x32xf32>
    %20 = vector.shape_cast %19 : vector<1x8x1x32xf32> to vector<8x32xf32>
    %21 = vector.shape_cast %18 : vector<8x32xf32> to vector<1x8x1x32xf32>
    tpu.vector_store %arg8[%c0_17, %c0_18, %c1, %c0_19], %21 {strides = array<i32>} : memref<1x8x32x32xf32, #tpu.memory_space<vmem>>, vector<1x8x1x32xf32>,
    %c0_20 = arith.constant 0 : index
    %c0_21 = arith.constant 0 : index
    %c1_22 = arith.constant 1 : index
    %c0_23 = arith.constant 0 : index
    %22 = vector.load %arg3[%c0_20, %c0_21, %c1_22, %c0_23] : memref<1x4x16x16xf32, #tpu.memory_space<vmem>>, vector<1x4x1x16xf32>
    %23 = vector.shape_cast %22 : vector<1x4x1x16xf32> to vector<4x16xf32>
    %cst_24 = arith.constant dense<0.000000e+00> : vector<32x16xf32>
    %24 = tpu.matmul %0, %23, %cst_24 {dimension_numbers = #tpu.dot_dimension_numbers<[1], [0], [0], [1], [0, 0, 1, 1], [], []>} : vector<32x4xf32>, vector<4x16xf32>, vector<32x16xf32> -> vector<32x16xf32>
    %25 = vector.extract_strided_slice %24 {offsets = [0, 0], sizes = [16, 16], strides = [1, 1]} : vector<32x16xf32> to vector<16x16xf32>
    %cst_25 = arith.constant dense<0.000000e+00> : vector<16x32xf32>
    %26 = tpu.matmul %25, %2, %cst_25 {dimension_numbers = #tpu.dot_dimension_numbers<[1], [0], [0], [1], [0, 0, 1, 1], [], []>} : vector<16x16xf32>, vector<16x32xf32>, vector<16x32xf32> -> vector<16x32xf32>
    %27 = vector.extract_strided_slice %24 {offsets = [16, 0], sizes = [16, 16], strides = [1, 1]} : vector<32x16xf32> to vector<16x16xf32>
    %cst_26 = arith.constant dense<0.000000e+00> : vector<16x32xf32>
    %28 = tpu.matmul %27, %3, %cst_26 {dimension_numbers = #tpu.dot_dimension_numbers<[1], [0], [0], [1], [0, 0, 1, 1], [], []>} : vector<16x16xf32>, vector<16x32xf32>, vector<16x32xf32> -> vector<16x32xf32>
    %29 = arith.addf %26, %28 : vector<16x32xf32>
    %30 = vector.broadcast %1 : vector<16x1xf32> to vector<16x32xf32>
    %31 = arith.addf %29, %30 : vector<16x32xf32>
    %32 = vector.extract_strided_slice %31 {offsets = [0, 0], sizes = [8, 32], strides = [1, 1]} : vector<16x32xf32> to vector<8x32xf32>
    %c0_27 = arith.constant 0 : index
    %c0_28 = arith.constant 0 : index
    %c2 = arith.constant 2 : index
    %c0_29 = arith.constant 0 : index
    %33 = vector.load %arg8[%c0_27, %c0_28, %c2, %c0_29] : memref<1x8x32x32xf32, #tpu.memory_space<vmem>>, vector<1x8x1x32xf32>
    %34 = vector.shape_cast %33 : vector<1x8x1x32xf32> to vector<8x32xf32>
    %35 = vector.shape_cast %32 : vector<8x32xf32> to vector<1x8x1x32xf32>
    tpu.vector_store %arg8[%c0_27, %c0_28, %c2, %c0_29], %35 {strides = array<i32>} : memref<1x8x32x32xf32, #tpu.memory_space<vmem>>, vector<1x8x1x32xf32>,
    %36 = vector.extract_strided_slice %31 {offsets = [8, 0], sizes = [8, 32], strides = [1, 1]} : vector<16x32xf32> to vector<8x32xf32>
    %c0_30 = arith.constant 0 : index
    %c0_31 = arith.constant 0 : index
    %c3 = arith.constant 3 : index
    %c0_32 = arith.constant 0 : index
    %37 = vector.load %arg8[%c0_30, %c0_31, %c3, %c0_32] : memref<1x8x32x32xf32, #tpu.memory_space<vmem>>, vector<1x8x1x32xf32>
    %38 = vector.shape_cast %37 : vector<1x8x1x32xf32> to vector<8x32xf32>
    %39 = vector.shape_cast %36 : vector<8x32xf32> to vector<1x8x1x32xf32>
    tpu.vector_store %arg8[%c0_30, %c0_31, %c3, %c0_32], %39 {strides = array<i32>} : memref<1x8x32x32xf32, #tpu.memory_space<vmem>>, vector<1x8x1x32xf32>,
    %c0_33 = arith.constant 0 : index
    %c0_34 = arith.constant 0 : index
    %c2_35 = arith.constant 2 : index
    %c0_36 = arith.constant 0 : index
    %40 = vector.load %arg3[%c0_33, %c0_34, %c2_35, %c0_36] : memref<1x4x16x16xf32, #tpu.memory_space<vmem>>, vector<1x4x1x16xf32>
    %41 = vector.shape_cast %40 : vector<1x4x1x16xf32> to vector<4x16xf32>
    %cst_37 = arith.constant dense<0.000000e+00> : vector<32x16xf32>
    %42 = tpu.matmul %0, %41, %cst_37 {dimension_numbers = #tpu.dot_dimension_numbers<[1], [0], [0], [1], [0, 0, 1, 1], [], []>} : vector<32x4xf32>, vector<4x16xf32>, vector<32x16xf32> -> vector<32x16xf32>
    %43 = vector.extract_strided_slice %42 {offsets = [0, 0], sizes = [16, 16], strides = [1, 1]} : vector<32x16xf32> to vector<16x16xf32>
    %cst_38 = arith.constant dense<0.000000e+00> : vector<16x32xf32>
    %44 = tpu.matmul %43, %2, %cst_38 {dimension_numbers = #tpu.dot_dimension_numbers<[1], [0], [0], [1], [0, 0, 1, 1], [], []>} : vector<16x16xf32>, vector<16x32xf32>, vector<16x32xf32> -> vector<16x32xf32>
    %45 = vector.extract_strided_slice %42 {offsets = [16, 0], sizes = [16, 16], strides = [1, 1]} : vector<32x16xf32> to vector<16x16xf32>
    %cst_39 = arith.constant dense<0.000000e+00> : vector<16x32xf32>
    %46 = tpu.matmul %45, %3, %cst_39 {dimension_numbers = #tpu.dot_dimension_numbers<[1], [0], [0], [1], [0, 0, 1, 1], [], []>} : vector<16x16xf32>, vector<16x32xf32>, vector<16x32xf32> -> vector<16x32xf32>
    %47 = arith.addf %44, %46 : vector<16x32xf32>
    %48 = vector.broadcast %1 : vector<16x1xf32> to vector<16x32xf32>
    %49 = arith.addf %47, %48 : vector<16x32xf32>
    %50 = vector.extract_strided_slice %49 {offsets = [0, 0], sizes = [8, 32], strides = [1, 1]} : vector<16x32xf32> to vector<8x32xf32>
    %c0_40 = arith.constant 0 : index
    %c0_41 = arith.constant 0 : index
    %c4 = arith.constant 4 : index
    %c0_42 = arith.constant 0 : index
    %51 = vector.load %arg8[%c0_40, %c0_41, %c4, %c0_42] : memref<1x8x32x32xf32, #tpu.memory_space<vmem>>, vector<1x8x1x32xf32>
    %52 = vector.shape_cast %51 : vector<1x8x1x32xf32> to vector<8x32xf32>
    %53 = vector.shape_cast %50 : vector<8x32xf32> to vector<1x8x1x32xf32>
    tpu.vector_store %arg8[%c0_40, %c0_41, %c4, %c0_42], %53 {strides = array<i32>} : memref<1x8x32x32xf32, #tpu.memory_space<vmem>>, vector<1x8x1x32xf32>,
    %54 = vector.extract_strided_slice %49 {offsets = [8, 0], sizes = [8, 32], strides = [1, 1]} : vector<16x32xf32> to vector<8x32xf32>
    %c0_43 = arith.constant 0 : index
    %c0_44 = arith.constant 0 : index
    %c5 = arith.constant 5 : index
    %c0_45 = arith.constant 0 : index
    %55 = vector.load %arg8[%c0_43, %c0_44, %c5, %c0_45] : memref<1x8x32x32xf32, #tpu.memory_space<vmem>>, vector<1x8x1x32xf32>
    %56 = vector.shape_cast %55 : vector<1x8x1x32xf32> to vector<8x32xf32>
    %57 = vector.shape_cast %54 : vector<8x32xf32> to vector<1x8x1x32xf32>
    tpu.vector_store %arg8[%c0_43, %c0_44, %c5, %c0_45], %57 {strides = array<i32>} : memref<1x8x32x32xf32, #tpu.memory_space<vmem>>, vector<1x8x1x32xf32>,
    %c0_46 = arith.constant 0 : index
    %c0_47 = arith.constant 0 : index
    %c3_48 = arith.constant 3 : index
    %c0_49 = arith.constant 0 : index
    %58 = vector.load %arg3[%c0_46, %c0_47, %c3_48, %c0_49] : memref<1x4x16x16xf32, #tpu.memory_space<vmem>>, vector<1x4x1x16xf32>
    %59 = vector.shape_cast %58 : vector<1x4x1x16xf32> to vector<4x16xf32>
    %cst_50 = arith.constant dense<0.000000e+00> : vector<32x16xf32>
    %60 = tpu.matmul %0, %59, %cst_50 {dimension_numbers = #tpu.dot_dimension_numbers<[1], [0], [0], [1], [0, 0, 1, 1], [], []>} : vector<32x4xf32>, vector<4x16xf32>, vector<32x16xf32> -> vector<32x16xf32>
    %61 = vector.extract_strided_slice %60 {offsets = [0, 0], sizes = [16, 16], strides = [1, 1]} : vector<32x16xf32> to vector<16x16xf32>
    %cst_51 = arith.constant dense<0.000000e+00> : vector<16x32xf32>
    %62 = tpu.matmul %61, %2, %cst_51 {dimension_numbers = #tpu.dot_dimension_numbers<[1], [0], [0], [1], [0, 0, 1, 1], [], []>} : vector<16x16xf32>, vector<16x32xf32>, vector<16x32xf32> -> vector<16x32xf32>
    %63 = vector.extract_strided_slice %60 {offsets = [16, 0], sizes = [16, 16], strides = [1, 1]} : vector<32x16xf32> to vector<16x16xf32>
    %cst_52 = arith.constant dense<0.000000e+00> : vector<16x32xf32>
    %64 = tpu.matmul %63, %3, %cst_52 {dimension_numbers = #tpu.dot_dimension_numbers<[1], [0], [0], [1], [0, 0, 1, 1], [], []>} : vector<16x16xf32>, vector<16x32xf32>, vector<16x32xf32> -> vector<16x32xf32>
    %65 = arith.addf %62, %64 : vector<16x32xf32>
    %66 = vector.broadcast %1 : vector<16x1xf32> to vector<16x32xf32>
    %67 = arith.addf %65, %66 : vector<16x32xf32>
    %68 = vector.extract_strided_slice %67 {offsets = [0, 0], sizes = [8, 32], strides = [1, 1]} : vector<16x32xf32> to vector<8x32xf32>
    %c0_53 = arith.constant 0 : index
    %c0_54 = arith.constant 0 : index
    %c6 = arith.constant 6 : index
    %c0_55 = arith.constant 0 : index
    %69 = vector.load %arg8[%c0_53, %c0_54, %c6, %c0_55] : memref<1x8x32x32xf32, #tpu.memory_space<vmem>>, vector<1x8x1x32xf32>
    %70 = vector.shape_cast %69 : vector<1x8x1x32xf32> to vector<8x32xf32>
    %71 = vector.shape_cast %68 : vector<8x32xf32> to vector<1x8x1x32xf32>
    tpu.vector_store %arg8[%c0_53, %c0_54, %c6, %c0_55], %71 {strides = array<i32>} : memref<1x8x32x32xf32, #tpu.memory_space<vmem>>, vector<1x8x1x32xf32>,
    %72 = vector.extract_strided_slice %67 {offsets = [8, 0], sizes = [8, 32], strides = [1, 1]} : vector<16x32xf32> to vector<8x32xf32>
    %c0_56 = arith.constant 0 : index
    %c0_57 = arith.constant 0 : index
    %c7 = arith.constant 7 : index
    %c0_58 = arith.constant 0 : index
    %73 = vector.load %arg8[%c0_56, %c0_57, %c7, %c0_58] : memref<1x8x32x32xf32, #tpu.memory_space<vmem>>, vector<1x8x1x32xf32>
    %74 = vector.shape_cast %73 : vector<1x8x1x32xf32> to vector<8x32xf32>
    %75 = vector.shape_cast %72 : vector<8x32xf32> to vector<1x8x1x32xf32>
    tpu.vector_store %arg8[%c0_56, %c0_57, %c7, %c0_58], %75 {strides = array<i32>} : memref<1x8x32x32xf32, #tpu.memory_space<vmem>>, vector<1x8x1x32xf32>,
    %c0_59 = arith.constant 0 : index
    %c0_60 = arith.constant 0 : index
    %c4_61 = arith.constant 4 : index
    %c0_62 = arith.constant 0 : index
    %76 = vector.load %arg3[%c0_59, %c0_60, %c4_61, %c0_62] : memref<1x4x16x16xf32, #tpu.memory_space<vmem>>, vector<1x4x1x16xf32>
    %77 = vector.shape_cast %76 : vector<1x4x1x16xf32> to vector<4x16xf32>
    %cst_63 = arith.constant dense<0.000000e+00> : vector<32x16xf32>
    %78 = tpu.matmul %0, %77, %cst_63 {dimension_numbers = #tpu.dot_dimension_numbers<[1], [0], [0], [1], [0, 0, 1, 1], [], []>} : vector<32x4xf32>, vector<4x16xf32>, vector<32x16xf32> -> vector<32x16xf32>
    %79 = vector.extract_strided_slice %78 {offsets = [0, 0], sizes = [16, 16], strides = [1, 1]} : vector<32x16xf32> to vector<16x16xf32>
    %cst_64 = arith.constant dense<0.000000e+00> : vector<16x32xf32>
    %80 = tpu.matmul %79, %2, %cst_64 {dimension_numbers = #tpu.dot_dimension_numbers<[1], [0], [0], [1], [0, 0, 1, 1], [], []>} : vector<16x16xf32>, vector<16x32xf32>, vector<16x32xf32> -> vector<16x32xf32>
    %81 = vector.extract_strided_slice %78 {offsets = [16, 0], sizes = [16, 16], strides = [1, 1]} : vector<32x16xf32> to vector<16x16xf32>
    %cst_65 = arith.constant dense<0.000000e+00> : vector<16x32xf32>
    %82 = tpu.matmul %81, %3, %cst_65 {dimension_numbers = #tpu.dot_dimension_numbers<[1], [0], [0], [1], [0, 0, 1, 1], [], []>} : vector<16x16xf32>, vector<16x32xf32>, vector<16x32xf32> -> vector<16x32xf32>
    %83 = arith.addf %80, %82 : vector<16x32xf32>
    %84 = vector.broadcast %1 : vector<16x1xf32> to vector<16x32xf32>
    %85 = arith.addf %83, %84 : vector<16x32xf32>
    %86 = vector.extract_strided_slice %85 {offsets = [0, 0], sizes = [8, 32], strides = [1, 1]} : vector<16x32xf32> to vector<8x32xf32>
    %c0_66 = arith.constant 0 : index
    %c0_67 = arith.constant 0 : index
    %c8 = arith.constant 8 : index
    %c0_68 = arith.constant 0 : index
    %87 = vector.load %arg8[%c0_66, %c0_67, %c8, %c0_68] : memref<1x8x32x32xf32, #tpu.memory_space<vmem>>, vector<1x8x1x32xf32>
    %88 = vector.shape_cast %87 : vector<1x8x1x32xf32> to vector<8x32xf32>
    %89 = vector.shape_cast %86 : vector<8x32xf32> to vector<1x8x1x32xf32>
    tpu.vector_store %arg8[%c0_66, %c0_67, %c8, %c0_68], %89 {strides = array<i32>} : memref<1x8x32x32xf32, #tpu.memory_space<vmem>>, vector<1x8x1x32xf32>,
    %90 = vector.extract_strided_slice %85 {offsets = [8, 0], sizes = [8, 32], strides = [1, 1]} : vector<16x32xf32> to vector<8x32xf32>
    %c0_69 = arith.constant 0 : index
    %c0_70 = arith.constant 0 : index
    %c9 = arith.constant 9 : index
    %c0_71 = arith.constant 0 : index
    %91 = vector.load %arg8[%c0_69, %c0_70, %c9, %c0_71] : memref<1x8x32x32xf32, #tpu.memory_space<vmem>>, vector<1x8x1x32xf32>
    %92 = vector.shape_cast %91 : vector<1x8x1x32xf32> to vector<8x32xf32>
    %93 = vector.shape_cast %90 : vector<8x32xf32> to vector<1x8x1x32xf32>
    tpu.vector_store %arg8[%c0_69, %c0_70, %c9, %c0_71], %93 {strides = array<i32>} : memref<1x8x32x32xf32, #tpu.memory_space<vmem>>, vector<1x8x1x32xf32>,
    %c0_72 = arith.constant 0 : index
    %c0_73 = arith.constant 0 : index
    %c5_74 = arith.constant 5 : index
    %c0_75 = arith.constant 0 : index
    %94 = vector.load %arg3[%c0_72, %c0_73, %c5_74, %c0_75] : memref<1x4x16x16xf32, #tpu.memory_space<vmem>>, vector<1x4x1x16xf32>
    %95 = vector.shape_cast %94 : vector<1x4x1x16xf32> to vector<4x16xf32>
    %cst_76 = arith.constant dense<0.000000e+00> : vector<32x16xf32>
    %96 = tpu.matmul %0, %95, %cst_76 {dimension_numbers = #tpu.dot_dimension_numbers<[1], [0], [0], [1], [0, 0, 1, 1], [], []>} : vector<32x4xf32>, vector<4x16xf32>, vector<32x16xf32> -> vector<32x16xf32>
    %97 = vector.extract_strided_slice %96 {offsets = [0, 0], sizes = [16, 16], strides = [1, 1]} : vector<32x16xf32> to vector<16x16xf32>
    %cst_77 = arith.constant dense<0.000000e+00> : vector<16x32xf32>
    %98 = tpu.matmul %97, %2, %cst_77 {dimension_numbers = #tpu.dot_dimension_numbers<[1], [0], [0], [1], [0, 0, 1, 1], [], []>} : vector<16x16xf32>, vector<16x32xf32>, vector<16x32xf32> -> vector<16x32xf32>
    %99 = vector.extract_strided_slice %96 {offsets = [16, 0], sizes = [16, 16], strides = [1, 1]} : vector<32x16xf32> to vector<16x16xf32>
    %cst_78 = arith.constant dense<0.000000e+00> : vector<16x32xf32>
    %100 = tpu.matmul %99, %3, %cst_78 {dimension_numbers = #tpu.dot_dimension_numbers<[1], [0], [0], [1], [0, 0, 1, 1], [], []>} : vector<16x16xf32>, vector<16x32xf32>, vector<16x32xf32> -> vector<16x32xf32>
    %101 = arith.addf %98, %100 : vector<16x32xf32>
    %102 = vector.broadcast %1 : vector<16x1xf32> to vector<16x32xf32>
    %103 = arith.addf %101, %102 : vector<16x32xf32>
    %104 = vector.extract_strided_slice %103 {offsets = [0, 0], sizes = [8, 32], strides = [1, 1]} : vector<16x32xf32> to vector<8x32xf32>
    %c0_79 = arith.constant 0 : index
    %c0_80 = arith.constant 0 : index
    %c10 = arith.constant 10 : index
    %c0_81 = arith.constant 0 : index
    %105 = vector.load %arg8[%c0_79, %c0_80, %c10, %c0_81] : memref<1x8x32x32xf32, #tpu.memory_space<vmem>>, vector<1x8x1x32xf32>
    %106 = vector.shape_cast %105 : vector<1x8x1x32xf32> to vector<8x32xf32>
    %107 = vector.shape_cast %104 : vector<8x32xf32> to vector<1x8x1x32xf32>
    tpu.vector_store %arg8[%c0_79, %c0_80, %c10, %c0_81], %107 {strides = array<i32>} : memref<1x8x32x32xf32, #tpu.memory_space<vmem>>, vector<1x8x1x32xf32>,
    %108 = vector.extract_strided_slice %103 {offsets = [8, 0], sizes = [8, 32], strides = [1, 1]} : vector<16x32xf32> to vector<8x32xf32>
    %c0_82 = arith.constant 0 : index
    %c0_83 = arith.constant 0 : index
    %c11 = arith.constant 11 : index
    %c0_84 = arith.constant 0 : index
    %109 = vector.load %arg8[%c0_82, %c0_83, %c11, %c0_84] : memref<1x8x32x32xf32, #tpu.memory_space<vmem>>, vector<1x8x1x32xf32>
    %110 = vector.shape_cast %109 : vector<1x8x1x32xf32> to vector<8x32xf32>
    %111 = vector.shape_cast %108 : vector<8x32xf32> to vector<1x8x1x32xf32>
    tpu.vector_store %arg8[%c0_82, %c0_83, %c11, %c0_84], %111 {strides = array<i32>} : memref<1x8x32x32xf32, #tpu.memory_space<vmem>>, vector<1x8x1x32xf32>,
    %c0_85 = arith.constant 0 : index
    %c0_86 = arith.constant 0 : index
    %c6_87 = arith.constant 6 : index
    %c0_88 = arith.constant 0 : index
    %112 = vector.load %arg3[%c0_85, %c0_86, %c6_87, %c0_88] : memref<1x4x16x16xf32, #tpu.memory_space<vmem>>, vector<1x4x1x16xf32>
    %113 = vector.shape_cast %112 : vector<1x4x1x16xf32> to vector<4x16xf32>
    %cst_89 = arith.constant dense<0.000000e+00> : vector<32x16xf32>
    %114 = tpu.matmul %0, %113, %cst_89 {dimension_numbers = #tpu.dot_dimension_numbers<[1], [0], [0], [1], [0, 0, 1, 1], [], []>} : vector<32x4xf32>, vector<4x16xf32>, vector<32x16xf32> -> vector<32x16xf32>
    %115 = vector.extract_strided_slice %114 {offsets = [0, 0], sizes = [16, 16], strides = [1, 1]} : vector<32x16xf32> to vector<16x16xf32>
    %cst_90 = arith.constant dense<0.000000e+00> : vector<16x32xf32>
    %116 = tpu.matmul %115, %2, %cst_90 {dimension_numbers = #tpu.dot_dimension_numbers<[1], [0], [0], [1], [0, 0, 1, 1], [], []>} : vector<16x16xf32>, vector<16x32xf32>, vector<16x32xf32> -> vector<16x32xf32>
    %117 = vector.extract_strided_slice %114 {offsets = [16, 0], sizes = [16, 16], strides = [1, 1]} : vector<32x16xf32> to vector<16x16xf32>
    %cst_91 = arith.constant dense<0.000000e+00> : vector<16x32xf32>
    %118 = tpu.matmul %117, %3, %cst_91 {dimension_numbers = #tpu.dot_dimension_numbers<[1], [0], [0], [1], [0, 0, 1, 1], [], []>} : vector<16x16xf32>, vector<16x32xf32>, vector<16x32xf32> -> vector<16x32xf32>
    %119 = arith.addf %116, %118 : vector<16x32xf32>
    %120 = vector.broadcast %1 : vector<16x1xf32> to vector<16x32xf32>
    %121 = arith.addf %119, %120 : vector<16x32xf32>
    %122 = vector.extract_strided_slice %121 {offsets = [0, 0], sizes = [8, 32], strides = [1, 1]} : vector<16x32xf32> to vector<8x32xf32>
    %c0_92 = arith.constant 0 : index
    %c0_93 = arith.constant 0 : index
    %c12 = arith.constant 12 : index
    %c0_94 = arith.constant 0 : index
    %123 = vector.load %arg8[%c0_92, %c0_93, %c12, %c0_94] : memref<1x8x32x32xf32, #tpu.memory_space<vmem>>, vector<1x8x1x32xf32>
    %124 = vector.shape_cast %123 : vector<1x8x1x32xf32> to vector<8x32xf32>
    %125 = vector.shape_cast %122 : vector<8x32xf32> to vector<1x8x1x32xf32>
    tpu.vector_store %arg8[%c0_92, %c0_93, %c12, %c0_94], %125 {strides = array<i32>} : memref<1x8x32x32xf32, #tpu.memory_space<vmem>>, vector<1x8x1x32xf32>,
    %126 = vector.extract_strided_slice %121 {offsets = [8, 0], sizes = [8, 32], strides = [1, 1]} : vector<16x32xf32> to vector<8x32xf32>
    %c0_95 = arith.constant 0 : index
    %c0_96 = arith.constant 0 : index
    %c13 = arith.constant 13 : index
    %c0_97 = arith.constant 0 : index
    %127 = vector.load %arg8[%c0_95, %c0_96, %c13, %c0_97] : memref<1x8x32x32xf32, #tpu.memory_space<vmem>>, vector<1x8x1x32xf32>
    %128 = vector.shape_cast %127 : vector<1x8x1x32xf32> to vector<8x32xf32>
    %129 = vector.shape_cast %126 : vector<8x32xf32> to vector<1x8x1x32xf32>
    tpu.vector_store %arg8[%c0_95, %c0_96, %c13, %c0_97], %129 {strides = array<i32>} : memref<1x8x32x32xf32, #tpu.memory_space<vmem>>, vector<1x8x1x32xf32>,
    %c0_98 = arith.constant 0 : index
    %c0_99 = arith.constant 0 : index
    %c7_100 = arith.constant 7 : index
    %c0_101 = arith.constant 0 : index
    %130 = vector.load %arg3[%c0_98, %c0_99, %c7_100, %c0_101] : memref<1x4x16x16xf32, #tpu.memory_space<vmem>>, vector<1x4x1x16xf32>
    %131 = vector.shape_cast %130 : vector<1x4x1x16xf32> to vector<4x16xf32>
    %cst_102 = arith.constant dense<0.000000e+00> : vector<32x16xf32>
    %132 = tpu.matmul %0, %131, %cst_102 {dimension_numbers = #tpu.dot_dimension_numbers<[1], [0], [0], [1], [0, 0, 1, 1], [], []>} : vector<32x4xf32>, vector<4x16xf32>, vector<32x16xf32> -> vector<32x16xf32>
    %133 = vector.extract_strided_slice %132 {offsets = [0, 0], sizes = [16, 16], strides = [1, 1]} : vector<32x16xf32> to vector<16x16xf32>
    %cst_103 = arith.constant dense<0.000000e+00> : vector<16x32xf32>
    %134 = tpu.matmul %133, %2, %cst_103 {dimension_numbers = #tpu.dot_dimension_numbers<[1], [0], [0], [1], [0, 0, 1, 1], [], []>} : vector<16x16xf32>, vector<16x32xf32>, vector<16x32xf32> -> vector<16x32xf32>
    %135 = vector.extract_strided_slice %132 {offsets = [16, 0], sizes = [16, 16], strides = [1, 1]} : vector<32x16xf32> to vector<16x16xf32>
    %cst_104 = arith.constant dense<0.000000e+00> : vector<16x32xf32>
    %136 = tpu.matmul %135, %3, %cst_104 {dimension_numbers = #tpu.dot_dimension_numbers<[1], [0], [0], [1], [0, 0, 1, 1], [], []>} : vector<16x16xf32>, vector<16x32xf32>, vector<16x32xf32> -> vector<16x32xf32>
    %137 = arith.addf %134, %136 : vector<16x32xf32>
    %138 = vector.broadcast %1 : vector<16x1xf32> to vector<16x32xf32>
    %139 = arith.addf %137, %138 : vector<16x32xf32>
    %140 = vector.extract_strided_slice %139 {offsets = [0, 0], sizes = [8, 32], strides = [1, 1]} : vector<16x32xf32> to vector<8x32xf32>
    %c0_105 = arith.constant 0 : index
    %c0_106 = arith.constant 0 : index
    %c14 = arith.constant 14 : index
    %c0_107 = arith.constant 0 : index
    %141 = vector.load %arg8[%c0_105, %c0_106, %c14, %c0_107] : memref<1x8x32x32xf32, #tpu.memory_space<vmem>>, vector<1x8x1x32xf32>
    %142 = vector.shape_cast %141 : vector<1x8x1x32xf32> to vector<8x32xf32>
    %143 = vector.shape_cast %140 : vector<8x32xf32> to vector<1x8x1x32xf32>
    tpu.vector_store %arg8[%c0_105, %c0_106, %c14, %c0_107], %143 {strides = array<i32>} : memref<1x8x32x32xf32, #tpu.memory_space<vmem>>, vector<1x8x1x32xf32>,
    %144 = vector.extract_strided_slice %139 {offsets = [8, 0], sizes = [8, 32], strides = [1, 1]} : vector<16x32xf32> to vector<8x32xf32>
    %c0_108 = arith.constant 0 : index
    %c0_109 = arith.constant 0 : index
    %c15 = arith.constant 15 : index
    %c0_110 = arith.constant 0 : index
    %145 = vector.load %arg8[%c0_108, %c0_109, %c15, %c0_110] : memref<1x8x32x32xf32, #tpu.memory_space<vmem>>, vector<1x8x1x32xf32>
    %146 = vector.shape_cast %145 : vector<1x8x1x32xf32> to vector<8x32xf32>
    %147 = vector.shape_cast %144 : vector<8x32xf32> to vector<1x8x1x32xf32>
    tpu.vector_store %arg8[%c0_108, %c0_109, %c15, %c0_110], %147 {strides = array<i32>} : memref<1x8x32x32xf32, #tpu.memory_space<vmem>>, vector<1x8x1x32xf32>,
    %c0_111 = arith.constant 0 : index
    %c0_112 = arith.constant 0 : index
    %c8_113 = arith.constant 8 : index
    %c0_114 = arith.constant 0 : index
    %148 = vector.load %arg3[%c0_111, %c0_112, %c8_113, %c0_114] : memref<1x4x16x16xf32, #tpu.memory_space<vmem>>, vector<1x4x1x16xf32>
    %149 = vector.shape_cast %148 : vector<1x4x1x16xf32> to vector<4x16xf32>
    %cst_115 = arith.constant dense<0.000000e+00> : vector<32x16xf32>
    %150 = tpu.matmul %0, %149, %cst_115 {dimension_numbers = #tpu.dot_dimension_numbers<[1], [0], [0], [1], [0, 0, 1, 1], [], []>} : vector<32x4xf32>, vector<4x16xf32>, vector<32x16xf32> -> vector<32x16xf32>
    %151 = vector.extract_strided_slice %150 {offsets = [0, 0], sizes = [16, 16], strides = [1, 1]} : vector<32x16xf32> to vector<16x16xf32>
    %cst_116 = arith.constant dense<0.000000e+00> : vector<16x32xf32>
    %152 = tpu.matmul %151, %2, %cst_116 {dimension_numbers = #tpu.dot_dimension_numbers<[1], [0], [0], [1], [0, 0, 1, 1], [], []>} : vector<16x16xf32>, vector<16x32xf32>, vector<16x32xf32> -> vector<16x32xf32>
    %153 = vector.extract_strided_slice %150 {offsets = [16, 0], sizes = [16, 16], strides = [1, 1]} : vector<32x16xf32> to vector<16x16xf32>
    %cst_117 = arith.constant dense<0.000000e+00> : vector<16x32xf32>
    %154 = tpu.matmul %153, %3, %cst_117 {dimension_numbers = #tpu.dot_dimension_numbers<[1], [0], [0], [1], [0, 0, 1, 1], [], []>} : vector<16x16xf32>, vector<16x32xf32>, vector<16x32xf32> -> vector<16x32xf32>
    %155 = arith.addf %152, %154 : vector<16x32xf32>
    %156 = vector.broadcast %1 : vector<16x1xf32> to vector<16x32xf32>
    %157 = arith.addf %155, %156 : vector<16x32xf32>
    %158 = vector.extract_strided_slice %157 {offsets = [0, 0], sizes = [8, 32], strides = [1, 1]} : vector<16x32xf32> to vector<8x32xf32>
    %c0_118 = arith.constant 0 : index
    %c0_119 = arith.constant 0 : index
    %c16 = arith.constant 16 : index
    %c0_120 = arith.constant 0 : index
    %159 = vector.load %arg8[%c0_118, %c0_119, %c16, %c0_120] : memref<1x8x32x32xf32, #tpu.memory_space<vmem>>, vector<1x8x1x32xf32>
    %160 = vector.shape_cast %159 : vector<1x8x1x32xf32> to vector<8x32xf32>
    %161 = vector.shape_cast %158 : vector<8x32xf32> to vector<1x8x1x32xf32>
    tpu.vector_store %arg8[%c0_118, %c0_119, %c16, %c0_120], %161 {strides = array<i32>} : memref<1x8x32x32xf32, #tpu.memory_space<vmem>>, vector<1x8x1x32xf32>,
    %162 = vector.extract_strided_slice %157 {offsets = [8, 0], sizes = [8, 32], strides = [1, 1]} : vector<16x32xf32> to vector<8x32xf32>
    %c0_121 = arith.constant 0 : index
    %c0_122 = arith.constant 0 : index
    %c17 = arith.constant 17 : index
    %c0_123 = arith.constant 0 : index
    %163 = vector.load %arg8[%c0_121, %c0_122, %c17, %c0_123] : memref<1x8x32x32xf32, #tpu.memory_space<vmem>>, vector<1x8x1x32xf32>
    %164 = vector.shape_cast %163 : vector<1x8x1x32xf32> to vector<8x32xf32>
    %165 = vector.shape_cast %162 : vector<8x32xf32> to vector<1x8x1x32xf32>
    tpu.vector_store %arg8[%c0_121, %c0_122, %c17, %c0_123], %165 {strides = array<i32>} : memref<1x8x32x32xf32, #tpu.memory_space<vmem>>, vector<1x8x1x32xf32>,
    %c0_124 = arith.constant 0 : index
    %c0_125 = arith.constant 0 : index
    %c9_126 = arith.constant 9 : index
    %c0_127 = arith.constant 0 : index
    %166 = vector.load %arg3[%c0_124, %c0_125, %c9_126, %c0_127] : memref<1x4x16x16xf32, #tpu.memory_space<vmem>>, vector<1x4x1x16xf32>
    %167 = vector.shape_cast %166 : vector<1x4x1x16xf32> to vector<4x16xf32>
    %cst_128 = arith.constant dense<0.000000e+00> : vector<32x16xf32>
    %168 = tpu.matmul %0, %167, %cst_128 {dimension_numbers = #tpu.dot_dimension_numbers<[1], [0], [0], [1], [0, 0, 1, 1], [], []>} : vector<32x4xf32>, vector<4x16xf32>, vector<32x16xf32> -> vector<32x16xf32>
    %169 = vector.extract_strided_slice %168 {offsets = [0, 0], sizes = [16, 16], strides = [1, 1]} : vector<32x16xf32> to vector<16x16xf32>
    %cst_129 = arith.constant dense<0.000000e+00> : vector<16x32xf32>
    %170 = tpu.matmul %169, %2, %cst_129 {dimension_numbers = #tpu.dot_dimension_numbers<[1], [0], [0], [1], [0, 0, 1, 1], [], []>} : vector<16x16xf32>, vector<16x32xf32>, vector<16x32xf32> -> vector<16x32xf32>
    %171 = vector.extract_strided_slice %168 {offsets = [16, 0], sizes = [16, 16], strides = [1, 1]} : vector<32x16xf32> to vector<16x16xf32>
    %cst_130 = arith.constant dense<0.000000e+00> : vector<16x32xf32>
    %172 = tpu.matmul %171, %3, %cst_130 {dimension_numbers = #tpu.dot_dimension_numbers<[1], [0], [0], [1], [0, 0, 1, 1], [], []>} : vector<16x16xf32>, vector<16x32xf32>, vector<16x32xf32> -> vector<16x32xf32>
    %173 = arith.addf %170, %172 : vector<16x32xf32>
    %174 = vector.broadcast %1 : vector<16x1xf32> to vector<16x32xf32>
    %175 = arith.addf %173, %174 : vector<16x32xf32>
    %176 = vector.extract_strided_slice %175 {offsets = [0, 0], sizes = [8, 32], strides = [1, 1]} : vector<16x32xf32> to vector<8x32xf32>
    %c0_131 = arith.constant 0 : index
    %c0_132 = arith.constant 0 : index
    %c18 = arith.constant 18 : index
    %c0_133 = arith.constant 0 : index
    %177 = vector.load %arg8[%c0_131, %c0_132, %c18, %c0_133] : memref<1x8x32x32xf32, #tpu.memory_space<vmem>>, vector<1x8x1x32xf32>
    %178 = vector.shape_cast %177 : vector<1x8x1x32xf32> to vector<8x32xf32>
    %179 = vector.shape_cast %176 : vector<8x32xf32> to vector<1x8x1x32xf32>
    tpu.vector_store %arg8[%c0_131, %c0_132, %c18, %c0_133], %179 {strides = array<i32>} : memref<1x8x32x32xf32, #tpu.memory_space<vmem>>, vector<1x8x1x32xf32>,
    %180 = vector.extract_strided_slice %175 {offsets = [8, 0], sizes = [8, 32], strides = [1, 1]} : vector<16x32xf32> to vector<8x32xf32>
    %c0_134 = arith.constant 0 : index
    %c0_135 = arith.constant 0 : index
    %c19 = arith.constant 19 : index
    %c0_136 = arith.constant 0 : index
    %181 = vector.load %arg8[%c0_134, %c0_135, %c19, %c0_136] : memref<1x8x32x32xf32, #tpu.memory_space<vmem>>, vector<1x8x1x32xf32>
    %182 = vector.shape_cast %181 : vector<1x8x1x32xf32> to vector<8x32xf32>
    %183 = vector.shape_cast %180 : vector<8x32xf32> to vector<1x8x1x32xf32>
    tpu.vector_store %arg8[%c0_134, %c0_135, %c19, %c0_136], %183 {strides = array<i32>} : memref<1x8x32x32xf32, #tpu.memory_space<vmem>>, vector<1x8x1x32xf32>,
    %c0_137 = arith.constant 0 : index
    %c0_138 = arith.constant 0 : index
    %c10_139 = arith.constant 10 : index
    %c0_140 = arith.constant 0 : index
    %184 = vector.load %arg3[%c0_137, %c0_138, %c10_139, %c0_140] : memref<1x4x16x16xf32, #tpu.memory_space<vmem>>, vector<1x4x1x16xf32>
    %185 = vector.shape_cast %184 : vector<1x4x1x16xf32> to vector<4x16xf32>
    %cst_141 = arith.constant dense<0.000000e+00> : vector<32x16xf32>
    %186 = tpu.matmul %0, %185, %cst_141 {dimension_numbers = #tpu.dot_dimension_numbers<[1], [0], [0], [1], [0, 0, 1, 1], [], []>} : vector<32x4xf32>, vector<4x16xf32>, vector<32x16xf32> -> vector<32x16xf32>
    %187 = vector.extract_strided_slice %186 {offsets = [0, 0], sizes = [16, 16], strides = [1, 1]} : vector<32x16xf32> to vector<16x16xf32>
    %cst_142 = arith.constant dense<0.000000e+00> : vector<16x32xf32>
    %188 = tpu.matmul %187, %2, %cst_142 {dimension_numbers = #tpu.dot_dimension_numbers<[1], [0], [0], [1], [0, 0, 1, 1], [], []>} : vector<16x16xf32>, vector<16x32xf32>, vector<16x32xf32> -> vector<16x32xf32>
    %189 = vector.extract_strided_slice %186 {offsets = [16, 0], sizes = [16, 16], strides = [1, 1]} : vector<32x16xf32> to vector<16x16xf32>
    %cst_143 = arith.constant dense<0.000000e+00> : vector<16x32xf32>
    %190 = tpu.matmul %189, %3, %cst_143 {dimension_numbers = #tpu.dot_dimension_numbers<[1], [0], [0], [1], [0, 0, 1, 1], [], []>} : vector<16x16xf32>, vector<16x32xf32>, vector<16x32xf32> -> vector<16x32xf32>
    %191 = arith.addf %188, %190 : vector<16x32xf32>
    %192 = vector.broadcast %1 : vector<16x1xf32> to vector<16x32xf32>
    %193 = arith.addf %191, %192 : vector<16x32xf32>
    %194 = vector.extract_strided_slice %193 {offsets = [0, 0], sizes = [8, 32], strides = [1, 1]} : vector<16x32xf32> to vector<8x32xf32>
    %c0_144 = arith.constant 0 : index
    %c0_145 = arith.constant 0 : index
    %c20 = arith.constant 20 : index
    %c0_146 = arith.constant 0 : index
    %195 = vector.load %arg8[%c0_144, %c0_145, %c20, %c0_146] : memref<1x8x32x32xf32, #tpu.memory_space<vmem>>, vector<1x8x1x32xf32>
    %196 = vector.shape_cast %195 : vector<1x8x1x32xf32> to vector<8x32xf32>
    %197 = vector.shape_cast %194 : vector<8x32xf32> to vector<1x8x1x32xf32>
    tpu.vector_store %arg8[%c0_144, %c0_145, %c20, %c0_146], %197 {strides = array<i32>} : memref<1x8x32x32xf32, #tpu.memory_space<vmem>>, vector<1x8x1x32xf32>,
    %198 = vector.extract_strided_slice %193 {offsets = [8, 0], sizes = [8, 32], strides = [1, 1]} : vector<16x32xf32> to vector<8x32xf32>
    %c0_147 = arith.constant 0 : index
    %c0_148 = arith.constant 0 : index
    %c21 = arith.constant 21 : index
    %c0_149 = arith.constant 0 : index
    %199 = vector.load %arg8[%c0_147, %c0_148, %c21, %c0_149] : memref<1x8x32x32xf32, #tpu.memory_space<vmem>>, vector<1x8x1x32xf32>
    %200 = vector.shape_cast %199 : vector<1x8x1x32xf32> to vector<8x32xf32>
    %201 = vector.shape_cast %198 : vector<8x32xf32> to vector<1x8x1x32xf32>
    tpu.vector_store %arg8[%c0_147, %c0_148, %c21, %c0_149], %201 {strides = array<i32>} : memref<1x8x32x32xf32, #tpu.memory_space<vmem>>, vector<1x8x1x32xf32>,
    %c0_150 = arith.constant 0 : index
    %c0_151 = arith.constant 0 : index
    %c11_152 = arith.constant 11 : index
    %c0_153 = arith.constant 0 : index
    %202 = vector.load %arg3[%c0_150, %c0_151, %c11_152, %c0_153] : memref<1x4x16x16xf32, #tpu.memory_space<vmem>>, vector<1x4x1x16xf32>
    %203 = vector.shape_cast %202 : vector<1x4x1x16xf32> to vector<4x16xf32>
    %cst_154 = arith.constant dense<0.000000e+00> : vector<32x16xf32>
    %204 = tpu.matmul %0, %203, %cst_154 {dimension_numbers = #tpu.dot_dimension_numbers<[1], [0], [0], [1], [0, 0, 1, 1], [], []>} : vector<32x4xf32>, vector<4x16xf32>, vector<32x16xf32> -> vector<32x16xf32>
    %205 = vector.extract_strided_slice %204 {offsets = [0, 0], sizes = [16, 16], strides = [1, 1]} : vector<32x16xf32> to vector<16x16xf32>
    %cst_155 = arith.constant dense<0.000000e+00> : vector<16x32xf32>
    %206 = tpu.matmul %205, %2, %cst_155 {dimension_numbers = #tpu.dot_dimension_numbers<[1], [0], [0], [1], [0, 0, 1, 1], [], []>} : vector<16x16xf32>, vector<16x32xf32>, vector<16x32xf32> -> vector<16x32xf32>
    %207 = vector.extract_strided_slice %204 {offsets = [16, 0], sizes = [16, 16], strides = [1, 1]} : vector<32x16xf32> to vector<16x16xf32>
    %cst_156 = arith.constant dense<0.000000e+00> : vector<16x32xf32>
    %208 = tpu.matmul %207, %3, %cst_156 {dimension_numbers = #tpu.dot_dimension_numbers<[1], [0], [0], [1], [0, 0, 1, 1], [], []>} : vector<16x16xf32>, vector<16x32xf32>, vector<16x32xf32> -> vector<16x32xf32>
    %209 = arith.addf %206, %208 : vector<16x32xf32>
    %210 = vector.broadcast %1 : vector<16x1xf32> to vector<16x32xf32>
    %211 = arith.addf %209, %210 : vector<16x32xf32>
    %212 = vector.extract_strided_slice %211 {offsets = [0, 0], sizes = [8, 32], strides = [1, 1]} : vector<16x32xf32> to vector<8x32xf32>
    %c0_157 = arith.constant 0 : index
    %c0_158 = arith.constant 0 : index
    %c22 = arith.constant 22 : index
    %c0_159 = arith.constant 0 : index
    %213 = vector.load %arg8[%c0_157, %c0_158, %c22, %c0_159] : memref<1x8x32x32xf32, #tpu.memory_space<vmem>>, vector<1x8x1x32xf32>
    %214 = vector.shape_cast %213 : vector<1x8x1x32xf32> to vector<8x32xf32>
    %215 = vector.shape_cast %212 : vector<8x32xf32> to vector<1x8x1x32xf32>
    tpu.vector_store %arg8[%c0_157, %c0_158, %c22, %c0_159], %215 {strides = array<i32>} : memref<1x8x32x32xf32, #tpu.memory_space<vmem>>, vector<1x8x1x32xf32>,
    %216 = vector.extract_strided_slice %211 {offsets = [8, 0], sizes = [8, 32], strides = [1, 1]} : vector<16x32xf32> to vector<8x32xf32>
    %c0_160 = arith.constant 0 : index
    %c0_161 = arith.constant 0 : index
    %c23 = arith.constant 23 : index
    %c0_162 = arith.constant 0 : index
    %217 = vector.load %arg8[%c0_160, %c0_161, %c23, %c0_162] : memref<1x8x32x32xf32, #tpu.memory_space<vmem>>, vector<1x8x1x32xf32>
    %218 = vector.shape_cast %217 : vector<1x8x1x32xf32> to vector<8x32xf32>
    %219 = vector.shape_cast %216 : vector<8x32xf32> to vector<1x8x1x32xf32>
    tpu.vector_store %arg8[%c0_160, %c0_161, %c23, %c0_162], %219 {strides = array<i32>} : memref<1x8x32x32xf32, #tpu.memory_space<vmem>>, vector<1x8x1x32xf32>,
    %c0_163 = arith.constant 0 : index
    %c0_164 = arith.constant 0 : index
    %c12_165 = arith.constant 12 : index
    %c0_166 = arith.constant 0 : index
    %220 = vector.load %arg3[%c0_163, %c0_164, %c12_165, %c0_166] : memref<1x4x16x16xf32, #tpu.memory_space<vmem>>, vector<1x4x1x16xf32>
    %221 = vector.shape_cast %220 : vector<1x4x1x16xf32> to vector<4x16xf32>
    %cst_167 = arith.constant dense<0.000000e+00> : vector<32x16xf32>
    %222 = tpu.matmul %0, %221, %cst_167 {dimension_numbers = #tpu.dot_dimension_numbers<[1], [0], [0], [1], [0, 0, 1, 1], [], []>} : vector<32x4xf32>, vector<4x16xf32>, vector<32x16xf32> -> vector<32x16xf32>
    %223 = vector.extract_strided_slice %222 {offsets = [0, 0], sizes = [16, 16], strides = [1, 1]} : vector<32x16xf32> to vector<16x16xf32>
    %cst_168 = arith.constant dense<0.000000e+00> : vector<16x32xf32>
    %224 = tpu.matmul %223, %2, %cst_168 {dimension_numbers = #tpu.dot_dimension_numbers<[1], [0], [0], [1], [0, 0, 1, 1], [], []>} : vector<16x16xf32>, vector<16x32xf32>, vector<16x32xf32> -> vector<16x32xf32>
    %225 = vector.extract_strided_slice %222 {offsets = [16, 0], sizes = [16, 16], strides = [1, 1]} : vector<32x16xf32> to vector<16x16xf32>
    %cst_169 = arith.constant dense<0.000000e+00> : vector<16x32xf32>
    %226 = tpu.matmul %225, %3, %cst_169 {dimension_numbers = #tpu.dot_dimension_numbers<[1], [0], [0], [1], [0, 0, 1, 1], [], []>} : vector<16x16xf32>, vector<16x32xf32>, vector<16x32xf32> -> vector<16x32xf32>
    %227 = arith.addf %224, %226 : vector<16x32xf32>
    %228 = vector.broadcast %1 : vector<16x1xf32> to vector<16x32xf32>
    %229 = arith.addf %227, %228 : vector<16x32xf32>
    %230 = vector.extract_strided_slice %229 {offsets = [0, 0], sizes = [8, 32], strides = [1, 1]} : vector<16x32xf32> to vector<8x32xf32>
    %c0_170 = arith.constant 0 : index
    %c0_171 = arith.constant 0 : index
    %c24 = arith.constant 24 : index
    %c0_172 = arith.constant 0 : index
    %231 = vector.load %arg8[%c0_170, %c0_171, %c24, %c0_172] : memref<1x8x32x32xf32, #tpu.memory_space<vmem>>, vector<1x8x1x32xf32>
    %232 = vector.shape_cast %231 : vector<1x8x1x32xf32> to vector<8x32xf32>
    %233 = vector.shape_cast %230 : vector<8x32xf32> to vector<1x8x1x32xf32>
    tpu.vector_store %arg8[%c0_170, %c0_171, %c24, %c0_172], %233 {strides = array<i32>} : memref<1x8x32x32xf32, #tpu.memory_space<vmem>>, vector<1x8x1x32xf32>,
    %234 = vector.extract_strided_slice %229 {offsets = [8, 0], sizes = [8, 32], strides = [1, 1]} : vector<16x32xf32> to vector<8x32xf32>
    %c0_173 = arith.constant 0 : index
    %c0_174 = arith.constant 0 : index
    %c25 = arith.constant 25 : index
    %c0_175 = arith.constant 0 : index
    %235 = vector.load %arg8[%c0_173, %c0_174, %c25, %c0_175] : memref<1x8x32x32xf32, #tpu.memory_space<vmem>>, vector<1x8x1x32xf32>
    %236 = vector.shape_cast %235 : vector<1x8x1x32xf32> to vector<8x32xf32>
    %237 = vector.shape_cast %234 : vector<8x32xf32> to vector<1x8x1x32xf32>
    tpu.vector_store %arg8[%c0_173, %c0_174, %c25, %c0_175], %237 {strides = array<i32>} : memref<1x8x32x32xf32, #tpu.memory_space<vmem>>, vector<1x8x1x32xf32>,
    %c0_176 = arith.constant 0 : index
    %c0_177 = arith.constant 0 : index
    %c13_178 = arith.constant 13 : index
    %c0_179 = arith.constant 0 : index
    %238 = vector.load %arg3[%c0_176, %c0_177, %c13_178, %c0_179] : memref<1x4x16x16xf32, #tpu.memory_space<vmem>>, vector<1x4x1x16xf32>
    %239 = vector.shape_cast %238 : vector<1x4x1x16xf32> to vector<4x16xf32>
    %cst_180 = arith.constant dense<0.000000e+00> : vector<32x16xf32>
    %240 = tpu.matmul %0, %239, %cst_180 {dimension_numbers = #tpu.dot_dimension_numbers<[1], [0], [0], [1], [0, 0, 1, 1], [], []>} : vector<32x4xf32>, vector<4x16xf32>, vector<32x16xf32> -> vector<32x16xf32>
    %241 = vector.extract_strided_slice %240 {offsets = [0, 0], sizes = [16, 16], strides = [1, 1]} : vector<32x16xf32> to vector<16x16xf32>
    %cst_181 = arith.constant dense<0.000000e+00> : vector<16x32xf32>
    %242 = tpu.matmul %241, %2, %cst_181 {dimension_numbers = #tpu.dot_dimension_numbers<[1], [0], [0], [1], [0, 0, 1, 1], [], []>} : vector<16x16xf32>, vector<16x32xf32>, vector<16x32xf32> -> vector<16x32xf32>
    %243 = vector.extract_strided_slice %240 {offsets = [16, 0], sizes = [16, 16], strides = [1, 1]} : vector<32x16xf32> to vector<16x16xf32>
    %cst_182 = arith.constant dense<0.000000e+00> : vector<16x32xf32>
    %244 = tpu.matmul %243, %3, %cst_182 {dimension_numbers = #tpu.dot_dimension_numbers<[1], [0], [0], [1], [0, 0, 1, 1], [], []>} : vector<16x16xf32>, vector<16x32xf32>, vector<16x32xf32> -> vector<16x32xf32>
    %245 = arith.addf %242, %244 : vector<16x32xf32>
    %246 = vector.broadcast %1 : vector<16x1xf32> to vector<16x32xf32>
    %247 = arith.addf %245, %246 : vector<16x32xf32>
    %248 = vector.extract_strided_slice %247 {offsets = [0, 0], sizes = [8, 32], strides = [1, 1]} : vector<16x32xf32> to vector<8x32xf32>
    %c0_183 = arith.constant 0 : index
    %c0_184 = arith.constant 0 : index
    %c26 = arith.constant 26 : index
    %c0_185 = arith.constant 0 : index
    %249 = vector.load %arg8[%c0_183, %c0_184, %c26, %c0_185] : memref<1x8x32x32xf32, #tpu.memory_space<vmem>>, vector<1x8x1x32xf32>
    %250 = vector.shape_cast %249 : vector<1x8x1x32xf32> to vector<8x32xf32>
    %251 = vector.shape_cast %248 : vector<8x32xf32> to vector<1x8x1x32xf32>
    tpu.vector_store %arg8[%c0_183, %c0_184, %c26, %c0_185], %251 {strides = array<i32>} : memref<1x8x32x32xf32, #tpu.memory_space<vmem>>, vector<1x8x1x32xf32>,
    %252 = vector.extract_strided_slice %247 {offsets = [8, 0], sizes = [8, 32], strides = [1, 1]} : vector<16x32xf32> to vector<8x32xf32>
    %c0_186 = arith.constant 0 : index
    %c0_187 = arith.constant 0 : index
    %c27 = arith.constant 27 : index
    %c0_188 = arith.constant 0 : index
    %253 = vector.load %arg8[%c0_186, %c0_187, %c27, %c0_188] : memref<1x8x32x32xf32, #tpu.memory_space<vmem>>, vector<1x8x1x32xf32>
    %254 = vector.shape_cast %253 : vector<1x8x1x32xf32> to vector<8x32xf32>
    %255 = vector.shape_cast %252 : vector<8x32xf32> to vector<1x8x1x32xf32>
    tpu.vector_store %arg8[%c0_186, %c0_187, %c27, %c0_188], %255 {strides = array<i32>} : memref<1x8x32x32xf32, #tpu.memory_space<vmem>>, vector<1x8x1x32xf32>,
    %c0_189 = arith.constant 0 : index
    %c0_190 = arith.constant 0 : index
    %c14_191 = arith.constant 14 : index
    %c0_192 = arith.constant 0 : index
    %256 = vector.load %arg3[%c0_189, %c0_190, %c14_191, %c0_192] : memref<1x4x16x16xf32, #tpu.memory_space<vmem>>, vector<1x4x1x16xf32>
    %257 = vector.shape_cast %256 : vector<1x4x1x16xf32> to vector<4x16xf32>
    %cst_193 = arith.constant dense<0.000000e+00> : vector<32x16xf32>
    %258 = tpu.matmul %0, %257, %cst_193 {dimension_numbers = #tpu.dot_dimension_numbers<[1], [0], [0], [1], [0, 0, 1, 1], [], []>} : vector<32x4xf32>, vector<4x16xf32>, vector<32x16xf32> -> vector<32x16xf32>
    %259 = vector.extract_strided_slice %258 {offsets = [0, 0], sizes = [16, 16], strides = [1, 1]} : vector<32x16xf32> to vector<16x16xf32>
    %cst_194 = arith.constant dense<0.000000e+00> : vector<16x32xf32>
    %260 = tpu.matmul %259, %2, %cst_194 {dimension_numbers = #tpu.dot_dimension_numbers<[1], [0], [0], [1], [0, 0, 1, 1], [], []>} : vector<16x16xf32>, vector<16x32xf32>, vector<16x32xf32> -> vector<16x32xf32>
    %261 = vector.extract_strided_slice %258 {offsets = [16, 0], sizes = [16, 16], strides = [1, 1]} : vector<32x16xf32> to vector<16x16xf32>
    %cst_195 = arith.constant dense<0.000000e+00> : vector<16x32xf32>
    %262 = tpu.matmul %261, %3, %cst_195 {dimension_numbers = #tpu.dot_dimension_numbers<[1], [0], [0], [1], [0, 0, 1, 1], [], []>} : vector<16x16xf32>, vector<16x32xf32>, vector<16x32xf32> -> vector<16x32xf32>
    %263 = arith.addf %260, %262 : vector<16x32xf32>
    %264 = vector.broadcast %1 : vector<16x1xf32> to vector<16x32xf32>
    %265 = arith.addf %263, %264 : vector<16x32xf32>
    %266 = vector.extract_strided_slice %265 {offsets = [0, 0], sizes = [8, 32], strides = [1, 1]} : vector<16x32xf32> to vector<8x32xf32>
    %c0_196 = arith.constant 0 : index
    %c0_197 = arith.constant 0 : index
    %c28 = arith.constant 28 : index
    %c0_198 = arith.constant 0 : index
    %267 = vector.load %arg8[%c0_196, %c0_197, %c28, %c0_198] : memref<1x8x32x32xf32, #tpu.memory_space<vmem>>, vector<1x8x1x32xf32>
    %268 = vector.shape_cast %267 : vector<1x8x1x32xf32> to vector<8x32xf32>
    %269 = vector.shape_cast %266 : vector<8x32xf32> to vector<1x8x1x32xf32>
    tpu.vector_store %arg8[%c0_196, %c0_197, %c28, %c0_198], %269 {strides = array<i32>} : memref<1x8x32x32xf32, #tpu.memory_space<vmem>>, vector<1x8x1x32xf32>,
    %270 = vector.extract_strided_slice %265 {offsets = [8, 0], sizes = [8, 32], strides = [1, 1]} : vector<16x32xf32> to vector<8x32xf32>
    %c0_199 = arith.constant 0 : index
    %c0_200 = arith.constant 0 : index
    %c29 = arith.constant 29 : index
    %c0_201 = arith.constant 0 : index
    %271 = vector.load %arg8[%c0_199, %c0_200, %c29, %c0_201] : memref<1x8x32x32xf32, #tpu.memory_space<vmem>>, vector<1x8x1x32xf32>
    %272 = vector.shape_cast %271 : vector<1x8x1x32xf32> to vector<8x32xf32>
    %273 = vector.shape_cast %270 : vector<8x32xf32> to vector<1x8x1x32xf32>
    tpu.vector_store %arg8[%c0_199, %c0_200, %c29, %c0_201], %273 {strides = array<i32>} : memref<1x8x32x32xf32, #tpu.memory_space<vmem>>, vector<1x8x1x32xf32>,
    %c0_202 = arith.constant 0 : index
    %c0_203 = arith.constant 0 : index
    %c15_204 = arith.constant 15 : index
    %c0_205 = arith.constant 0 : index
    %274 = vector.load %arg3[%c0_202, %c0_203, %c15_204, %c0_205] : memref<1x4x16x16xf32, #tpu.memory_space<vmem>>, vector<1x4x1x16xf32>
    %275 = vector.shape_cast %274 : vector<1x4x1x16xf32> to vector<4x16xf32>
    %cst_206 = arith.constant dense<0.000000e+00> : vector<32x16xf32>
    %276 = tpu.matmul %0, %275, %cst_206 {dimension_numbers = #tpu.dot_dimension_numbers<[1], [0], [0], [1], [0, 0, 1, 1], [], []>} : vector<32x4xf32>, vector<4x16xf32>, vector<32x16xf32> -> vector<32x16xf32>
    %277 = vector.extract_strided_slice %276 {offsets = [0, 0], sizes = [16, 16], strides = [1, 1]} : vector<32x16xf32> to vector<16x16xf32>
    %cst_207 = arith.constant dense<0.000000e+00> : vector<16x32xf32>
    %278 = tpu.matmul %277, %2, %cst_207 {dimension_numbers = #tpu.dot_dimension_numbers<[1], [0], [0], [1], [0, 0, 1, 1], [], []>} : vector<16x16xf32>, vector<16x32xf32>, vector<16x32xf32> -> vector<16x32xf32>
    %279 = vector.extract_strided_slice %276 {offsets = [16, 0], sizes = [16, 16], strides = [1, 1]} : vector<32x16xf32> to vector<16x16xf32>
    %cst_208 = arith.constant dense<0.000000e+00> : vector<16x32xf32>
    %280 = tpu.matmul %279, %3, %cst_208 {dimension_numbers = #tpu.dot_dimension_numbers<[1], [0], [0], [1], [0, 0, 1, 1], [], []>} : vector<16x16xf32>, vector<16x32xf32>, vector<16x32xf32> -> vector<16x32xf32>
    %281 = arith.addf %278, %280 : vector<16x32xf32>
    %282 = vector.broadcast %1 : vector<16x1xf32> to vector<16x32xf32>
    %283 = arith.addf %281, %282 : vector<16x32xf32>
    %284 = vector.extract_strided_slice %283 {offsets = [0, 0], sizes = [8, 32], strides = [1, 1]} : vector<16x32xf32> to vector<8x32xf32>
    %c0_209 = arith.constant 0 : index
    %c0_210 = arith.constant 0 : index
    %c30 = arith.constant 30 : index
    %c0_211 = arith.constant 0 : index
    %285 = vector.load %arg8[%c0_209, %c0_210, %c30, %c0_211] : memref<1x8x32x32xf32, #tpu.memory_space<vmem>>, vector<1x8x1x32xf32>
    %286 = vector.shape_cast %285 : vector<1x8x1x32xf32> to vector<8x32xf32>
    %287 = vector.shape_cast %284 : vector<8x32xf32> to vector<1x8x1x32xf32>
    tpu.vector_store %arg8[%c0_209, %c0_210, %c30, %c0_211], %287 {strides = array<i32>} : memref<1x8x32x32xf32, #tpu.memory_space<vmem>>, vector<1x8x1x32xf32>,
    %288 = vector.extract_strided_slice %283 {offsets = [8, 0], sizes = [8, 32], strides = [1, 1]} : vector<16x32xf32> to vector<8x32xf32>
    %c0_212 = arith.constant 0 : index
    %c0_213 = arith.constant 0 : index
    %c31 = arith.constant 31 : index
    %c0_214 = arith.constant 0 : index
    %289 = vector.load %arg8[%c0_212, %c0_213, %c31, %c0_214] : memref<1x8x32x32xf32, #tpu.memory_space<vmem>>, vector<1x8x1x32xf32>
    %290 = vector.shape_cast %289 : vector<1x8x1x32xf32> to vector<8x32xf32>
    %291 = vector.shape_cast %288 : vector<8x32xf32> to vector<1x8x1x32xf32>
    tpu.vector_store %arg8[%c0_212, %c0_213, %c31, %c0_214], %291 {strides = array<i32>} : memref<1x8x32x32xf32, #tpu.memory_space<vmem>>, vector<1x8x1x32xf32>,
    return
  }
  func.func @transform_0(%arg0: i32, %arg1: i32, %arg2: i32) -> (i32, i32, i32, i32) {
    %c0_i32 = arith.constant 0 : i32
    %c0_i32_0 = arith.constant 0 : i32
    return %arg0, %c0_i32, %arg1, %arg2 : i32, i32, i32, i32
  }
  func.func @transform_1(%arg0: i32, %arg1: i32, %arg2: i32) -> (i32, i32) {
    %c0_i32 = arith.constant 0 : i32
    %c0_i32_0 = arith.constant 0 : i32
    %c0_i32_1 = arith.constant 0 : i32
    return %c0_i32, %c0_i32_0 : i32, i32
  }
  func.func @transform_2(%arg0: i32, %arg1: i32, %arg2: i32) -> (i32, i32) {
    %c0_i32 = arith.constant 0 : i32
    %c0_i32_0 = arith.constant 0 : i32
    %c0_i32_1 = arith.constant 0 : i32
    return %c0_i32, %c0_i32_0 : i32, i32
  }
  func.func @transform_3(%arg0: i32, %arg1: i32, %arg2: i32) -> (i32, i32) {
    %c0_i32 = arith.constant 0 : i32
    %c0_i32_0 = arith.constant 0 : i32
    %c0_i32_1 = arith.constant 0 : i32
    return %c0_i32, %c0_i32_0 : i32, i32
  }
  func.func @transform_4(%arg0: i32, %arg1: i32, %arg2: i32) -> (i32, i32) {
    %c0_i32 = arith.constant 0 : i32
    %c0_i32_0 = arith.constant 0 : i32
    %c0_i32_1 = arith.constant 0 : i32
    return %c0_i32, %c0_i32_0 : i32, i32
  }
  func.func @transform_5(%arg0: i32, %arg1: i32, %arg2: i32) -> (i32, i32, i32, i32) {
    %c0_i32 = arith.constant 0 : i32
    %c0_i32_0 = arith.constant 0 : i32
    return %arg0, %c0_i32, %arg1, %arg2 : i32, i32, i32, i32
  }
}

</mosaic_0001>

<llo_original>
// kernel: tpu_custom_call.1
$region0: #{tpu_custom_call.1}
  #allocation0 [shape = 'u32[]', space=smem, size = 0x4, offset = 0x4, fixed_abs, tag = 'smem constant byte address 0x4 - core index']
  #allocation1 [shape = 'u32[144,128]{1,0:T(1,128)}', space=vmem, size = 0x12000, scoped, tag = 'internal scratch']
  %s0 = inlined_call_operand.hbm [shape: f32[2,4,16,16], index: 0, kind: input, shape index: {}]
  %s1 = inlined_call_operand.vmem [shape: f32[32,4], index: 1, kind: input, shape index: {}]
  %s2 = inlined_call_operand.vmem [shape: f32[16,1], index: 2, kind: input, shape index: {}]
  %s3 = inlined_call_operand.vmem [shape: f32[16,32], index: 3, kind: input, shape index: {}]
  %s4 = inlined_call_operand.vmem [shape: f32[16,32], index: 4, kind: input, shape index: {}]
  %s5 = inlined_call_operand.hbm [shape: f32[2,8,32,32], index: 5, kind: output, shape index: {}]
  %s6 = sld [smem:[#allocation0]]
  $region57: #{tpu_custom_call.1} parent=0
    _
  %s8 = ssub.s32 1, %s6
  %s9 = scalar_select 0, %s8, %s6
  $region1: #{tpu_custom_call.1} parent=0
    #allocation2 [shape = 'u8[65536]{0}', space=vmem, size = 0x10000, scoped, tag = 'input window, operand 0']
    #allocation3 [shape = 's32[2]{0}', space=sflag, size = 0x8, scoped, tag = 'scoped memory for tpu_custom_call.1']
    #allocation4 [shape = 's32[2]{0}', space=sflag, size = 0x8, scoped, tag = 'scoped memory for tpu_custom_call.1']
    #allocation5 [shape = 'u8[262144]{0}', space=vmem, size = 0x40000, scoped, tag = 'output window, operand 0']
    %10 = vsyncpa [#allocation3], 0
    %s11 = scalar_lea.sflag [#allocation3], 1
    %12 = vsyncpa %s11, 0
    %13 = vsyncpa [#allocation4], 0
    %s14 = scalar_lea.sflag [#allocation4], 1
    %15 = vsyncpa %s14, 0
    loop: start=0, step=1, limit=4
    $region2: #{tpu_custom_call.1} parent=1 // loop_pre_header
      _
    $region3: #{tpu_custom_call.1} parent=1 // loop_header
      %s17 = sphi 0, %s21
      %p18 = scmp.ge.s32.totalorder %s17, 4
      %s24 = sphi 0, %s43
      %s25 = sphi 0, %s39
      %s26 = sphi 0, %s35
      %s27 = sphi 0, %s24
      %s28 = sphi 0, %s25
      %s29 = sphi 0, %s26
      %s30 = sphi 0, %s27
      %s31 = sphi 0, %s28
      %s32 = sphi 0, %s29
      %s50 = sphi 0, %s52
      %s53 = sphi 0, %s50
      %s54 = sphi 0, %s53
      %s70 = sphi 0, %s54
      %s74 = sphi 0, %s74
      %s76 = sphi 0, %s74
      %s77 = sphi 0, %s76
      %s91 = sphi 0, %s77
      %s95 = sphi 0, %s95
      %s97 = sphi 0, %s95
      %s98 = sphi 0, %s97
      %s112 = sphi 0, %s98
      %s116 = sphi 0, %s116
      %s118 = sphi 0, %s116
      %s119 = sphi 0, %s118
      %s133 = sphi 0, %s119
      %s137 = sphi 0, %s137
      %s139 = sphi 0, %s137
      %s140 = sphi 0, %s139
      %s154 = sphi 0, %s140
      %s164 = sphi 0, %s166
      %s167 = sphi 0, %s164
      %s168 = sphi 0, %s167
      %s184 = sphi 0, %s168
    $region4: #{tpu_custom_call.1} parent=1 // loop_header_branch
      %20 = sbr.rel (%p18) target = $region8
    $region5: #{tpu_custom_call.1} parent=1 // loop_body
      %s22 = ssub.s32 %s17, 1
      %s23 = ssub.s32 %s17, 2
      %s33 = sadd.s32 1, %s26
      %p34 = scmp.ge.s32.totalorder %s33, 1
      %s35 = scalar_select %p34, 0, %s33
      %s36 = sadd.s32 1, %s25
      %s37 = scalar_select %p34, %s36, %s25
      %p38 = scmp.ge.s32.totalorder %s37, 1
      %s39 = scalar_select %p38, 0, %s37
      %s40 = sadd.s32 1, %s24
      %s41 = scalar_select %p38, %s40, %s24
      %p42 = scmp.ge.s32.totalorder %s41, 2
      %s43 = scalar_select %p42, 0, %s41
      %s44 = ssub.s32 %s24, %s43
      %s45 = ssub.s32 %s25, %s39
      %s46 = sor.u32 %s44, %s45
      %s47 = ssub.s32 %s26, %s35
      %s48 = sor.u32 %s46, %s47
      %p49 = scmp.eq.s32.totalorder %s48, 0
      %s51 = sadd.s32 %s50, 1
      %s52 = scalar_select %p49, %s50, %s51
      %p55 = pneg %p49
      %p56 = scmp.eq.s32.totalorder %s17, 1
      %p57 = por %p55, %p56
      %p58 = scmp.ne.s32.totalorder %s50, %s53
      %p59 = scmp.eq.s32.totalorder %s17, 0
      %p60 = por %p58, %p59
      %p61 = scmp.ne.s32.totalorder %s50, %s53
      %p62 = scmp.eq.s32.totalorder %s22, 1
      %p63 = por %p61, %p62
      %p64 = scmp.ne.s32.totalorder %s53, %s54
      %p65 = scmp.eq.s32.totalorder %s22, 0
      %p66 = por %p64, %p65
      %p67 = scmp.ne.s32.totalorder %s53, %s54
      %p68 = scmp.eq.s32.totalorder %s23, 1
      %p69 = por %p67, %p68
      %p71 = scmp.ne.s32.totalorder %s54, %s70
      %p72 = scmp.eq.s32.totalorder %s23, 0
      %p73 = por %p71, %p72
      %s75 = sadd.s32 %s74, 1
      %p78 = scmp.eq.s32.totalorder %s17, 1
      %p79 = scmp.ne.s32.totalorder %s74, %s76
      %p80 = scmp.eq.s32.totalorder %s17, 0
      %p81 = por %p79, %p80
      %p82 = scmp.ne.s32.totalorder %s74, %s76
      %p83 = scmp.eq.s32.totalorder %s22, 1
      %p84 = por %p82, %p83
      %p85 = scmp.ne.s32.totalorder %s76, %s77
      %p86 = scmp.eq.s32.totalorder %s22, 0
      %p87 = por %p85, %p86
      %p88 = scmp.ne.s32.totalorder %s76, %s77
      %p89 = scmp.eq.s32.totalorder %s23, 1
      %p90 = por %p88, %p89
      %p92 = scmp.ne.s32.totalorder %s77, %s91
      %p93 = scmp.eq.s32.totalorder %s23, 0
      %p94 = por %p92, %p93
      %s96 = sadd.s32 %s95, 1
      %p99 = scmp.eq.s32.totalorder %s17, 1
      %p100 = scmp.ne.s32.totalorder %s95, %s97
      %p101 = scmp.eq.s32.totalorder %s17, 0
      %p102 = por %p100, %p101
      %p103 = scmp.ne.s32.totalorder %s95, %s97
      %p104 = scmp.eq.s32.totalorder %s22, 1
      %p105 = por %p103, %p104
      %p106 = scmp.ne.s32.totalorder %s97, %s98
      %p107 = scmp.eq.s32.totalorder %s22, 0
      %p108 = por %p106, %p107
      %p109 = scmp.ne.s32.totalorder %s97, %s98
      %p110 = scmp.eq.s32.totalorder %s23, 1
      %p111 = por %p109, %p110
      %p113 = scmp.ne.s32.totalorder %s98, %s112
      %p114 = scmp.eq.s32.totalorder %s23, 0
      %p115 = por %p113, %p114
      %s117 = sadd.s32 %s116, 1
      %p120 = scmp.eq.s32.totalorder %s17, 1
      %p121 = scmp.ne.s32.totalorder %s116, %s118
      %p122 = scmp.eq.s32.totalorder %s17, 0
      %p123 = por %p121, %p122
      %p124 = scmp.ne.s32.totalorder %s116, %s118
      %p125 = scmp.eq.s32.totalorder %s22, 1
      %p126 = por %p124, %p125
      %p127 = scmp.ne.s32.totalorder %s118, %s119
      %p128 = scmp.eq.s32.totalorder %s22, 0
      %p129 = por %p127, %p128
      %p130 = scmp.ne.s32.totalorder %s118, %s119
      %p131 = scmp.eq.s32.totalorder %s23, 1
      %p132 = por %p130, %p131
      %p134 = scmp.ne.s32.totalorder %s119, %s133
      %p135 = scmp.eq.s32.totalorder %s23, 0
      %p136 = por %p134, %p135
      %s138 = sadd.s32 %s137, 1
      %p141 = scmp.eq.s32.totalorder %s17, 1
      %p142 = scmp.ne.s32.totalorder %s137, %s139
      %p143 = scmp.eq.s32.totalorder %s17, 0
      %p144 = por %p142, %p143
      %p145 = scmp.ne.s32.totalorder %s137, %s139
      %p146 = scmp.eq.s32.totalorder %s22, 1
      %p147 = por %p145, %p146
      %p148 = scmp.ne.s32.totalorder %s139, %s140
      %p149 = scmp.eq.s32.totalorder %s22, 0
      %p150 = por %p148, %p149
      %p151 = scmp.ne.s32.totalorder %s139, %s140
      %p152 = scmp.eq.s32.totalorder %s23, 1
      %p153 = por %p151, %p152
      %p155 = scmp.ne.s32.totalorder %s140, %s154
      %p156 = scmp.eq.s32.totalorder %s23, 0
      %p157 = por %p155, %p156
      %s158 = ssub.s32 %s24, %s43
      %s159 = ssub.s32 %s25, %s39
      %s160 = sor.u32 %s158, %s159
      %s161 = ssub.s32 %s26, %s35
      %s162 = sor.u32 %s160, %s161
      %p163 = scmp.eq.s32.totalorder %s162, 0
      %s165 = sadd.s32 %s164, 1
      %s166 = scalar_select %p163, %s164, %s165
      %p169 = pneg %p163
      %p170 = scmp.eq.s32.totalorder %s17, 1
      %p171 = por %p169, %p170
      %p172 = scmp.ne.s32.totalorder %s164, %s167
      %p173 = scmp.eq.s32.totalorder %s17, 0
      %p174 = por %p172, %p173
      %p175 = scmp.ne.s32.totalorder %s164, %s167
      %p176 = scmp.eq.s32.totalorder %s22, 1
      %p177 = por %p175, %p176
      %p178 = scmp.ne.s32.totalorder %s167, %s168
      %p179 = scmp.eq.s32.totalorder %s22, 0
      %p180 = por %p178, %p179
      %p181 = scmp.ne.s32.totalorder %s167, %s168
      %p182 = scmp.eq.s32.totalorder %s23, 1
      %p183 = por %p181, %p182
      %p185 = scmp.ne.s32.totalorder %s168, %s184
      %p186 = scmp.eq.s32.totalorder %s23, 0
      %p187 = por %p185, %p186
      %p188 = scmp.le.s32.totalorder 1, %s17
      %p189 = scmp.lt.s32.totalorder %s17, 3
      %p190 = pnand %p188, %p189
      %p191 = pneg %p190
      // Predicated region
      $region9: #{tpu_custom_call.1} parent=5 // pred_check
        _
      $region10: #{tpu_custom_call.1} parent=5 // pred_check_branch
        %193 = sbr.rel (%p190) target = $region12
      $region11: #{tpu_custom_call.1} parent=5 // pred_region
        %s194 = ssub.s32 %s17, 1
        // Predicated region
        $region13: #{tpu_custom_call.1} parent=11 // pred_check
          %p195 = pneg %p87
        $region14: #{tpu_custom_call.1} parent=11 // pred_check_branch
          %197 = sbr.rel (%p195) target = $region16
        $region15: #{tpu_custom_call.1} parent=11 // pred_region
          _
        $region16: #{tpu_custom_call.1} parent=11 // pred_fallthru
          _
        // Predicated region
        $region17: #{tpu_custom_call.1} parent=11 // pred_check
          %p198 = pneg %p108
        $region18: #{tpu_custom_call.1} parent=11 // pred_check_branch
          %200 = sbr.rel (%p198) target = $region20
        $region19: #{tpu_custom_call.1} parent=11 // pred_region
          _
        $region20: #{tpu_custom_call.1} parent=11 // pred_fallthru
          _
        // Predicated region
        $region21: #{tpu_custom_call.1} parent=11 // pred_check
          %p201 = pneg %p129
        $region22: #{tpu_custom_call.1} parent=11 // pred_check_branch
          %203 = sbr.rel (%p201) target = $region24
        $region23: #{tpu_custom_call.1} parent=11 // pred_region
          _
        $region24: #{tpu_custom_call.1} parent=11 // pred_fallthru
          _
        // Predicated region
        $region25: #{tpu_custom_call.1} parent=11 // pred_check
          %p204 = pneg %p150
        $region26: #{tpu_custom_call.1} parent=11 // pred_check_branch
          %206 = sbr.rel (%p204) target = $region28
        $region27: #{tpu_custom_call.1} parent=11 // pred_region
          _
        $region28: #{tpu_custom_call.1} parent=11 // pred_fallthru
          _
      $region12: #{tpu_custom_call.1} parent=5 // pred_fallthru
        _
      %p207 = scmp.lt.s32.totalorder %s17, 2
      // Predicated region
      $region29: #{tpu_custom_call.1} parent=5 // pred_check
        %p208 = pneg %p207
      $region30: #{tpu_custom_call.1} parent=5 // pred_check_branch
        %210 = sbr.rel (%p208) target = $region32
      $region31: #{tpu_custom_call.1} parent=5 // pred_region
        // Predicated region
        $region33: #{tpu_custom_call.1} parent=31 // pred_check
          %p211 = pneg %p60
        $region34: #{tpu_custom_call.1} parent=31 // pred_check_branch
          %213 = sbr.rel (%p211) target = $region36
        $region35: #{tpu_custom_call.1} parent=31 // pred_region
          %s214 = sand.u32 %s50, 1
          %s215 = scalar_lea.sflag [#allocation3], %s214
          %s216 = sand.u32 %s50, 1
          %s217 = smul.addr %s216, 64
          %s218 = scalar_lea.vmem [#allocation2], %s217
          %s219 = smul.u32 2, %s25
          %s221 = ssub.s32 1024, 1024
          %222 = vsyncadd %s215, %s221
          %s223 = sadd.s32 %s26, %s219
          %s224 = smul.addr %s24, 8
          %s225 = sadd.s32 %s223, %s224
          %s226 = smul.addr %s225, 128
          %s227 = scalar_lea.hbm %s0, %s226
          %s228 = sshll.u32 %s218, 4
          %s229 = int_to_ptr.vmem [resolvable:$true] %s228
          %234 = dma.hbm_to_vmem [thread:$0]  %s227, 1024, %s229, %s215, 128, 128, 8
        $region36: #{tpu_custom_call.1} parent=31 // pred_fallthru
          _
      $region32: #{tpu_custom_call.1} parent=5 // pred_fallthru
        _
      %p235 = scmp.le.s32.totalorder 1, %s17
      %p236 = scmp.lt.s32.totalorder %s17, 3
      %p237 = pnand %p235, %p236
      %p238 = pneg %p237
      // Predicated region
      $region37: #{tpu_custom_call.1} parent=5 // pred_check
        _
      $region38: #{tpu_custom_call.1} parent=5 // pred_check_branch
        %240 = sbr.rel (%p237) target = $region40
      $region39: #{tpu_custom_call.1} parent=5 // pred_region
        %s241 = ssub.s32 %s17, 1
        %s242 = sand.u32 %s53, 1
        %s243 = scalar_lea.sflag [#allocation3], %s242
        %s244 = sand.u32 %s53, 1
        %s245 = smul.addr %s244, 64
        %s246 = scalar_lea.vmem [#allocation2], %s245
        // Predicated region
        $region41: #{tpu_custom_call.1} parent=39 // pred_check
          %p247 = pneg %p66
        $region42: #{tpu_custom_call.1} parent=39 // pred_check_branch
          %249 = sbr.rel (%p247) target = $region44
        $region43: #{tpu_custom_call.1} parent=39 // pred_region
          %250 = dma.done %s243, 1024
        $region44: #{tpu_custom_call.1} parent=39 // pred_fallthru
          _
        %s251 = sand.u32 %s53, 1
        %s252 = scalar_lea.sflag [#allocation3], %s251
        %s253 = sand.u32 %s53, 1
        %s254 = smul.addr %s253, 64
        %s255 = scalar_lea.vmem [#allocation2], %s254
        %p256 = pneg %p66
        %p257 = pneg %p63
        %p258 = pneg %p87
        %p259 = pneg %p84
        %p260 = pneg %p108
        %p261 = pneg %p105
        %p262 = pneg %p129
        %p263 = pneg %p126
        %p264 = pneg %p150
        %p265 = pneg %p147
        %p266 = pneg %p180
        %p267 = pneg %p177
        %s268 = sand.u32 %s167, 1
        %s269 = scalar_lea.sflag [#allocation4], %s268
        %s270 = sand.u32 %s167, 1
        %s271 = smul.addr %s270, 256
        %s272 = scalar_lea.vmem [#allocation5], %s271
        %s273 = smul.u32 2, %s28
        %s274 = smul.u32 4, %s28
        %v275 = vld [vmem:[%s1] sm:$0xff]
        %v276 = vld [vmem:[%s1 + $0x8] sm:$0xff]
        %v277 = vld [vmem:[%s1 + $0x10] sm:$0xff]
        %v278 = vld [vmem:[%s1 + $0x18] sm:$0xff]
        %v279 = vld [vmem:[%s2] sm:$0xff]
        %v280 = vld [vmem:[%s2 + $0x8] sm:$0xff]
        %v281 = vld [vmem:[%s3] sm:$0xff]
        %v282 = vld [vmem:[%s3 + $0x8] sm:$0xff]
        %v283 = vld [vmem:[%s4] sm:$0xff]
        %v284 = vld [vmem:[%s4 + $0x8] sm:$0xff]
        %v285 = vld [vmem:[%s246] sm:$0x1]
        %v286 = vld [vmem:[%s246 + $0x10] sm:$0x1]
        %v287 = vld [vmem:[%s246 + $0x20] sm:$0x1]
        %v288 = vld [vmem:[%s246 + $0x30] sm:$0x1]
        %v293 = vrot.slane %v286, 7
        %vm294 = vcmask 1041409
        %v295 = vsel %vm294, %v293, %v285
        %v296 = vrot.slane %v287, 6
        %vm297 = vcmask 1042434
        %v298 = vsel %vm297, %v296, %v295
        %v299 = vrot.slane %v288, 5
        %vm300 = vcmask 1043459
        %v301 = vsel %vm300, %v299, %v298
        %vm302 = vcmask 31744
        %v304 = vsel %vm302, %v275, 0
        %v307 = vsel %vm302, %v276, 0
        %v310 = vsel %vm302, %v277, 0
        %v313 = vsel %vm302, %v278, 0
        %vm315 = vcmask 1043456
        %v316 = vsel %vm315, %v301, 0
        %318 = vmatprep.subr.mxu0 0.0
        %319 = vmatpush1.msra.mxu0 %v316
        %320 = vmatprep.subr.mxu0 0.0
        %321 = vmatpush1.msra.mxu0 0.0
        %322 = vmatprep.subr.mxu0 0.0
        %323 = vmatpush1.msra.mxu0 0.0
        %324 = vmatprep.subr.mxu0 0.0
        %325 = vmatpush1.msra.mxu0 0.0
        %326 = vmatprep.subr.mxu0 0.0
        %327 = vmatpush1.msra.mxu0 0.0
        %328 = vmatprep.subr.mxu0 0.0
        %329 = vmatpush1.msra.mxu0 0.0
        %330 = vmatprep.subr.mxu0 0.0
        %331 = vmatpush1.msra.mxu0 0.0
        %332 = vmatprep.subr.mxu0 0.0
        %333 = vmatpush1.msra.mxu0 0.0
        %334 = vmatprep.subr.mxu0 0.0
        %335 = vmatpush1.msra.mxu0 0.0
        %336 = vmatprep.subr.mxu0 0.0
        %337 = vmatpush1.msra.mxu0 0.0
        %338 = vmatprep.subr.mxu0 0.0
        %339 = vmatpush1.msra.mxu0 0.0
        %340 = vmatprep.subr.mxu0 0.0
        %341 = vmatpush1.msra.mxu0 0.0
        %342 = vmatprep.subr.mxu0 0.0
        %343 = vmatpush1.msra.mxu0 0.0
        %344 = vmatprep.subr.mxu0 0.0
        %345 = vmatpush1.msra.mxu0 0.0
        %346 = vmatprep.subr.mxu0 0.0
        %347 = vmatpush1.msra.mxu0 0.0
        %348 = vmatprep.subr.mxu0 0.0
        %349 = vmatpush1.msra.mxu0 0.0
        %350 = vmatprep.subr.mxu0 0.0
        %351 = vmatpush1.msra.mxu0 0.0
        %352 = vmatprep.subr.mxu0 0.0
        %353 = vmatpush1.msra.mxu0 0.0
        %354 = vmatprep.subr.mxu0 0.0
        %355 = vmatpush1.msra.mxu0 0.0
        %356 = vmatprep.subr.mxu0 0.0
        %357 = vmatpush1.msra.mxu0 0.0
        %358 = vmatprep.subr.mxu0 0.0
        %359 = vmatpush1.msra.mxu0 0.0
        %360 = vmatprep.subr.mxu0 0.0
        %361 = vmatpush1.msra.mxu0 0.0
        %362 = vmatprep.subr.mxu0 0.0
        %363 = vmatpush1.msra.mxu0 0.0
        %364 = vmatprep.subr.mxu0 0.0
        %365 = vmatpush1.msra.mxu0 0.0
        %366 = vmatprep.subr.mxu0 0.0
        %367 = vmatpush1.msra.mxu0 0.0
        %368 = vmatprep.subr.mxu0 0.0
        %369 = vmatpush1.msra.mxu0 0.0
        %370 = vmatprep.subr.mxu0 0.0
        %371 = vmatpush1.msra.mxu0 0.0
        %372 = vmatprep.subr.mxu0 0.0
        %373 = vmatpush1.msra.mxu0 0.0
        %374 = vmatprep.subr.mxu0 0.0
        %375 = vmatpush1.msra.mxu0 0.0
        %376 = vmatprep.subr.mxu0 0.0
        %377 = vmatpush1.msra.mxu0 0.0
        %378 = vmatprep.subr.mxu0 0.0
        %379 = vmatpush1.msra.mxu0 0.0
        %380 = vmatprep.subr.mxu0 0.0
        %381 = vmatpush1.msra.mxu0 0.0
        %382 = vmatprep.mubr.f32.mxu0 0.0
        %383 = vmatmul.mubr.f32.gmra.mrb[0].mxu0 %v304
        %v384 = vpop.f32.mrb[0].mxu0
        %v385 = vadd.f32 0.0, %v384
        %v386 = vpop.f32.mrb[0].mxu0
        %387 = vmatprep.mubr.f32.mxu0 0.0
        %388 = vmatmul.mubr.f32.gmra.mrb[0].mxu0 %v307
        %v389 = vpop.f32.mrb[0].mxu0
        %v390 = vadd.f32 0.0, %v389
        %v391 = vpop.f32.mrb[0].mxu0
        %392 = vmatprep.mubr.f32.mxu0 0.0
        %393 = vmatmul.mubr.f32.gmra.mrb[0].mxu0 %v310
        %v394 = vpop.f32.mrb[0].mxu0
        %v395 = vadd.f32 0.0, %v394
        %v396 = vpop.f32.mrb[0].mxu0
        %397 = vmatprep.mubr.f32.mxu0 0.0
        %398 = vmatmul.mubr.f32.gmra.mrb[0].mxu0 %v313
        %v399 = vpop.f32.mrb[0].mxu0
        %v400 = vadd.f32 0.0, %v399
        %v401 = vpop.f32.mrb[0].mxu0
        %402 = vdwg.mxu0
        %vm403 = vcmask 130048
        %v405 = vsel %vm403, %v395, 0
        %v408 = vsel %vm403, %v400, 0
        %410 = vmatprep.subr.mxu0 0.0
        %411 = vmatpush1.msra.mxu0 %v283
        %412 = vmatprep.subr.mxu0 0.0
        %413 = vmatpush1.msra.mxu0 %v284
        %414 = vmatprep.subr.mxu0 0.0
        %415 = vmatpush1.msra.mxu0 0.0
        %416 = vmatprep.subr.mxu0 0.0
        %417 = vmatpush1.msra.mxu0 0.0
        %418 = vmatprep.subr.mxu0 0.0
        %419 = vmatpush1.msra.mxu0 0.0
        %420 = vmatprep.subr.mxu0 0.0
        %421 = vmatpush1.msra.mxu0 0.0
        %422 = vmatprep.subr.mxu0 0.0
        %423 = vmatpush1.msra.mxu0 0.0
        %424 = vmatprep.subr.mxu0 0.0
        %425 = vmatpush1.msra.mxu0 0.0
        %426 = vmatprep.subr.mxu0 0.0
        %427 = vmatpush1.msra.mxu0 0.0
        %428 = vmatprep.subr.mxu0 0.0
        %429 = vmatpush1.msra.mxu0 0.0
        %430 = vmatprep.subr.mxu0 0.0
        %431 = vmatpush1.msra.mxu0 0.0
        %432 = vmatprep.subr.mxu0 0.0
        %433 = vmatpush1.msra.mxu0 0.0
        %434 = vmatprep.subr.mxu0 0.0
        %435 = vmatpush1.msra.mxu0 0.0
        %436 = vmatprep.subr.mxu0 0.0
        %437 = vmatpush1.msra.mxu0 0.0
        %438 = vmatprep.subr.mxu0 0.0
        %439 = vmatpush1.msra.mxu0 0.0
        %440 = vmatprep.subr.mxu0 0.0
        %441 = vmatpush1.msra.mxu0 0.0
        %442 = vmatprep.subr.mxu0 0.0
        %443 = vmatpush1.msra.mxu0 0.0
        %444 = vmatprep.subr.mxu0 0.0
        %445 = vmatpush1.msra.mxu0 0.0
        %446 = vmatprep.subr.mxu0 0.0
        %447 = vmatpush1.msra.mxu0 0.0
        %448 = vmatprep.subr.mxu0 0.0
        %449 = vmatpush1.msra.mxu0 0.0
        %450 = vmatprep.subr.mxu0 0.0
        %451 = vmatpush1.msra.mxu0 0.0
        %452 = vmatprep.subr.mxu0 0.0
        %453 = vmatpush1.msra.mxu0 0.0
        %454 = vmatprep.subr.mxu0 0.0
        %455 = vmatpush1.msra.mxu0 0.0
        %456 = vmatprep.subr.mxu0 0.0
        %457 = vmatpush1.msra.mxu0 0.0
        %458 = vmatprep.subr.mxu0 0.0
        %459 = vmatpush1.msra.mxu0 0.0
        %460 = vmatprep.subr.mxu0 0.0
        %461 = vmatpush1.msra.mxu0 0.0
        %462 = vmatprep.subr.mxu0 0.0
        %463 = vmatpush1.msra.mxu0 0.0
        %464 = vmatprep.subr.mxu0 0.0
        %465 = vmatpush1.msra.mxu0 0.0
        %466 = vmatprep.subr.mxu0 0.0
        %467 = vmatpush1.msra.mxu0 0.0
        %468 = vmatprep.subr.mxu0 0.0
        %469 = vmatpush1.msra.mxu0 0.0
        %470 = vmatprep.subr.mxu0 0.0
        %471 = vmatpush1.msra.mxu0 0.0
        %472 = vmatprep.subr.mxu0 0.0
        %473 = vmatpush1.msra.mxu0 0.0
        %474 = vmatprep.mubr.f32.mxu0 0.0
        %475 = vmatmul.mubr.f32.gmra.mrb[0].mxu0 %v405
        %v476 = vpop.f32.mrb[0].mxu0
        %v477 = vadd.f32 0.0, %v476
        %v478 = vpop.f32.mrb[0].mxu0
        %479 = vmatprep.mubr.f32.mxu0 0.0
        %480 = vmatmul.mubr.f32.gmra.mrb[0].mxu0 %v408
        %v481 = vpop.f32.mrb[0].mxu0
        %v482 = vadd.f32 0.0, %v481
        %v483 = vpop.f32.mrb[0].mxu0
        %484 = vdwg.mxu0
        %v486 = vsel %vm403, %v385, 0
        %v489 = vsel %vm403, %v390, 0
        %491 = vmatprep.subr.mxu0 0.0
        %492 = vmatpush1.msra.mxu0 %v281
        %493 = vmatprep.subr.mxu0 0.0
        %494 = vmatpush1.msra.mxu0 %v282
        %495 = vmatprep.subr.mxu0 0.0
        %496 = vmatpush1.msra.mxu0 0.0
        %497 = vmatprep.subr.mxu0 0.0
        %498 = vmatpush1.msra.mxu0 0.0
        %499 = vmatprep.subr.mxu0 0.0
        %500 = vmatpush1.msra.mxu0 0.0
        %501 = vmatprep.subr.mxu0 0.0
        %502 = vmatpush1.msra.mxu0 0.0
        %503 = vmatprep.subr.mxu0 0.0
        %504 = vmatpush1.msra.mxu0 0.0
        %505 = vmatprep.subr.mxu0 0.0
        %506 = vmatpush1.msra.mxu0 0.0
        %507 = vmatprep.subr.mxu0 0.0
        %508 = vmatpush1.msra.mxu0 0.0
        %509 = vmatprep.subr.mxu0 0.0
        %510 = vmatpush1.msra.mxu0 0.0
        %511 = vmatprep.subr.mxu0 0.0
        %512 = vmatpush1.msra.mxu0 0.0
        %513 = vmatprep.subr.mxu0 0.0
        %514 = vmatpush1.msra.mxu0 0.0
        %515 = vmatprep.subr.mxu0 0.0
        %516 = vmatpush1.msra.mxu0 0.0
        %517 = vmatprep.subr.mxu0 0.0
        %518 = vmatpush1.msra.mxu0 0.0
        %519 = vmatprep.subr.mxu0 0.0
        %520 = vmatpush1.msra.mxu0 0.0
        %521 = vmatprep.subr.mxu0 0.0
        %522 = vmatpush1.msra.mxu0 0.0
        %523 = vmatprep.subr.mxu0 0.0
        %524 = vmatpush1.msra.mxu0 0.0
        %525 = vmatprep.subr.mxu0 0.0
        %526 = vmatpush1.msra.mxu0 0.0
        %527 = vmatprep.subr.mxu0 0.0
        %528 = vmatpush1.msra.mxu0 0.0
        %529 = vmatprep.subr.mxu0 0.0
        %530 = vmatpush1.msra.mxu0 0.0
        %531 = vmatprep.subr.mxu0 0.0
        %532 = vmatpush1.msra.mxu0 0.0
        %533 = vmatprep.subr.mxu0 0.0
        %534 = vmatpush1.msra.mxu0 0.0
        %535 = vmatprep.subr.mxu0 0.0
        %536 = vmatpush1.msra.mxu0 0.0
        %537 = vmatprep.subr.mxu0 0.0
        %538 = vmatpush1.msra.mxu0 0.0
        %539 = vmatprep.subr.mxu0 0.0
        %540 = vmatpush1.msra.mxu0 0.0
        %541 = vmatprep.subr.mxu0 0.0
        %542 = vmatpush1.msra.mxu0 0.0
        %543 = vmatprep.subr.mxu0 0.0
        %544 = vmatpush1.msra.mxu0 0.0
        %545 = vmatprep.subr.mxu0 0.0
        %546 = vmatpush1.msra.mxu0 0.0
        %547 = vmatprep.subr.mxu0 0.0
        %548 = vmatpush1.msra.mxu0 0.0
        %549 = vmatprep.subr.mxu0 0.0
        %550 = vmatpush1.msra.mxu0 0.0
        %551 = vmatprep.subr.mxu0 0.0
        %552 = vmatpush1.msra.mxu0 0.0
        %553 = vmatprep.subr.mxu0 0.0
        %554 = vmatpush1.msra.mxu0 0.0
        %555 = vmatprep.mubr.f32.mxu0 0.0
        %556 = vmatmul.mubr.f32.gmra.mrb[0].mxu0 %v486
        %v557 = vpop.f32.mrb[0].mxu0
        %v558 = vadd.f32 %v477, %v557
        %v559 = vpop.f32.mrb[0].mxu0
        %560 = vmatprep.mubr.f32.mxu0 0.0
        %561 = vmatmul.mubr.f32.gmra.mrb[0].mxu0 %v489
        %v562 = vpop.f32.mrb[0].mxu0
        %v563 = vadd.f32 %v482, %v562
        %v564 = vpop.f32.mrb[0].mxu0
        %565 = vdwg.mxu0
        %567 = vset.pattern.permute.xlu0 0
        %568 = vperm.xlu0 %567, %v279
        %v569 = vpop.permute.xlu0 %568
        %572 = vset.pattern.permute.xlu0 0
        %573 = vperm.xlu0 %572, %v280
        %v574 = vpop.permute.xlu0 %573
        %v576 = vadd.f32 %v558, %v569
        %v577 = vadd.f32 %v563, %v574
        %v579 = vcombine.high %v576, %v576
        %v581 = vunpack.c.l.s4 1966171168
        %v582 = vunpack.c.0.s8 %v581
        %v583 = vlaneseq
        %v584 = vshrl.u32 %v583, 7
        %v585 = vsub.s32 %v582, %v584
        %v586 = vrot.slane %v576, %v585
        %v588 = vunpack.c.l.s4 1966171168
        %v589 = vunpack.c.0.s8 %v588
        %v590 = vlaneseq
        %v591 = vshrl.u32 %v590, 7
        %v592 = vsub.s32 %v589, %v591
        %v593 = vrot.slane %v579, %v592
        %v594 = vcombine.high %v586, %v586
        %v595 = vcombine.high %v593, %v593
        %v597 = vunpack.c.l.s4 1966171168
        %v598 = vunpack.c.0.s8 %v597
        %v599 = vlaneseq
        %v600 = vshrl.u32 %v599, 7
        %v601 = vsub.s32 %v598, %v600
        %v602 = vrot.slane %v586, %v601
        %v604 = vunpack.c.l.s4 1966171168
        %v605 = vunpack.c.0.s8 %v604
        %v606 = vlaneseq
        %v607 = vshrl.u32 %v606, 7
        %v608 = vsub.s32 %v605, %v607
        %v609 = vrot.slane %v593, %v608
        %v611 = vunpack.c.l.s4 1966171168
        %v612 = vunpack.c.0.s8 %v611
        %v613 = vlaneseq
        %v614 = vshrl.u32 %v613, 7
        %v615 = vsub.s32 %v612, %v614
        %v616 = vrot.slane %v594, %v615
        %v618 = vunpack.c.l.s4 1966171168
        %v619 = vunpack.c.0.s8 %v618
        %v620 = vlaneseq
        %v621 = vshrl.u32 %v620, 7
        %v622 = vsub.s32 %v619, %v621
        %v623 = vrot.slane %v595, %v622
        %v624 = vcombine.high %v602, %v602
        %v625 = vcombine.high %v609, %v609
        %v626 = vcombine.high %v616, %v616
        %v627 = vcombine.high %v623, %v623
        %vm636 = vcmask 253952
        %637 = vst.msk [vmem:[%s272] sm:$0x1] %vm636, %v602
        %638 = vst.msk [vmem:[%s272 + $0x20] sm:$0x1] %vm636, %v616
        %639 = vst.msk [vmem:[%s272 + $0x40] sm:$0x1] %vm636, %v624
        %640 = vst.msk [vmem:[%s272 + $0x60] sm:$0x1] %vm636, %v626
        %641 = vst.msk [vmem:[%s272 + $0x80] sm:$0x1] %vm636, %v609
        %642 = vst.msk [vmem:[%s272 + $0xa0] sm:$0x1] %vm636, %v623
        %643 = vst.msk [vmem:[%s272 + $0xc0] sm:$0x1] %vm636, %v625
        %644 = vst.msk [vmem:[%s272 + $0xe0] sm:$0x1] %vm636, %v627
        %v646 = vcombine.high %v577, %v577
        %v648 = vunpack.c.l.s4 1966171168
        %v649 = vunpack.c.0.s8 %v648
        %v650 = vlaneseq
        %v651 = vshrl.u32 %v650, 7
        %v652 = vsub.s32 %v649, %v651
        %v653 = vrot.slane %v577, %v652
        %v655 = vunpack.c.l.s4 1966171168
        %v656 = vunpack.c.0.s8 %v655
        %v657 = vlaneseq
        %v658 = vshrl.u32 %v657, 7
        %v659 = vsub.s32 %v656, %v658
        %v660 = vrot.slane %v646, %v659
        %v661 = vcombine.high %v653, %v653
        %v662 = vcombine.high %v660, %v660
        %v664 = vunpack.c.l.s4 1966171168
        %v665 = vunpack.c.0.s8 %v664
        %v666 = vlaneseq
        %v667 = vshrl.u32 %v666, 7
        %v668 = vsub.s32 %v665, %v667
        %v669 = vrot.slane %v653, %v668
        %v671 = vunpack.c.l.s4 1966171168
        %v672 = vunpack.c.0.s8 %v671
        %v673 = vlaneseq
        %v674 = vshrl.u32 %v673, 7
        %v675 = vsub.s32 %v672, %v674
        %v676 = vrot.slane %v660, %v675
        %v678 = vunpack.c.l.s4 1966171168
        %v679 = vunpack.c.0.s8 %v678
        %v680 = vlaneseq
        %v681 = vshrl.u32 %v680, 7
        %v682 = vsub.s32 %v679, %v681
        %v683 = vrot.slane %v661, %v682
        %v685 = vunpack.c.l.s4 1966171168
        %v686 = vunpack.c.0.s8 %v685
        %v687 = vlaneseq
        %v688 = vshrl.u32 %v687, 7
        %v689 = vsub.s32 %v686, %v688
        %v690 = vrot.slane %v662, %v689
        %v691 = vcombine.high %v669, %v669
        %v692 = vcombine.high %v676, %v676
        %v693 = vcombine.high %v683, %v683
        %v694 = vcombine.high %v690, %v690
        %703 = vst.msk [vmem:[%s272 + $0x1] sm:$0x1] %vm636, %v669
        %704 = vst.msk [vmem:[%s272 + $0x21] sm:$0x1] %vm636, %v683
        %705 = vst.msk [vmem:[%s272 + $0x41] sm:$0x1] %vm636, %v691
        %706 = vst.msk [vmem:[%s272 + $0x61] sm:$0x1] %vm636, %v693
        %707 = vst.msk [vmem:[%s272 + $0x81] sm:$0x1] %vm636, %v676
        %708 = vst.msk [vmem:[%s272 + $0xa1] sm:$0x1] %vm636, %v690
        %709 = vst.msk [vmem:[%s272 + $0xc1] sm:$0x1] %vm636, %v692
        %710 = vst.msk [vmem:[%s272 + $0xe1] sm:$0x1] %vm636, %v694
        %v711 = vld [vmem:[%s246 + $0x1] sm:$0x1]
        %v712 = vld [vmem:[%s246 + $0x11] sm:$0x1]
        %v713 = vld [vmem:[%s246 + $0x21] sm:$0x1]
        %v714 = vld [vmem:[%s246 + $0x31] sm:$0x1]
        %v719 = vrot.slane %v712, 7
        %v720 = vsel %vm294, %v719, %v711
        %v721 = vrot.slane %v713, 6
        %v722 = vsel %vm297, %v721, %v720
        %v723 = vrot.slane %v714, 5
        %v724 = vsel %vm300, %v723, %v722
        %v725 = vsel %vm315, %v724, 0
        %727 = vmatprep.subr.mxu0 0.0
        %728 = vmatpush1.msra.mxu0 %v725
        %729 = vmatprep.subr.mxu0 0.0
        %730 = vmatpush1.msra.mxu0 0.0
        %731 = vmatprep.subr.mxu0 0.0
        %732 = vmatpush1.msra.mxu0 0.0
        %733 = vmatprep.subr.mxu0 0.0
        %734 = vmatpush1.msra.mxu0 0.0
        %735 = vmatprep.subr.mxu0 0.0
        %736 = vmatpush1.msra.mxu0 0.0
        %737 = vmatprep.subr.mxu0 0.0
        %738 = vmatpush1.msra.mxu0 0.0
        %739 = vmatprep.subr.mxu0 0.0
        %740 = vmatpush1.msra.mxu0 0.0
        %741 = vmatprep.subr.mxu0 0.0
        %742 = vmatpush1.msra.mxu0 0.0
        %743 = vmatprep.subr.mxu0 0.0
        %744 = vmatpush1.msra.mxu0 0.0
        %745 = vmatprep.subr.mxu0 0.0
        %746 = vmatpush1.msra.mxu0 0.0
        %747 = vmatprep.subr.mxu0 0.0
        %748 = vmatpush1.msra.mxu0 0.0
        %749 = vmatprep.subr.mxu0 0.0
        %750 = vmatpush1.msra.mxu0 0.0
        %751 = vmatprep.subr.mxu0 0.0
        %752 = vmatpush1.msra.mxu0 0.0
        %753 = vmatprep.subr.mxu0 0.0
        %754 = vmatpush1.msra.mxu0 0.0
        %755 = vmatprep.subr.mxu0 0.0
        %756 = vmatpush1.msra.mxu0 0.0
        %757 = vmatprep.subr.mxu0 0.0
        %758 = vmatpush1.msra.mxu0 0.0
        %759 = vmatprep.subr.mxu0 0.0
        %760 = vmatpush1.msra.mxu0 0.0
        %761 = vmatprep.subr.mxu0 0.0
        %762 = vmatpush1.msra.mxu0 0.0
        %763 = vmatprep.subr.mxu0 0.0
        %764 = vmatpush1.msra.mxu0 0.0
        %765 = vmatprep.subr.mxu0 0.0
        %766 = vmatpush1.msra.mxu0 0.0
        %767 = vmatprep.subr.mxu0 0.0
        %768 = vmatpush1.msra.mxu0 0.0
        %769 = vmatprep.subr.mxu0 0.0
        %770 = vmatpush1.msra.mxu0 0.0
        %771 = vmatprep.subr.mxu0 0.0
        %772 = vmatpush1.msra.mxu0 0.0
        %773 = vmatprep.subr.mxu0 0.0
        %774 = vmatpush1.msra.mxu0 0.0
        %775 = vmatprep.subr.mxu0 0.0
        %776 = vmatpush1.msra.mxu0 0.0
        %777 = vmatprep.subr.mxu0 0.0
        %778 = vmatpush1.msra.mxu0 0.0
        %779 = vmatprep.subr.mxu0 0.0
        %780 = vmatpush1.msra.mxu0 0.0
        %781 = vmatprep.subr.mxu0 0.0
        %782 = vmatpush1.msra.mxu0 0.0
        %783 = vmatprep.subr.mxu0 0.0
        %784 = vmatpush1.msra.mxu0 0.0
        %785 = vmatprep.subr.mxu0 0.0
        %786 = vmatpush1.msra.mxu0 0.0
        %787 = vmatprep.subr.mxu0 0.0
        %788 = vmatpush1.msra.mxu0 0.0
        %789 = vmatprep.subr.mxu0 0.0
        %790 = vmatpush1.msra.mxu0 0.0
        %791 = vmatprep.mubr.f32.mxu0 0.0
        %792 = vmatmul.mubr.f32.gmra.mrb[0].mxu0 %v304
        %v793 = vpop.f32.mrb[0].mxu0
        %v794 = vadd.f32 0.0, %v793
        %v795 = vpop.f32.mrb[0].mxu0
        %796 = vmatprep.mubr.f32.mxu0 0.0
        %797 = vmatmul.mubr.f32.gmra.mrb[0].mxu0 %v307
        %v798 = vpop.f32.mrb[0].mxu0
        %v799 = vadd.f32 0.0, %v798
        %v800 = vpop.f32.mrb[0].mxu0
        %801 = vmatprep.mubr.f32.mxu0 0.0
        %802 = vmatmul.mubr.f32.gmra.mrb[0].mxu0 %v310
        %v803 = vpop.f32.mrb[0].mxu0
        %v804 = vadd.f32 0.0, %v803
        %v805 = vpop.f32.mrb[0].mxu0
        %806 = vmatprep.mubr.f32.mxu0 0.0
        %807 = vmatmul.mubr.f32.gmra.mrb[0].mxu0 %v313
        %v808 = vpop.f32.mrb[0].mxu0
        %v809 = vadd.f32 0.0, %v808
        %v810 = vpop.f32.mrb[0].mxu0
        %811 = vdwg.mxu0
        %v813 = vsel %vm403, %v804, 0
        %v816 = vsel %vm403, %v809, 0
        %818 = vmatprep.subr.mxu0 0.0
        %819 = vmatpush1.msra.mxu0 %v283
        %820 = vmatprep.subr.mxu0 0.0
        %821 = vmatpush1.msra.mxu0 %v284
        %822 = vmatprep.subr.mxu0 0.0
        %823 = vmatpush1.msra.mxu0 0.0
        %824 = vmatprep.subr.mxu0 0.0
        %825 = vmatpush1.msra.mxu0 0.0
        %826 = vmatprep.subr.mxu0 0.0
        %827 = vmatpush1.msra.mxu0 0.0
        %828 = vmatprep.subr.mxu0 0.0
        %829 = vmatpush1.msra.mxu0 0.0
        %830 = vmatprep.subr.mxu0 0.0
        %831 = vmatpush1.msra.mxu0 0.0
        %832 = vmatprep.subr.mxu0 0.0
        %833 = vmatpush1.msra.mxu0 0.0
        %834 = vmatprep.subr.mxu0 0.0
        %835 = vmatpush1.msra.mxu0 0.0
        %836 = vmatprep.subr.mxu0 0.0
        %837 = vmatpush1.msra.mxu0 0.0
        %838 = vmatprep.subr.mxu0 0.0
        %839 = vmatpush1.msra.mxu0 0.0
        %840 = vmatprep.subr.mxu0 0.0
        %841 = vmatpush1.msra.mxu0 0.0
        %842 = vmatprep.subr.mxu0 0.0
        %843 = vmatpush1.msra.mxu0 0.0
        %844 = vmatprep.subr.mxu0 0.0
        %845 = vmatpush1.msra.mxu0 0.0
        %846 = vmatprep.subr.mxu0 0.0
        %847 = vmatpush1.msra.mxu0 0.0
        %848 = vmatprep.subr.mxu0 0.0
        %849 = vmatpush1.msra.mxu0 0.0
        %850 = vmatprep.subr.mxu0 0.0
        %851 = vmatpush1.msra.mxu0 0.0
        %852 = vmatprep.subr.mxu0 0.0
        %853 = vmatpush1.msra.mxu0 0.0
        %854 = vmatprep.subr.mxu0 0.0
        %855 = vmatpush1.msra.mxu0 0.0
        %856 = vmatprep.subr.mxu0 0.0
        %857 = vmatpush1.msra.mxu0 0.0
        %858 = vmatprep.subr.mxu0 0.0
        %859 = vmatpush1.msra.mxu0 0.0
        %860 = vmatprep.subr.mxu0 0.0
        %861 = vmatpush1.msra.mxu0 0.0
        %862 = vmatprep.subr.mxu0 0.0
        %863 = vmatpush1.msra.mxu0 0.0
        %864 = vmatprep.subr.mxu0 0.0
        %865 = vmatpush1.msra.mxu0 0.0
        %866 = vmatprep.subr.mxu0 0.0
        %867 = vmatpush1.msra.mxu0 0.0
        %868 = vmatprep.subr.mxu0 0.0
        %869 = vmatpush1.msra.mxu0 0.0
        %870 = vmatprep.subr.mxu0 0.0
        %871 = vmatpush1.msra.mxu0 0.0
        %872 = vmatprep.subr.mxu0 0.0
        %873 = vmatpush1.msra.mxu0 0.0
        %874 = vmatprep.subr.mxu0 0.0
        %875 = vmatpush1.msra.mxu0 0.0
        %876 = vmatprep.subr.mxu0 0.0
        %877 = vmatpush1.msra.mxu0 0.0
        %878 = vmatprep.subr.mxu0 0.0
        %879 = vmatpush1.msra.mxu0 0.0
        %880 = vmatprep.subr.mxu0 0.0
        %881 = vmatpush1.msra.mxu0 0.0
        %882 = vmatprep.mubr.f32.mxu0 0.0
        %883 = vmatmul.mubr.f32.gmra.mrb[0].mxu0 %v813
        %v884 = vpop.f32.mrb[0].mxu0
        %v885 = vadd.f32 0.0, %v884
        %v886 = vpop.f32.mrb[0].mxu0
        %887 = vmatprep.mubr.f32.mxu0 0.0
        %888 = vmatmul.mubr.f32.gmra.mrb[0].mxu0 %v816
        %v889 = vpop.f32.mrb[0].mxu0
        %v890 = vadd.f32 0.0, %v889
        %v891 = vpop.f32.mrb[0].mxu0
        %892 = vdwg.mxu0
        %v894 = vsel %vm403, %v794, 0
        %v897 = vsel %vm403, %v799, 0
        %899 = vmatprep.subr.mxu0 0.0
        %900 = vmatpush1.msra.mxu0 %v281
        %901 = vmatprep.subr.mxu0 0.0
        %902 = vmatpush1.msra.mxu0 %v282
        %903 = vmatprep.subr.mxu0 0.0
        %904 = vmatpush1.msra.mxu0 0.0
        %905 = vmatprep.subr.mxu0 0.0
        %906 = vmatpush1.msra.mxu0 0.0
        %907 = vmatprep.subr.mxu0 0.0
        %908 = vmatpush1.msra.mxu0 0.0
        %909 = vmatprep.subr.mxu0 0.0
        %910 = vmatpush1.msra.mxu0 0.0
        %911 = vmatprep.subr.mxu0 0.0
        %912 = vmatpush1.msra.mxu0 0.0
        %913 = vmatprep.subr.mxu0 0.0
        %914 = vmatpush1.msra.mxu0 0.0
        %915 = vmatprep.subr.mxu0 0.0
        %916 = vmatpush1.msra.mxu0 0.0
        %917 = vmatprep.subr.mxu0 0.0
        %918 = vmatpush1.msra.mxu0 0.0
        %919 = vmatprep.subr.mxu0 0.0
        %920 = vmatpush1.msra.mxu0 0.0
        %921 = vmatprep.subr.mxu0 0.0
        %922 = vmatpush1.msra.mxu0 0.0
        %923 = vmatprep.subr.mxu0 0.0
        %924 = vmatpush1.msra.mxu0 0.0
        %925 = vmatprep.subr.mxu0 0.0
        %926 = vmatpush1.msra.mxu0 0.0
        %927 = vmatprep.subr.mxu0 0.0
        %928 = vmatpush1.msra.mxu0 0.0
        %929 = vmatprep.subr.mxu0 0.0
        %930 = vmatpush1.msra.mxu0 0.0
        %931 = vmatprep.subr.mxu0 0.0
        %932 = vmatpush1.msra.mxu0 0.0
        %933 = vmatprep.subr.mxu0 0.0
        %934 = vmatpush1.msra.mxu0 0.0
        %935 = vmatprep.subr.mxu0 0.0
        %936 = vmatpush1.msra.mxu0 0.0
        %937 = vmatprep.subr.mxu0 0.0
        %938 = vmatpush1.msra.mxu0 0.0
        %939 = vmatprep.subr.mxu0 0.0
        %940 = vmatpush1.msra.mxu0 0.0
        %941 = vmatprep.subr.mxu0 0.0
        %942 = vmatpush1.msra.mxu0 0.0
        %943 = vmatprep.subr.mxu0 0.0
        %944 = vmatpush1.msra.mxu0 0.0
        %945 = vmatprep.subr.mxu0 0.0
        %946 = vmatpush1.msra.mxu0 0.0
        %947 = vmatprep.subr.mxu0 0.0
        %948 = vmatpush1.msra.mxu0 0.0
        %949 = vmatprep.subr.mxu0 0.0
        %950 = vmatpush1.msra.mxu0 0.0
        %951 = vmatprep.subr.mxu0 0.0
        %952 = vmatpush1.msra.mxu0 0.0
        %953 = vmatprep.subr.mxu0 0.0
        %954 = vmatpush1.msra.mxu0 0.0
        %955 = vmatprep.subr.mxu0 0.0
        %956 = vmatpush1.msra.mxu0 0.0
        %957 = vmatprep.subr.mxu0 0.0
        %958 = vmatpush1.msra.mxu0 0.0
        %959 = vmatprep.subr.mxu0 0.0
        %960 = vmatpush1.msra.mxu0 0.0
        %961 = vmatprep.subr.mxu0 0.0
        %962 = vmatpush1.msra.mxu0 0.0
        %963 = vmatprep.mubr.f32.mxu0 0.0
        %964 = vmatmul.mubr.f32.gmra.mrb[0].mxu0 %v894
        %v965 = vpop.f32.mrb[0].mxu0
        %v966 = vadd.f32 %v885, %v965
        %v967 = vpop.f32.mrb[0].mxu0
        %968 = vmatprep.mubr.f32.mxu0 0.0
        %969 = vmatmul.mubr.f32.gmra.mrb[0].mxu0 %v897
        %v970 = vpop.f32.mrb[0].mxu0
        %v971 = vadd.f32 %v890, %v970
        %v972 = vpop.f32.mrb[0].mxu0
        %973 = vdwg.mxu0
        %v974 = vadd.f32 %v966, %v569
        %v975 = vadd.f32 %v971, %v574
        %v977 = vcombine.high %v974, %v974
        %v979 = vunpack.c.l.s4 1966171168
        %v980 = vunpack.c.0.s8 %v979
        %v981 = vlaneseq
        %v982 = vshrl.u32 %v981, 7
        %v983 = vsub.s32 %v980, %v982
        %v984 = vrot.slane %v974, %v983
        %v986 = vunpack.c.l.s4 1966171168
        %v987 = vunpack.c.0.s8 %v986
        %v988 = vlaneseq
        %v989 = vshrl.u32 %v988, 7
        %v990 = vsub.s32 %v987, %v989
        %v991 = vrot.slane %v977, %v990
        %v992 = vcombine.high %v984, %v984
        %v993 = vcombine.high %v991, %v991
        %v995 = vunpack.c.l.s4 1966171168
        %v996 = vunpack.c.0.s8 %v995
        %v997 = vlaneseq
        %v998 = vshrl.u32 %v997, 7
        %v999 = vsub.s32 %v996, %v998
        %v1000 = vrot.slane %v984, %v999
        %v1002 = vunpack.c.l.s4 1966171168
        %v1003 = vunpack.c.0.s8 %v1002
        %v1004 = vlaneseq
        %v1005 = vshrl.u32 %v1004, 7
        %v1006 = vsub.s32 %v1003, %v1005
        %v1007 = vrot.slane %v991, %v1006
        %v1009 = vunpack.c.l.s4 1966171168
        %v1010 = vunpack.c.0.s8 %v1009
        %v1011 = vlaneseq
        %v1012 = vshrl.u32 %v1011, 7
        %v1013 = vsub.s32 %v1010, %v1012
        %v1014 = vrot.slane %v992, %v1013
        %v1016 = vunpack.c.l.s4 1966171168
        %v1017 = vunpack.c.0.s8 %v1016
        %v1018 = vlaneseq
        %v1019 = vshrl.u32 %v1018, 7
        %v1020 = vsub.s32 %v1017, %v1019
        %v1021 = vrot.slane %v993, %v1020
        %v1022 = vcombine.high %v1000, %v1000
        %v1023 = vcombine.high %v1007, %v1007
        %v1024 = vcombine.high %v1014, %v1014
        %v1025 = vcombine.high %v1021, %v1021
        %1034 = vst.msk [vmem:[%s272 + $0x2] sm:$0x1] %vm636, %v1000
        %1035 = vst.msk [vmem:[%s272 + $0x22] sm:$0x1] %vm636, %v1014
        %1036 = vst.msk [vmem:[%s272 + $0x42] sm:$0x1] %vm636, %v1022
        %1037 = vst.msk [vmem:[%s272 + $0x62] sm:$0x1] %vm636, %v1024
        %1038 = vst.msk [vmem:[%s272 + $0x82] sm:$0x1] %vm636, %v1007
        %1039 = vst.msk [vmem:[%s272 + $0xa2] sm:$0x1] %vm636, %v1021
        %1040 = vst.msk [vmem:[%s272 + $0xc2] sm:$0x1] %vm636, %v1023
        %1041 = vst.msk [vmem:[%s272 + $0xe2] sm:$0x1] %vm636, %v1025
        %v1043 = vcombine.high %v975, %v975
        %v1045 = vunpack.c.l.s4 1966171168
        %v1046 = vunpack.c.0.s8 %v1045
        %v1047 = vlaneseq
        %v1048 = vshrl.u32 %v1047, 7
        %v1049 = vsub.s32 %v1046, %v1048
        %v1050 = vrot.slane %v975, %v1049
        %v1052 = vunpack.c.l.s4 1966171168
        %v1053 = vunpack.c.0.s8 %v1052
        %v1054 = vlaneseq
        %v1055 = vshrl.u32 %v1054, 7
        %v1056 = vsub.s32 %v1053, %v1055
        %v1057 = vrot.slane %v1043, %v1056
        %v1058 = vcombine.high %v1050, %v1050
        %v1059 = vcombine.high %v1057, %v1057
        %v1061 = vunpack.c.l.s4 1966171168
        %v1062 = vunpack.c.0.s8 %v1061
        %v1063 = vlaneseq
        %v1064 = vshrl.u32 %v1063, 7
        %v1065 = vsub.s32 %v1062, %v1064
        %v1066 = vrot.slane %v1050, %v1065
        %v1068 = vunpack.c.l.s4 1966171168
        %v1069 = vunpack.c.0.s8 %v1068
        %v1070 = vlaneseq
        %v1071 = vshrl.u32 %v1070, 7
        %v1072 = vsub.s32 %v1069, %v1071
        %v1073 = vrot.slane %v1057, %v1072
        %v1075 = vunpack.c.l.s4 1966171168
        %v1076 = vunpack.c.0.s8 %v1075
        %v1077 = vlaneseq
        %v1078 = vshrl.u32 %v1077, 7
        %v1079 = vsub.s32 %v1076, %v1078
        %v1080 = vrot.slane %v1058, %v1079
        %v1082 = vunpack.c.l.s4 1966171168
        %v1083 = vunpack.c.0.s8 %v1082
        %v1084 = vlaneseq
        %v1085 = vshrl.u32 %v1084, 7
        %v1086 = vsub.s32 %v1083, %v1085
        %v1087 = vrot.slane %v1059, %v1086
        %v1088 = vcombine.high %v1066, %v1066
        %v1089 = vcombine.high %v1073, %v1073
        %v1090 = vcombine.high %v1080, %v1080
        %v1091 = vcombine.high %v1087, %v1087
        %1100 = vst.msk [vmem:[%s272 + $0x3] sm:$0x1] %vm636, %v1066
        %1101 = vst.msk [vmem:[%s272 + $0x23] sm:$0x1] %vm636, %v1080
        %1102 = vst.msk [vmem:[%s272 + $0x43] sm:$0x1] %vm636, %v1088
        %1103 = vst.msk [vmem:[%s272 + $0x63] sm:$0x1] %vm636, %v1090
        %1104 = vst.msk [vmem:[%s272 + $0x83] sm:$0x1] %vm636, %v1073
        %1105 = vst.msk [vmem:[%s272 + $0xa3] sm:$0x1] %vm636, %v1087
        %1106 = vst.msk [vmem:[%s272 + $0xc3] sm:$0x1] %vm636, %v1089
        %1107 = vst.msk [vmem:[%s272 + $0xe3] sm:$0x1] %vm636, %v1091
        %v1108 = vld [vmem:[%s246 + $0x2] sm:$0x1]
        %v1109 = vld [vmem:[%s246 + $0x12] sm:$0x1]
        %v1110 = vld [vmem:[%s246 + $0x22] sm:$0x1]
        %v1111 = vld [vmem:[%s246 + $0x32] sm:$0x1]
        %v1116 = vrot.slane %v1109, 7
        %v1117 = vsel %vm294, %v1116, %v1108
        %v1118 = vrot.slane %v1110, 6
        %v1119 = vsel %vm297, %v1118, %v1117
        %v1120 = vrot.slane %v1111, 5
        %v1121 = vsel %vm300, %v1120, %v1119
        %v1122 = vsel %vm315, %v1121, 0
        %1124 = vmatprep.subr.mxu0 0.0
        %1125 = vmatpush1.msra.mxu0 %v1122
        %1126 = vmatprep.subr.mxu0 0.0
        %1127 = vmatpush1.msra.mxu0 0.0
        %1128 = vmatprep.subr.mxu0 0.0
        %1129 = vmatpush1.msra.mxu0 0.0
        %1130 = vmatprep.subr.mxu0 0.0
        %1131 = vmatpush1.msra.mxu0 0.0
        %1132 = vmatprep.subr.mxu0 0.0
        %1133 = vmatpush1.msra.mxu0 0.0
        %1134 = vmatprep.subr.mxu0 0.0
        %1135 = vmatpush1.msra.mxu0 0.0
        %1136 = vmatprep.subr.mxu0 0.0
        %1137 = vmatpush1.msra.mxu0 0.0
        %1138 = vmatprep.subr.mxu0 0.0
        %1139 = vmatpush1.msra.mxu0 0.0
        %1140 = vmatprep.subr.mxu0 0.0
        %1141 = vmatpush1.msra.mxu0 0.0
        %1142 = vmatprep.subr.mxu0 0.0
        %1143 = vmatpush1.msra.mxu0 0.0
        %1144 = vmatprep.subr.mxu0 0.0
        %1145 = vmatpush1.msra.mxu0 0.0
        %1146 = vmatprep.subr.mxu0 0.0
        %1147 = vmatpush1.msra.mxu0 0.0
        %1148 = vmatprep.subr.mxu0 0.0
        %1149 = vmatpush1.msra.mxu0 0.0
        %1150 = vmatprep.subr.mxu0 0.0
        %1151 = vmatpush1.msra.mxu0 0.0
        %1152 = vmatprep.subr.mxu0 0.0
        %1153 = vmatpush1.msra.mxu0 0.0
        %1154 = vmatprep.subr.mxu0 0.0
        %1155 = vmatpush1.msra.mxu0 0.0
        %1156 = vmatprep.subr.mxu0 0.0
        %1157 = vmatpush1.msra.mxu0 0.0
        %1158 = vmatprep.subr.mxu0 0.0
        %1159 = vmatpush1.msra.mxu0 0.0
        %1160 = vmatprep.subr.mxu0 0.0
        %1161 = vmatpush1.msra.mxu0 0.0
        %1162 = vmatprep.subr.mxu0 0.0
        %1163 = vmatpush1.msra.mxu0 0.0
        %1164 = vmatprep.subr.mxu0 0.0
        %1165 = vmatpush1.msra.mxu0 0.0
        %1166 = vmatprep.subr.mxu0 0.0
        %1167 = vmatpush1.msra.mxu0 0.0
        %1168 = vmatprep.subr.mxu0 0.0
        %1169 = vmatpush1.msra.mxu0 0.0
        %1170 = vmatprep.subr.mxu0 0.0
        %1171 = vmatpush1.msra.mxu0 0.0
        %1172 = vmatprep.subr.mxu0 0.0
        %1173 = vmatpush1.msra.mxu0 0.0
        %1174 = vmatprep.subr.mxu0 0.0
        %1175 = vmatpush1.msra.mxu0 0.0
        %1176 = vmatprep.subr.mxu0 0.0
        %1177 = vmatpush1.msra.mxu0 0.0
        %1178 = vmatprep.subr.mxu0 0.0
        %1179 = vmatpush1.msra.mxu0 0.0
        %1180 = vmatprep.subr.mxu0 0.0
        %1181 = vmatpush1.msra.mxu0 0.0
        %1182 = vmatprep.subr.mxu0 0.0
        %1183 = vmatpush1.msra.mxu0 0.0
        %1184 = vmatprep.subr.mxu0 0.0
        %1185 = vmatpush1.msra.mxu0 0.0
        %1186 = vmatprep.subr.mxu0 0.0
        %1187 = vmatpush1.msra.mxu0 0.0
        %1188 = vmatprep.mubr.f32.mxu0 0.0
        %1189 = vmatmul.mubr.f32.gmra.mrb[0].mxu0 %v304
        %v1190 = vpop.f32.mrb[0].mxu0
        %v1191 = vadd.f32 0.0, %v1190
        %v1192 = vpop.f32.mrb[0].mxu0
        %1193 = vmatprep.mubr.f32.mxu0 0.0
        %1194 = vmatmul.mubr.f32.gmra.mrb[0].mxu0 %v307
        %v1195 = vpop.f32.mrb[0].mxu0
        %v1196 = vadd.f32 0.0, %v1195
        %v1197 = vpop.f32.mrb[0].mxu0
        %1198 = vmatprep.mubr.f32.mxu0 0.0
        %1199 = vmatmul.mubr.f32.gmra.mrb[0].mxu0 %v310
        %v1200 = vpop.f32.mrb[0].mxu0
        %v1201 = vadd.f32 0.0, %v1200
        %v1202 = vpop.f32.mrb[0].mxu0
        %1203 = vmatprep.mubr.f32.mxu0 0.0
        %1204 = vmatmul.mubr.f32.gmra.mrb[0].mxu0 %v313
        %v1205 = vpop.f32.mrb[0].mxu0
        %v1206 = vadd.f32 0.0, %v1205
        %v1207 = vpop.f32.mrb[0].mxu0
        %1208 = vdwg.mxu0
        %v1210 = vsel %vm403, %v1201, 0
        %v1213 = vsel %vm403, %v1206, 0
        %1215 = vmatprep.subr.mxu0 0.0
        %1216 = vmatpush1.msra.mxu0 %v283
        %1217 = vmatprep.subr.mxu0 0.0
        %1218 = vmatpush1.msra.mxu0 %v284
        %1219 = vmatprep.subr.mxu0 0.0
        %1220 = vmatpush1.msra.mxu0 0.0
        %1221 = vmatprep.subr.mxu0 0.0
        %1222 = vmatpush1.msra.mxu0 0.0
        %1223 = vmatprep.subr.mxu0 0.0
        %1224 = vmatpush1.msra.mxu0 0.0
        %1225 = vmatprep.subr.mxu0 0.0
        %1226 = vmatpush1.msra.mxu0 0.0
        %1227 = vmatprep.subr.mxu0 0.0
        %1228 = vmatpush1.msra.mxu0 0.0
        %1229 = vmatprep.subr.mxu0 0.0
        %1230 = vmatpush1.msra.mxu0 0.0
        %1231 = vmatprep.subr.mxu0 0.0
        %1232 = vmatpush1.msra.mxu0 0.0
        %1233 = vmatprep.subr.mxu0 0.0
        %1234 = vmatpush1.msra.mxu0 0.0
        %1235 = vmatprep.subr.mxu0 0.0
        %1236 = vmatpush1.msra.mxu0 0.0
        %1237 = vmatprep.subr.mxu0 0.0
        %1238 = vmatpush1.msra.mxu0 0.0
        %1239 = vmatprep.subr.mxu0 0.0
        %1240 = vmatpush1.msra.mxu0 0.0
        %1241 = vmatprep.subr.mxu0 0.0
        %1242 = vmatpush1.msra.mxu0 0.0
        %1243 = vmatprep.subr.mxu0 0.0
        %1244 = vmatpush1.msra.mxu0 0.0
        %1245 = vmatprep.subr.mxu0 0.0
        %1246 = vmatpush1.msra.mxu0 0.0
        %1247 = vmatprep.subr.mxu0 0.0
        %1248 = vmatpush1.msra.mxu0 0.0
        %1249 = vmatprep.subr.mxu0 0.0
        %1250 = vmatpush1.msra.mxu0 0.0
        %1251 = vmatprep.subr.mxu0 0.0
        %1252 = vmatpush1.msra.mxu0 0.0
        %1253 = vmatprep.subr.mxu0 0.0
        %1254 = vmatpush1.msra.mxu0 0.0
        %1255 = vmatprep.subr.mxu0 0.0
        %1256 = vmatpush1.msra.mxu0 0.0
        %1257 = vmatprep.subr.mxu0 0.0
        %1258 = vmatpush1.msra.mxu0 0.0
        %1259 = vmatprep.subr.mxu0 0.0
        %1260 = vmatpush1.msra.mxu0 0.0
        %1261 = vmatprep.subr.mxu0 0.0
        %1262 = vmatpush1.msra.mxu0 0.0
        %1263 = vmatprep.subr.mxu0 0.0
        %1264 = vmatpush1.msra.mxu0 0.0
        %1265 = vmatprep.subr.mxu0 0.0
        %1266 = vmatpush1.msra.mxu0 0.0
        %1267 = vmatprep.subr.mxu0 0.0
        %1268 = vmatpush1.msra.mxu0 0.0
        %1269 = vmatprep.subr.mxu0 0.0
        %1270 = vmatpush1.msra.mxu0 0.0
        %1271 = vmatprep.subr.mxu0 0.0
        %1272 = vmatpush1.msra.mxu0 0.0
        %1273 = vmatprep.subr.mxu0 0.0
        %1274 = vmatpush1.msra.mxu0 0.0
        %1275 = vmatprep.subr.mxu0 0.0
        %1276 = vmatpush1.msra.mxu0 0.0
        %1277 = vmatprep.subr.mxu0 0.0
        %1278 = vmatpush1.msra.mxu0 0.0
        %1279 = vmatprep.mubr.f32.mxu0 0.0
        %1280 = vmatmul.mubr.f32.gmra.mrb[0].mxu0 %v1210
        %v1281 = vpop.f32.mrb[0].mxu0
        %v1282 = vadd.f32 0.0, %v1281
        %v1283 = vpop.f32.mrb[0].mxu0
        %1284 = vmatprep.mubr.f32.mxu0 0.0
        %1285 = vmatmul.mubr.f32.gmra.mrb[0].mxu0 %v1213
        %v1286 = vpop.f32.mrb[0].mxu0
        %v1287 = vadd.f32 0.0, %v1286
        %v1288 = vpop.f32.mrb[0].mxu0
        %1289 = vdwg.mxu0
        %v1291 = vsel %vm403, %v1191, 0
        %v1294 = vsel %vm403, %v1196, 0
        %1296 = vmatprep.subr.mxu0 0.0
        %1297 = vmatpush1.msra.mxu0 %v281
        %1298 = vmatprep.subr.mxu0 0.0
        %1299 = vmatpush1.msra.mxu0 %v282
        %1300 = vmatprep.subr.mxu0 0.0
        %1301 = vmatpush1.msra.mxu0 0.0
        %1302 = vmatprep.subr.mxu0 0.0
        %1303 = vmatpush1.msra.mxu0 0.0
        %1304 = vmatprep.subr.mxu0 0.0
        %1305 = vmatpush1.msra.mxu0 0.0
        %1306 = vmatprep.subr.mxu0 0.0
        %1307 = vmatpush1.msra.mxu0 0.0
        %1308 = vmatprep.subr.mxu0 0.0
        %1309 = vmatpush1.msra.mxu0 0.0
        %1310 = vmatprep.subr.mxu0 0.0
        %1311 = vmatpush1.msra.mxu0 0.0
        %1312 = vmatprep.subr.mxu0 0.0
        %1313 = vmatpush1.msra.mxu0 0.0
        %1314 = vmatprep.subr.mxu0 0.0
        %1315 = vmatpush1.msra.mxu0 0.0
        %1316 = vmatprep.subr.mxu0 0.0
        %1317 = vmatpush1.msra.mxu0 0.0
        %1318 = vmatprep.subr.mxu0 0.0
        %1319 = vmatpush1.msra.mxu0 0.0
        %1320 = vmatprep.subr.mxu0 0.0
        %1321 = vmatpush1.msra.mxu0 0.0
        %1322 = vmatprep.subr.mxu0 0.0
        %1323 = vmatpush1.msra.mxu0 0.0
        %1324 = vmatprep.subr.mxu0 0.0
        %1325 = vmatpush1.msra.mxu0 0.0
        %1326 = vmatprep.subr.mxu0 0.0
        %1327 = vmatpush1.msra.mxu0 0.0
        %1328 = vmatprep.subr.mxu0 0.0
        %1329 = vmatpush1.msra.mxu0 0.0
        %1330 = vmatprep.subr.mxu0 0.0
        %1331 = vmatpush1.msra.mxu0 0.0
        %1332 = vmatprep.subr.mxu0 0.0
        %1333 = vmatpush1.msra.mxu0 0.0
        %1334 = vmatprep.subr.mxu0 0.0
        %1335 = vmatpush1.msra.mxu0 0.0
        %1336 = vmatprep.subr.mxu0 0.0
        %1337 = vmatpush1.msra.mxu0 0.0
        %1338 = vmatprep.subr.mxu0 0.0
        %1339 = vmatpush1.msra.mxu0 0.0
        %1340 = vmatprep.subr.mxu0 0.0
        %1341 = vmatpush1.msra.mxu0 0.0
        %1342 = vmatprep.subr.mxu0 0.0
        %1343 = vmatpush1.msra.mxu0 0.0
        %1344 = vmatprep.subr.mxu0 0.0
        %1345 = vmatpush1.msra.mxu0 0.0
        %1346 = vmatprep.subr.mxu0 0.0
        %1347 = vmatpush1.msra.mxu0 0.0
        %1348 = vmatprep.subr.mxu0 0.0
        %1349 = vmatpush1.msra.mxu0 0.0
        %1350 = vmatprep.subr.mxu0 0.0
        %1351 = vmatpush1.msra.mxu0 0.0
        %1352 = vmatprep.subr.mxu0 0.0
        %1353 = vmatpush1.msra.mxu0 0.0
        %1354 = vmatprep.subr.mxu0 0.0
        %1355 = vmatpush1.msra.mxu0 0.0
        %1356 = vmatprep.subr.mxu0 0.0
        %1357 = vmatpush1.msra.mxu0 0.0
        %1358 = vmatprep.subr.mxu0 0.0
        %1359 = vmatpush1.msra.mxu0 0.0
        %1360 = vmatprep.mubr.f32.mxu0 0.0
        %1361 = vmatmul.mubr.f32.gmra.mrb[0].mxu0 %v1291
        %v1362 = vpop.f32.mrb[0].mxu0
        %v1363 = vadd.f32 %v1282, %v1362
        %v1364 = vpop.f32.mrb[0].mxu0
        %1365 = vmatprep.mubr.f32.mxu0 0.0
        %1366 = vmatmul.mubr.f32.gmra.mrb[0].mxu0 %v1294
        %v1367 = vpop.f32.mrb[0].mxu0
        %v1368 = vadd.f32 %v1287, %v1367
        %v1369 = vpop.f32.mrb[0].mxu0
        %1370 = vdwg.mxu0
        %v1371 = vadd.f32 %v1363, %v569
        %v1372 = vadd.f32 %v1368, %v574
        %v1374 = vcombine.high %v1371, %v1371
        %v1376 = vunpack.c.l.s4 1966171168
        %v1377 = vunpack.c.0.s8 %v1376
        %v1378 = vlaneseq
        %v1379 = vshrl.u32 %v1378, 7
        %v1380 = vsub.s32 %v1377, %v1379
        %v1381 = vrot.slane %v1371, %v1380
        %v1383 = vunpack.c.l.s4 1966171168
        %v1384 = vunpack.c.0.s8 %v1383
        %v1385 = vlaneseq
        %v1386 = vshrl.u32 %v1385, 7
        %v1387 = vsub.s32 %v1384, %v1386
        %v1388 = vrot.slane %v1374, %v1387
        %v1389 = vcombine.high %v1381, %v1381
        %v1390 = vcombine.high %v1388, %v1388
        %v1392 = vunpack.c.l.s4 1966171168
        %v1393 = vunpack.c.0.s8 %v1392
        %v1394 = vlaneseq
        %v1395 = vshrl.u32 %v1394, 7
        %v1396 = vsub.s32 %v1393, %v1395
        %v1397 = vrot.slane %v1381, %v1396
        %v1399 = vunpack.c.l.s4 1966171168
        %v1400 = vunpack.c.0.s8 %v1399
        %v1401 = vlaneseq
        %v1402 = vshrl.u32 %v1401, 7
        %v1403 = vsub.s32 %v1400, %v1402
        %v1404 = vrot.slane %v1388, %v1403
        %v1406 = vunpack.c.l.s4 1966171168
        %v1407 = vunpack.c.0.s8 %v1406
        %v1408 = vlaneseq
        %v1409 = vshrl.u32 %v1408, 7
        %v1410 = vsub.s32 %v1407, %v1409
        %v1411 = vrot.slane %v1389, %v1410
        %v1413 = vunpack.c.l.s4 1966171168
        %v1414 = vunpack.c.0.s8 %v1413
        %v1415 = vlaneseq
        %v1416 = vshrl.u32 %v1415, 7
        %v1417 = vsub.s32 %v1414, %v1416
        %v1418 = vrot.slane %v1390, %v1417
        %v1419 = vcombine.high %v1397, %v1397
        %v1420 = vcombine.high %v1404, %v1404
        %v1421 = vcombine.high %v1411, %v1411
        %v1422 = vcombine.high %v1418, %v1418
        %1431 = vst.msk [vmem:[%s272 + $0x4] sm:$0x1] %vm636, %v1397
        %1432 = vst.msk [vmem:[%s272 + $0x24] sm:$0x1] %vm636, %v1411
        %1433 = vst.msk [vmem:[%s272 + $0x44] sm:$0x1] %vm636, %v1419
        %1434 = vst.msk [vmem:[%s272 + $0x64] sm:$0x1] %vm636, %v1421
        %1435 = vst.msk [vmem:[%s272 + $0x84] sm:$0x1] %vm636, %v1404
        %1436 = vst.msk [vmem:[%s272 + $0xa4] sm:$0x1] %vm636, %v1418
        %1437 = vst.msk [vmem:[%s272 + $0xc4] sm:$0x1] %vm636, %v1420
        %1438 = vst.msk [vmem:[%s272 + $0xe4] sm:$0x1] %vm636, %v1422
        %v1440 = vcombine.high %v1372, %v1372
        %v1442 = vunpack.c.l.s4 1966171168
        %v1443 = vunpack.c.0.s8 %v1442
        %v1444 = vlaneseq
        %v1445 = vshrl.u32 %v1444, 7
        %v1446 = vsub.s32 %v1443, %v1445
        %v1447 = vrot.slane %v1372, %v1446
        %v1449 = vunpack.c.l.s4 1966171168
        %v1450 = vunpack.c.0.s8 %v1449
        %v1451 = vlaneseq
        %v1452 = vshrl.u32 %v1451, 7
        %v1453 = vsub.s32 %v1450, %v1452
        %v1454 = vrot.slane %v1440, %v1453
        %v1455 = vcombine.high %v1447, %v1447
        %v1456 = vcombine.high %v1454, %v1454
        %v1458 = vunpack.c.l.s4 1966171168
        %v1459 = vunpack.c.0.s8 %v1458
        %v1460 = vlaneseq
        %v1461 = vshrl.u32 %v1460, 7
        %v1462 = vsub.s32 %v1459, %v1461
        %v1463 = vrot.slane %v1447, %v1462
        %v1465 = vunpack.c.l.s4 1966171168
        %v1466 = vunpack.c.0.s8 %v1465
        %v1467 = vlaneseq
        %v1468 = vshrl.u32 %v1467, 7
        %v1469 = vsub.s32 %v1466, %v1468
        %v1470 = vrot.slane %v1454, %v1469
        %v1472 = vunpack.c.l.s4 1966171168
        %v1473 = vunpack.c.0.s8 %v1472
        %v1474 = vlaneseq
        %v1475 = vshrl.u32 %v1474, 7
        %v1476 = vsub.s32 %v1473, %v1475
        %v1477 = vrot.slane %v1455, %v1476
        %v1479 = vunpack.c.l.s4 1966171168
        %v1480 = vunpack.c.0.s8 %v1479
        %v1481 = vlaneseq
        %v1482 = vshrl.u32 %v1481, 7
        %v1483 = vsub.s32 %v1480, %v1482
        %v1484 = vrot.slane %v1456, %v1483
        %v1485 = vcombine.high %v1463, %v1463
        %v1486 = vcombine.high %v1470, %v1470
        %v1487 = vcombine.high %v1477, %v1477
        %v1488 = vcombine.high %v1484, %v1484
        %1497 = vst.msk [vmem:[%s272 + $0x5] sm:$0x1] %vm636, %v1463
        %1498 = vst.msk [vmem:[%s272 + $0x25] sm:$0x1] %vm636, %v1477
        %1499 = vst.msk [vmem:[%s272 + $0x45] sm:$0x1] %vm636, %v1485
        %1500 = vst.msk [vmem:[%s272 + $0x65] sm:$0x1] %vm636, %v1487
        %1501 = vst.msk [vmem:[%s272 + $0x85] sm:$0x1] %vm636, %v1470
        %1502 = vst.msk [vmem:[%s272 + $0xa5] sm:$0x1] %vm636, %v1484
        %1503 = vst.msk [vmem:[%s272 + $0xc5] sm:$0x1] %vm636, %v1486
        %1504 = vst.msk [vmem:[%s272 + $0xe5] sm:$0x1] %vm636, %v1488
        %v1505 = vld [vmem:[%s246 + $0x3] sm:$0x1]
        %v1506 = vld [vmem:[%s246 + $0x13] sm:$0x1]
        %v1507 = vld [vmem:[%s246 + $0x23] sm:$0x1]
        %v1508 = vld [vmem:[%s246 + $0x33] sm:$0x1]
        %v1513 = vrot.slane %v1506, 7
        %v1514 = vsel %vm294, %v1513, %v1505
        %v1515 = vrot.slane %v1507, 6
        %v1516 = vsel %vm297, %v1515, %v1514
        %v1517 = vrot.slane %v1508, 5
        %v1518 = vsel %vm300, %v1517, %v1516
        %v1519 = vsel %vm315, %v1518, 0
        %1521 = vmatprep.subr.mxu0 0.0
        %1522 = vmatpush1.msra.mxu0 %v1519
        %1523 = vmatprep.subr.mxu0 0.0
        %1524 = vmatpush1.msra.mxu0 0.0
        %1525 = vmatprep.subr.mxu0 0.0
        %1526 = vmatpush1.msra.mxu0 0.0
        %1527 = vmatprep.subr.mxu0 0.0
        %1528 = vmatpush1.msra.mxu0 0.0
        %1529 = vmatprep.subr.mxu0 0.0
        %1530 = vmatpush1.msra.mxu0 0.0
        %1531 = vmatprep.subr.mxu0 0.0
        %1532 = vmatpush1.msra.mxu0 0.0
        %1533 = vmatprep.subr.mxu0 0.0
        %1534 = vmatpush1.msra.mxu0 0.0
        %1535 = vmatprep.subr.mxu0 0.0
        %1536 = vmatpush1.msra.mxu0 0.0
        %1537 = vmatprep.subr.mxu0 0.0
        %1538 = vmatpush1.msra.mxu0 0.0
        %1539 = vmatprep.subr.mxu0 0.0
        %1540 = vmatpush1.msra.mxu0 0.0
        %1541 = vmatprep.subr.mxu0 0.0
        %1542 = vmatpush1.msra.mxu0 0.0
        %1543 = vmatprep.subr.mxu0 0.0
        %1544 = vmatpush1.msra.mxu0 0.0
        %1545 = vmatprep.subr.mxu0 0.0
        %1546 = vmatpush1.msra.mxu0 0.0
        %1547 = vmatprep.subr.mxu0 0.0
        %1548 = vmatpush1.msra.mxu0 0.0
        %1549 = vmatprep.subr.mxu0 0.0
        %1550 = vmatpush1.msra.mxu0 0.0
        %1551 = vmatprep.subr.mxu0 0.0
        %1552 = vmatpush1.msra.mxu0 0.0
        %1553 = vmatprep.subr.mxu0 0.0
        %1554 = vmatpush1.msra.mxu0 0.0
        %1555 = vmatprep.subr.mxu0 0.0
        %1556 = vmatpush1.msra.mxu0 0.0
        %1557 = vmatprep.subr.mxu0 0.0
        %1558 = vmatpush1.msra.mxu0 0.0
        %1559 = vmatprep.subr.mxu0 0.0
        %1560 = vmatpush1.msra.mxu0 0.0
        %1561 = vmatprep.subr.mxu0 0.0
        %1562 = vmatpush1.msra.mxu0 0.0
        %1563 = vmatprep.subr.mxu0 0.0
        %1564 = vmatpush1.msra.mxu0 0.0
        %1565 = vmatprep.subr.mxu0 0.0
        %1566 = vmatpush1.msra.mxu0 0.0
        %1567 = vmatprep.subr.mxu0 0.0
        %1568 = vmatpush1.msra.mxu0 0.0
        %1569 = vmatprep.subr.mxu0 0.0
        %1570 = vmatpush1.msra.mxu0 0.0
        %1571 = vmatprep.subr.mxu0 0.0
        %1572 = vmatpush1.msra.mxu0 0.0
        %1573 = vmatprep.subr.mxu0 0.0
        %1574 = vmatpush1.msra.mxu0 0.0
        %1575 = vmatprep.subr.mxu0 0.0
        %1576 = vmatpush1.msra.mxu0 0.0
        %1577 = vmatprep.subr.mxu0 0.0
        %1578 = vmatpush1.msra.mxu0 0.0
        %1579 = vmatprep.subr.mxu0 0.0
        %1580 = vmatpush1.msra.mxu0 0.0
        %1581 = vmatprep.subr.mxu0 0.0
        %1582 = vmatpush1.msra.mxu0 0.0
        %1583 = vmatprep.subr.mxu0 0.0
        %1584 = vmatpush1.msra.mxu0 0.0
        %1585 = vmatprep.mubr.f32.mxu0 0.0
        %1586 = vmatmul.mubr.f32.gmra.mrb[0].mxu0 %v304
        %v1587 = vpop.f32.mrb[0].mxu0
        %v1588 = vadd.f32 0.0, %v1587
        %v1589 = vpop.f32.mrb[0].mxu0
        %1590 = vmatprep.mubr.f32.mxu0 0.0
        %1591 = vmatmul.mubr.f32.gmra.mrb[0].mxu0 %v307
        %v1592 = vpop.f32.mrb[0].mxu0
        %v1593 = vadd.f32 0.0, %v1592
        %v1594 = vpop.f32.mrb[0].mxu0
        %1595 = vmatprep.mubr.f32.mxu0 0.0
        %1596 = vmatmul.mubr.f32.gmra.mrb[0].mxu0 %v310
        %v1597 = vpop.f32.mrb[0].mxu0
        %v1598 = vadd.f32 0.0, %v1597
        %v1599 = vpop.f32.mrb[0].mxu0
        %1600 = vmatprep.mubr.f32.mxu0 0.0
        %1601 = vmatmul.mubr.f32.gmra.mrb[0].mxu0 %v313
        %v1602 = vpop.f32.mrb[0].mxu0
        %v1603 = vadd.f32 0.0, %v1602
        %v1604 = vpop.f32.mrb[0].mxu0
        %1605 = vdwg.mxu0
        %v1607 = vsel %vm403, %v1598, 0
        %v1610 = vsel %vm403, %v1603, 0
        %1612 = vmatprep.subr.mxu0 0.0
        %1613 = vmatpush1.msra.mxu0 %v283
        %1614 = vmatprep.subr.mxu0 0.0
        %1615 = vmatpush1.msra.mxu0 %v284
        %1616 = vmatprep.subr.mxu0 0.0
        %1617 = vmatpush1.msra.mxu0 0.0
        %1618 = vmatprep.subr.mxu0 0.0
        %1619 = vmatpush1.msra.mxu0 0.0
        %1620 = vmatprep.subr.mxu0 0.0
        %1621 = vmatpush1.msra.mxu0 0.0
        %1622 = vmatprep.subr.mxu0 0.0
        %1623 = vmatpush1.msra.mxu0 0.0
        %1624 = vmatprep.subr.mxu0 0.0
        %1625 = vmatpush1.msra.mxu0 0.0
        %1626 = vmatprep.subr.mxu0 0.0
        %1627 = vmatpush1.msra.mxu0 0.0
        %1628 = vmatprep.subr.mxu0 0.0
        %1629 = vmatpush1.msra.mxu0 0.0
        %1630 = vmatprep.subr.mxu0 0.0
        %1631 = vmatpush1.msra.mxu0 0.0
        %1632 = vmatprep.subr.mxu0 0.0
        %1633 = vmatpush1.msra.mxu0 0.0
        %1634 = vmatprep.subr.mxu0 0.0
        %1635 = vmatpush1.msra.mxu0 0.0
        %1636 = vmatprep.subr.mxu0 0.0
        %1637 = vmatpush1.msra.mxu0 0.0
        %1638 = vmatprep.subr.mxu0 0.0
        %1639 = vmatpush1.msra.mxu0 0.0
        %1640 = vmatprep.subr.mxu0 0.0
        %1641 = vmatpush1.msra.mxu0 0.0
        %1642 = vmatprep.subr.mxu0 0.0
        %1643 = vmatpush1.msra.mxu0 0.0
        %1644 = vmatprep.subr.mxu0 0.0
        %1645 = vmatpush1.msra.mxu0 0.0
        %1646 = vmatprep.subr.mxu0 0.0
        %1647 = vmatpush1.msra.mxu0 0.0
        %1648 = vmatprep.subr.mxu0 0.0
        %1649 = vmatpush1.msra.mxu0 0.0
        %1650 = vmatprep.subr.mxu0 0.0
        %1651 = vmatpush1.msra.mxu0 0.0
        %1652 = vmatprep.subr.mxu0 0.0
        %1653 = vmatpush1.msra.mxu0 0.0
        %1654 = vmatprep.subr.mxu0 0.0
        %1655 = vmatpush1.msra.mxu0 0.0
        %1656 = vmatprep.subr.mxu0 0.0
        %1657 = vmatpush1.msra.mxu0 0.0
        %1658 = vmatprep.subr.mxu0 0.0
        %1659 = vmatpush1.msra.mxu0 0.0
        %1660 = vmatprep.subr.mxu0 0.0
        %1661 = vmatpush1.msra.mxu0 0.0
        %1662 = vmatprep.subr.mxu0 0.0
        %1663 = vmatpush1.msra.mxu0 0.0
        %1664 = vmatprep.subr.mxu0 0.0
        %1665 = vmatpush1.msra.mxu0 0.0
        %1666 = vmatprep.subr.mxu0 0.0
        %1667 = vmatpush1.msra.mxu0 0.0
        %1668 = vmatprep.subr.mxu0 0.0
        %1669 = vmatpush1.msra.mxu0 0.0
        %1670 = vmatprep.subr.mxu0 0.0
        %1671 = vmatpush1.msra.mxu0 0.0
        %1672 = vmatprep.subr.mxu0 0.0
        %1673 = vmatpush1.msra.mxu0 0.0
        %1674 = vmatprep.subr.mxu0 0.0
        %1675 = vmatpush1.msra.mxu0 0.0
        %1676 = vmatprep.mubr.f32.mxu0 0.0
        %1677 = vmatmul.mubr.f32.gmra.mrb[0].mxu0 %v1607
        %v1678 = vpop.f32.mrb[0].mxu0
        %v1679 = vadd.f32 0.0, %v1678
        %v1680 = vpop.f32.mrb[0].mxu0
        %1681 = vmatprep.mubr.f32.mxu0 0.0
        %1682 = vmatmul.mubr.f32.gmra.mrb[0].mxu0 %v1610
        %v1683 = vpop.f32.mrb[0].mxu0
        %v1684 = vadd.f32 0.0, %v1683
        %v1685 = vpop.f32.mrb[0].mxu0
        %1686 = vdwg.mxu0
        %v1688 = vsel %vm403, %v1588, 0
        %v1691 = vsel %vm403, %v1593, 0
        %1693 = vmatprep.subr.mxu0 0.0
        %1694 = vmatpush1.msra.mxu0 %v281
        %1695 = vmatprep.subr.mxu0 0.0
        %1696 = vmatpush1.msra.mxu0 %v282
        %1697 = vmatprep.subr.mxu0 0.0
        %1698 = vmatpush1.msra.mxu0 0.0
        %1699 = vmatprep.subr.mxu0 0.0
        %1700 = vmatpush1.msra.mxu0 0.0
        %1701 = vmatprep.subr.mxu0 0.0
        %1702 = vmatpush1.msra.mxu0 0.0
        %1703 = vmatprep.subr.mxu0 0.0
        %1704 = vmatpush1.msra.mxu0 0.0
        %1705 = vmatprep.subr.mxu0 0.0
        %1706 = vmatpush1.msra.mxu0 0.0
        %1707 = vmatprep.subr.mxu0 0.0
        %1708 = vmatpush1.msra.mxu0 0.0
        %1709 = vmatprep.subr.mxu0 0.0
        %1710 = vmatpush1.msra.mxu0 0.0
        %1711 = vmatprep.subr.mxu0 0.0
        %1712 = vmatpush1.msra.mxu0 0.0
        %1713 = vmatprep.subr.mxu0 0.0
        %1714 = vmatpush1.msra.mxu0 0.0
        %1715 = vmatprep.subr.mxu0 0.0
        %1716 = vmatpush1.msra.mxu0 0.0
        %1717 = vmatprep.subr.mxu0 0.0
        %1718 = vmatpush1.msra.mxu0 0.0
        %1719 = vmatprep.subr.mxu0 0.0
        %1720 = vmatpush1.msra.mxu0 0.0
        %1721 = vmatprep.subr.mxu0 0.0
        %1722 = vmatpush1.msra.mxu0 0.0
        %1723 = vmatprep.subr.mxu0 0.0
        %1724 = vmatpush1.msra.mxu0 0.0
        %1725 = vmatprep.subr.mxu0 0.0
        %1726 = vmatpush1.msra.mxu0 0.0
        %1727 = vmatprep.subr.mxu0 0.0
        %1728 = vmatpush1.msra.mxu0 0.0
        %1729 = vmatprep.subr.mxu0 0.0
        %1730 = vmatpush1.msra.mxu0 0.0
        %1731 = vmatprep.subr.mxu0 0.0
        %1732 = vmatpush1.msra.mxu0 0.0
        %1733 = vmatprep.subr.mxu0 0.0
        %1734 = vmatpush1.msra.mxu0 0.0
        %1735 = vmatprep.subr.mxu0 0.0
        %1736 = vmatpush1.msra.mxu0 0.0
        %1737 = vmatprep.subr.mxu0 0.0
        %1738 = vmatpush1.msra.mxu0 0.0
        %1739 = vmatprep.subr.mxu0 0.0
        %1740 = vmatpush1.msra.mxu0 0.0
        %1741 = vmatprep.subr.mxu0 0.0
        %1742 = vmatpush1.msra.mxu0 0.0
        %1743 = vmatprep.subr.mxu0 0.0
        %1744 = vmatpush1.msra.mxu0 0.0
        %1745 = vmatprep.subr.mxu0 0.0
        %1746 = vmatpush1.msra.mxu0 0.0
        %1747 = vmatprep.subr.mxu0 0.0
        %1748 = vmatpush1.msra.mxu0 0.0
        %1749 = vmatprep.subr.mxu0 0.0
        %1750 = vmatpush1.msra.mxu0 0.0
        %1751 = vmatprep.subr.mxu0 0.0
        %1752 = vmatpush1.msra.mxu0 0.0
        %1753 = vmatprep.subr.mxu0 0.0
        %1754 = vmatpush1.msra.mxu0 0.0
        %1755 = vmatprep.subr.mxu0 0.0
        %1756 = vmatpush1.msra.mxu0 0.0
        %1757 = vmatprep.mubr.f32.mxu0 0.0
        %1758 = vmatmul.mubr.f32.gmra.mrb[0].mxu0 %v1688
        %v1759 = vpop.f32.mrb[0].mxu0
        %v1760 = vadd.f32 %v1679, %v1759
        %v1761 = vpop.f32.mrb[0].mxu0
        %1762 = vmatprep.mubr.f32.mxu0 0.0
        %1763 = vmatmul.mubr.f32.gmra.mrb[0].mxu0 %v1691
        %v1764 = vpop.f32.mrb[0].mxu0
        %v1765 = vadd.f32 %v1684, %v1764
        %v1766 = vpop.f32.mrb[0].mxu0
        %1767 = vdwg.mxu0
        %v1768 = vadd.f32 %v1760, %v569
        %v1769 = vadd.f32 %v1765, %v574
        %v1771 = vcombine.high %v1768, %v1768
        %v1773 = vunpack.c.l.s4 1966171168
        %v1774 = vunpack.c.0.s8 %v1773
        %v1775 = vlaneseq
        %v1776 = vshrl.u32 %v1775, 7
        %v1777 = vsub.s32 %v1774, %v1776
        %v1778 = vrot.slane %v1768, %v1777
        %v1780 = vunpack.c.l.s4 1966171168
        %v1781 = vunpack.c.0.s8 %v1780
        %v1782 = vlaneseq
        %v1783 = vshrl.u32 %v1782, 7
        %v1784 = vsub.s32 %v1781, %v1783
        %v1785 = vrot.slane %v1771, %v1784
        %v1786 = vcombine.high %v1778, %v1778
        %v1787 = vcombine.high %v1785, %v1785
        %v1789 = vunpack.c.l.s4 1966171168
        %v1790 = vunpack.c.0.s8 %v1789
        %v1791 = vlaneseq
        %v1792 = vshrl.u32 %v1791, 7
        %v1793 = vsub.s32 %v1790, %v1792
        %v1794 = vrot.slane %v1778, %v1793
        %v1796 = vunpack.c.l.s4 1966171168
        %v1797 = vunpack.c.0.s8 %v1796
        %v1798 = vlaneseq
        %v1799 = vshrl.u32 %v1798, 7
        %v1800 = vsub.s32 %v1797, %v1799
        %v1801 = vrot.slane %v1785, %v1800
        %v1803 = vunpack.c.l.s4 1966171168
        %v1804 = vunpack.c.0.s8 %v1803
        %v1805 = vlaneseq
        %v1806 = vshrl.u32 %v1805, 7
        %v1807 = vsub.s32 %v1804, %v1806
        %v1808 = vrot.slane %v1786, %v1807
        %v1810 = vunpack.c.l.s4 1966171168
        %v1811 = vunpack.c.0.s8 %v1810
        %v1812 = vlaneseq
        %v1813 = vshrl.u32 %v1812, 7
        %v1814 = vsub.s32 %v1811, %v1813
        %v1815 = vrot.slane %v1787, %v1814
        %v1816 = vcombine.high %v1794, %v1794
        %v1817 = vcombine.high %v1801, %v1801
        %v1818 = vcombine.high %v1808, %v1808
        %v1819 = vcombine.high %v1815, %v1815
        %1828 = vst.msk [vmem:[%s272 + $0x6] sm:$0x1] %vm636, %v1794
        %1829 = vst.msk [vmem:[%s272 + $0x26] sm:$0x1] %vm636, %v1808
        %1830 = vst.msk [vmem:[%s272 + $0x46] sm:$0x1] %vm636, %v1816
        %1831 = vst.msk [vmem:[%s272 + $0x66] sm:$0x1] %vm636, %v1818
        %1832 = vst.msk [vmem:[%s272 + $0x86] sm:$0x1] %vm636, %v1801
        %1833 = vst.msk [vmem:[%s272 + $0xa6] sm:$0x1] %vm636, %v1815
        %1834 = vst.msk [vmem:[%s272 + $0xc6] sm:$0x1] %vm636, %v1817
        %1835 = vst.msk [vmem:[%s272 + $0xe6] sm:$0x1] %vm636, %v1819
        %v1837 = vcombine.high %v1769, %v1769
        %v1839 = vunpack.c.l.s4 1966171168
        %v1840 = vunpack.c.0.s8 %v1839
        %v1841 = vlaneseq
        %v1842 = vshrl.u32 %v1841, 7
        %v1843 = vsub.s32 %v1840, %v1842
        %v1844 = vrot.slane %v1769, %v1843
        %v1846 = vunpack.c.l.s4 1966171168
        %v1847 = vunpack.c.0.s8 %v1846
        %v1848 = vlaneseq
        %v1849 = vshrl.u32 %v1848, 7
        %v1850 = vsub.s32 %v1847, %v1849
        %v1851 = vrot.slane %v1837, %v1850
        %v1852 = vcombine.high %v1844, %v1844
        %v1853 = vcombine.high %v1851, %v1851
        %v1855 = vunpack.c.l.s4 1966171168
        %v1856 = vunpack.c.0.s8 %v1855
        %v1857 = vlaneseq
        %v1858 = vshrl.u32 %v1857, 7
        %v1859 = vsub.s32 %v1856, %v1858
        %v1860 = vrot.slane %v1844, %v1859
        %v1862 = vunpack.c.l.s4 1966171168
        %v1863 = vunpack.c.0.s8 %v1862
        %v1864 = vlaneseq
        %v1865 = vshrl.u32 %v1864, 7
        %v1866 = vsub.s32 %v1863, %v1865
        %v1867 = vrot.slane %v1851, %v1866
        %v1869 = vunpack.c.l.s4 1966171168
        %v1870 = vunpack.c.0.s8 %v1869
        %v1871 = vlaneseq
        %v1872 = vshrl.u32 %v1871, 7
        %v1873 = vsub.s32 %v1870, %v1872
        %v1874 = vrot.slane %v1852, %v1873
        %v1876 = vunpack.c.l.s4 1966171168
        %v1877 = vunpack.c.0.s8 %v1876
        %v1878 = vlaneseq
        %v1879 = vshrl.u32 %v1878, 7
        %v1880 = vsub.s32 %v1877, %v1879
        %v1881 = vrot.slane %v1853, %v1880
        %v1882 = vcombine.high %v1860, %v1860
        %v1883 = vcombine.high %v1867, %v1867
        %v1884 = vcombine.high %v1874, %v1874
        %v1885 = vcombine.high %v1881, %v1881
        %1894 = vst.msk [vmem:[%s272 + $0x7] sm:$0x1] %vm636, %v1860
        %1895 = vst.msk [vmem:[%s272 + $0x27] sm:$0x1] %vm636, %v1874
        %1896 = vst.msk [vmem:[%s272 + $0x47] sm:$0x1] %vm636, %v1882
        %1897 = vst.msk [vmem:[%s272 + $0x67] sm:$0x1] %vm636, %v1884
        %1898 = vst.msk [vmem:[%s272 + $0x87] sm:$0x1] %vm636, %v1867
        %1899 = vst.msk [vmem:[%s272 + $0xa7] sm:$0x1] %vm636, %v1881
        %1900 = vst.msk [vmem:[%s272 + $0xc7] sm:$0x1] %vm636, %v1883
        %1901 = vst.msk [vmem:[%s272 + $0xe7] sm:$0x1] %vm636, %v1885
        %v1902 = vld [vmem:[%s246 + $0x4] sm:$0x1]
        %v1903 = vld [vmem:[%s246 + $0x14] sm:$0x1]
        %v1904 = vld [vmem:[%s246 + $0x24] sm:$0x1]
        %v1905 = vld [vmem:[%s246 + $0x34] sm:$0x1]
        %v1910 = vrot.slane %v1903, 7
        %v1911 = vsel %vm294, %v1910, %v1902
        %v1912 = vrot.slane %v1904, 6
        %v1913 = vsel %vm297, %v1912, %v1911
        %v1914 = vrot.slane %v1905, 5
        %v1915 = vsel %vm300, %v1914, %v1913
        %v1916 = vsel %vm315, %v1915, 0
        %1918 = vmatprep.subr.mxu0 0.0
        %1919 = vmatpush1.msra.mxu0 %v1916
        %1920 = vmatprep.subr.mxu0 0.0
        %1921 = vmatpush1.msra.mxu0 0.0
        %1922 = vmatprep.subr.mxu0 0.0
        %1923 = vmatpush1.msra.mxu0 0.0
        %1924 = vmatprep.subr.mxu0 0.0
        %1925 = vmatpush1.msra.mxu0 0.0
        %1926 = vmatprep.subr.mxu0 0.0
        %1927 = vmatpush1.msra.mxu0 0.0
        %1928 = vmatprep.subr.mxu0 0.0
        %1929 = vmatpush1.msra.mxu0 0.0
        %1930 = vmatprep.subr.mxu0 0.0
        %1931 = vmatpush1.msra.mxu0 0.0
        %1932 = vmatprep.subr.mxu0 0.0
        %1933 = vmatpush1.msra.mxu0 0.0
        %1934 = vmatprep.subr.mxu0 0.0
        %1935 = vmatpush1.msra.mxu0 0.0
        %1936 = vmatprep.subr.mxu0 0.0
        %1937 = vmatpush1.msra.mxu0 0.0
        %1938 = vmatprep.subr.mxu0 0.0
        %1939 = vmatpush1.msra.mxu0 0.0
        %1940 = vmatprep.subr.mxu0 0.0
        %1941 = vmatpush1.msra.mxu0 0.0
        %1942 = vmatprep.subr.mxu0 0.0
        %1943 = vmatpush1.msra.mxu0 0.0
        %1944 = vmatprep.subr.mxu0 0.0
        %1945 = vmatpush1.msra.mxu0 0.0
        %1946 = vmatprep.subr.mxu0 0.0
        %1947 = vmatpush1.msra.mxu0 0.0
        %1948 = vmatprep.subr.mxu0 0.0
        %1949 = vmatpush1.msra.mxu0 0.0
        %1950 = vmatprep.subr.mxu0 0.0
        %1951 = vmatpush1.msra.mxu0 0.0
        %1952 = vmatprep.subr.mxu0 0.0
        %1953 = vmatpush1.msra.mxu0 0.0
        %1954 = vmatprep.subr.mxu0 0.0
        %1955 = vmatpush1.msra.mxu0 0.0
        %1956 = vmatprep.subr.mxu0 0.0
        %1957 = vmatpush1.msra.mxu0 0.0
        %1958 = vmatprep.subr.mxu0 0.0
        %1959 = vmatpush1.msra.mxu0 0.0
        %1960 = vmatprep.subr.mxu0 0.0
        %1961 = vmatpush1.msra.mxu0 0.0
        %1962 = vmatprep.subr.mxu0 0.0
        %1963 = vmatpush1.msra.mxu0 0.0
        %1964 = vmatprep.subr.mxu0 0.0
        %1965 = vmatpush1.msra.mxu0 0.0
        %1966 = vmatprep.subr.mxu0 0.0
        %1967 = vmatpush1.msra.mxu0 0.0
        %1968 = vmatprep.subr.mxu0 0.0
        %1969 = vmatpush1.msra.mxu0 0.0
        %1970 = vmatprep.subr.mxu0 0.0
        %1971 = vmatpush1.msra.mxu0 0.0
        %1972 = vmatprep.subr.mxu0 0.0
        %1973 = vmatpush1.msra.mxu0 0.0
        %1974 = vmatprep.subr.mxu0 0.0
        %1975 = vmatpush1.msra.mxu0 0.0
        %1976 = vmatprep.subr.mxu0 0.0
        %1977 = vmatpush1.msra.mxu0 0.0
        %1978 = vmatprep.subr.mxu0 0.0
        %1979 = vmatpush1.msra.mxu0 0.0
        %1980 = vmatprep.subr.mxu0 0.0
        %1981 = vmatpush1.msra.mxu0 0.0
        %1982 = vmatprep.mubr.f32.mxu0 0.0
        %1983 = vmatmul.mubr.f32.gmra.mrb[0].mxu0 %v304
        %v1984 = vpop.f32.mrb[0].mxu0
        %v1985 = vadd.f32 0.0, %v1984
        %v1986 = vpop.f32.mrb[0].mxu0
        %1987 = vmatprep.mubr.f32.mxu0 0.0
        %1988 = vmatmul.mubr.f32.gmra.mrb[0].mxu0 %v307
        %v1989 = vpop.f32.mrb[0].mxu0
        %v1990 = vadd.f32 0.0, %v1989
        %v1991 = vpop.f32.mrb[0].mxu0
        %1992 = vmatprep.mubr.f32.mxu0 0.0
        %1993 = vmatmul.mubr.f32.gmra.mrb[0].mxu0 %v310
        %v1994 = vpop.f32.mrb[0].mxu0
        %v1995 = vadd.f32 0.0, %v1994
        %v1996 = vpop.f32.mrb[0].mxu0
        %1997 = vmatprep.mubr.f32.mxu0 0.0
        %1998 = vmatmul.mubr.f32.gmra.mrb[0].mxu0 %v313
        %v1999 = vpop.f32.mrb[0].mxu0
        %v2000 = vadd.f32 0.0, %v1999
        %v2001 = vpop.f32.mrb[0].mxu0
        %2002 = vdwg.mxu0
        %v2004 = vsel %vm403, %v1995, 0
        %v2007 = vsel %vm403, %v2000, 0
        %2009 = vmatprep.subr.mxu0 0.0
        %2010 = vmatpush1.msra.mxu0 %v283
        %2011 = vmatprep.subr.mxu0 0.0
        %2012 = vmatpush1.msra.mxu0 %v284
        %2013 = vmatprep.subr.mxu0 0.0
        %2014 = vmatpush1.msra.mxu0 0.0
        %2015 = vmatprep.subr.mxu0 0.0
        %2016 = vmatpush1.msra.mxu0 0.0
        %2017 = vmatprep.subr.mxu0 0.0
        %2018 = vmatpush1.msra.mxu0 0.0
        %2019 = vmatprep.subr.mxu0 0.0
        %2020 = vmatpush1.msra.mxu0 0.0
        %2021 = vmatprep.subr.mxu0 0.0
        %2022 = vmatpush1.msra.mxu0 0.0
        %2023 = vmatprep.subr.mxu0 0.0
        %2024 = vmatpush1.msra.mxu0 0.0
        %2025 = vmatprep.subr.mxu0 0.0
        %2026 = vmatpush1.msra.mxu0 0.0
        %2027 = vmatprep.subr.mxu0 0.0
        %2028 = vmatpush1.msra.mxu0 0.0
        %2029 = vmatprep.subr.mxu0 0.0
        %2030 = vmatpush1.msra.mxu0 0.0
        %2031 = vmatprep.subr.mxu0 0.0
        %2032 = vmatpush1.msra.mxu0 0.0
        %2033 = vmatprep.subr.mxu0 0.0
        %2034 = vmatpush1.msra.mxu0 0.0
        %2035 = vmatprep.subr.mxu0 0.0
        %2036 = vmatpush1.msra.mxu0 0.0
        %2037 = vmatprep.subr.mxu0 0.0
        %2038 = vmatpush1.msra.mxu0 0.0
        %2039 = vmatprep.subr.mxu0 0.0
        %2040 = vmatpush1.msra.mxu0 0.0
        %2041 = vmatprep.subr.mxu0 0.0
        %2042 = vmatpush1.msra.mxu0 0.0
        %2043 = vmatprep.subr.mxu0 0.0
        %2044 = vmatpush1.msra.mxu0 0.0
        %2045 = vmatprep.subr.mxu0 0.0
        %2046 = vmatpush1.msra.mxu0 0.0
        %2047 = vmatprep.subr.mxu0 0.0
        %2048 = vmatpush1.msra.mxu0 0.0
        %2049 = vmatprep.subr.mxu0 0.0
        %2050 = vmatpush1.msra.mxu0 0.0
        %2051 = vmatprep.subr.mxu0 0.0
        %2052 = vmatpush1.msra.mxu0 0.0
        %2053 = vmatprep.subr.mxu0 0.0
        %2054 = vmatpush1.msra.mxu0 0.0
        %2055 = vmatprep.subr.mxu0 0.0
        %2056 = vmatpush1.msra.mxu0 0.0
        %2057 = vmatprep.subr.mxu0 0.0
        %2058 = vmatpush1.msra.mxu0 0.0
        %2059 = vmatprep.subr.mxu0 0.0
        %2060 = vmatpush1.msra.mxu0 0.0
        %2061 = vmatprep.subr.mxu0 0.0
        %2062 = vmatpush1.msra.mxu0 0.0
        %2063 = vmatprep.subr.mxu0 0.0
        %2064 = vmatpush1.msra.mxu0 0.0
        %2065 = vmatprep.subr.mxu0 0.0
        %2066 = vmatpush1.msra.mxu0 0.0
        %2067 = vmatprep.subr.mxu0 0.0
        %2068 = vmatpush1.msra.mxu0 0.0
        %2069 = vmatprep.subr.mxu0 0.0
        %2070 = vmatpush1.msra.mxu0 0.0
        %2071 = vmatprep.subr.mxu0 0.0
        %2072 = vmatpush1.msra.mxu0 0.0
        %2073 = vmatprep.mubr.f32.mxu0 0.0
        %2074 = vmatmul.mubr.f32.gmra.mrb[0].mxu0 %v2004
        %v2075 = vpop.f32.mrb[0].mxu0
        %v2076 = vadd.f32 0.0, %v2075
        %v2077 = vpop.f32.mrb[0].mxu0
        %2078 = vmatprep.mubr.f32.mxu0 0.0
        %2079 = vmatmul.mubr.f32.gmra.mrb[0].mxu0 %v2007
        %v2080 = vpop.f32.mrb[0].mxu0
        %v2081 = vadd.f32 0.0, %v2080
        %v2082 = vpop.f32.mrb[0].mxu0
        %2083 = vdwg.mxu0
        %v2085 = vsel %vm403, %v1985, 0
        %v2088 = vsel %vm403, %v1990, 0
        %2090 = vmatprep.subr.mxu0 0.0
        %2091 = vmatpush1.msra.mxu0 %v281
        %2092 = vmatprep.subr.mxu0 0.0
        %2093 = vmatpush1.msra.mxu0 %v282
        %2094 = vmatprep.subr.mxu0 0.0
        %2095 = vmatpush1.msra.mxu0 0.0
        %2096 = vmatprep.subr.mxu0 0.0
        %2097 = vmatpush1.msra.mxu0 0.0
        %2098 = vmatprep.subr.mxu0 0.0
        %2099 = vmatpush1.msra.mxu0 0.0
        %2100 = vmatprep.subr.mxu0 0.0
        %2101 = vmatpush1.msra.mxu0 0.0
        %2102 = vmatprep.subr.mxu0 0.0
        %2103 = vmatpush1.msra.mxu0 0.0
        %2104 = vmatprep.subr.mxu0 0.0
        %2105 = vmatpush1.msra.mxu0 0.0
        %2106 = vmatprep.subr.mxu0 0.0
        %2107 = vmatpush1.msra.mxu0 0.0
        %2108 = vmatprep.subr.mxu0 0.0
        %2109 = vmatpush1.msra.mxu0 0.0
        %2110 = vmatprep.subr.mxu0 0.0
        %2111 = vmatpush1.msra.mxu0 0.0
        %2112 = vmatprep.subr.mxu0 0.0
        %2113 = vmatpush1.msra.mxu0 0.0
        %2114 = vmatprep.subr.mxu0 0.0
        %2115 = vmatpush1.msra.mxu0 0.0
        %2116 = vmatprep.subr.mxu0 0.0
        %2117 = vmatpush1.msra.mxu0 0.0
        %2118 = vmatprep.subr.mxu0 0.0
        %2119 = vmatpush1.msra.mxu0 0.0
        %2120 = vmatprep.subr.mxu0 0.0
        %2121 = vmatpush1.msra.mxu0 0.0
        %2122 = vmatprep.subr.mxu0 0.0
        %2123 = vmatpush1.msra.mxu0 0.0
        %2124 = vmatprep.subr.mxu0 0.0
        %2125 = vmatpush1.msra.mxu0 0.0
        %2126 = vmatprep.subr.mxu0 0.0
        %2127 = vmatpush1.msra.mxu0 0.0
        %2128 = vmatprep.subr.mxu0 0.0
        %2129 = vmatpush1.msra.mxu0 0.0
        %2130 = vmatprep.subr.mxu0 0.0
        %2131 = vmatpush1.msra.mxu0 0.0
        %2132 = vmatprep.subr.mxu0 0.0
        %2133 = vmatpush1.msra.mxu0 0.0
        %2134 = vmatprep.subr.mxu0 0.0
        %2135 = vmatpush1.msra.mxu0 0.0
        %2136 = vmatprep.subr.mxu0 0.0
        %2137 = vmatpush1.msra.mxu0 0.0
        %2138 = vmatprep.subr.mxu0 0.0
        %2139 = vmatpush1.msra.mxu0 0.0
        %2140 = vmatprep.subr.mxu0 0.0
        %2141 = vmatpush1.msra.mxu0 0.0
        %2142 = vmatprep.subr.mxu0 0.0
        %2143 = vmatpush1.msra.mxu0 0.0
        %2144 = vmatprep.subr.mxu0 0.0
        %2145 = vmatpush1.msra.mxu0 0.0
        %2146 = vmatprep.subr.mxu0 0.0
        %2147 = vmatpush1.msra.mxu0 0.0
        %2148 = vmatprep.subr.mxu0 0.0
        %2149 = vmatpush1.msra.mxu0 0.0
        %2150 = vmatprep.subr.mxu0 0.0
        %2151 = vmatpush1.msra.mxu0 0.0
        %2152 = vmatprep.subr.mxu0 0.0
        %2153 = vmatpush1.msra.mxu0 0.0
        %2154 = vmatprep.mubr.f32.mxu0 0.0
        %2155 = vmatmul.mubr.f32.gmra.mrb[0].mxu0 %v2085
        %v2156 = vpop.f32.mrb[0].mxu0
        %v2157 = vadd.f32 %v2076, %v2156
        %v2158 = vpop.f32.mrb[0].mxu0
        %2159 = vmatprep.mubr.f32.mxu0 0.0
        %2160 = vmatmul.mubr.f32.gmra.mrb[0].mxu0 %v2088
        %v2161 = vpop.f32.mrb[0].mxu0
        %v2162 = vadd.f32 %v2081, %v2161
        %v2163 = vpop.f32.mrb[0].mxu0
        %2164 = vdwg.mxu0
        %v2165 = vadd.f32 %v2157, %v569
        %v2166 = vadd.f32 %v2162, %v574
        %v2168 = vcombine.high %v2165, %v2165
        %v2170 = vunpack.c.l.s4 1966171168
        %v2171 = vunpack.c.0.s8 %v2170
        %v2172 = vlaneseq
        %v2173 = vshrl.u32 %v2172, 7
        %v2174 = vsub.s32 %v2171, %v2173
        %v2175 = vrot.slane %v2165, %v2174
        %v2177 = vunpack.c.l.s4 1966171168
        %v2178 = vunpack.c.0.s8 %v2177
        %v2179 = vlaneseq
        %v2180 = vshrl.u32 %v2179, 7
        %v2181 = vsub.s32 %v2178, %v2180
        %v2182 = vrot.slane %v2168, %v2181
        %v2183 = vcombine.high %v2175, %v2175
        %v2184 = vcombine.high %v2182, %v2182
        %v2186 = vunpack.c.l.s4 1966171168
        %v2187 = vunpack.c.0.s8 %v2186
        %v2188 = vlaneseq
        %v2189 = vshrl.u32 %v2188, 7
        %v2190 = vsub.s32 %v2187, %v2189
        %v2191 = vrot.slane %v2175, %v2190
        %v2193 = vunpack.c.l.s4 1966171168
        %v2194 = vunpack.c.0.s8 %v2193
        %v2195 = vlaneseq
        %v2196 = vshrl.u32 %v2195, 7
        %v2197 = vsub.s32 %v2194, %v2196
        %v2198 = vrot.slane %v2182, %v2197
        %v2200 = vunpack.c.l.s4 1966171168
        %v2201 = vunpack.c.0.s8 %v2200
        %v2202 = vlaneseq
        %v2203 = vshrl.u32 %v2202, 7
        %v2204 = vsub.s32 %v2201, %v2203
        %v2205 = vrot.slane %v2183, %v2204
        %v2207 = vunpack.c.l.s4 1966171168
        %v2208 = vunpack.c.0.s8 %v2207
        %v2209 = vlaneseq
        %v2210 = vshrl.u32 %v2209, 7
        %v2211 = vsub.s32 %v2208, %v2210
        %v2212 = vrot.slane %v2184, %v2211
        %v2213 = vcombine.high %v2191, %v2191
        %v2214 = vcombine.high %v2198, %v2198
        %v2215 = vcombine.high %v2205, %v2205
        %v2216 = vcombine.high %v2212, %v2212
        %2225 = vst.msk [vmem:[%s272 + $0x8] sm:$0x1] %vm636, %v2191
        %2226 = vst.msk [vmem:[%s272 + $0x28] sm:$0x1] %vm636, %v2205
        %2227 = vst.msk [vmem:[%s272 + $0x48] sm:$0x1] %vm636, %v2213
        %2228 = vst.msk [vmem:[%s272 + $0x68] sm:$0x1] %vm636, %v2215
        %2229 = vst.msk [vmem:[%s272 + $0x88] sm:$0x1] %vm636, %v2198
        %2230 = vst.msk [vmem:[%s272 + $0xa8] sm:$0x1] %vm636, %v2212
        %2231 = vst.msk [vmem:[%s272 + $0xc8] sm:$0x1] %vm636, %v2214
        %2232 = vst.msk [vmem:[%s272 + $0xe8] sm:$0x1] %vm636, %v2216
        %v2234 = vcombine.high %v2166, %v2166
        %v2236 = vunpack.c.l.s4 1966171168
        %v2237 = vunpack.c.0.s8 %v2236
        %v2238 = vlaneseq
        %v2239 = vshrl.u32 %v2238, 7
        %v2240 = vsub.s32 %v2237, %v2239
        %v2241 = vrot.slane %v2166, %v2240
        %v2243 = vunpack.c.l.s4 1966171168
        %v2244 = vunpack.c.0.s8 %v2243
        %v2245 = vlaneseq
        %v2246 = vshrl.u32 %v2245, 7
        %v2247 = vsub.s32 %v2244, %v2246
        %v2248 = vrot.slane %v2234, %v2247
        %v2249 = vcombine.high %v2241, %v2241
        %v2250 = vcombine.high %v2248, %v2248
        %v2252 = vunpack.c.l.s4 1966171168
        %v2253 = vunpack.c.0.s8 %v2252
        %v2254 = vlaneseq
        %v2255 = vshrl.u32 %v2254, 7
        %v2256 = vsub.s32 %v2253, %v2255
        %v2257 = vrot.slane %v2241, %v2256
        %v2259 = vunpack.c.l.s4 1966171168
        %v2260 = vunpack.c.0.s8 %v2259
        %v2261 = vlaneseq
        %v2262 = vshrl.u32 %v2261, 7
        %v2263 = vsub.s32 %v2260, %v2262
        %v2264 = vrot.slane %v2248, %v2263
        %v2266 = vunpack.c.l.s4 1966171168
        %v2267 = vunpack.c.0.s8 %v2266
        %v2268 = vlaneseq
        %v2269 = vshrl.u32 %v2268, 7
        %v2270 = vsub.s32 %v2267, %v2269
        %v2271 = vrot.slane %v2249, %v2270
        %v2273 = vunpack.c.l.s4 1966171168
        %v2274 = vunpack.c.0.s8 %v2273
        %v2275 = vlaneseq
        %v2276 = vshrl.u32 %v2275, 7
        %v2277 = vsub.s32 %v2274, %v2276
        %v2278 = vrot.slane %v2250, %v2277
        %v2279 = vcombine.high %v2257, %v2257
        %v2280 = vcombine.high %v2264, %v2264
        %v2281 = vcombine.high %v2271, %v2271
        %v2282 = vcombine.high %v2278, %v2278
        %2291 = vst.msk [vmem:[%s272 + $0x9] sm:$0x1] %vm636, %v2257
        %2292 = vst.msk [vmem:[%s272 + $0x29] sm:$0x1] %vm636, %v2271
        %2293 = vst.msk [vmem:[%s272 + $0x49] sm:$0x1] %vm636, %v2279
        %2294 = vst.msk [vmem:[%s272 + $0x69] sm:$0x1] %vm636, %v2281
        %2295 = vst.msk [vmem:[%s272 + $0x89] sm:$0x1] %vm636, %v2264
        %2296 = vst.msk [vmem:[%s272 + $0xa9] sm:$0x1] %vm636, %v2278
        %2297 = vst.msk [vmem:[%s272 + $0xc9] sm:$0x1] %vm636, %v2280
        %2298 = vst.msk [vmem:[%s272 + $0xe9] sm:$0x1] %vm636, %v2282
        %v2299 = vld [vmem:[%s246 + $0x5] sm:$0x1]
        %v2300 = vld [vmem:[%s246 + $0x15] sm:$0x1]
        %v2301 = vld [vmem:[%s246 + $0x25] sm:$0x1]
        %v2302 = vld [vmem:[%s246 + $0x35] sm:$0x1]
        %v2307 = vrot.slane %v2300, 7
        %v2308 = vsel %vm294, %v2307, %v2299
        %v2309 = vrot.slane %v2301, 6
        %v2310 = vsel %vm297, %v2309, %v2308
        %v2311 = vrot.slane %v2302, 5
        %v2312 = vsel %vm300, %v2311, %v2310
        %v2313 = vsel %vm315, %v2312, 0
        %2315 = vmatprep.subr.mxu0 0.0
        %2316 = vmatpush1.msra.mxu0 %v2313
        %2317 = vmatprep.subr.mxu0 0.0
        %2318 = vmatpush1.msra.mxu0 0.0
        %2319 = vmatprep.subr.mxu0 0.0
        %2320 = vmatpush1.msra.mxu0 0.0
        %2321 = vmatprep.subr.mxu0 0.0
        %2322 = vmatpush1.msra.mxu0 0.0
        %2323 = vmatprep.subr.mxu0 0.0
        %2324 = vmatpush1.msra.mxu0 0.0
        %2325 = vmatprep.subr.mxu0 0.0
        %2326 = vmatpush1.msra.mxu0 0.0
        %2327 = vmatprep.subr.mxu0 0.0
        %2328 = vmatpush1.msra.mxu0 0.0
        %2329 = vmatprep.subr.mxu0 0.0
        %2330 = vmatpush1.msra.mxu0 0.0
        %2331 = vmatprep.subr.mxu0 0.0
        %2332 = vmatpush1.msra.mxu0 0.0
        %2333 = vmatprep.subr.mxu0 0.0
        %2334 = vmatpush1.msra.mxu0 0.0
        %2335 = vmatprep.subr.mxu0 0.0
        %2336 = vmatpush1.msra.mxu0 0.0
        %2337 = vmatprep.subr.mxu0 0.0
        %2338 = vmatpush1.msra.mxu0 0.0
        %2339 = vmatprep.subr.mxu0 0.0
        %2340 = vmatpush1.msra.mxu0 0.0
        %2341 = vmatprep.subr.mxu0 0.0
        %2342 = vmatpush1.msra.mxu0 0.0
        %2343 = vmatprep.subr.mxu0 0.0
        %2344 = vmatpush1.msra.mxu0 0.0
        %2345 = vmatprep.subr.mxu0 0.0
        %2346 = vmatpush1.msra.mxu0 0.0
        %2347 = vmatprep.subr.mxu0 0.0
        %2348 = vmatpush1.msra.mxu0 0.0
        %2349 = vmatprep.subr.mxu0 0.0
        %2350 = vmatpush1.msra.mxu0 0.0
        %2351 = vmatprep.subr.mxu0 0.0
        %2352 = vmatpush1.msra.mxu0 0.0
        %2353 = vmatprep.subr.mxu0 0.0
        %2354 = vmatpush1.msra.mxu0 0.0
        %2355 = vmatprep.subr.mxu0 0.0
        %2356 = vmatpush1.msra.mxu0 0.0
        %2357 = vmatprep.subr.mxu0 0.0
        %2358 = vmatpush1.msra.mxu0 0.0
        %2359 = vmatprep.subr.mxu0 0.0
        %2360 = vmatpush1.msra.mxu0 0.0
        %2361 = vmatprep.subr.mxu0 0.0
        %2362 = vmatpush1.msra.mxu0 0.0
        %2363 = vmatprep.subr.mxu0 0.0
        %2364 = vmatpush1.msra.mxu0 0.0
        %2365 = vmatprep.subr.mxu0 0.0
        %2366 = vmatpush1.msra.mxu0 0.0
        %2367 = vmatprep.subr.mxu0 0.0
        %2368 = vmatpush1.msra.mxu0 0.0
        %2369 = vmatprep.subr.mxu0 0.0
        %2370 = vmatpush1.msra.mxu0 0.0
        %2371 = vmatprep.subr.mxu0 0.0
        %2372 = vmatpush1.msra.mxu0 0.0
        %2373 = vmatprep.subr.mxu0 0.0
        %2374 = vmatpush1.msra.mxu0 0.0
        %2375 = vmatprep.subr.mxu0 0.0
        %2376 = vmatpush1.msra.mxu0 0.0
        %2377 = vmatprep.subr.mxu0 0.0
        %2378 = vmatpush1.msra.mxu0 0.0
        %2379 = vmatprep.mubr.f32.mxu0 0.0
        %2380 = vmatmul.mubr.f32.gmra.mrb[0].mxu0 %v304
        %v2381 = vpop.f32.mrb[0].mxu0
        %v2382 = vadd.f32 0.0, %v2381
        %v2383 = vpop.f32.mrb[0].mxu0
        %2384 = vmatprep.mubr.f32.mxu0 0.0
        %2385 = vmatmul.mubr.f32.gmra.mrb[0].mxu0 %v307
        %v2386 = vpop.f32.mrb[0].mxu0
        %v2387 = vadd.f32 0.0, %v2386
        %v2388 = vpop.f32.mrb[0].mxu0
        %2389 = vmatprep.mubr.f32.mxu0 0.0
        %2390 = vmatmul.mubr.f32.gmra.mrb[0].mxu0 %v310
        %v2391 = vpop.f32.mrb[0].mxu0
        %v2392 = vadd.f32 0.0, %v2391
        %v2393 = vpop.f32.mrb[0].mxu0
        %2394 = vmatprep.mubr.f32.mxu0 0.0
        %2395 = vmatmul.mubr.f32.gmra.mrb[0].mxu0 %v313
        %v2396 = vpop.f32.mrb[0].mxu0
        %v2397 = vadd.f32 0.0, %v2396
        %v2398 = vpop.f32.mrb[0].mxu0
        %2399 = vdwg.mxu0
        %v2401 = vsel %vm403, %v2392, 0
        %v2404 = vsel %vm403, %v2397, 0
        %2406 = vmatprep.subr.mxu0 0.0
        %2407 = vmatpush1.msra.mxu0 %v283
        %2408 = vmatprep.subr.mxu0 0.0
        %2409 = vmatpush1.msra.mxu0 %v284
        %2410 = vmatprep.subr.mxu0 0.0
        %2411 = vmatpush1.msra.mxu0 0.0
        %2412 = vmatprep.subr.mxu0 0.0
        %2413 = vmatpush1.msra.mxu0 0.0
        %2414 = vmatprep.subr.mxu0 0.0
        %2415 = vmatpush1.msra.mxu0 0.0
        %2416 = vmatprep.subr.mxu0 0.0
        %2417 = vmatpush1.msra.mxu0 0.0
        %2418 = vmatprep.subr.mxu0 0.0
        %2419 = vmatpush1.msra.mxu0 0.0
        %2420 = vmatprep.subr.mxu0 0.0
        %2421 = vmatpush1.msra.mxu0 0.0
        %2422 = vmatprep.subr.mxu0 0.0
        %2423 = vmatpush1.msra.mxu0 0.0
        %2424 = vmatprep.subr.mxu0 0.0
        %2425 = vmatpush1.msra.mxu0 0.0
        %2426 = vmatprep.subr.mxu0 0.0
        %2427 = vmatpush1.msra.mxu0 0.0
        %2428 = vmatprep.subr.mxu0 0.0
        %2429 = vmatpush1.msra.mxu0 0.0
        %2430 = vmatprep.subr.mxu0 0.0
        %2431 = vmatpush1.msra.mxu0 0.0
        %2432 = vmatprep.subr.mxu0 0.0
        %2433 = vmatpush1.msra.mxu0 0.0
        %2434 = vmatprep.subr.mxu0 0.0
        %2435 = vmatpush1.msra.mxu0 0.0
        %2436 = vmatprep.subr.mxu0 0.0
        %2437 = vmatpush1.msra.mxu0 0.0
        %2438 = vmatprep.subr.mxu0 0.0
        %2439 = vmatpush1.msra.mxu0 0.0
        %2440 = vmatprep.subr.mxu0 0.0
        %2441 = vmatpush1.msra.mxu0 0.0
        %2442 = vmatprep.subr.mxu0 0.0
        %2443 = vmatpush1.msra.mxu0 0.0
        %2444 = vmatprep.subr.mxu0 0.0
        %2445 = vmatpush1.msra.mxu0 0.0
        %2446 = vmatprep.subr.mxu0 0.0
        %2447 = vmatpush1.msra.mxu0 0.0
        %2448 = vmatprep.subr.mxu0 0.0
        %2449 = vmatpush1.msra.mxu0 0.0
        %2450 = vmatprep.subr.mxu0 0.0
        %2451 = vmatpush1.msra.mxu0 0.0
        %2452 = vmatprep.subr.mxu0 0.0
        %2453 = vmatpush1.msra.mxu0 0.0
        %2454 = vmatprep.subr.mxu0 0.0
        %2455 = vmatpush1.msra.mxu0 0.0
        %2456 = vmatprep.subr.mxu0 0.0
        %2457 = vmatpush1.msra.mxu0 0.0
        %2458 = vmatprep.subr.mxu0 0.0
        %2459 = vmatpush1.msra.mxu0 0.0
        %2460 = vmatprep.subr.mxu0 0.0
        %2461 = vmatpush1.msra.mxu0 0.0
        %2462 = vmatprep.subr.mxu0 0.0
        %2463 = vmatpush1.msra.mxu0 0.0
        %2464 = vmatprep.subr.mxu0 0.0
        %2465 = vmatpush1.msra.mxu0 0.0
        %2466 = vmatprep.subr.mxu0 0.0
        %2467 = vmatpush1.msra.mxu0 0.0
        %2468 = vmatprep.subr.mxu0 0.0
        %2469 = vmatpush1.msra.mxu0 0.0
        %2470 = vmatprep.mubr.f32.mxu0 0.0
        %2471 = vmatmul.mubr.f32.gmra.mrb[0].mxu0 %v2401
        %v2472 = vpop.f32.mrb[0].mxu0
        %v2473 = vadd.f32 0.0, %v2472
        %v2474 = vpop.f32.mrb[0].mxu0
        %2475 = vmatprep.mubr.f32.mxu0 0.0
        %2476 = vmatmul.mubr.f32.gmra.mrb[0].mxu0 %v2404
        %v2477 = vpop.f32.mrb[0].mxu0
        %v2478 = vadd.f32 0.0, %v2477
        %v2479 = vpop.f32.mrb[0].mxu0
        %2480 = vdwg.mxu0
        %v2482 = vsel %vm403, %v2382, 0
        %v2485 = vsel %vm403, %v2387, 0
        %2487 = vmatprep.subr.mxu0 0.0
        %2488 = vmatpush1.msra.mxu0 %v281
        %2489 = vmatprep.subr.mxu0 0.0
        %2490 = vmatpush1.msra.mxu0 %v282
        %2491 = vmatprep.subr.mxu0 0.0
        %2492 = vmatpush1.msra.mxu0 0.0
        %2493 = vmatprep.subr.mxu0 0.0
        %2494 = vmatpush1.msra.mxu0 0.0
        %2495 = vmatprep.subr.mxu0 0.0
        %2496 = vmatpush1.msra.mxu0 0.0
        %2497 = vmatprep.subr.mxu0 0.0
        %2498 = vmatpush1.msra.mxu0 0.0
        %2499 = vmatprep.subr.mxu0 0.0
        %2500 = vmatpush1.msra.mxu0 0.0
        %2501 = vmatprep.subr.mxu0 0.0
        %2502 = vmatpush1.msra.mxu0 0.0
        %2503 = vmatprep.subr.mxu0 0.0
        %2504 = vmatpush1.msra.mxu0 0.0
        %2505 = vmatprep.subr.mxu0 0.0
        %2506 = vmatpush1.msra.mxu0 0.0
        %2507 = vmatprep.subr.mxu0 0.0
        %2508 = vmatpush1.msra.mxu0 0.0
        %2509 = vmatprep.subr.mxu0 0.0
        %2510 = vmatpush1.msra.mxu0 0.0
        %2511 = vmatprep.subr.mxu0 0.0
        %2512 = vmatpush1.msra.mxu0 0.0
        %2513 = vmatprep.subr.mxu0 0.0
        %2514 = vmatpush1.msra.mxu0 0.0
        %2515 = vmatprep.subr.mxu0 0.0
        %2516 = vmatpush1.msra.mxu0 0.0
        %2517 = vmatprep.subr.mxu0 0.0
        %2518 = vmatpush1.msra.mxu0 0.0
        %2519 = vmatprep.subr.mxu0 0.0
        %2520 = vmatpush1.msra.mxu0 0.0
        %2521 = vmatprep.subr.mxu0 0.0
        %2522 = vmatpush1.msra.mxu0 0.0
        %2523 = vmatprep.subr.mxu0 0.0
        %2524 = vmatpush1.msra.mxu0 0.0
        %2525 = vmatprep.subr.mxu0 0.0
        %2526 = vmatpush1.msra.mxu0 0.0
        %2527 = vmatprep.subr.mxu0 0.0
        %2528 = vmatpush1.msra.mxu0 0.0
        %2529 = vmatprep.subr.mxu0 0.0
        %2530 = vmatpush1.msra.mxu0 0.0
        %2531 = vmatprep.subr.mxu0 0.0
        %2532 = vmatpush1.msra.mxu0 0.0
        %2533 = vmatprep.subr.mxu0 0.0
        %2534 = vmatpush1.msra.mxu0 0.0
        %2535 = vmatprep.subr.mxu0 0.0
        %2536 = vmatpush1.msra.mxu0 0.0
        %2537 = vmatprep.subr.mxu0 0.0
        %2538 = vmatpush1.msra.mxu0 0.0
        %2539 = vmatprep.subr.mxu0 0.0
        %2540 = vmatpush1.msra.mxu0 0.0
        %2541 = vmatprep.subr.mxu0 0.0
        %2542 = vmatpush1.msra.mxu0 0.0
        %2543 = vmatprep.subr.mxu0 0.0
        %2544 = vmatpush1.msra.mxu0 0.0
        %2545 = vmatprep.subr.mxu0 0.0
        %2546 = vmatpush1.msra.mxu0 0.0
        %2547 = vmatprep.subr.mxu0 0.0
        %2548 = vmatpush1.msra.mxu0 0.0
        %2549 = vmatprep.subr.mxu0 0.0
        %2550 = vmatpush1.msra.mxu0 0.0
        %2551 = vmatprep.mubr.f32.mxu0 0.0
        %2552 = vmatmul.mubr.f32.gmra.mrb[0].mxu0 %v2482
        %v2553 = vpop.f32.mrb[0].mxu0
        %v2554 = vadd.f32 %v2473, %v2553
        %v2555 = vpop.f32.mrb[0].mxu0
        %2556 = vmatprep.mubr.f32.mxu0 0.0
        %2557 = vmatmul.mubr.f32.gmra.mrb[0].mxu0 %v2485
        %v2558 = vpop.f32.mrb[0].mxu0
        %v2559 = vadd.f32 %v2478, %v2558
        %v2560 = vpop.f32.mrb[0].mxu0
        %2561 = vdwg.mxu0
        %v2562 = vadd.f32 %v2554, %v569
        %v2563 = vadd.f32 %v2559, %v574
        %v2565 = vcombine.high %v2562, %v2562
        %v2567 = vunpack.c.l.s4 1966171168
        %v2568 = vunpack.c.0.s8 %v2567
        %v2569 = vlaneseq
        %v2570 = vshrl.u32 %v2569, 7
        %v2571 = vsub.s32 %v2568, %v2570
        %v2572 = vrot.slane %v2562, %v2571
        %v2574 = vunpack.c.l.s4 1966171168
        %v2575 = vunpack.c.0.s8 %v2574
        %v2576 = vlaneseq
        %v2577 = vshrl.u32 %v2576, 7
        %v2578 = vsub.s32 %v2575, %v2577
        %v2579 = vrot.slane %v2565, %v2578
        %v2580 = vcombine.high %v2572, %v2572
        %v2581 = vcombine.high %v2579, %v2579
        %v2583 = vunpack.c.l.s4 1966171168
        %v2584 = vunpack.c.0.s8 %v2583
        %v2585 = vlaneseq
        %v2586 = vshrl.u32 %v2585, 7
        %v2587 = vsub.s32 %v2584, %v2586
        %v2588 = vrot.slane %v2572, %v2587
        %v2590 = vunpack.c.l.s4 1966171168
        %v2591 = vunpack.c.0.s8 %v2590
        %v2592 = vlaneseq
        %v2593 = vshrl.u32 %v2592, 7
        %v2594 = vsub.s32 %v2591, %v2593
        %v2595 = vrot.slane %v2579, %v2594
        %v2597 = vunpack.c.l.s4 1966171168
        %v2598 = vunpack.c.0.s8 %v2597
        %v2599 = vlaneseq
        %v2600 = vshrl.u32 %v2599, 7
        %v2601 = vsub.s32 %v2598, %v2600
        %v2602 = vrot.slane %v2580, %v2601
        %v2604 = vunpack.c.l.s4 1966171168
        %v2605 = vunpack.c.0.s8 %v2604
        %v2606 = vlaneseq
        %v2607 = vshrl.u32 %v2606, 7
        %v2608 = vsub.s32 %v2605, %v2607
        %v2609 = vrot.slane %v2581, %v2608
        %v2610 = vcombine.high %v2588, %v2588
        %v2611 = vcombine.high %v2595, %v2595
        %v2612 = vcombine.high %v2602, %v2602
        %v2613 = vcombine.high %v2609, %v2609
        %2622 = vst.msk [vmem:[%s272 + $0xa] sm:$0x1] %vm636, %v2588
        %2623 = vst.msk [vmem:[%s272 + $0x2a] sm:$0x1] %vm636, %v2602
        %2624 = vst.msk [vmem:[%s272 + $0x4a] sm:$0x1] %vm636, %v2610
        %2625 = vst.msk [vmem:[%s272 + $0x6a] sm:$0x1] %vm636, %v2612
        %2626 = vst.msk [vmem:[%s272 + $0x8a] sm:$0x1] %vm636, %v2595
        %2627 = vst.msk [vmem:[%s272 + $0xaa] sm:$0x1] %vm636, %v2609
        %2628 = vst.msk [vmem:[%s272 + $0xca] sm:$0x1] %vm636, %v2611
        %2629 = vst.msk [vmem:[%s272 + $0xea] sm:$0x1] %vm636, %v2613
        %v2631 = vcombine.high %v2563, %v2563
        %v2633 = vunpack.c.l.s4 1966171168
        %v2634 = vunpack.c.0.s8 %v2633
        %v2635 = vlaneseq
        %v2636 = vshrl.u32 %v2635, 7
        %v2637 = vsub.s32 %v2634, %v2636
        %v2638 = vrot.slane %v2563, %v2637
        %v2640 = vunpack.c.l.s4 1966171168
        %v2641 = vunpack.c.0.s8 %v2640
        %v2642 = vlaneseq
        %v2643 = vshrl.u32 %v2642, 7
        %v2644 = vsub.s32 %v2641, %v2643
        %v2645 = vrot.slane %v2631, %v2644
        %v2646 = vcombine.high %v2638, %v2638
        %v2647 = vcombine.high %v2645, %v2645
        %v2649 = vunpack.c.l.s4 1966171168
        %v2650 = vunpack.c.0.s8 %v2649
        %v2651 = vlaneseq
        %v2652 = vshrl.u32 %v2651, 7
        %v2653 = vsub.s32 %v2650, %v2652
        %v2654 = vrot.slane %v2638, %v2653
        %v2656 = vunpack.c.l.s4 1966171168
        %v2657 = vunpack.c.0.s8 %v2656
        %v2658 = vlaneseq
        %v2659 = vshrl.u32 %v2658, 7
        %v2660 = vsub.s32 %v2657, %v2659
        %v2661 = vrot.slane %v2645, %v2660
        %v2663 = vunpack.c.l.s4 1966171168
        %v2664 = vunpack.c.0.s8 %v2663
        %v2665 = vlaneseq
        %v2666 = vshrl.u32 %v2665, 7
        %v2667 = vsub.s32 %v2664, %v2666
        %v2668 = vrot.slane %v2646, %v2667
        %v2670 = vunpack.c.l.s4 1966171168
        %v2671 = vunpack.c.0.s8 %v2670
        %v2672 = vlaneseq
        %v2673 = vshrl.u32 %v2672, 7
        %v2674 = vsub.s32 %v2671, %v2673
        %v2675 = vrot.slane %v2647, %v2674
        %v2676 = vcombine.high %v2654, %v2654
        %v2677 = vcombine.high %v2661, %v2661
        %v2678 = vcombine.high %v2668, %v2668
        %v2679 = vcombine.high %v2675, %v2675
        %2688 = vst.msk [vmem:[%s272 + $0xb] sm:$0x1] %vm636, %v2654
        %2689 = vst.msk [vmem:[%s272 + $0x2b] sm:$0x1] %vm636, %v2668
        %2690 = vst.msk [vmem:[%s272 + $0x4b] sm:$0x1] %vm636, %v2676
        %2691 = vst.msk [vmem:[%s272 + $0x6b] sm:$0x1] %vm636, %v2678
        %2692 = vst.msk [vmem:[%s272 + $0x8b] sm:$0x1] %vm636, %v2661
        %2693 = vst.msk [vmem:[%s272 + $0xab] sm:$0x1] %vm636, %v2675
        %2694 = vst.msk [vmem:[%s272 + $0xcb] sm:$0x1] %vm636, %v2677
        %2695 = vst.msk [vmem:[%s272 + $0xeb] sm:$0x1] %vm636, %v2679
        %v2696 = vld [vmem:[%s246 + $0x6] sm:$0x1]
        %v2697 = vld [vmem:[%s246 + $0x16] sm:$0x1]
        %v2698 = vld [vmem:[%s246 + $0x26] sm:$0x1]
        %v2699 = vld [vmem:[%s246 + $0x36] sm:$0x1]
        %v2704 = vrot.slane %v2697, 7
        %v2705 = vsel %vm294, %v2704, %v2696
        %v2706 = vrot.slane %v2698, 6
        %v2707 = vsel %vm297, %v2706, %v2705
        %v2708 = vrot.slane %v2699, 5
        %v2709 = vsel %vm300, %v2708, %v2707
        %v2710 = vsel %vm315, %v2709, 0
        %2712 = vmatprep.subr.mxu0 0.0
        %2713 = vmatpush1.msra.mxu0 %v2710
        %2714 = vmatprep.subr.mxu0 0.0
        %2715 = vmatpush1.msra.mxu0 0.0
        %2716 = vmatprep.subr.mxu0 0.0
        %2717 = vmatpush1.msra.mxu0 0.0
        %2718 = vmatprep.subr.mxu0 0.0
        %2719 = vmatpush1.msra.mxu0 0.0
        %2720 = vmatprep.subr.mxu0 0.0
        %2721 = vmatpush1.msra.mxu0 0.0
        %2722 = vmatprep.subr.mxu0 0.0
        %2723 = vmatpush1.msra.mxu0 0.0
        %2724 = vmatprep.subr.mxu0 0.0
        %2725 = vmatpush1.msra.mxu0 0.0
        %2726 = vmatprep.subr.mxu0 0.0
        %2727 = vmatpush1.msra.mxu0 0.0
        %2728 = vmatprep.subr.mxu0 0.0
        %2729 = vmatpush1.msra.mxu0 0.0
        %2730 = vmatprep.subr.mxu0 0.0
        %2731 = vmatpush1.msra.mxu0 0.0
        %2732 = vmatprep.subr.mxu0 0.0
        %2733 = vmatpush1.msra.mxu0 0.0
        %2734 = vmatprep.subr.mxu0 0.0
        %2735 = vmatpush1.msra.mxu0 0.0
        %2736 = vmatprep.subr.mxu0 0.0
        %2737 = vmatpush1.msra.mxu0 0.0
        %2738 = vmatprep.subr.mxu0 0.0
        %2739 = vmatpush1.msra.mxu0 0.0
        %2740 = vmatprep.subr.mxu0 0.0
        %2741 = vmatpush1.msra.mxu0 0.0
        %2742 = vmatprep.subr.mxu0 0.0
        %2743 = vmatpush1.msra.mxu0 0.0
        %2744 = vmatprep.subr.mxu0 0.0
        %2745 = vmatpush1.msra.mxu0 0.0
        %2746 = vmatprep.subr.mxu0 0.0
        %2747 = vmatpush1.msra.mxu0 0.0
        %2748 = vmatprep.subr.mxu0 0.0
        %2749 = vmatpush1.msra.mxu0 0.0
        %2750 = vmatprep.subr.mxu0 0.0
        %2751 = vmatpush1.msra.mxu0 0.0
        %2752 = vmatprep.subr.mxu0 0.0
        %2753 = vmatpush1.msra.mxu0 0.0
        %2754 = vmatprep.subr.mxu0 0.0
        %2755 = vmatpush1.msra.mxu0 0.0
        %2756 = vmatprep.subr.mxu0 0.0
        %2757 = vmatpush1.msra.mxu0 0.0
        %2758 = vmatprep.subr.mxu0 0.0
        %2759 = vmatpush1.msra.mxu0 0.0
        %2760 = vmatprep.subr.mxu0 0.0
        %2761 = vmatpush1.msra.mxu0 0.0
        %2762 = vmatprep.subr.mxu0 0.0
        %2763 = vmatpush1.msra.mxu0 0.0
        %2764 = vmatprep.subr.mxu0 0.0
        %2765 = vmatpush1.msra.mxu0 0.0
        %2766 = vmatprep.subr.mxu0 0.0
        %2767 = vmatpush1.msra.mxu0 0.0
        %2768 = vmatprep.subr.mxu0 0.0
        %2769 = vmatpush1.msra.mxu0 0.0
        %2770 = vmatprep.subr.mxu0 0.0
        %2771 = vmatpush1.msra.mxu0 0.0
        %2772 = vmatprep.subr.mxu0 0.0
        %2773 = vmatpush1.msra.mxu0 0.0
        %2774 = vmatprep.subr.mxu0 0.0
        %2775 = vmatpush1.msra.mxu0 0.0
        %2776 = vmatprep.mubr.f32.mxu0 0.0
        %2777 = vmatmul.mubr.f32.gmra.mrb[0].mxu0 %v304
        %v2778 = vpop.f32.mrb[0].mxu0
        %v2779 = vadd.f32 0.0, %v2778
        %v2780 = vpop.f32.mrb[0].mxu0
        %2781 = vmatprep.mubr.f32.mxu0 0.0
        %2782 = vmatmul.mubr.f32.gmra.mrb[0].mxu0 %v307
        %v2783 = vpop.f32.mrb[0].mxu0
        %v2784 = vadd.f32 0.0, %v2783
        %v2785 = vpop.f32.mrb[0].mxu0
        %2786 = vmatprep.mubr.f32.mxu0 0.0
        %2787 = vmatmul.mubr.f32.gmra.mrb[0].mxu0 %v310
        %v2788 = vpop.f32.mrb[0].mxu0
        %v2789 = vadd.f32 0.0, %v2788
        %v2790 = vpop.f32.mrb[0].mxu0
        %2791 = vmatprep.mubr.f32.mxu0 0.0
        %2792 = vmatmul.mubr.f32.gmra.mrb[0].mxu0 %v313
        %v2793 = vpop.f32.mrb[0].mxu0
        %v2794 = vadd.f32 0.0, %v2793
        %v2795 = vpop.f32.mrb[0].mxu0
        %2796 = vdwg.mxu0
        %v2798 = vsel %vm403, %v2789, 0
        %v2801 = vsel %vm403, %v2794, 0
        %2803 = vmatprep.subr.mxu0 0.0
        %2804 = vmatpush1.msra.mxu0 %v283
        %2805 = vmatprep.subr.mxu0 0.0
        %2806 = vmatpush1.msra.mxu0 %v284
        %2807 = vmatprep.subr.mxu0 0.0
        %2808 = vmatpush1.msra.mxu0 0.0
        %2809 = vmatprep.subr.mxu0 0.0
        %2810 = vmatpush1.msra.mxu0 0.0
        %2811 = vmatprep.subr.mxu0 0.0
        %2812 = vmatpush1.msra.mxu0 0.0
        %2813 = vmatprep.subr.mxu0 0.0
        %2814 = vmatpush1.msra.mxu0 0.0
        %2815 = vmatprep.subr.mxu0 0.0
        %2816 = vmatpush1.msra.mxu0 0.0
        %2817 = vmatprep.subr.mxu0 0.0
        %2818 = vmatpush1.msra.mxu0 0.0
        %2819 = vmatprep.subr.mxu0 0.0
        %2820 = vmatpush1.msra.mxu0 0.0
        %2821 = vmatprep.subr.mxu0 0.0
        %2822 = vmatpush1.msra.mxu0 0.0
        %2823 = vmatprep.subr.mxu0 0.0
        %2824 = vmatpush1.msra.mxu0 0.0
        %2825 = vmatprep.subr.mxu0 0.0
        %2826 = vmatpush1.msra.mxu0 0.0
        %2827 = vmatprep.subr.mxu0 0.0
        %2828 = vmatpush1.msra.mxu0 0.0
        %2829 = vmatprep.subr.mxu0 0.0
        %2830 = vmatpush1.msra.mxu0 0.0
        %2831 = vmatprep.subr.mxu0 0.0
        %2832 = vmatpush1.msra.mxu0 0.0
        %2833 = vmatprep.subr.mxu0 0.0
        %2834 = vmatpush1.msra.mxu0 0.0
        %2835 = vmatprep.subr.mxu0 0.0
        %2836 = vmatpush1.msra.mxu0 0.0
        %2837 = vmatprep.subr.mxu0 0.0
        %2838 = vmatpush1.msra.mxu0 0.0
        %2839 = vmatprep.subr.mxu0 0.0
        %2840 = vmatpush1.msra.mxu0 0.0
        %2841 = vmatprep.subr.mxu0 0.0
        %2842 = vmatpush1.msra.mxu0 0.0
        %2843 = vmatprep.subr.mxu0 0.0
        %2844 = vmatpush1.msra.mxu0 0.0
        %2845 = vmatprep.subr.mxu0 0.0
        %2846 = vmatpush1.msra.mxu0 0.0
        %2847 = vmatprep.subr.mxu0 0.0
        %2848 = vmatpush1.msra.mxu0 0.0
        %2849 = vmatprep.subr.mxu0 0.0
        %2850 = vmatpush1.msra.mxu0 0.0
        %2851 = vmatprep.subr.mxu0 0.0
        %2852 = vmatpush1.msra.mxu0 0.0
        %2853 = vmatprep.subr.mxu0 0.0
        %2854 = vmatpush1.msra.mxu0 0.0
        %2855 = vmatprep.subr.mxu0 0.0
        %2856 = vmatpush1.msra.mxu0 0.0
        %2857 = vmatprep.subr.mxu0 0.0
        %2858 = vmatpush1.msra.mxu0 0.0
        %2859 = vmatprep.subr.mxu0 0.0
        %2860 = vmatpush1.msra.mxu0 0.0
        %2861 = vmatprep.subr.mxu0 0.0
        %2862 = vmatpush1.msra.mxu0 0.0
        %2863 = vmatprep.subr.mxu0 0.0
        %2864 = vmatpush1.msra.mxu0 0.0
        %2865 = vmatprep.subr.mxu0 0.0
        %2866 = vmatpush1.msra.mxu0 0.0
        %2867 = vmatprep.mubr.f32.mxu0 0.0
        %2868 = vmatmul.mubr.f32.gmra.mrb[0].mxu0 %v2798
        %v2869 = vpop.f32.mrb[0].mxu0
        %v2870 = vadd.f32 0.0, %v2869
        %v2871 = vpop.f32.mrb[0].mxu0
        %2872 = vmatprep.mubr.f32.mxu0 0.0
        %2873 = vmatmul.mubr.f32.gmra.mrb[0].mxu0 %v2801
        %v2874 = vpop.f32.mrb[0].mxu0
        %v2875 = vadd.f32 0.0, %v2874
        %v2876 = vpop.f32.mrb[0].mxu0
        %2877 = vdwg.mxu0
        %v2879 = vsel %vm403, %v2779, 0
        %v2882 = vsel %vm403, %v2784, 0
        %2884 = vmatprep.subr.mxu0 0.0
        %2885 = vmatpush1.msra.mxu0 %v281
        %2886 = vmatprep.subr.mxu0 0.0
        %2887 = vmatpush1.msra.mxu0 %v282
        %2888 = vmatprep.subr.mxu0 0.0
        %2889 = vmatpush1.msra.mxu0 0.0
        %2890 = vmatprep.subr.mxu0 0.0
        %2891 = vmatpush1.msra.mxu0 0.0
        %2892 = vmatprep.subr.mxu0 0.0
        %2893 = vmatpush1.msra.mxu0 0.0
        %2894 = vmatprep.subr.mxu0 0.0
        %2895 = vmatpush1.msra.mxu0 0.0
        %2896 = vmatprep.subr.mxu0 0.0
        %2897 = vmatpush1.msra.mxu0 0.0
        %2898 = vmatprep.subr.mxu0 0.0
        %2899 = vmatpush1.msra.mxu0 0.0
        %2900 = vmatprep.subr.mxu0 0.0
        %2901 = vmatpush1.msra.mxu0 0.0
        %2902 = vmatprep.subr.mxu0 0.0
        %2903 = vmatpush1.msra.mxu0 0.0
        %2904 = vmatprep.subr.mxu0 0.0
        %2905 = vmatpush1.msra.mxu0 0.0
        %2906 = vmatprep.subr.mxu0 0.0
        %2907 = vmatpush1.msra.mxu0 0.0
        %2908 = vmatprep.subr.mxu0 0.0
        %2909 = vmatpush1.msra.mxu0 0.0
        %2910 = vmatprep.subr.mxu0 0.0
        %2911 = vmatpush1.msra.mxu0 0.0
        %2912 = vmatprep.subr.mxu0 0.0
        %2913 = vmatpush1.msra.mxu0 0.0
        %2914 = vmatprep.subr.mxu0 0.0
        %2915 = vmatpush1.msra.mxu0 0.0
        %2916 = vmatprep.subr.mxu0 0.0
        %2917 = vmatpush1.msra.mxu0 0.0
        %2918 = vmatprep.subr.mxu0 0.0
        %2919 = vmatpush1.msra.mxu0 0.0
        %2920 = vmatprep.subr.mxu0 0.0
        %2921 = vmatpush1.msra.mxu0 0.0
        %2922 = vmatprep.subr.mxu0 0.0
        %2923 = vmatpush1.msra.mxu0 0.0
        %2924 = vmatprep.subr.mxu0 0.0
        %2925 = vmatpush1.msra.mxu0 0.0
        %2926 = vmatprep.subr.mxu0 0.0
        %2927 = vmatpush1.msra.mxu0 0.0
        %2928 = vmatprep.subr.mxu0 0.0
        %2929 = vmatpush1.msra.mxu0 0.0
        %2930 = vmatprep.subr.mxu0 0.0
        %2931 = vmatpush1.msra.mxu0 0.0
        %2932 = vmatprep.subr.mxu0 0.0
        %2933 = vmatpush1.msra.mxu0 0.0
        %2934 = vmatprep.subr.mxu0 0.0
        %2935 = vmatpush1.msra.mxu0 0.0
        %2936 = vmatprep.subr.mxu0 0.0
        %2937 = vmatpush1.msra.mxu0 0.0
        %2938 = vmatprep.subr.mxu0 0.0
        %2939 = vmatpush1.msra.mxu0 0.0
        %2940 = vmatprep.subr.mxu0 0.0
        %2941 = vmatpush1.msra.mxu0 0.0
        %2942 = vmatprep.subr.mxu0 0.0
        %2943 = vmatpush1.msra.mxu0 0.0
        %2944 = vmatprep.subr.mxu0 0.0
        %2945 = vmatpush1.msra.mxu0 0.0
        %2946 = vmatprep.subr.mxu0 0.0
        %2947 = vmatpush1.msra.mxu0 0.0
        %2948 = vmatprep.mubr.f32.mxu0 0.0
        %2949 = vmatmul.mubr.f32.gmra.mrb[0].mxu0 %v2879
        %v2950 = vpop.f32.mrb[0].mxu0
        %v2951 = vadd.f32 %v2870, %v2950
        %v2952 = vpop.f32.mrb[0].mxu0
        %2953 = vmatprep.mubr.f32.mxu0 0.0
        %2954 = vmatmul.mubr.f32.gmra.mrb[0].mxu0 %v2882
        %v2955 = vpop.f32.mrb[0].mxu0
        %v2956 = vadd.f32 %v2875, %v2955
        %v2957 = vpop.f32.mrb[0].mxu0
        %2958 = vdwg.mxu0
        %v2959 = vadd.f32 %v2951, %v569
        %v2960 = vadd.f32 %v2956, %v574
        %v2962 = vcombine.high %v2959, %v2959
        %v2964 = vunpack.c.l.s4 1966171168
        %v2965 = vunpack.c.0.s8 %v2964
        %v2966 = vlaneseq
        %v2967 = vshrl.u32 %v2966, 7
        %v2968 = vsub.s32 %v2965, %v2967
        %v2969 = vrot.slane %v2959, %v2968
        %v2971 = vunpack.c.l.s4 1966171168
        %v2972 = vunpack.c.0.s8 %v2971
        %v2973 = vlaneseq
        %v2974 = vshrl.u32 %v2973, 7
        %v2975 = vsub.s32 %v2972, %v2974
        %v2976 = vrot.slane %v2962, %v2975
        %v2977 = vcombine.high %v2969, %v2969
        %v2978 = vcombine.high %v2976, %v2976
        %v2980 = vunpack.c.l.s4 1966171168
        %v2981 = vunpack.c.0.s8 %v2980
        %v2982 = vlaneseq
        %v2983 = vshrl.u32 %v2982, 7
        %v2984 = vsub.s32 %v2981, %v2983
        %v2985 = vrot.slane %v2969, %v2984
        %v2987 = vunpack.c.l.s4 1966171168
        %v2988 = vunpack.c.0.s8 %v2987
        %v2989 = vlaneseq
        %v2990 = vshrl.u32 %v2989, 7
        %v2991 = vsub.s32 %v2988, %v2990
        %v2992 = vrot.slane %v2976, %v2991
        %v2994 = vunpack.c.l.s4 1966171168
        %v2995 = vunpack.c.0.s8 %v2994
        %v2996 = vlaneseq
        %v2997 = vshrl.u32 %v2996, 7
        %v2998 = vsub.s32 %v2995, %v2997
        %v2999 = vrot.slane %v2977, %v2998
        %v3001 = vunpack.c.l.s4 1966171168
        %v3002 = vunpack.c.0.s8 %v3001
        %v3003 = vlaneseq
        %v3004 = vshrl.u32 %v3003, 7
        %v3005 = vsub.s32 %v3002, %v3004
        %v3006 = vrot.slane %v2978, %v3005
        %v3007 = vcombine.high %v2985, %v2985
        %v3008 = vcombine.high %v2992, %v2992
        %v3009 = vcombine.high %v2999, %v2999
        %v3010 = vcombine.high %v3006, %v3006
        %3019 = vst.msk [vmem:[%s272 + $0xc] sm:$0x1] %vm636, %v2985
        %3020 = vst.msk [vmem:[%s272 + $0x2c] sm:$0x1] %vm636, %v2999
        %3021 = vst.msk [vmem:[%s272 + $0x4c] sm:$0x1] %vm636, %v3007
        %3022 = vst.msk [vmem:[%s272 + $0x6c] sm:$0x1] %vm636, %v3009
        %3023 = vst.msk [vmem:[%s272 + $0x8c] sm:$0x1] %vm636, %v2992
        %3024 = vst.msk [vmem:[%s272 + $0xac] sm:$0x1] %vm636, %v3006
        %3025 = vst.msk [vmem:[%s272 + $0xcc] sm:$0x1] %vm636, %v3008
        %3026 = vst.msk [vmem:[%s272 + $0xec] sm:$0x1] %vm636, %v3010
        %v3028 = vcombine.high %v2960, %v2960
        %v3030 = vunpack.c.l.s4 1966171168
        %v3031 = vunpack.c.0.s8 %v3030
        %v3032 = vlaneseq
        %v3033 = vshrl.u32 %v3032, 7
        %v3034 = vsub.s32 %v3031, %v3033
        %v3035 = vrot.slane %v2960, %v3034
        %v3037 = vunpack.c.l.s4 1966171168
        %v3038 = vunpack.c.0.s8 %v3037
        %v3039 = vlaneseq
        %v3040 = vshrl.u32 %v3039, 7
        %v3041 = vsub.s32 %v3038, %v3040
        %v3042 = vrot.slane %v3028, %v3041
        %v3043 = vcombine.high %v3035, %v3035
        %v3044 = vcombine.high %v3042, %v3042
        %v3046 = vunpack.c.l.s4 1966171168
        %v3047 = vunpack.c.0.s8 %v3046
        %v3048 = vlaneseq
        %v3049 = vshrl.u32 %v3048, 7
        %v3050 = vsub.s32 %v3047, %v3049
        %v3051 = vrot.slane %v3035, %v3050
        %v3053 = vunpack.c.l.s4 1966171168
        %v3054 = vunpack.c.0.s8 %v3053
        %v3055 = vlaneseq
        %v3056 = vshrl.u32 %v3055, 7
        %v3057 = vsub.s32 %v3054, %v3056
        %v3058 = vrot.slane %v3042, %v3057
        %v3060 = vunpack.c.l.s4 1966171168
        %v3061 = vunpack.c.0.s8 %v3060
        %v3062 = vlaneseq
        %v3063 = vshrl.u32 %v3062, 7
        %v3064 = vsub.s32 %v3061, %v3063
        %v3065 = vrot.slane %v3043, %v3064
        %v3067 = vunpack.c.l.s4 1966171168
        %v3068 = vunpack.c.0.s8 %v3067
        %v3069 = vlaneseq
        %v3070 = vshrl.u32 %v3069, 7
        %v3071 = vsub.s32 %v3068, %v3070
        %v3072 = vrot.slane %v3044, %v3071
        %v3073 = vcombine.high %v3051, %v3051
        %v3074 = vcombine.high %v3058, %v3058
        %v3075 = vcombine.high %v3065, %v3065
        %v3076 = vcombine.high %v3072, %v3072
        %3085 = vst.msk [vmem:[%s272 + $0xd] sm:$0x1] %vm636, %v3051
        %3086 = vst.msk [vmem:[%s272 + $0x2d] sm:$0x1] %vm636, %v3065
        %3087 = vst.msk [vmem:[%s272 + $0x4d] sm:$0x1] %vm636, %v3073
        %3088 = vst.msk [vmem:[%s272 + $0x6d] sm:$0x1] %vm636, %v3075
        %3089 = vst.msk [vmem:[%s272 + $0x8d] sm:$0x1] %vm636, %v3058
        %3090 = vst.msk [vmem:[%s272 + $0xad] sm:$0x1] %vm636, %v3072
        %3091 = vst.msk [vmem:[%s272 + $0xcd] sm:$0x1] %vm636, %v3074
        %3092 = vst.msk [vmem:[%s272 + $0xed] sm:$0x1] %vm636, %v3076
        %v3093 = vld [vmem:[%s246 + $0x7] sm:$0x1]
        %v3094 = vld [vmem:[%s246 + $0x17] sm:$0x1]
        %v3095 = vld [vmem:[%s246 + $0x27] sm:$0x1]
        %v3096 = vld [vmem:[%s246 + $0x37] sm:$0x1]
        %v3101 = vrot.slane %v3094, 7
        %v3102 = vsel %vm294, %v3101, %v3093
        %v3103 = vrot.slane %v3095, 6
        %v3104 = vsel %vm297, %v3103, %v3102
        %v3105 = vrot.slane %v3096, 5
        %v3106 = vsel %vm300, %v3105, %v3104
        %v3107 = vsel %vm315, %v3106, 0
        %3109 = vmatprep.subr.mxu0 0.0
        %3110 = vmatpush1.msra.mxu0 %v3107
        %3111 = vmatprep.subr.mxu0 0.0
        %3112 = vmatpush1.msra.mxu0 0.0
        %3113 = vmatprep.subr.mxu0 0.0
        %3114 = vmatpush1.msra.mxu0 0.0
        %3115 = vmatprep.subr.mxu0 0.0
        %3116 = vmatpush1.msra.mxu0 0.0
        %3117 = vmatprep.subr.mxu0 0.0
        %3118 = vmatpush1.msra.mxu0 0.0
        %3119 = vmatprep.subr.mxu0 0.0
        %3120 = vmatpush1.msra.mxu0 0.0
        %3121 = vmatprep.subr.mxu0 0.0
        %3122 = vmatpush1.msra.mxu0 0.0
        %3123 = vmatprep.subr.mxu0 0.0
        %3124 = vmatpush1.msra.mxu0 0.0
        %3125 = vmatprep.subr.mxu0 0.0
        %3126 = vmatpush1.msra.mxu0 0.0
        %3127 = vmatprep.subr.mxu0 0.0
        %3128 = vmatpush1.msra.mxu0 0.0
        %3129 = vmatprep.subr.mxu0 0.0
        %3130 = vmatpush1.msra.mxu0 0.0
        %3131 = vmatprep.subr.mxu0 0.0
        %3132 = vmatpush1.msra.mxu0 0.0
        %3133 = vmatprep.subr.mxu0 0.0
        %3134 = vmatpush1.msra.mxu0 0.0
        %3135 = vmatprep.subr.mxu0 0.0
        %3136 = vmatpush1.msra.mxu0 0.0
        %3137 = vmatprep.subr.mxu0 0.0
        %3138 = vmatpush1.msra.mxu0 0.0
        %3139 = vmatprep.subr.mxu0 0.0
        %3140 = vmatpush1.msra.mxu0 0.0
        %3141 = vmatprep.subr.mxu0 0.0
        %3142 = vmatpush1.msra.mxu0 0.0
        %3143 = vmatprep.subr.mxu0 0.0
        %3144 = vmatpush1.msra.mxu0 0.0
        %3145 = vmatprep.subr.mxu0 0.0
        %3146 = vmatpush1.msra.mxu0 0.0
        %3147 = vmatprep.subr.mxu0 0.0
        %3148 = vmatpush1.msra.mxu0 0.0
        %3149 = vmatprep.subr.mxu0 0.0
        %3150 = vmatpush1.msra.mxu0 0.0
        %3151 = vmatprep.subr.mxu0 0.0
        %3152 = vmatpush1.msra.mxu0 0.0
        %3153 = vmatprep.subr.mxu0 0.0
        %3154 = vmatpush1.msra.mxu0 0.0
        %3155 = vmatprep.subr.mxu0 0.0
        %3156 = vmatpush1.msra.mxu0 0.0
        %3157 = vmatprep.subr.mxu0 0.0
        %3158 = vmatpush1.msra.mxu0 0.0
        %3159 = vmatprep.subr.mxu0 0.0
        %3160 = vmatpush1.msra.mxu0 0.0
        %3161 = vmatprep.subr.mxu0 0.0
        %3162 = vmatpush1.msra.mxu0 0.0
        %3163 = vmatprep.subr.mxu0 0.0
        %3164 = vmatpush1.msra.mxu0 0.0
        %3165 = vmatprep.subr.mxu0 0.0
        %3166 = vmatpush1.msra.mxu0 0.0
        %3167 = vmatprep.subr.mxu0 0.0
        %3168 = vmatpush1.msra.mxu0 0.0
        %3169 = vmatprep.subr.mxu0 0.0
        %3170 = vmatpush1.msra.mxu0 0.0
        %3171 = vmatprep.subr.mxu0 0.0
        %3172 = vmatpush1.msra.mxu0 0.0
        %3173 = vmatprep.mubr.f32.mxu0 0.0
        %3174 = vmatmul.mubr.f32.gmra.mrb[0].mxu0 %v304
        %v3175 = vpop.f32.mrb[0].mxu0
        %v3176 = vadd.f32 0.0, %v3175
        %v3177 = vpop.f32.mrb[0].mxu0
        %3178 = vmatprep.mubr.f32.mxu0 0.0
        %3179 = vmatmul.mubr.f32.gmra.mrb[0].mxu0 %v307
        %v3180 = vpop.f32.mrb[0].mxu0
        %v3181 = vadd.f32 0.0, %v3180
        %v3182 = vpop.f32.mrb[0].mxu0
        %3183 = vmatprep.mubr.f32.mxu0 0.0
        %3184 = vmatmul.mubr.f32.gmra.mrb[0].mxu0 %v310
        %v3185 = vpop.f32.mrb[0].mxu0
        %v3186 = vadd.f32 0.0, %v3185
        %v3187 = vpop.f32.mrb[0].mxu0
        %3188 = vmatprep.mubr.f32.mxu0 0.0
        %3189 = vmatmul.mubr.f32.gmra.mrb[0].mxu0 %v313
        %v3190 = vpop.f32.mrb[0].mxu0
        %v3191 = vadd.f32 0.0, %v3190
        %v3192 = vpop.f32.mrb[0].mxu0
        %3193 = vdwg.mxu0
        %v3195 = vsel %vm403, %v3186, 0
        %v3198 = vsel %vm403, %v3191, 0
        %3200 = vmatprep.subr.mxu0 0.0
        %3201 = vmatpush1.msra.mxu0 %v283
        %3202 = vmatprep.subr.mxu0 0.0
        %3203 = vmatpush1.msra.mxu0 %v284
        %3204 = vmatprep.subr.mxu0 0.0
        %3205 = vmatpush1.msra.mxu0 0.0
        %3206 = vmatprep.subr.mxu0 0.0
        %3207 = vmatpush1.msra.mxu0 0.0
        %3208 = vmatprep.subr.mxu0 0.0
        %3209 = vmatpush1.msra.mxu0 0.0
        %3210 = vmatprep.subr.mxu0 0.0
        %3211 = vmatpush1.msra.mxu0 0.0
        %3212 = vmatprep.subr.mxu0 0.0
        %3213 = vmatpush1.msra.mxu0 0.0
        %3214 = vmatprep.subr.mxu0 0.0
        %3215 = vmatpush1.msra.mxu0 0.0
        %3216 = vmatprep.subr.mxu0 0.0
        %3217 = vmatpush1.msra.mxu0 0.0
        %3218 = vmatprep.subr.mxu0 0.0
        %3219 = vmatpush1.msra.mxu0 0.0
        %3220 = vmatprep.subr.mxu0 0.0
        %3221 = vmatpush1.msra.mxu0 0.0
        %3222 = vmatprep.subr.mxu0 0.0
        %3223 = vmatpush1.msra.mxu0 0.0
        %3224 = vmatprep.subr.mxu0 0.0
        %3225 = vmatpush1.msra.mxu0 0.0
        %3226 = vmatprep.subr.mxu0 0.0
        %3227 = vmatpush1.msra.mxu0 0.0
        %3228 = vmatprep.subr.mxu0 0.0
        %3229 = vmatpush1.msra.mxu0 0.0
        %3230 = vmatprep.subr.mxu0 0.0
        %3231 = vmatpush1.msra.mxu0 0.0
        %3232 = vmatprep.subr.mxu0 0.0
        %3233 = vmatpush1.msra.mxu0 0.0
        %3234 = vmatprep.subr.mxu0 0.0
        %3235 = vmatpush1.msra.mxu0 0.0
        %3236 = vmatprep.subr.mxu0 0.0
        %3237 = vmatpush1.msra.mxu0 0.0
        %3238 = vmatprep.subr.mxu0 0.0
        %3239 = vmatpush1.msra.mxu0 0.0
        %3240 = vmatprep.subr.mxu0 0.0
        %3241 = vmatpush1.msra.mxu0 0.0
        %3242 = vmatprep.subr.mxu0 0.0
        %3243 = vmatpush1.msra.mxu0 0.0
        %3244 = vmatprep.subr.mxu0 0.0
        %3245 = vmatpush1.msra.mxu0 0.0
        %3246 = vmatprep.subr.mxu0 0.0
        %3247 = vmatpush1.msra.mxu0 0.0
        %3248 = vmatprep.subr.mxu0 0.0
        %3249 = vmatpush1.msra.mxu0 0.0
        %3250 = vmatprep.subr.mxu0 0.0
        %3251 = vmatpush1.msra.mxu0 0.0
        %3252 = vmatprep.subr.mxu0 0.0
        %3253 = vmatpush1.msra.mxu0 0.0
        %3254 = vmatprep.subr.mxu0 0.0
        %3255 = vmatpush1.msra.mxu0 0.0
        %3256 = vmatprep.subr.mxu0 0.0
        %3257 = vmatpush1.msra.mxu0 0.0
        %3258 = vmatprep.subr.mxu0 0.0
        %3259 = vmatpush1.msra.mxu0 0.0
        %3260 = vmatprep.subr.mxu0 0.0
        %3261 = vmatpush1.msra.mxu0 0.0
        %3262 = vmatprep.subr.mxu0 0.0
        %3263 = vmatpush1.msra.mxu0 0.0
        %3264 = vmatprep.mubr.f32.mxu0 0.0
        %3265 = vmatmul.mubr.f32.gmra.mrb[0].mxu0 %v3195
        %v3266 = vpop.f32.mrb[0].mxu0
        %v3267 = vadd.f32 0.0, %v3266
        %v3268 = vpop.f32.mrb[0].mxu0
        %3269 = vmatprep.mubr.f32.mxu0 0.0
        %3270 = vmatmul.mubr.f32.gmra.mrb[0].mxu0 %v3198
        %v3271 = vpop.f32.mrb[0].mxu0
        %v3272 = vadd.f32 0.0, %v3271
        %v3273 = vpop.f32.mrb[0].mxu0
        %3274 = vdwg.mxu0
        %v3276 = vsel %vm403, %v3176, 0
        %v3279 = vsel %vm403, %v3181, 0
        %3281 = vmatprep.subr.mxu0 0.0
        %3282 = vmatpush1.msra.mxu0 %v281
        %3283 = vmatprep.subr.mxu0 0.0
        %3284 = vmatpush1.msra.mxu0 %v282
        %3285 = vmatprep.subr.mxu0 0.0
        %3286 = vmatpush1.msra.mxu0 0.0
        %3287 = vmatprep.subr.mxu0 0.0
        %3288 = vmatpush1.msra.mxu0 0.0
        %3289 = vmatprep.subr.mxu0 0.0
        %3290 = vmatpush1.msra.mxu0 0.0
        %3291 = vmatprep.subr.mxu0 0.0
        %3292 = vmatpush1.msra.mxu0 0.0
        %3293 = vmatprep.subr.mxu0 0.0
        %3294 = vmatpush1.msra.mxu0 0.0
        %3295 = vmatprep.subr.mxu0 0.0
        %3296 = vmatpush1.msra.mxu0 0.0
        %3297 = vmatprep.subr.mxu0 0.0
        %3298 = vmatpush1.msra.mxu0 0.0
        %3299 = vmatprep.subr.mxu0 0.0
        %3300 = vmatpush1.msra.mxu0 0.0
        %3301 = vmatprep.subr.mxu0 0.0
        %3302 = vmatpush1.msra.mxu0 0.0
        %3303 = vmatprep.subr.mxu0 0.0
        %3304 = vmatpush1.msra.mxu0 0.0
        %3305 = vmatprep.subr.mxu0 0.0
        %3306 = vmatpush1.msra.mxu0 0.0
        %3307 = vmatprep.subr.mxu0 0.0
        %3308 = vmatpush1.msra.mxu0 0.0
        %3309 = vmatprep.subr.mxu0 0.0
        %3310 = vmatpush1.msra.mxu0 0.0
        %3311 = vmatprep.subr.mxu0 0.0
        %3312 = vmatpush1.msra.mxu0 0.0
        %3313 = vmatprep.subr.mxu0 0.0
        %3314 = vmatpush1.msra.mxu0 0.0
        %3315 = vmatprep.subr.mxu0 0.0
        %3316 = vmatpush1.msra.mxu0 0.0
        %3317 = vmatprep.subr.mxu0 0.0
        %3318 = vmatpush1.msra.mxu0 0.0
        %3319 = vmatprep.subr.mxu0 0.0
        %3320 = vmatpush1.msra.mxu0 0.0
        %3321 = vmatprep.subr.mxu0 0.0
        %3322 = vmatpush1.msra.mxu0 0.0
        %3323 = vmatprep.subr.mxu0 0.0
        %3324 = vmatpush1.msra.mxu0 0.0
        %3325 = vmatprep.subr.mxu0 0.0
        %3326 = vmatpush1.msra.mxu0 0.0
        %3327 = vmatprep.subr.mxu0 0.0
        %3328 = vmatpush1.msra.mxu0 0.0
        %3329 = vmatprep.subr.mxu0 0.0
        %3330 = vmatpush1.msra.mxu0 0.0
        %3331 = vmatprep.subr.mxu0 0.0
        %3332 = vmatpush1.msra.mxu0 0.0
        %3333 = vmatprep.subr.mxu0 0.0
        %3334 = vmatpush1.msra.mxu0 0.0
        %3335 = vmatprep.subr.mxu0 0.0
        %3336 = vmatpush1.msra.mxu0 0.0
        %3337 = vmatprep.subr.mxu0 0.0
        %3338 = vmatpush1.msra.mxu0 0.0
        %3339 = vmatprep.subr.mxu0 0.0
        %3340 = vmatpush1.msra.mxu0 0.0
        %3341 = vmatprep.subr.mxu0 0.0
        %3342 = vmatpush1.msra.mxu0 0.0
        %3343 = vmatprep.subr.mxu0 0.0
        %3344 = vmatpush1.msra.mxu0 0.0
        %3345 = vmatprep.mubr.f32.mxu0 0.0
        %3346 = vmatmul.mubr.f32.gmra.mrb[0].mxu0 %v3276
        %v3347 = vpop.f32.mrb[0].mxu0
        %v3348 = vadd.f32 %v3267, %v3347
        %v3349 = vpop.f32.mrb[0].mxu0
        %3350 = vmatprep.mubr.f32.mxu0 0.0
        %3351 = vmatmul.mubr.f32.gmra.mrb[0].mxu0 %v3279
        %v3352 = vpop.f32.mrb[0].mxu0
        %v3353 = vadd.f32 %v3272, %v3352
        %v3354 = vpop.f32.mrb[0].mxu0
        %3355 = vdwg.mxu0
        %v3356 = vadd.f32 %v3348, %v569
        %v3357 = vadd.f32 %v3353, %v574
        %v3359 = vcombine.high %v3356, %v3356
        %v3361 = vunpack.c.l.s4 1966171168
        %v3362 = vunpack.c.0.s8 %v3361
        %v3363 = vlaneseq
        %v3364 = vshrl.u32 %v3363, 7
        %v3365 = vsub.s32 %v3362, %v3364
        %v3366 = vrot.slane %v3356, %v3365
        %v3368 = vunpack.c.l.s4 1966171168
        %v3369 = vunpack.c.0.s8 %v3368
        %v3370 = vlaneseq
        %v3371 = vshrl.u32 %v3370, 7
        %v3372 = vsub.s32 %v3369, %v3371
        %v3373 = vrot.slane %v3359, %v3372
        %v3374 = vcombine.high %v3366, %v3366
        %v3375 = vcombine.high %v3373, %v3373
        %v3377 = vunpack.c.l.s4 1966171168
        %v3378 = vunpack.c.0.s8 %v3377
        %v3379 = vlaneseq
        %v3380 = vshrl.u32 %v3379, 7
        %v3381 = vsub.s32 %v3378, %v3380
        %v3382 = vrot.slane %v3366, %v3381
        %v3384 = vunpack.c.l.s4 1966171168
        %v3385 = vunpack.c.0.s8 %v3384
        %v3386 = vlaneseq
        %v3387 = vshrl.u32 %v3386, 7
        %v3388 = vsub.s32 %v3385, %v3387
        %v3389 = vrot.slane %v3373, %v3388
        %v3391 = vunpack.c.l.s4 1966171168
        %v3392 = vunpack.c.0.s8 %v3391
        %v3393 = vlaneseq
        %v3394 = vshrl.u32 %v3393, 7
        %v3395 = vsub.s32 %v3392, %v3394
        %v3396 = vrot.slane %v3374, %v3395
        %v3398 = vunpack.c.l.s4 1966171168
        %v3399 = vunpack.c.0.s8 %v3398
        %v3400 = vlaneseq
        %v3401 = vshrl.u32 %v3400, 7
        %v3402 = vsub.s32 %v3399, %v3401
        %v3403 = vrot.slane %v3375, %v3402
        %v3404 = vcombine.high %v3382, %v3382
        %v3405 = vcombine.high %v3389, %v3389
        %v3406 = vcombine.high %v3396, %v3396
        %v3407 = vcombine.high %v3403, %v3403
        %3416 = vst.msk [vmem:[%s272 + $0xe] sm:$0x1] %vm636, %v3382
        %3417 = vst.msk [vmem:[%s272 + $0x2e] sm:$0x1] %vm636, %v3396
        %3418 = vst.msk [vmem:[%s272 + $0x4e] sm:$0x1] %vm636, %v3404
        %3419 = vst.msk [vmem:[%s272 + $0x6e] sm:$0x1] %vm636, %v3406
        %3420 = vst.msk [vmem:[%s272 + $0x8e] sm:$0x1] %vm636, %v3389
        %3421 = vst.msk [vmem:[%s272 + $0xae] sm:$0x1] %vm636, %v3403
        %3422 = vst.msk [vmem:[%s272 + $0xce] sm:$0x1] %vm636, %v3405
        %3423 = vst.msk [vmem:[%s272 + $0xee] sm:$0x1] %vm636, %v3407
        %v3425 = vcombine.high %v3357, %v3357
        %v3427 = vunpack.c.l.s4 1966171168
        %v3428 = vunpack.c.0.s8 %v3427
        %v3429 = vlaneseq
        %v3430 = vshrl.u32 %v3429, 7
        %v3431 = vsub.s32 %v3428, %v3430
        %v3432 = vrot.slane %v3357, %v3431
        %v3434 = vunpack.c.l.s4 1966171168
        %v3435 = vunpack.c.0.s8 %v3434
        %v3436 = vlaneseq
        %v3437 = vshrl.u32 %v3436, 7
        %v3438 = vsub.s32 %v3435, %v3437
        %v3439 = vrot.slane %v3425, %v3438
        %v3440 = vcombine.high %v3432, %v3432
        %v3441 = vcombine.high %v3439, %v3439
        %v3443 = vunpack.c.l.s4 1966171168
        %v3444 = vunpack.c.0.s8 %v3443
        %v3445 = vlaneseq
        %v3446 = vshrl.u32 %v3445, 7
        %v3447 = vsub.s32 %v3444, %v3446
        %v3448 = vrot.slane %v3432, %v3447
        %v3450 = vunpack.c.l.s4 1966171168
        %v3451 = vunpack.c.0.s8 %v3450
        %v3452 = vlaneseq
        %v3453 = vshrl.u32 %v3452, 7
        %v3454 = vsub.s32 %v3451, %v3453
        %v3455 = vrot.slane %v3439, %v3454
        %v3457 = vunpack.c.l.s4 1966171168
        %v3458 = vunpack.c.0.s8 %v3457
        %v3459 = vlaneseq
        %v3460 = vshrl.u32 %v3459, 7
        %v3461 = vsub.s32 %v3458, %v3460
        %v3462 = vrot.slane %v3440, %v3461
        %v3464 = vunpack.c.l.s4 1966171168
        %v3465 = vunpack.c.0.s8 %v3464
        %v3466 = vlaneseq
        %v3467 = vshrl.u32 %v3466, 7
        %v3468 = vsub.s32 %v3465, %v3467
        %v3469 = vrot.slane %v3441, %v3468
        %v3470 = vcombine.high %v3448, %v3448
        %v3471 = vcombine.high %v3455, %v3455
        %v3472 = vcombine.high %v3462, %v3462
        %v3473 = vcombine.high %v3469, %v3469
        %3482 = vst.msk [vmem:[%s272 + $0xf] sm:$0x1] %vm636, %v3448
        %3483 = vst.msk [vmem:[%s272 + $0x2f] sm:$0x1] %vm636, %v3462
        %3484 = vst.msk [vmem:[%s272 + $0x4f] sm:$0x1] %vm636, %v3470
        %3485 = vst.msk [vmem:[%s272 + $0x6f] sm:$0x1] %vm636, %v3472
        %3486 = vst.msk [vmem:[%s272 + $0x8f] sm:$0x1] %vm636, %v3455
        %3487 = vst.msk [vmem:[%s272 + $0xaf] sm:$0x1] %vm636, %v3469
        %3488 = vst.msk [vmem:[%s272 + $0xcf] sm:$0x1] %vm636, %v3471
        %3489 = vst.msk [vmem:[%s272 + $0xef] sm:$0x1] %vm636, %v3473
        %v3490 = vld [vmem:[%s246 + $0x8] sm:$0x1]
        %v3491 = vld [vmem:[%s246 + $0x18] sm:$0x1]
        %v3492 = vld [vmem:[%s246 + $0x28] sm:$0x1]
        %v3493 = vld [vmem:[%s246 + $0x38] sm:$0x1]
        %v3498 = vrot.slane %v3491, 7
        %v3499 = vsel %vm294, %v3498, %v3490
        %v3500 = vrot.slane %v3492, 6
        %v3501 = vsel %vm297, %v3500, %v3499
        %v3502 = vrot.slane %v3493, 5
        %v3503 = vsel %vm300, %v3502, %v3501
        %v3504 = vsel %vm315, %v3503, 0
        %3506 = vmatprep.subr.mxu0 0.0
        %3507 = vmatpush1.msra.mxu0 %v3504
        %3508 = vmatprep.subr.mxu0 0.0
        %3509 = vmatpush1.msra.mxu0 0.0
        %3510 = vmatprep.subr.mxu0 0.0
        %3511 = vmatpush1.msra.mxu0 0.0
        %3512 = vmatprep.subr.mxu0 0.0
        %3513 = vmatpush1.msra.mxu0 0.0
        %3514 = vmatprep.subr.mxu0 0.0
        %3515 = vmatpush1.msra.mxu0 0.0
        %3516 = vmatprep.subr.mxu0 0.0
        %3517 = vmatpush1.msra.mxu0 0.0
        %3518 = vmatprep.subr.mxu0 0.0
        %3519 = vmatpush1.msra.mxu0 0.0
        %3520 = vmatprep.subr.mxu0 0.0
        %3521 = vmatpush1.msra.mxu0 0.0
        %3522 = vmatprep.subr.mxu0 0.0
        %3523 = vmatpush1.msra.mxu0 0.0
        %3524 = vmatprep.subr.mxu0 0.0
        %3525 = vmatpush1.msra.mxu0 0.0
        %3526 = vmatprep.subr.mxu0 0.0
        %3527 = vmatpush1.msra.mxu0 0.0
        %3528 = vmatprep.subr.mxu0 0.0
        %3529 = vmatpush1.msra.mxu0 0.0
        %3530 = vmatprep.subr.mxu0 0.0
        %3531 = vmatpush1.msra.mxu0 0.0
        %3532 = vmatprep.subr.mxu0 0.0
        %3533 = vmatpush1.msra.mxu0 0.0
        %3534 = vmatprep.subr.mxu0 0.0
        %3535 = vmatpush1.msra.mxu0 0.0
        %3536 = vmatprep.subr.mxu0 0.0
        %3537 = vmatpush1.msra.mxu0 0.0
        %3538 = vmatprep.subr.mxu0 0.0
        %3539 = vmatpush1.msra.mxu0 0.0
        %3540 = vmatprep.subr.mxu0 0.0
        %3541 = vmatpush1.msra.mxu0 0.0
        %3542 = vmatprep.subr.mxu0 0.0
        %3543 = vmatpush1.msra.mxu0 0.0
        %3544 = vmatprep.subr.mxu0 0.0
        %3545 = vmatpush1.msra.mxu0 0.0
        %3546 = vmatprep.subr.mxu0 0.0
        %3547 = vmatpush1.msra.mxu0 0.0
        %3548 = vmatprep.subr.mxu0 0.0
        %3549 = vmatpush1.msra.mxu0 0.0
        %3550 = vmatprep.subr.mxu0 0.0
        %3551 = vmatpush1.msra.mxu0 0.0
        %3552 = vmatprep.subr.mxu0 0.0
        %3553 = vmatpush1.msra.mxu0 0.0
        %3554 = vmatprep.subr.mxu0 0.0
        %3555 = vmatpush1.msra.mxu0 0.0
        %3556 = vmatprep.subr.mxu0 0.0
        %3557 = vmatpush1.msra.mxu0 0.0
        %3558 = vmatprep.subr.mxu0 0.0
        %3559 = vmatpush1.msra.mxu0 0.0
        %3560 = vmatprep.subr.mxu0 0.0
        %3561 = vmatpush1.msra.mxu0 0.0
        %3562 = vmatprep.subr.mxu0 0.0
        %3563 = vmatpush1.msra.mxu0 0.0
        %3564 = vmatprep.subr.mxu0 0.0
        %3565 = vmatpush1.msra.mxu0 0.0
        %3566 = vmatprep.subr.mxu0 0.0
        %3567 = vmatpush1.msra.mxu0 0.0
        %3568 = vmatprep.subr.mxu0 0.0
        %3569 = vmatpush1.msra.mxu0 0.0
        %3570 = vmatprep.mubr.f32.mxu0 0.0
        %3571 = vmatmul.mubr.f32.gmra.mrb[0].mxu0 %v304
        %v3572 = vpop.f32.mrb[0].mxu0
        %v3573 = vadd.f32 0.0, %v3572
        %v3574 = vpop.f32.mrb[0].mxu0
        %3575 = vmatprep.mubr.f32.mxu0 0.0
        %3576 = vmatmul.mubr.f32.gmra.mrb[0].mxu0 %v307
        %v3577 = vpop.f32.mrb[0].mxu0
        %v3578 = vadd.f32 0.0, %v3577
        %v3579 = vpop.f32.mrb[0].mxu0
        %3580 = vmatprep.mubr.f32.mxu0 0.0
        %3581 = vmatmul.mubr.f32.gmra.mrb[0].mxu0 %v310
        %v3582 = vpop.f32.mrb[0].mxu0
        %v3583 = vadd.f32 0.0, %v3582
        %v3584 = vpop.f32.mrb[0].mxu0
        %3585 = vmatprep.mubr.f32.mxu0 0.0
        %3586 = vmatmul.mubr.f32.gmra.mrb[0].mxu0 %v313
        %v3587 = vpop.f32.mrb[0].mxu0
        %v3588 = vadd.f32 0.0, %v3587
        %v3589 = vpop.f32.mrb[0].mxu0
        %3590 = vdwg.mxu0
        %v3592 = vsel %vm403, %v3583, 0
        %v3595 = vsel %vm403, %v3588, 0
        %3597 = vmatprep.subr.mxu0 0.0
        %3598 = vmatpush1.msra.mxu0 %v283
        %3599 = vmatprep.subr.mxu0 0.0
        %3600 = vmatpush1.msra.mxu0 %v284
        %3601 = vmatprep.subr.mxu0 0.0
        %3602 = vmatpush1.msra.mxu0 0.0
        %3603 = vmatprep.subr.mxu0 0.0
        %3604 = vmatpush1.msra.mxu0 0.0
        %3605 = vmatprep.subr.mxu0 0.0
        %3606 = vmatpush1.msra.mxu0 0.0
        %3607 = vmatprep.subr.mxu0 0.0
        %3608 = vmatpush1.msra.mxu0 0.0
        %3609 = vmatprep.subr.mxu0 0.0
        %3610 = vmatpush1.msra.mxu0 0.0
        %3611 = vmatprep.subr.mxu0 0.0
        %3612 = vmatpush1.msra.mxu0 0.0
        %3613 = vmatprep.subr.mxu0 0.0
        %3614 = vmatpush1.msra.mxu0 0.0
        %3615 = vmatprep.subr.mxu0 0.0
        %3616 = vmatpush1.msra.mxu0 0.0
        %3617 = vmatprep.subr.mxu0 0.0
        %3618 = vmatpush1.msra.mxu0 0.0
        %3619 = vmatprep.subr.mxu0 0.0
        %3620 = vmatpush1.msra.mxu0 0.0
        %3621 = vmatprep.subr.mxu0 0.0
        %3622 = vmatpush1.msra.mxu0 0.0
        %3623 = vmatprep.subr.mxu0 0.0
        %3624 = vmatpush1.msra.mxu0 0.0
        %3625 = vmatprep.subr.mxu0 0.0
        %3626 = vmatpush1.msra.mxu0 0.0
        %3627 = vmatprep.subr.mxu0 0.0
        %3628 = vmatpush1.msra.mxu0 0.0
        %3629 = vmatprep.subr.mxu0 0.0
        %3630 = vmatpush1.msra.mxu0 0.0
        %3631 = vmatprep.subr.mxu0 0.0
        %3632 = vmatpush1.msra.mxu0 0.0
        %3633 = vmatprep.subr.mxu0 0.0
        %3634 = vmatpush1.msra.mxu0 0.0
        %3635 = vmatprep.subr.mxu0 0.0
        %3636 = vmatpush1.msra.mxu0 0.0
        %3637 = vmatprep.subr.mxu0 0.0
        %3638 = vmatpush1.msra.mxu0 0.0
        %3639 = vmatprep.subr.mxu0 0.0
        %3640 = vmatpush1.msra.mxu0 0.0
        %3641 = vmatprep.subr.mxu0 0.0
        %3642 = vmatpush1.msra.mxu0 0.0
        %3643 = vmatprep.subr.mxu0 0.0
        %3644 = vmatpush1.msra.mxu0 0.0
        %3645 = vmatprep.subr.mxu0 0.0
        %3646 = vmatpush1.msra.mxu0 0.0
        %3647 = vmatprep.subr.mxu0 0.0
        %3648 = vmatpush1.msra.mxu0 0.0
        %3649 = vmatprep.subr.mxu0 0.0
        %3650 = vmatpush1.msra.mxu0 0.0
        %3651 = vmatprep.subr.mxu0 0.0
        %3652 = vmatpush1.msra.mxu0 0.0
        %3653 = vmatprep.subr.mxu0 0.0
        %3654 = vmatpush1.msra.mxu0 0.0
        %3655 = vmatprep.subr.mxu0 0.0
        %3656 = vmatpush1.msra.mxu0 0.0
        %3657 = vmatprep.subr.mxu0 0.0
        %3658 = vmatpush1.msra.mxu0 0.0
        %3659 = vmatprep.subr.mxu0 0.0
        %3660 = vmatpush1.msra.mxu0 0.0
        %3661 = vmatprep.mubr.f32.mxu0 0.0
        %3662 = vmatmul.mubr.f32.gmra.mrb[0].mxu0 %v3592
        %v3663 = vpop.f32.mrb[0].mxu0
        %v3664 = vadd.f32 0.0, %v3663
        %v3665 = vpop.f32.mrb[0].mxu0
        %3666 = vmatprep.mubr.f32.mxu0 0.0
        %3667 = vmatmul.mubr.f32.gmra.mrb[0].mxu0 %v3595
        %v3668 = vpop.f32.mrb[0].mxu0
        %v3669 = vadd.f32 0.0, %v3668
        %v3670 = vpop.f32.mrb[0].mxu0
        %3671 = vdwg.mxu0
        %v3673 = vsel %vm403, %v3573, 0
        %v3676 = vsel %vm403, %v3578, 0
        %3678 = vmatprep.subr.mxu0 0.0
        %3679 = vmatpush1.msra.mxu0 %v281
        %3680 = vmatprep.subr.mxu0 0.0
        %3681 = vmatpush1.msra.mxu0 %v282
        %3682 = vmatprep.subr.mxu0 0.0
        %3683 = vmatpush1.msra.mxu0 0.0
        %3684 = vmatprep.subr.mxu0 0.0
        %3685 = vmatpush1.msra.mxu0 0.0
        %3686 = vmatprep.subr.mxu0 0.0
        %3687 = vmatpush1.msra.mxu0 0.0
        %3688 = vmatprep.subr.mxu0 0.0
        %3689 = vmatpush1.msra.mxu0 0.0
        %3690 = vmatprep.subr.mxu0 0.0
        %3691 = vmatpush1.msra.mxu0 0.0
        %3692 = vmatprep.subr.mxu0 0.0
        %3693 = vmatpush1.msra.mxu0 0.0
        %3694 = vmatprep.subr.mxu0 0.0
        %3695 = vmatpush1.msra.mxu0 0.0
        %3696 = vmatprep.subr.mxu0 0.0
        %3697 = vmatpush1.msra.mxu0 0.0
        %3698 = vmatprep.subr.mxu0 0.0
        %3699 = vmatpush1.msra.mxu0 0.0
        %3700 = vmatprep.subr.mxu0 0.0
        %3701 = vmatpush1.msra.mxu0 0.0
        %3702 = vmatprep.subr.mxu0 0.0
        %3703 = vmatpush1.msra.mxu0 0.0
        %3704 = vmatprep.subr.mxu0 0.0
        %3705 = vmatpush1.msra.mxu0 0.0
        %3706 = vmatprep.subr.mxu0 0.0
        %3707 = vmatpush1.msra.mxu0 0.0
        %3708 = vmatprep.subr.mxu0 0.0
        %3709 = vmatpush1.msra.mxu0 0.0
        %3710 = vmatprep.subr.mxu0 0.0
        %3711 = vmatpush1.msra.mxu0 0.0
        %3712 = vmatprep.subr.mxu0 0.0
        %3713 = vmatpush1.msra.mxu0 0.0
        %3714 = vmatprep.subr.mxu0 0.0
        %3715 = vmatpush1.msra.mxu0 0.0
        %3716 = vmatprep.subr.mxu0 0.0
        %3717 = vmatpush1.msra.mxu0 0.0
        %3718 = vmatprep.subr.mxu0 0.0
        %3719 = vmatpush1.msra.mxu0 0.0
        %3720 = vmatprep.subr.mxu0 0.0
        %3721 = vmatpush1.msra.mxu0 0.0
        %3722 = vmatprep.subr.mxu0 0.0
        %3723 = vmatpush1.msra.mxu0 0.0
        %3724 = vmatprep.subr.mxu0 0.0
        %3725 = vmatpush1.msra.mxu0 0.0
        %3726 = vmatprep.subr.mxu0 0.0
        %3727 = vmatpush1.msra.mxu0 0.0
        %3728 = vmatprep.subr.mxu0 0.0
        %3729 = vmatpush1.msra.mxu0 0.0
        %3730 = vmatprep.subr.mxu0 0.0
        %3731 = vmatpush1.msra.mxu0 0.0
        %3732 = vmatprep.subr.mxu0 0.0
        %3733 = vmatpush1.msra.mxu0 0.0
        %3734 = vmatprep.subr.mxu0 0.0
        %3735 = vmatpush1.msra.mxu0 0.0
        %3736 = vmatprep.subr.mxu0 0.0
        %3737 = vmatpush1.msra.mxu0 0.0
        %3738 = vmatprep.subr.mxu0 0.0
        %3739 = vmatpush1.msra.mxu0 0.0
        %3740 = vmatprep.subr.mxu0 0.0
        %3741 = vmatpush1.msra.mxu0 0.0
        %3742 = vmatprep.mubr.f32.mxu0 0.0
        %3743 = vmatmul.mubr.f32.gmra.mrb[0].mxu0 %v3673
        %v3744 = vpop.f32.mrb[0].mxu0
        %v3745 = vadd.f32 %v3664, %v3744
        %v3746 = vpop.f32.mrb[0].mxu0
        %3747 = vmatprep.mubr.f32.mxu0 0.0
        %3748 = vmatmul.mubr.f32.gmra.mrb[0].mxu0 %v3676
        %v3749 = vpop.f32.mrb[0].mxu0
        %v3750 = vadd.f32 %v3669, %v3749
        %v3751 = vpop.f32.mrb[0].mxu0
        %3752 = vdwg.mxu0
        %v3753 = vadd.f32 %v3745, %v569
        %v3754 = vadd.f32 %v3750, %v574
        %v3756 = vcombine.high %v3753, %v3753
        %v3758 = vunpack.c.l.s4 1966171168
        %v3759 = vunpack.c.0.s8 %v3758
        %v3760 = vlaneseq
        %v3761 = vshrl.u32 %v3760, 7
        %v3762 = vsub.s32 %v3759, %v3761
        %v3763 = vrot.slane %v3753, %v3762
        %v3765 = vunpack.c.l.s4 1966171168
        %v3766 = vunpack.c.0.s8 %v3765
        %v3767 = vlaneseq
        %v3768 = vshrl.u32 %v3767, 7
        %v3769 = vsub.s32 %v3766, %v3768
        %v3770 = vrot.slane %v3756, %v3769
        %v3771 = vcombine.high %v3763, %v3763
        %v3772 = vcombine.high %v3770, %v3770
        %v3774 = vunpack.c.l.s4 1966171168
        %v3775 = vunpack.c.0.s8 %v3774
        %v3776 = vlaneseq
        %v3777 = vshrl.u32 %v3776, 7
        %v3778 = vsub.s32 %v3775, %v3777
        %v3779 = vrot.slane %v3763, %v3778
        %v3781 = vunpack.c.l.s4 1966171168
        %v3782 = vunpack.c.0.s8 %v3781
        %v3783 = vlaneseq
        %v3784 = vshrl.u32 %v3783, 7
        %v3785 = vsub.s32 %v3782, %v3784
        %v3786 = vrot.slane %v3770, %v3785
        %v3788 = vunpack.c.l.s4 1966171168
        %v3789 = vunpack.c.0.s8 %v3788
        %v3790 = vlaneseq
        %v3791 = vshrl.u32 %v3790, 7
        %v3792 = vsub.s32 %v3789, %v3791
        %v3793 = vrot.slane %v3771, %v3792
        %v3795 = vunpack.c.l.s4 1966171168
        %v3796 = vunpack.c.0.s8 %v3795
        %v3797 = vlaneseq
        %v3798 = vshrl.u32 %v3797, 7
        %v3799 = vsub.s32 %v3796, %v3798
        %v3800 = vrot.slane %v3772, %v3799
        %v3801 = vcombine.high %v3779, %v3779
        %v3802 = vcombine.high %v3786, %v3786
        %v3803 = vcombine.high %v3793, %v3793
        %v3804 = vcombine.high %v3800, %v3800
        %3813 = vst.msk [vmem:[%s272 + $0x10] sm:$0x1] %vm636, %v3779
        %3814 = vst.msk [vmem:[%s272 + $0x30] sm:$0x1] %vm636, %v3793
        %3815 = vst.msk [vmem:[%s272 + $0x50] sm:$0x1] %vm636, %v3801
        %3816 = vst.msk [vmem:[%s272 + $0x70] sm:$0x1] %vm636, %v3803
        %3817 = vst.msk [vmem:[%s272 + $0x90] sm:$0x1] %vm636, %v3786
        %3818 = vst.msk [vmem:[%s272 + $0xb0] sm:$0x1] %vm636, %v3800
        %3819 = vst.msk [vmem:[%s272 + $0xd0] sm:$0x1] %vm636, %v3802
        %3820 = vst.msk [vmem:[%s272 + $0xf0] sm:$0x1] %vm636, %v3804
        %v3822 = vcombine.high %v3754, %v3754
        %v3824 = vunpack.c.l.s4 1966171168
        %v3825 = vunpack.c.0.s8 %v3824
        %v3826 = vlaneseq
        %v3827 = vshrl.u32 %v3826, 7
        %v3828 = vsub.s32 %v3825, %v3827
        %v3829 = vrot.slane %v3754, %v3828
        %v3831 = vunpack.c.l.s4 1966171168
        %v3832 = vunpack.c.0.s8 %v3831
        %v3833 = vlaneseq
        %v3834 = vshrl.u32 %v3833, 7
        %v3835 = vsub.s32 %v3832, %v3834
        %v3836 = vrot.slane %v3822, %v3835
        %v3837 = vcombine.high %v3829, %v3829
        %v3838 = vcombine.high %v3836, %v3836
        %v3840 = vunpack.c.l.s4 1966171168
        %v3841 = vunpack.c.0.s8 %v3840
        %v3842 = vlaneseq
        %v3843 = vshrl.u32 %v3842, 7
        %v3844 = vsub.s32 %v3841, %v3843
        %v3845 = vrot.slane %v3829, %v3844
        %v3847 = vunpack.c.l.s4 1966171168
        %v3848 = vunpack.c.0.s8 %v3847
        %v3849 = vlaneseq
        %v3850 = vshrl.u32 %v3849, 7
        %v3851 = vsub.s32 %v3848, %v3850
        %v3852 = vrot.slane %v3836, %v3851
        %v3854 = vunpack.c.l.s4 1966171168
        %v3855 = vunpack.c.0.s8 %v3854
        %v3856 = vlaneseq
        %v3857 = vshrl.u32 %v3856, 7
        %v3858 = vsub.s32 %v3855, %v3857
        %v3859 = vrot.slane %v3837, %v3858
        %v3861 = vunpack.c.l.s4 1966171168
        %v3862 = vunpack.c.0.s8 %v3861
        %v3863 = vlaneseq
        %v3864 = vshrl.u32 %v3863, 7
        %v3865 = vsub.s32 %v3862, %v3864
        %v3866 = vrot.slane %v3838, %v3865
        %v3867 = vcombine.high %v3845, %v3845
        %v3868 = vcombine.high %v3852, %v3852
        %v3869 = vcombine.high %v3859, %v3859
        %v3870 = vcombine.high %v3866, %v3866
        %3879 = vst.msk [vmem:[%s272 + $0x11] sm:$0x1] %vm636, %v3845
        %3880 = vst.msk [vmem:[%s272 + $0x31] sm:$0x1] %vm636, %v3859
        %3881 = vst.msk [vmem:[%s272 + $0x51] sm:$0x1] %vm636, %v3867
        %3882 = vst.msk [vmem:[%s272 + $0x71] sm:$0x1] %vm636, %v3869
        %3883 = vst.msk [vmem:[%s272 + $0x91] sm:$0x1] %vm636, %v3852
        %3884 = vst.msk [vmem:[%s272 + $0xb1] sm:$0x1] %vm636, %v3866
        %3885 = vst.msk [vmem:[%s272 + $0xd1] sm:$0x1] %vm636, %v3868
        %3886 = vst.msk [vmem:[%s272 + $0xf1] sm:$0x1] %vm636, %v3870
        %v3887 = vld [vmem:[%s246 + $0x9] sm:$0x1]
        %v3888 = vld [vmem:[%s246 + $0x19] sm:$0x1]
        %v3889 = vld [vmem:[%s246 + $0x29] sm:$0x1]
        %v3890 = vld [vmem:[%s246 + $0x39] sm:$0x1]
        %v3895 = vrot.slane %v3888, 7
        %v3896 = vsel %vm294, %v3895, %v3887
        %v3897 = vrot.slane %v3889, 6
        %v3898 = vsel %vm297, %v3897, %v3896
        %v3899 = vrot.slane %v3890, 5
        %v3900 = vsel %vm300, %v3899, %v3898
        %v3901 = vsel %vm315, %v3900, 0
        %3903 = vmatprep.subr.mxu0 0.0
        %3904 = vmatpush1.msra.mxu0 %v3901
        %3905 = vmatprep.subr.mxu0 0.0
        %3906 = vmatpush1.msra.mxu0 0.0
        %3907 = vmatprep.subr.mxu0 0.0
        %3908 = vmatpush1.msra.mxu0 0.0
        %3909 = vmatprep.subr.mxu0 0.0
        %3910 = vmatpush1.msra.mxu0 0.0
        %3911 = vmatprep.subr.mxu0 0.0
        %3912 = vmatpush1.msra.mxu0 0.0
        %3913 = vmatprep.subr.mxu0 0.0
        %3914 = vmatpush1.msra.mxu0 0.0
        %3915 = vmatprep.subr.mxu0 0.0
        %3916 = vmatpush1.msra.mxu0 0.0
        %3917 = vmatprep.subr.mxu0 0.0
        %3918 = vmatpush1.msra.mxu0 0.0
        %3919 = vmatprep.subr.mxu0 0.0
        %3920 = vmatpush1.msra.mxu0 0.0
        %3921 = vmatprep.subr.mxu0 0.0
        %3922 = vmatpush1.msra.mxu0 0.0
        %3923 = vmatprep.subr.mxu0 0.0
        %3924 = vmatpush1.msra.mxu0 0.0
        %3925 = vmatprep.subr.mxu0 0.0
        %3926 = vmatpush1.msra.mxu0 0.0
        %3927 = vmatprep.subr.mxu0 0.0
        %3928 = vmatpush1.msra.mxu0 0.0
        %3929 = vmatprep.subr.mxu0 0.0
        %3930 = vmatpush1.msra.mxu0 0.0
        %3931 = vmatprep.subr.mxu0 0.0
        %3932 = vmatpush1.msra.mxu0 0.0
        %3933 = vmatprep.subr.mxu0 0.0
        %3934 = vmatpush1.msra.mxu0 0.0
        %3935 = vmatprep.subr.mxu0 0.0
        %3936 = vmatpush1.msra.mxu0 0.0
        %3937 = vmatprep.subr.mxu0 0.0
        %3938 = vmatpush1.msra.mxu0 0.0
        %3939 = vmatprep.subr.mxu0 0.0
        %3940 = vmatpush1.msra.mxu0 0.0
        %3941 = vmatprep.subr.mxu0 0.0
        %3942 = vmatpush1.msra.mxu0 0.0
        %3943 = vmatprep.subr.mxu0 0.0
        %3944 = vmatpush1.msra.mxu0 0.0
        %3945 = vmatprep.subr.mxu0 0.0
        %3946 = vmatpush1.msra.mxu0 0.0
        %3947 = vmatprep.subr.mxu0 0.0
        %3948 = vmatpush1.msra.mxu0 0.0
        %3949 = vmatprep.subr.mxu0 0.0
        %3950 = vmatpush1.msra.mxu0 0.0
        %3951 = vmatprep.subr.mxu0 0.0
        %3952 = vmatpush1.msra.mxu0 0.0
        %3953 = vmatprep.subr.mxu0 0.0
        %3954 = vmatpush1.msra.mxu0 0.0
        %3955 = vmatprep.subr.mxu0 0.0
        %3956 = vmatpush1.msra.mxu0 0.0
        %3957 = vmatprep.subr.mxu0 0.0
        %3958 = vmatpush1.msra.mxu0 0.0
        %3959 = vmatprep.subr.mxu0 0.0
        %3960 = vmatpush1.msra.mxu0 0.0
        %3961 = vmatprep.subr.mxu0 0.0
        %3962 = vmatpush1.msra.mxu0 0.0
        %3963 = vmatprep.subr.mxu0 0.0
        %3964 = vmatpush1.msra.mxu0 0.0
        %3965 = vmatprep.subr.mxu0 0.0
        %3966 = vmatpush1.msra.mxu0 0.0
        %3967 = vmatprep.mubr.f32.mxu0 0.0
        %3968 = vmatmul.mubr.f32.gmra.mrb[0].mxu0 %v304
        %v3969 = vpop.f32.mrb[0].mxu0
        %v3970 = vadd.f32 0.0, %v3969
        %v3971 = vpop.f32.mrb[0].mxu0
        %3972 = vmatprep.mubr.f32.mxu0 0.0
        %3973 = vmatmul.mubr.f32.gmra.mrb[0].mxu0 %v307
        %v3974 = vpop.f32.mrb[0].mxu0
        %v3975 = vadd.f32 0.0, %v3974
        %v3976 = vpop.f32.mrb[0].mxu0
        %3977 = vmatprep.mubr.f32.mxu0 0.0
        %3978 = vmatmul.mubr.f32.gmra.mrb[0].mxu0 %v310
        %v3979 = vpop.f32.mrb[0].mxu0
        %v3980 = vadd.f32 0.0, %v3979
        %v3981 = vpop.f32.mrb[0].mxu0
        %3982 = vmatprep.mubr.f32.mxu0 0.0
        %3983 = vmatmul.mubr.f32.gmra.mrb[0].mxu0 %v313
        %v3984 = vpop.f32.mrb[0].mxu0
        %v3985 = vadd.f32 0.0, %v3984
        %v3986 = vpop.f32.mrb[0].mxu0
        %3987 = vdwg.mxu0
        %v3989 = vsel %vm403, %v3980, 0
        %v3992 = vsel %vm403, %v3985, 0
        %3994 = vmatprep.subr.mxu0 0.0
        %3995 = vmatpush1.msra.mxu0 %v283
        %3996 = vmatprep.subr.mxu0 0.0
        %3997 = vmatpush1.msra.mxu0 %v284
        %3998 = vmatprep.subr.mxu0 0.0
        %3999 = vmatpush1.msra.mxu0 0.0
        %4000 = vmatprep.subr.mxu0 0.0
        %4001 = vmatpush1.msra.mxu0 0.0
        %4002 = vmatprep.subr.mxu0 0.0
        %4003 = vmatpush1.msra.mxu0 0.0
        %4004 = vmatprep.subr.mxu0 0.0
        %4005 = vmatpush1.msra.mxu0 0.0
        %4006 = vmatprep.subr.mxu0 0.0
        %4007 = vmatpush1.msra.mxu0 0.0
        %4008 = vmatprep.subr.mxu0 0.0
        %4009 = vmatpush1.msra.mxu0 0.0
        %4010 = vmatprep.subr.mxu0 0.0
        %4011 = vmatpush1.msra.mxu0 0.0
        %4012 = vmatprep.subr.mxu0 0.0
        %4013 = vmatpush1.msra.mxu0 0.0
        %4014 = vmatprep.subr.mxu0 0.0
        %4015 = vmatpush1.msra.mxu0 0.0
        %4016 = vmatprep.subr.mxu0 0.0
        %4017 = vmatpush1.msra.mxu0 0.0
        %4018 = vmatprep.subr.mxu0 0.0
        %4019 = vmatpush1.msra.mxu0 0.0
        %4020 = vmatprep.subr.mxu0 0.0
        %4021 = vmatpush1.msra.mxu0 0.0
        %4022 = vmatprep.subr.mxu0 0.0
        %4023 = vmatpush1.msra.mxu0 0.0
        %4024 = vmatprep.subr.mxu0 0.0
        %4025 = vmatpush1.msra.mxu0 0.0
        %4026 = vmatprep.subr.mxu0 0.0
        %4027 = vmatpush1.msra.mxu0 0.0
        %4028 = vmatprep.subr.mxu0 0.0
        %4029 = vmatpush1.msra.mxu0 0.0
        %4030 = vmatprep.subr.mxu0 0.0
        %4031 = vmatpush1.msra.mxu0 0.0
        %4032 = vmatprep.subr.mxu0 0.0
        %4033 = vmatpush1.msra.mxu0 0.0
        %4034 = vmatprep.subr.mxu0 0.0
        %4035 = vmatpush1.msra.mxu0 0.0
        %4036 = vmatprep.subr.mxu0 0.0
        %4037 = vmatpush1.msra.mxu0 0.0
        %4038 = vmatprep.subr.mxu0 0.0
        %4039 = vmatpush1.msra.mxu0 0.0
        %4040 = vmatprep.subr.mxu0 0.0
        %4041 = vmatpush1.msra.mxu0 0.0
        %4042 = vmatprep.subr.mxu0 0.0
        %4043 = vmatpush1.msra.mxu0 0.0
        %4044 = vmatprep.subr.mxu0 0.0
        %4045 = vmatpush1.msra.mxu0 0.0
        %4046 = vmatprep.subr.mxu0 0.0
        %4047 = vmatpush1.msra.mxu0 0.0
        %4048 = vmatprep.subr.mxu0 0.0
        %4049 = vmatpush1.msra.mxu0 0.0
        %4050 = vmatprep.subr.mxu0 0.0
        %4051 = vmatpush1.msra.mxu0 0.0
        %4052 = vmatprep.subr.mxu0 0.0
        %4053 = vmatpush1.msra.mxu0 0.0
        %4054 = vmatprep.subr.mxu0 0.0
        %4055 = vmatpush1.msra.mxu0 0.0
        %4056 = vmatprep.subr.mxu0 0.0
        %4057 = vmatpush1.msra.mxu0 0.0
        %4058 = vmatprep.mubr.f32.mxu0 0.0
        %4059 = vmatmul.mubr.f32.gmra.mrb[0].mxu0 %v3989
        %v4060 = vpop.f32.mrb[0].mxu0
        %v4061 = vadd.f32 0.0, %v4060
        %v4062 = vpop.f32.mrb[0].mxu0
        %4063 = vmatprep.mubr.f32.mxu0 0.0
        %4064 = vmatmul.mubr.f32.gmra.mrb[0].mxu0 %v3992
        %v4065 = vpop.f32.mrb[0].mxu0
        %v4066 = vadd.f32 0.0, %v4065
        %v4067 = vpop.f32.mrb[0].mxu0
        %4068 = vdwg.mxu0
        %v4070 = vsel %vm403, %v3970, 0
        %v4073 = vsel %vm403, %v3975, 0
        %4075 = vmatprep.subr.mxu0 0.0
        %4076 = vmatpush1.msra.mxu0 %v281
        %4077 = vmatprep.subr.mxu0 0.0
        %4078 = vmatpush1.msra.mxu0 %v282
        %4079 = vmatprep.subr.mxu0 0.0
        %4080 = vmatpush1.msra.mxu0 0.0
        %4081 = vmatprep.subr.mxu0 0.0
        %4082 = vmatpush1.msra.mxu0 0.0
        %4083 = vmatprep.subr.mxu0 0.0
        %4084 = vmatpush1.msra.mxu0 0.0
        %4085 = vmatprep.subr.mxu0 0.0
        %4086 = vmatpush1.msra.mxu0 0.0
        %4087 = vmatprep.subr.mxu0 0.0
        %4088 = vmatpush1.msra.mxu0 0.0
        %4089 = vmatprep.subr.mxu0 0.0
        %4090 = vmatpush1.msra.mxu0 0.0
        %4091 = vmatprep.subr.mxu0 0.0
        %4092 = vmatpush1.msra.mxu0 0.0
        %4093 = vmatprep.subr.mxu0 0.0
        %4094 = vmatpush1.msra.mxu0 0.0
        %4095 = vmatprep.subr.mxu0 0.0
        %4096 = vmatpush1.msra.mxu0 0.0
        %4097 = vmatprep.subr.mxu0 0.0
        %4098 = vmatpush1.msra.mxu0 0.0
        %4099 = vmatprep.subr.mxu0 0.0
        %4100 = vmatpush1.msra.mxu0 0.0
        %4101 = vmatprep.subr.mxu0 0.0
        %4102 = vmatpush1.msra.mxu0 0.0
        %4103 = vmatprep.subr.mxu0 0.0
        %4104 = vmatpush1.msra.mxu0 0.0
        %4105 = vmatprep.subr.mxu0 0.0
        %4106 = vmatpush1.msra.mxu0 0.0
        %4107 = vmatprep.subr.mxu0 0.0
        %4108 = vmatpush1.msra.mxu0 0.0
        %4109 = vmatprep.subr.mxu0 0.0
        %4110 = vmatpush1.msra.mxu0 0.0
        %4111 = vmatprep.subr.mxu0 0.0
        %4112 = vmatpush1.msra.mxu0 0.0
        %4113 = vmatprep.subr.mxu0 0.0
        %4114 = vmatpush1.msra.mxu0 0.0
        %4115 = vmatprep.subr.mxu0 0.0
        %4116 = vmatpush1.msra.mxu0 0.0
        %4117 = vmatprep.subr.mxu0 0.0
        %4118 = vmatpush1.msra.mxu0 0.0
        %4119 = vmatprep.subr.mxu0 0.0
        %4120 = vmatpush1.msra.mxu0 0.0
        %4121 = vmatprep.subr.mxu0 0.0
        %4122 = vmatpush1.msra.mxu0 0.0
        %4123 = vmatprep.subr.mxu0 0.0
        %4124 = vmatpush1.msra.mxu0 0.0
        %4125 = vmatprep.subr.mxu0 0.0
        %4126 = vmatpush1.msra.mxu0 0.0
        %4127 = vmatprep.subr.mxu0 0.0
        %4128 = vmatpush1.msra.mxu0 0.0
        %4129 = vmatprep.subr.mxu0 0.0
        %4130 = vmatpush1.msra.mxu0 0.0
        %4131 = vmatprep.subr.mxu0 0.0
        %4132 = vmatpush1.msra.mxu0 0.0
        %4133 = vmatprep.subr.mxu0 0.0
        %4134 = vmatpush1.msra.mxu0 0.0
        %4135 = vmatprep.subr.mxu0 0.0
        %4136 = vmatpush1.msra.mxu0 0.0
        %4137 = vmatprep.subr.mxu0 0.0
        %4138 = vmatpush1.msra.mxu0 0.0
        %4139 = vmatprep.mubr.f32.mxu0 0.0
        %4140 = vmatmul.mubr.f32.gmra.mrb[0].mxu0 %v4070
        %v4141 = vpop.f32.mrb[0].mxu0
        %v4142 = vadd.f32 %v4061, %v4141
        %v4143 = vpop.f32.mrb[0].mxu0
        %4144 = vmatprep.mubr.f32.mxu0 0.0
        %4145 = vmatmul.mubr.f32.gmra.mrb[0].mxu0 %v4073
        %v4146 = vpop.f32.mrb[0].mxu0
        %v4147 = vadd.f32 %v4066, %v4146
        %v4148 = vpop.f32.mrb[0].mxu0
        %4149 = vdwg.mxu0
        %v4150 = vadd.f32 %v4142, %v569
        %v4151 = vadd.f32 %v4147, %v574
        %v4153 = vcombine.high %v4150, %v4150
        %v4155 = vunpack.c.l.s4 1966171168
        %v4156 = vunpack.c.0.s8 %v4155
        %v4157 = vlaneseq
        %v4158 = vshrl.u32 %v4157, 7
        %v4159 = vsub.s32 %v4156, %v4158
        %v4160 = vrot.slane %v4150, %v4159
        %v4162 = vunpack.c.l.s4 1966171168
        %v4163 = vunpack.c.0.s8 %v4162
        %v4164 = vlaneseq
        %v4165 = vshrl.u32 %v4164, 7
        %v4166 = vsub.s32 %v4163, %v4165
        %v4167 = vrot.slane %v4153, %v4166
        %v4168 = vcombine.high %v4160, %v4160
        %v4169 = vcombine.high %v4167, %v4167
        %v4171 = vunpack.c.l.s4 1966171168
        %v4172 = vunpack.c.0.s8 %v4171
        %v4173 = vlaneseq
        %v4174 = vshrl.u32 %v4173, 7
        %v4175 = vsub.s32 %v4172, %v4174
        %v4176 = vrot.slane %v4160, %v4175
        %v4178 = vunpack.c.l.s4 1966171168
        %v4179 = vunpack.c.0.s8 %v4178
        %v4180 = vlaneseq
        %v4181 = vshrl.u32 %v4180, 7
        %v4182 = vsub.s32 %v4179, %v4181
        %v4183 = vrot.slane %v4167, %v4182
        %v4185 = vunpack.c.l.s4 1966171168
        %v4186 = vunpack.c.0.s8 %v4185
        %v4187 = vlaneseq
        %v4188 = vshrl.u32 %v4187, 7
        %v4189 = vsub.s32 %v4186, %v4188
        %v4190 = vrot.slane %v4168, %v4189
        %v4192 = vunpack.c.l.s4 1966171168
        %v4193 = vunpack.c.0.s8 %v4192
        %v4194 = vlaneseq
        %v4195 = vshrl.u32 %v4194, 7
        %v4196 = vsub.s32 %v4193, %v4195
        %v4197 = vrot.slane %v4169, %v4196
        %v4198 = vcombine.high %v4176, %v4176
        %v4199 = vcombine.high %v4183, %v4183
        %v4200 = vcombine.high %v4190, %v4190
        %v4201 = vcombine.high %v4197, %v4197
        %4210 = vst.msk [vmem:[%s272 + $0x12] sm:$0x1] %vm636, %v4176
        %4211 = vst.msk [vmem:[%s272 + $0x32] sm:$0x1] %vm636, %v4190
        %4212 = vst.msk [vmem:[%s272 + $0x52] sm:$0x1] %vm636, %v4198
        %4213 = vst.msk [vmem:[%s272 + $0x72] sm:$0x1] %vm636, %v4200
        %4214 = vst.msk [vmem:[%s272 + $0x92] sm:$0x1] %vm636, %v4183
        %4215 = vst.msk [vmem:[%s272 + $0xb2] sm:$0x1] %vm636, %v4197
        %4216 = vst.msk [vmem:[%s272 + $0xd2] sm:$0x1] %vm636, %v4199
        %4217 = vst.msk [vmem:[%s272 + $0xf2] sm:$0x1] %vm636, %v4201
        %v4219 = vcombine.high %v4151, %v4151
        %v4221 = vunpack.c.l.s4 1966171168
        %v4222 = vunpack.c.0.s8 %v4221
        %v4223 = vlaneseq
        %v4224 = vshrl.u32 %v4223, 7
        %v4225 = vsub.s32 %v4222, %v4224
        %v4226 = vrot.slane %v4151, %v4225
        %v4228 = vunpack.c.l.s4 1966171168
        %v4229 = vunpack.c.0.s8 %v4228
        %v4230 = vlaneseq
        %v4231 = vshrl.u32 %v4230, 7
        %v4232 = vsub.s32 %v4229, %v4231
        %v4233 = vrot.slane %v4219, %v4232
        %v4234 = vcombine.high %v4226, %v4226
        %v4235 = vcombine.high %v4233, %v4233
        %v4237 = vunpack.c.l.s4 1966171168
        %v4238 = vunpack.c.0.s8 %v4237
        %v4239 = vlaneseq
        %v4240 = vshrl.u32 %v4239, 7
        %v4241 = vsub.s32 %v4238, %v4240
        %v4242 = vrot.slane %v4226, %v4241
        %v4244 = vunpack.c.l.s4 1966171168
        %v4245 = vunpack.c.0.s8 %v4244
        %v4246 = vlaneseq
        %v4247 = vshrl.u32 %v4246, 7
        %v4248 = vsub.s32 %v4245, %v4247
        %v4249 = vrot.slane %v4233, %v4248
        %v4251 = vunpack.c.l.s4 1966171168
        %v4252 = vunpack.c.0.s8 %v4251
        %v4253 = vlaneseq
        %v4254 = vshrl.u32 %v4253, 7
        %v4255 = vsub.s32 %v4252, %v4254
        %v4256 = vrot.slane %v4234, %v4255
        %v4258 = vunpack.c.l.s4 1966171168
        %v4259 = vunpack.c.0.s8 %v4258
        %v4260 = vlaneseq
        %v4261 = vshrl.u32 %v4260, 7
        %v4262 = vsub.s32 %v4259, %v4261
        %v4263 = vrot.slane %v4235, %v4262
        %v4264 = vcombine.high %v4242, %v4242
        %v4265 = vcombine.high %v4249, %v4249
        %v4266 = vcombine.high %v4256, %v4256
        %v4267 = vcombine.high %v4263, %v4263
        %4276 = vst.msk [vmem:[%s272 + $0x13] sm:$0x1] %vm636, %v4242
        %4277 = vst.msk [vmem:[%s272 + $0x33] sm:$0x1] %vm636, %v4256
        %4278 = vst.msk [vmem:[%s272 + $0x53] sm:$0x1] %vm636, %v4264
        %4279 = vst.msk [vmem:[%s272 + $0x73] sm:$0x1] %vm636, %v4266
        %4280 = vst.msk [vmem:[%s272 + $0x93] sm:$0x1] %vm636, %v4249
        %4281 = vst.msk [vmem:[%s272 + $0xb3] sm:$0x1] %vm636, %v4263
        %4282 = vst.msk [vmem:[%s272 + $0xd3] sm:$0x1] %vm636, %v4265
        %4283 = vst.msk [vmem:[%s272 + $0xf3] sm:$0x1] %vm636, %v4267
        %v4284 = vld [vmem:[%s246 + $0xa] sm:$0x1]
        %v4285 = vld [vmem:[%s246 + $0x1a] sm:$0x1]
        %v4286 = vld [vmem:[%s246 + $0x2a] sm:$0x1]
        %v4287 = vld [vmem:[%s246 + $0x3a] sm:$0x1]
        %v4292 = vrot.slane %v4285, 7
        %v4293 = vsel %vm294, %v4292, %v4284
        %v4294 = vrot.slane %v4286, 6
        %v4295 = vsel %vm297, %v4294, %v4293
        %v4296 = vrot.slane %v4287, 5
        %v4297 = vsel %vm300, %v4296, %v4295
        %v4298 = vsel %vm315, %v4297, 0
        %4300 = vmatprep.subr.mxu0 0.0
        %4301 = vmatpush1.msra.mxu0 %v4298
        %4302 = vmatprep.subr.mxu0 0.0
        %4303 = vmatpush1.msra.mxu0 0.0
        %4304 = vmatprep.subr.mxu0 0.0
        %4305 = vmatpush1.msra.mxu0 0.0
        %4306 = vmatprep.subr.mxu0 0.0
        %4307 = vmatpush1.msra.mxu0 0.0
        %4308 = vmatprep.subr.mxu0 0.0
        %4309 = vmatpush1.msra.mxu0 0.0
        %4310 = vmatprep.subr.mxu0 0.0
        %4311 = vmatpush1.msra.mxu0 0.0
        %4312 = vmatprep.subr.mxu0 0.0
        %4313 = vmatpush1.msra.mxu0 0.0
        %4314 = vmatprep.subr.mxu0 0.0
        %4315 = vmatpush1.msra.mxu0 0.0
        %4316 = vmatprep.subr.mxu0 0.0
        %4317 = vmatpush1.msra.mxu0 0.0
        %4318 = vmatprep.subr.mxu0 0.0
        %4319 = vmatpush1.msra.mxu0 0.0
        %4320 = vmatprep.subr.mxu0 0.0
        %4321 = vmatpush1.msra.mxu0 0.0
        %4322 = vmatprep.subr.mxu0 0.0
        %4323 = vmatpush1.msra.mxu0 0.0
        %4324 = vmatprep.subr.mxu0 0.0
        %4325 = vmatpush1.msra.mxu0 0.0
        %4326 = vmatprep.subr.mxu0 0.0
        %4327 = vmatpush1.msra.mxu0 0.0
        %4328 = vmatprep.subr.mxu0 0.0
        %4329 = vmatpush1.msra.mxu0 0.0
        %4330 = vmatprep.subr.mxu0 0.0
        %4331 = vmatpush1.msra.mxu0 0.0
        %4332 = vmatprep.subr.mxu0 0.0
        %4333 = vmatpush1.msra.mxu0 0.0
        %4334 = vmatprep.subr.mxu0 0.0
        %4335 = vmatpush1.msra.mxu0 0.0
        %4336 = vmatprep.subr.mxu0 0.0
        %4337 = vmatpush1.msra.mxu0 0.0
        %4338 = vmatprep.subr.mxu0 0.0
        %4339 = vmatpush1.msra.mxu0 0.0
        %4340 = vmatprep.subr.mxu0 0.0
        %4341 = vmatpush1.msra.mxu0 0.0
        %4342 = vmatprep.subr.mxu0 0.0
        %4343 = vmatpush1.msra.mxu0 0.0
        %4344 = vmatprep.subr.mxu0 0.0
        %4345 = vmatpush1.msra.mxu0 0.0
        %4346 = vmatprep.subr.mxu0 0.0
        %4347 = vmatpush1.msra.mxu0 0.0
        %4348 = vmatprep.subr.mxu0 0.0
        %4349 = vmatpush1.msra.mxu0 0.0
        %4350 = vmatprep.subr.mxu0 0.0
        %4351 = vmatpush1.msra.mxu0 0.0
        %4352 = vmatprep.subr.mxu0 0.0
        %4353 = vmatpush1.msra.mxu0 0.0
        %4354 = vmatprep.subr.mxu0 0.0
        %4355 = vmatpush1.msra.mxu0 0.0
        %4356 = vmatprep.subr.mxu0 0.0
        %4357 = vmatpush1.msra.mxu0 0.0
        %4358 = vmatprep.subr.mxu0 0.0
        %4359 = vmatpush1.msra.mxu0 0.0
        %4360 = vmatprep.subr.mxu0 0.0
        %4361 = vmatpush1.msra.mxu0 0.0
        %4362 = vmatprep.subr.mxu0 0.0
        %4363 = vmatpush1.msra.mxu0 0.0
        %4364 = vmatprep.mubr.f32.mxu0 0.0
        %4365 = vmatmul.mubr.f32.gmra.mrb[0].mxu0 %v304
        %v4366 = vpop.f32.mrb[0].mxu0
        %v4367 = vadd.f32 0.0, %v4366
        %v4368 = vpop.f32.mrb[0].mxu0
        %4369 = vmatprep.mubr.f32.mxu0 0.0
        %4370 = vmatmul.mubr.f32.gmra.mrb[0].mxu0 %v307
        %v4371 = vpop.f32.mrb[0].mxu0
        %v4372 = vadd.f32 0.0, %v4371
        %v4373 = vpop.f32.mrb[0].mxu0
        %4374 = vmatprep.mubr.f32.mxu0 0.0
        %4375 = vmatmul.mubr.f32.gmra.mrb[0].mxu0 %v310
        %v4376 = vpop.f32.mrb[0].mxu0
        %v4377 = vadd.f32 0.0, %v4376
        %v4378 = vpop.f32.mrb[0].mxu0
        %4379 = vmatprep.mubr.f32.mxu0 0.0
        %4380 = vmatmul.mubr.f32.gmra.mrb[0].mxu0 %v313
        %v4381 = vpop.f32.mrb[0].mxu0
        %v4382 = vadd.f32 0.0, %v4381
        %v4383 = vpop.f32.mrb[0].mxu0
        %4384 = vdwg.mxu0
        %v4386 = vsel %vm403, %v4377, 0
        %v4389 = vsel %vm403, %v4382, 0
        %4391 = vmatprep.subr.mxu0 0.0
        %4392 = vmatpush1.msra.mxu0 %v283
        %4393 = vmatprep.subr.mxu0 0.0
        %4394 = vmatpush1.msra.mxu0 %v284
        %4395 = vmatprep.subr.mxu0 0.0
        %4396 = vmatpush1.msra.mxu0 0.0
        %4397 = vmatprep.subr.mxu0 0.0
        %4398 = vmatpush1.msra.mxu0 0.0
        %4399 = vmatprep.subr.mxu0 0.0
        %4400 = vmatpush1.msra.mxu0 0.0
        %4401 = vmatprep.subr.mxu0 0.0
        %4402 = vmatpush1.msra.mxu0 0.0
        %4403 = vmatprep.subr.mxu0 0.0
        %4404 = vmatpush1.msra.mxu0 0.0
        %4405 = vmatprep.subr.mxu0 0.0
        %4406 = vmatpush1.msra.mxu0 0.0
        %4407 = vmatprep.subr.mxu0 0.0
        %4408 = vmatpush1.msra.mxu0 0.0
        %4409 = vmatprep.subr.mxu0 0.0
        %4410 = vmatpush1.msra.mxu0 0.0
        %4411 = vmatprep.subr.mxu0 0.0
        %4412 = vmatpush1.msra.mxu0 0.0
        %4413 = vmatprep.subr.mxu0 0.0
        %4414 = vmatpush1.msra.mxu0 0.0
        %4415 = vmatprep.subr.mxu0 0.0
        %4416 = vmatpush1.msra.mxu0 0.0
        %4417 = vmatprep.subr.mxu0 0.0
        %4418 = vmatpush1.msra.mxu0 0.0
        %4419 = vmatprep.subr.mxu0 0.0
        %4420 = vmatpush1.msra.mxu0 0.0
        %4421 = vmatprep.subr.mxu0 0.0
        %4422 = vmatpush1.msra.mxu0 0.0
        %4423 = vmatprep.subr.mxu0 0.0
        %4424 = vmatpush1.msra.mxu0 0.0
        %4425 = vmatprep.subr.mxu0 0.0
        %4426 = vmatpush1.msra.mxu0 0.0
        %4427 = vmatprep.subr.mxu0 0.0
        %4428 = vmatpush1.msra.mxu0 0.0
        %4429 = vmatprep.subr.mxu0 0.0
        %4430 = vmatpush1.msra.mxu0 0.0
        %4431 = vmatprep.subr.mxu0 0.0
        %4432 = vmatpush1.msra.mxu0 0.0
        %4433 = vmatprep.subr.mxu0 0.0
        %4434 = vmatpush1.msra.mxu0 0.0
        %4435 = vmatprep.subr.mxu0 0.0
        %4436 = vmatpush1.msra.mxu0 0.0
        %4437 = vmatprep.subr.mxu0 0.0
        %4438 = vmatpush1.msra.mxu0 0.0
        %4439 = vmatprep.subr.mxu0 0.0
        %4440 = vmatpush1.msra.mxu0 0.0
        %4441 = vmatprep.subr.mxu0 0.0
        %4442 = vmatpush1.msra.mxu0 0.0
        %4443 = vmatprep.subr.mxu0 0.0
        %4444 = vmatpush1.msra.mxu0 0.0
        %4445 = vmatprep.subr.mxu0 0.0
        %4446 = vmatpush1.msra.mxu0 0.0
        %4447 = vmatprep.subr.mxu0 0.0
        %4448 = vmatpush1.msra.mxu0 0.0
        %4449 = vmatprep.subr.mxu0 0.0
        %4450 = vmatpush1.msra.mxu0 0.0
        %4451 = vmatprep.subr.mxu0 0.0
        %4452 = vmatpush1.msra.mxu0 0.0
        %4453 = vmatprep.subr.mxu0 0.0
        %4454 = vmatpush1.msra.mxu0 0.0
        %4455 = vmatprep.mubr.f32.mxu0 0.0
        %4456 = vmatmul.mubr.f32.gmra.mrb[0].mxu0 %v4386
        %v4457 = vpop.f32.mrb[0].mxu0
        %v4458 = vadd.f32 0.0, %v4457
        %v4459 = vpop.f32.mrb[0].mxu0
        %4460 = vmatprep.mubr.f32.mxu0 0.0
        %4461 = vmatmul.mubr.f32.gmra.mrb[0].mxu0 %v4389
        %v4462 = vpop.f32.mrb[0].mxu0
        %v4463 = vadd.f32 0.0, %v4462
        %v4464 = vpop.f32.mrb[0].mxu0
        %4465 = vdwg.mxu0
        %v4467 = vsel %vm403, %v4367, 0
        %v4470 = vsel %vm403, %v4372, 0
        %4472 = vmatprep.subr.mxu0 0.0
        %4473 = vmatpush1.msra.mxu0 %v281
        %4474 = vmatprep.subr.mxu0 0.0
        %4475 = vmatpush1.msra.mxu0 %v282
        %4476 = vmatprep.subr.mxu0 0.0
        %4477 = vmatpush1.msra.mxu0 0.0
        %4478 = vmatprep.subr.mxu0 0.0
        %4479 = vmatpush1.msra.mxu0 0.0
        %4480 = vmatprep.subr.mxu0 0.0
        %4481 = vmatpush1.msra.mxu0 0.0
        %4482 = vmatprep.subr.mxu0 0.0
        %4483 = vmatpush1.msra.mxu0 0.0
        %4484 = vmatprep.subr.mxu0 0.0
        %4485 = vmatpush1.msra.mxu0 0.0
        %4486 = vmatprep.subr.mxu0 0.0
        %4487 = vmatpush1.msra.mxu0 0.0
        %4488 = vmatprep.subr.mxu0 0.0
        %4489 = vmatpush1.msra.mxu0 0.0
        %4490 = vmatprep.subr.mxu0 0.0
        %4491 = vmatpush1.msra.mxu0 0.0
        %4492 = vmatprep.subr.mxu0 0.0
        %4493 = vmatpush1.msra.mxu0 0.0
        %4494 = vmatprep.subr.mxu0 0.0
        %4495 = vmatpush1.msra.mxu0 0.0
        %4496 = vmatprep.subr.mxu0 0.0
        %4497 = vmatpush1.msra.mxu0 0.0
        %4498 = vmatprep.subr.mxu0 0.0
        %4499 = vmatpush1.msra.mxu0 0.0
        %4500 = vmatprep.subr.mxu0 0.0
        %4501 = vmatpush1.msra.mxu0 0.0
        %4502 = vmatprep.subr.mxu0 0.0
        %4503 = vmatpush1.msra.mxu0 0.0
        %4504 = vmatprep.subr.mxu0 0.0
        %4505 = vmatpush1.msra.mxu0 0.0
        %4506 = vmatprep.subr.mxu0 0.0
        %4507 = vmatpush1.msra.mxu0 0.0
        %4508 = vmatprep.subr.mxu0 0.0
        %4509 = vmatpush1.msra.mxu0 0.0
        %4510 = vmatprep.subr.mxu0 0.0
        %4511 = vmatpush1.msra.mxu0 0.0
        %4512 = vmatprep.subr.mxu0 0.0
        %4513 = vmatpush1.msra.mxu0 0.0
        %4514 = vmatprep.subr.mxu0 0.0
        %4515 = vmatpush1.msra.mxu0 0.0
        %4516 = vmatprep.subr.mxu0 0.0
        %4517 = vmatpush1.msra.mxu0 0.0
        %4518 = vmatprep.subr.mxu0 0.0
        %4519 = vmatpush1.msra.mxu0 0.0
        %4520 = vmatprep.subr.mxu0 0.0
        %4521 = vmatpush1.msra.mxu0 0.0
        %4522 = vmatprep.subr.mxu0 0.0
        %4523 = vmatpush1.msra.mxu0 0.0
        %4524 = vmatprep.subr.mxu0 0.0
        %4525 = vmatpush1.msra.mxu0 0.0
        %4526 = vmatprep.subr.mxu0 0.0
        %4527 = vmatpush1.msra.mxu0 0.0
        %4528 = vmatprep.subr.mxu0 0.0
        %4529 = vmatpush1.msra.mxu0 0.0
        %4530 = vmatprep.subr.mxu0 0.0
        %4531 = vmatpush1.msra.mxu0 0.0
        %4532 = vmatprep.subr.mxu0 0.0
        %4533 = vmatpush1.msra.mxu0 0.0
        %4534 = vmatprep.subr.mxu0 0.0
        %4535 = vmatpush1.msra.mxu0 0.0
        %4536 = vmatprep.mubr.f32.mxu0 0.0
        %4537 = vmatmul.mubr.f32.gmra.mrb[0].mxu0 %v4467
        %v4538 = vpop.f32.mrb[0].mxu0
        %v4539 = vadd.f32 %v4458, %v4538
        %v4540 = vpop.f32.mrb[0].mxu0
        %4541 = vmatprep.mubr.f32.mxu0 0.0
        %4542 = vmatmul.mubr.f32.gmra.mrb[0].mxu0 %v4470
        %v4543 = vpop.f32.mrb[0].mxu0
        %v4544 = vadd.f32 %v4463, %v4543
        %v4545 = vpop.f32.mrb[0].mxu0
        %4546 = vdwg.mxu0
        %v4547 = vadd.f32 %v4539, %v569
        %v4548 = vadd.f32 %v4544, %v574
        %v4550 = vcombine.high %v4547, %v4547
        %v4552 = vunpack.c.l.s4 1966171168
        %v4553 = vunpack.c.0.s8 %v4552
        %v4554 = vlaneseq
        %v4555 = vshrl.u32 %v4554, 7
        %v4556 = vsub.s32 %v4553, %v4555
        %v4557 = vrot.slane %v4547, %v4556
        %v4559 = vunpack.c.l.s4 1966171168
        %v4560 = vunpack.c.0.s8 %v4559
        %v4561 = vlaneseq
        %v4562 = vshrl.u32 %v4561, 7
        %v4563 = vsub.s32 %v4560, %v4562
        %v4564 = vrot.slane %v4550, %v4563
        %v4565 = vcombine.high %v4557, %v4557
        %v4566 = vcombine.high %v4564, %v4564
        %v4568 = vunpack.c.l.s4 1966171168
        %v4569 = vunpack.c.0.s8 %v4568
        %v4570 = vlaneseq
        %v4571 = vshrl.u32 %v4570, 7
        %v4572 = vsub.s32 %v4569, %v4571
        %v4573 = vrot.slane %v4557, %v4572
        %v4575 = vunpack.c.l.s4 1966171168
        %v4576 = vunpack.c.0.s8 %v4575
        %v4577 = vlaneseq
        %v4578 = vshrl.u32 %v4577, 7
        %v4579 = vsub.s32 %v4576, %v4578
        %v4580 = vrot.slane %v4564, %v4579
        %v4582 = vunpack.c.l.s4 1966171168
        %v4583 = vunpack.c.0.s8 %v4582
        %v4584 = vlaneseq
        %v4585 = vshrl.u32 %v4584, 7
        %v4586 = vsub.s32 %v4583, %v4585
        %v4587 = vrot.slane %v4565, %v4586
        %v4589 = vunpack.c.l.s4 1966171168
        %v4590 = vunpack.c.0.s8 %v4589
        %v4591 = vlaneseq
        %v4592 = vshrl.u32 %v4591, 7
        %v4593 = vsub.s32 %v4590, %v4592
        %v4594 = vrot.slane %v4566, %v4593
        %v4595 = vcombine.high %v4573, %v4573
        %v4596 = vcombine.high %v4580, %v4580
        %v4597 = vcombine.high %v4587, %v4587
        %v4598 = vcombine.high %v4594, %v4594
        %4607 = vst.msk [vmem:[%s272 + $0x14] sm:$0x1] %vm636, %v4573
        %4608 = vst.msk [vmem:[%s272 + $0x34] sm:$0x1] %vm636, %v4587
        %4609 = vst.msk [vmem:[%s272 + $0x54] sm:$0x1] %vm636, %v4595
        %4610 = vst.msk [vmem:[%s272 + $0x74] sm:$0x1] %vm636, %v4597
        %4611 = vst.msk [vmem:[%s272 + $0x94] sm:$0x1] %vm636, %v4580
        %4612 = vst.msk [vmem:[%s272 + $0xb4] sm:$0x1] %vm636, %v4594
        %4613 = vst.msk [vmem:[%s272 + $0xd4] sm:$0x1] %vm636, %v4596
        %4614 = vst.msk [vmem:[%s272 + $0xf4] sm:$0x1] %vm636, %v4598
        %v4616 = vcombine.high %v4548, %v4548
        %v4618 = vunpack.c.l.s4 1966171168
        %v4619 = vunpack.c.0.s8 %v4618
        %v4620 = vlaneseq
        %v4621 = vshrl.u32 %v4620, 7
        %v4622 = vsub.s32 %v4619, %v4621
        %v4623 = vrot.slane %v4548, %v4622
        %v4625 = vunpack.c.l.s4 1966171168
        %v4626 = vunpack.c.0.s8 %v4625
        %v4627 = vlaneseq
        %v4628 = vshrl.u32 %v4627, 7
        %v4629 = vsub.s32 %v4626, %v4628
        %v4630 = vrot.slane %v4616, %v4629
        %v4631 = vcombine.high %v4623, %v4623
        %v4632 = vcombine.high %v4630, %v4630
        %v4634 = vunpack.c.l.s4 1966171168
        %v4635 = vunpack.c.0.s8 %v4634
        %v4636 = vlaneseq
        %v4637 = vshrl.u32 %v4636, 7
        %v4638 = vsub.s32 %v4635, %v4637
        %v4639 = vrot.slane %v4623, %v4638
        %v4641 = vunpack.c.l.s4 1966171168
        %v4642 = vunpack.c.0.s8 %v4641
        %v4643 = vlaneseq
        %v4644 = vshrl.u32 %v4643, 7
        %v4645 = vsub.s32 %v4642, %v4644
        %v4646 = vrot.slane %v4630, %v4645
        %v4648 = vunpack.c.l.s4 1966171168
        %v4649 = vunpack.c.0.s8 %v4648
        %v4650 = vlaneseq
        %v4651 = vshrl.u32 %v4650, 7
        %v4652 = vsub.s32 %v4649, %v4651
        %v4653 = vrot.slane %v4631, %v4652
        %v4655 = vunpack.c.l.s4 1966171168
        %v4656 = vunpack.c.0.s8 %v4655
        %v4657 = vlaneseq
        %v4658 = vshrl.u32 %v4657, 7
        %v4659 = vsub.s32 %v4656, %v4658
        %v4660 = vrot.slane %v4632, %v4659
        %v4661 = vcombine.high %v4639, %v4639
        %v4662 = vcombine.high %v4646, %v4646
        %v4663 = vcombine.high %v4653, %v4653
        %v4664 = vcombine.high %v4660, %v4660
        %4673 = vst.msk [vmem:[%s272 + $0x15] sm:$0x1] %vm636, %v4639
        %4674 = vst.msk [vmem:[%s272 + $0x35] sm:$0x1] %vm636, %v4653
        %4675 = vst.msk [vmem:[%s272 + $0x55] sm:$0x1] %vm636, %v4661
        %4676 = vst.msk [vmem:[%s272 + $0x75] sm:$0x1] %vm636, %v4663
        %4677 = vst.msk [vmem:[%s272 + $0x95] sm:$0x1] %vm636, %v4646
        %4678 = vst.msk [vmem:[%s272 + $0xb5] sm:$0x1] %vm636, %v4660
        %4679 = vst.msk [vmem:[%s272 + $0xd5] sm:$0x1] %vm636, %v4662
        %4680 = vst.msk [vmem:[%s272 + $0xf5] sm:$0x1] %vm636, %v4664
        %v4681 = vld [vmem:[%s246 + $0xb] sm:$0x1]
        %v4682 = vld [vmem:[%s246 + $0x1b] sm:$0x1]
        %v4683 = vld [vmem:[%s246 + $0x2b] sm:$0x1]
        %v4684 = vld [vmem:[%s246 + $0x3b] sm:$0x1]
        %v4689 = vrot.slane %v4682, 7
        %v4690 = vsel %vm294, %v4689, %v4681
        %v4691 = vrot.slane %v4683, 6
        %v4692 = vsel %vm297, %v4691, %v4690
        %v4693 = vrot.slane %v4684, 5
        %v4694 = vsel %vm300, %v4693, %v4692
        %v4695 = vsel %vm315, %v4694, 0
        %4697 = vmatprep.subr.mxu0 0.0
        %4698 = vmatpush1.msra.mxu0 %v4695
        %4699 = vmatprep.subr.mxu0 0.0
        %4700 = vmatpush1.msra.mxu0 0.0
        %4701 = vmatprep.subr.mxu0 0.0
        %4702 = vmatpush1.msra.mxu0 0.0
        %4703 = vmatprep.subr.mxu0 0.0
        %4704 = vmatpush1.msra.mxu0 0.0
        %4705 = vmatprep.subr.mxu0 0.0
        %4706 = vmatpush1.msra.mxu0 0.0
        %4707 = vmatprep.subr.mxu0 0.0
        %4708 = vmatpush1.msra.mxu0 0.0
        %4709 = vmatprep.subr.mxu0 0.0
        %4710 = vmatpush1.msra.mxu0 0.0
        %4711 = vmatprep.subr.mxu0 0.0
        %4712 = vmatpush1.msra.mxu0 0.0
        %4713 = vmatprep.subr.mxu0 0.0
        %4714 = vmatpush1.msra.mxu0 0.0
        %4715 = vmatprep.subr.mxu0 0.0
        %4716 = vmatpush1.msra.mxu0 0.0
        %4717 = vmatprep.subr.mxu0 0.0
        %4718 = vmatpush1.msra.mxu0 0.0
        %4719 = vmatprep.subr.mxu0 0.0
        %4720 = vmatpush1.msra.mxu0 0.0
        %4721 = vmatprep.subr.mxu0 0.0
        %4722 = vmatpush1.msra.mxu0 0.0
        %4723 = vmatprep.subr.mxu0 0.0
        %4724 = vmatpush1.msra.mxu0 0.0
        %4725 = vmatprep.subr.mxu0 0.0
        %4726 = vmatpush1.msra.mxu0 0.0
        %4727 = vmatprep.subr.mxu0 0.0
        %4728 = vmatpush1.msra.mxu0 0.0
        %4729 = vmatprep.subr.mxu0 0.0
        %4730 = vmatpush1.msra.mxu0 0.0
        %4731 = vmatprep.subr.mxu0 0.0
        %4732 = vmatpush1.msra.mxu0 0.0
        %4733 = vmatprep.subr.mxu0 0.0
        %4734 = vmatpush1.msra.mxu0 0.0
        %4735 = vmatprep.subr.mxu0 0.0
        %4736 = vmatpush1.msra.mxu0 0.0
        %4737 = vmatprep.subr.mxu0 0.0
        %4738 = vmatpush1.msra.mxu0 0.0
        %4739 = vmatprep.subr.mxu0 0.0
        %4740 = vmatpush1.msra.mxu0 0.0
        %4741 = vmatprep.subr.mxu0 0.0
        %4742 = vmatpush1.msra.mxu0 0.0
        %4743 = vmatprep.subr.mxu0 0.0
        %4744 = vmatpush1.msra.mxu0 0.0
        %4745 = vmatprep.subr.mxu0 0.0
        %4746 = vmatpush1.msra.mxu0 0.0
        %4747 = vmatprep.subr.mxu0 0.0
        %4748 = vmatpush1.msra.mxu0 0.0
        %4749 = vmatprep.subr.mxu0 0.0
        %4750 = vmatpush1.msra.mxu0 0.0
        %4751 = vmatprep.subr.mxu0 0.0
        %4752 = vmatpush1.msra.mxu0 0.0
        %4753 = vmatprep.subr.mxu0 0.0
        %4754 = vmatpush1.msra.mxu0 0.0
        %4755 = vmatprep.subr.mxu0 0.0
        %4756 = vmatpush1.msra.mxu0 0.0
        %4757 = vmatprep.subr.mxu0 0.0
        %4758 = vmatpush1.msra.mxu0 0.0
        %4759 = vmatprep.subr.mxu0 0.0
        %4760 = vmatpush1.msra.mxu0 0.0
        %4761 = vmatprep.mubr.f32.mxu0 0.0
        %4762 = vmatmul.mubr.f32.gmra.mrb[0].mxu0 %v304
        %v4763 = vpop.f32.mrb[0].mxu0
        %v4764 = vadd.f32 0.0, %v4763
        %v4765 = vpop.f32.mrb[0].mxu0
        %4766 = vmatprep.mubr.f32.mxu0 0.0
        %4767 = vmatmul.mubr.f32.gmra.mrb[0].mxu0 %v307
        %v4768 = vpop.f32.mrb[0].mxu0
        %v4769 = vadd.f32 0.0, %v4768
        %v4770 = vpop.f32.mrb[0].mxu0
        %4771 = vmatprep.mubr.f32.mxu0 0.0
        %4772 = vmatmul.mubr.f32.gmra.mrb[0].mxu0 %v310
        %v4773 = vpop.f32.mrb[0].mxu0
        %v4774 = vadd.f32 0.0, %v4773
        %v4775 = vpop.f32.mrb[0].mxu0
        %4776 = vmatprep.mubr.f32.mxu0 0.0
        %4777 = vmatmul.mubr.f32.gmra.mrb[0].mxu0 %v313
        %v4778 = vpop.f32.mrb[0].mxu0
        %v4779 = vadd.f32 0.0, %v4778
        %v4780 = vpop.f32.mrb[0].mxu0
        %4781 = vdwg.mxu0
        %v4783 = vsel %vm403, %v4774, 0
        %v4786 = vsel %vm403, %v4779, 0
        %4788 = vmatprep.subr.mxu0 0.0
        %4789 = vmatpush1.msra.mxu0 %v283
        %4790 = vmatprep.subr.mxu0 0.0
        %4791 = vmatpush1.msra.mxu0 %v284
        %4792 = vmatprep.subr.mxu0 0.0
        %4793 = vmatpush1.msra.mxu0 0.0
        %4794 = vmatprep.subr.mxu0 0.0
        %4795 = vmatpush1.msra.mxu0 0.0
        %4796 = vmatprep.subr.mxu0 0.0
        %4797 = vmatpush1.msra.mxu0 0.0
        %4798 = vmatprep.subr.mxu0 0.0
        %4799 = vmatpush1.msra.mxu0 0.0
        %4800 = vmatprep.subr.mxu0 0.0
        %4801 = vmatpush1.msra.mxu0 0.0
        %4802 = vmatprep.subr.mxu0 0.0
        %4803 = vmatpush1.msra.mxu0 0.0
        %4804 = vmatprep.subr.mxu0 0.0
        %4805 = vmatpush1.msra.mxu0 0.0
        %4806 = vmatprep.subr.mxu0 0.0
        %4807 = vmatpush1.msra.mxu0 0.0
        %4808 = vmatprep.subr.mxu0 0.0
        %4809 = vmatpush1.msra.mxu0 0.0
        %4810 = vmatprep.subr.mxu0 0.0
        %4811 = vmatpush1.msra.mxu0 0.0
        %4812 = vmatprep.subr.mxu0 0.0
        %4813 = vmatpush1.msra.mxu0 0.0
        %4814 = vmatprep.subr.mxu0 0.0
        %4815 = vmatpush1.msra.mxu0 0.0
        %4816 = vmatprep.subr.mxu0 0.0
        %4817 = vmatpush1.msra.mxu0 0.0
        %4818 = vmatprep.subr.mxu0 0.0
        %4819 = vmatpush1.msra.mxu0 0.0
        %4820 = vmatprep.subr.mxu0 0.0
        %4821 = vmatpush1.msra.mxu0 0.0
        %4822 = vmatprep.subr.mxu0 0.0
        %4823 = vmatpush1.msra.mxu0 0.0
        %4824 = vmatprep.subr.mxu0 0.0
        %4825 = vmatpush1.msra.mxu0 0.0
        %4826 = vmatprep.subr.mxu0 0.0
        %4827 = vmatpush1.msra.mxu0 0.0
        %4828 = vmatprep.subr.mxu0 0.0
        %4829 = vmatpush1.msra.mxu0 0.0
        %4830 = vmatprep.subr.mxu0 0.0
        %4831 = vmatpush1.msra.mxu0 0.0
        %4832 = vmatprep.subr.mxu0 0.0
        %4833 = vmatpush1.msra.mxu0 0.0
        %4834 = vmatprep.subr.mxu0 0.0
        %4835 = vmatpush1.msra.mxu0 0.0
        %4836 = vmatprep.subr.mxu0 0.0
        %4837 = vmatpush1.msra.mxu0 0.0
        %4838 = vmatprep.subr.mxu0 0.0
        %4839 = vmatpush1.msra.mxu0 0.0
        %4840 = vmatprep.subr.mxu0 0.0
        %4841 = vmatpush1.msra.mxu0 0.0
        %4842 = vmatprep.subr.mxu0 0.0
        %4843 = vmatpush1.msra.mxu0 0.0
        %4844 = vmatprep.subr.mxu0 0.0
        %4845 = vmatpush1.msra.mxu0 0.0
        %4846 = vmatprep.subr.mxu0 0.0
        %4847 = vmatpush1.msra.mxu0 0.0
        %4848 = vmatprep.subr.mxu0 0.0
        %4849 = vmatpush1.msra.mxu0 0.0
        %4850 = vmatprep.subr.mxu0 0.0
        %4851 = vmatpush1.msra.mxu0 0.0
        %4852 = vmatprep.mubr.f32.mxu0 0.0
        %4853 = vmatmul.mubr.f32.gmra.mrb[0].mxu0 %v4783
        %v4854 = vpop.f32.mrb[0].mxu0
        %v4855 = vadd.f32 0.0, %v4854
        %v4856 = vpop.f32.mrb[0].mxu0
        %4857 = vmatprep.mubr.f32.mxu0 0.0
        %4858 = vmatmul.mubr.f32.gmra.mrb[0].mxu0 %v4786
        %v4859 = vpop.f32.mrb[0].mxu0
        %v4860 = vadd.f32 0.0, %v4859
        %v4861 = vpop.f32.mrb[0].mxu0
        %4862 = vdwg.mxu0
        %v4864 = vsel %vm403, %v4764, 0
        %v4867 = vsel %vm403, %v4769, 0
        %4869 = vmatprep.subr.mxu0 0.0
        %4870 = vmatpush1.msra.mxu0 %v281
        %4871 = vmatprep.subr.mxu0 0.0
        %4872 = vmatpush1.msra.mxu0 %v282
        %4873 = vmatprep.subr.mxu0 0.0
        %4874 = vmatpush1.msra.mxu0 0.0
        %4875 = vmatprep.subr.mxu0 0.0
        %4876 = vmatpush1.msra.mxu0 0.0
        %4877 = vmatprep.subr.mxu0 0.0
        %4878 = vmatpush1.msra.mxu0 0.0
        %4879 = vmatprep.subr.mxu0 0.0
        %4880 = vmatpush1.msra.mxu0 0.0
        %4881 = vmatprep.subr.mxu0 0.0
        %4882 = vmatpush1.msra.mxu0 0.0
        %4883 = vmatprep.subr.mxu0 0.0
        %4884 = vmatpush1.msra.mxu0 0.0
        %4885 = vmatprep.subr.mxu0 0.0
        %4886 = vmatpush1.msra.mxu0 0.0
        %4887 = vmatprep.subr.mxu0 0.0
        %4888 = vmatpush1.msra.mxu0 0.0
        %4889 = vmatprep.subr.mxu0 0.0
        %4890 = vmatpush1.msra.mxu0 0.0
        %4891 = vmatprep.subr.mxu0 0.0
        %4892 = vmatpush1.msra.mxu0 0.0
        %4893 = vmatprep.subr.mxu0 0.0
        %4894 = vmatpush1.msra.mxu0 0.0
        %4895 = vmatprep.subr.mxu0 0.0
        %4896 = vmatpush1.msra.mxu0 0.0
        %4897 = vmatprep.subr.mxu0 0.0
        %4898 = vmatpush1.msra.mxu0 0.0
        %4899 = vmatprep.subr.mxu0 0.0
        %4900 = vmatpush1.msra.mxu0 0.0
        %4901 = vmatprep.subr.mxu0 0.0
        %4902 = vmatpush1.msra.mxu0 0.0
        %4903 = vmatprep.subr.mxu0 0.0
        %4904 = vmatpush1.msra.mxu0 0.0
        %4905 = vmatprep.subr.mxu0 0.0
        %4906 = vmatpush1.msra.mxu0 0.0
        %4907 = vmatprep.subr.mxu0 0.0
        %4908 = vmatpush1.msra.mxu0 0.0
        %4909 = vmatprep.subr.mxu0 0.0
        %4910 = vmatpush1.msra.mxu0 0.0
        %4911 = vmatprep.subr.mxu0 0.0
        %4912 = vmatpush1.msra.mxu0 0.0
        %4913 = vmatprep.subr.mxu0 0.0
        %4914 = vmatpush1.msra.mxu0 0.0
        %4915 = vmatprep.subr.mxu0 0.0
        %4916 = vmatpush1.msra.mxu0 0.0
        %4917 = vmatprep.subr.mxu0 0.0
        %4918 = vmatpush1.msra.mxu0 0.0
        %4919 = vmatprep.subr.mxu0 0.0
        %4920 = vmatpush1.msra.mxu0 0.0
        %4921 = vmatprep.subr.mxu0 0.0
        %4922 = vmatpush1.msra.mxu0 0.0
        %4923 = vmatprep.subr.mxu0 0.0
        %4924 = vmatpush1.msra.mxu0 0.0
        %4925 = vmatprep.subr.mxu0 0.0
        %4926 = vmatpush1.msra.mxu0 0.0
        %4927 = vmatprep.subr.mxu0 0.0
        %4928 = vmatpush1.msra.mxu0 0.0
        %4929 = vmatprep.subr.mxu0 0.0
        %4930 = vmatpush1.msra.mxu0 0.0
        %4931 = vmatprep.subr.mxu0 0.0
        %4932 = vmatpush1.msra.mxu0 0.0
        %4933 = vmatprep.mubr.f32.mxu0 0.0
        %4934 = vmatmul.mubr.f32.gmra.mrb[0].mxu0 %v4864
        %v4935 = vpop.f32.mrb[0].mxu0
        %v4936 = vadd.f32 %v4855, %v4935
        %v4937 = vpop.f32.mrb[0].mxu0
        %4938 = vmatprep.mubr.f32.mxu0 0.0
        %4939 = vmatmul.mubr.f32.gmra.mrb[0].mxu0 %v4867
        %v4940 = vpop.f32.mrb[0].mxu0
        %v4941 = vadd.f32 %v4860, %v4940
        %v4942 = vpop.f32.mrb[0].mxu0
        %4943 = vdwg.mxu0
        %v4944 = vadd.f32 %v4936, %v569
        %v4945 = vadd.f32 %v4941, %v574
        %v4947 = vcombine.high %v4944, %v4944
        %v4949 = vunpack.c.l.s4 1966171168
        %v4950 = vunpack.c.0.s8 %v4949
        %v4951 = vlaneseq
        %v4952 = vshrl.u32 %v4951, 7
        %v4953 = vsub.s32 %v4950, %v4952
        %v4954 = vrot.slane %v4944, %v4953
        %v4956 = vunpack.c.l.s4 1966171168
        %v4957 = vunpack.c.0.s8 %v4956
        %v4958 = vlaneseq
        %v4959 = vshrl.u32 %v4958, 7
        %v4960 = vsub.s32 %v4957, %v4959
        %v4961 = vrot.slane %v4947, %v4960
        %v4962 = vcombine.high %v4954, %v4954
        %v4963 = vcombine.high %v4961, %v4961
        %v4965 = vunpack.c.l.s4 1966171168
        %v4966 = vunpack.c.0.s8 %v4965
        %v4967 = vlaneseq
        %v4968 = vshrl.u32 %v4967, 7
        %v4969 = vsub.s32 %v4966, %v4968
        %v4970 = vrot.slane %v4954, %v4969
        %v4972 = vunpack.c.l.s4 1966171168
        %v4973 = vunpack.c.0.s8 %v4972
        %v4974 = vlaneseq
        %v4975 = vshrl.u32 %v4974, 7
        %v4976 = vsub.s32 %v4973, %v4975
        %v4977 = vrot.slane %v4961, %v4976
        %v4979 = vunpack.c.l.s4 1966171168
        %v4980 = vunpack.c.0.s8 %v4979
        %v4981 = vlaneseq
        %v4982 = vshrl.u32 %v4981, 7
        %v4983 = vsub.s32 %v4980, %v4982
        %v4984 = vrot.slane %v4962, %v4983
        %v4986 = vunpack.c.l.s4 1966171168
        %v4987 = vunpack.c.0.s8 %v4986
        %v4988 = vlaneseq
        %v4989 = vshrl.u32 %v4988, 7
        %v4990 = vsub.s32 %v4987, %v4989
        %v4991 = vrot.slane %v4963, %v4990
        %v4992 = vcombine.high %v4970, %v4970
        %v4993 = vcombine.high %v4977, %v4977
        %v4994 = vcombine.high %v4984, %v4984
        %v4995 = vcombine.high %v4991, %v4991
        %5004 = vst.msk [vmem:[%s272 + $0x16] sm:$0x1] %vm636, %v4970
        %5005 = vst.msk [vmem:[%s272 + $0x36] sm:$0x1] %vm636, %v4984
        %5006 = vst.msk [vmem:[%s272 + $0x56] sm:$0x1] %vm636, %v4992
        %5007 = vst.msk [vmem:[%s272 + $0x76] sm:$0x1] %vm636, %v4994
        %5008 = vst.msk [vmem:[%s272 + $0x96] sm:$0x1] %vm636, %v4977
        %5009 = vst.msk [vmem:[%s272 + $0xb6] sm:$0x1] %vm636, %v4991
        %5010 = vst.msk [vmem:[%s272 + $0xd6] sm:$0x1] %vm636, %v4993
        %5011 = vst.msk [vmem:[%s272 + $0xf6] sm:$0x1] %vm636, %v4995
        %v5013 = vcombine.high %v4945, %v4945
        %v5015 = vunpack.c.l.s4 1966171168
        %v5016 = vunpack.c.0.s8 %v5015
        %v5017 = vlaneseq
        %v5018 = vshrl.u32 %v5017, 7
        %v5019 = vsub.s32 %v5016, %v5018
        %v5020 = vrot.slane %v4945, %v5019
        %v5022 = vunpack.c.l.s4 1966171168
        %v5023 = vunpack.c.0.s8 %v5022
        %v5024 = vlaneseq
        %v5025 = vshrl.u32 %v5024, 7
        %v5026 = vsub.s32 %v5023, %v5025
        %v5027 = vrot.slane %v5013, %v5026
        %v5028 = vcombine.high %v5020, %v5020
        %v5029 = vcombine.high %v5027, %v5027
        %v5031 = vunpack.c.l.s4 1966171168
        %v5032 = vunpack.c.0.s8 %v5031
        %v5033 = vlaneseq
        %v5034 = vshrl.u32 %v5033, 7
        %v5035 = vsub.s32 %v5032, %v5034
        %v5036 = vrot.slane %v5020, %v5035
        %v5038 = vunpack.c.l.s4 1966171168
        %v5039 = vunpack.c.0.s8 %v5038
        %v5040 = vlaneseq
        %v5041 = vshrl.u32 %v5040, 7
        %v5042 = vsub.s32 %v5039, %v5041
        %v5043 = vrot.slane %v5027, %v5042
        %v5045 = vunpack.c.l.s4 1966171168
        %v5046 = vunpack.c.0.s8 %v5045
        %v5047 = vlaneseq
        %v5048 = vshrl.u32 %v5047, 7
        %v5049 = vsub.s32 %v5046, %v5048
        %v5050 = vrot.slane %v5028, %v5049
        %v5052 = vunpack.c.l.s4 1966171168
        %v5053 = vunpack.c.0.s8 %v5052
        %v5054 = vlaneseq
        %v5055 = vshrl.u32 %v5054, 7
        %v5056 = vsub.s32 %v5053, %v5055
        %v5057 = vrot.slane %v5029, %v5056
        %v5058 = vcombine.high %v5036, %v5036
        %v5059 = vcombine.high %v5043, %v5043
        %v5060 = vcombine.high %v5050, %v5050
        %v5061 = vcombine.high %v5057, %v5057
        %5070 = vst.msk [vmem:[%s272 + $0x17] sm:$0x1] %vm636, %v5036
        %5071 = vst.msk [vmem:[%s272 + $0x37] sm:$0x1] %vm636, %v5050
        %5072 = vst.msk [vmem:[%s272 + $0x57] sm:$0x1] %vm636, %v5058
        %5073 = vst.msk [vmem:[%s272 + $0x77] sm:$0x1] %vm636, %v5060
        %5074 = vst.msk [vmem:[%s272 + $0x97] sm:$0x1] %vm636, %v5043
        %5075 = vst.msk [vmem:[%s272 + $0xb7] sm:$0x1] %vm636, %v5057
        %5076 = vst.msk [vmem:[%s272 + $0xd7] sm:$0x1] %vm636, %v5059
        %5077 = vst.msk [vmem:[%s272 + $0xf7] sm:$0x1] %vm636, %v5061
        %v5078 = vld [vmem:[%s246 + $0xc] sm:$0x1]
        %v5079 = vld [vmem:[%s246 + $0x1c] sm:$0x1]
        %v5080 = vld [vmem:[%s246 + $0x2c] sm:$0x1]
        %v5081 = vld [vmem:[%s246 + $0x3c] sm:$0x1]
        %v5086 = vrot.slane %v5079, 7
        %v5087 = vsel %vm294, %v5086, %v5078
        %v5088 = vrot.slane %v5080, 6
        %v5089 = vsel %vm297, %v5088, %v5087
        %v5090 = vrot.slane %v5081, 5
        %v5091 = vsel %vm300, %v5090, %v5089
        %v5092 = vsel %vm315, %v5091, 0
        %5094 = vmatprep.subr.mxu0 0.0
        %5095 = vmatpush1.msra.mxu0 %v5092
        %5096 = vmatprep.subr.mxu0 0.0
        %5097 = vmatpush1.msra.mxu0 0.0
        %5098 = vmatprep.subr.mxu0 0.0
        %5099 = vmatpush1.msra.mxu0 0.0
        %5100 = vmatprep.subr.mxu0 0.0
        %5101 = vmatpush1.msra.mxu0 0.0
        %5102 = vmatprep.subr.mxu0 0.0
        %5103 = vmatpush1.msra.mxu0 0.0
        %5104 = vmatprep.subr.mxu0 0.0
        %5105 = vmatpush1.msra.mxu0 0.0
        %5106 = vmatprep.subr.mxu0 0.0
        %5107 = vmatpush1.msra.mxu0 0.0
        %5108 = vmatprep.subr.mxu0 0.0
        %5109 = vmatpush1.msra.mxu0 0.0
        %5110 = vmatprep.subr.mxu0 0.0
        %5111 = vmatpush1.msra.mxu0 0.0
        %5112 = vmatprep.subr.mxu0 0.0
        %5113 = vmatpush1.msra.mxu0 0.0
        %5114 = vmatprep.subr.mxu0 0.0
        %5115 = vmatpush1.msra.mxu0 0.0
        %5116 = vmatprep.subr.mxu0 0.0
        %5117 = vmatpush1.msra.mxu0 0.0
        %5118 = vmatprep.subr.mxu0 0.0
        %5119 = vmatpush1.msra.mxu0 0.0
        %5120 = vmatprep.subr.mxu0 0.0
        %5121 = vmatpush1.msra.mxu0 0.0
        %5122 = vmatprep.subr.mxu0 0.0
        %5123 = vmatpush1.msra.mxu0 0.0
        %5124 = vmatprep.subr.mxu0 0.0
        %5125 = vmatpush1.msra.mxu0 0.0
        %5126 = vmatprep.subr.mxu0 0.0
        %5127 = vmatpush1.msra.mxu0 0.0
        %5128 = vmatprep.subr.mxu0 0.0
        %5129 = vmatpush1.msra.mxu0 0.0
        %5130 = vmatprep.subr.mxu0 0.0
        %5131 = vmatpush1.msra.mxu0 0.0
        %5132 = vmatprep.subr.mxu0 0.0
        %5133 = vmatpush1.msra.mxu0 0.0
        %5134 = vmatprep.subr.mxu0 0.0
        %5135 = vmatpush1.msra.mxu0 0.0
        %5136 = vmatprep.subr.mxu0 0.0
        %5137 = vmatpush1.msra.mxu0 0.0
        %5138 = vmatprep.subr.mxu0 0.0
        %5139 = vmatpush1.msra.mxu0 0.0
        %5140 = vmatprep.subr.mxu0 0.0
        %5141 = vmatpush1.msra.mxu0 0.0
        %5142 = vmatprep.subr.mxu0 0.0
        %5143 = vmatpush1.msra.mxu0 0.0
        %5144 = vmatprep.subr.mxu0 0.0
        %5145 = vmatpush1.msra.mxu0 0.0
        %5146 = vmatprep.subr.mxu0 0.0
        %5147 = vmatpush1.msra.mxu0 0.0
        %5148 = vmatprep.subr.mxu0 0.0
        %5149 = vmatpush1.msra.mxu0 0.0
        %5150 = vmatprep.subr.mxu0 0.0
        %5151 = vmatpush1.msra.mxu0 0.0
        %5152 = vmatprep.subr.mxu0 0.0
        %5153 = vmatpush1.msra.mxu0 0.0
        %5154 = vmatprep.subr.mxu0 0.0
        %5155 = vmatpush1.msra.mxu0 0.0
        %5156 = vmatprep.subr.mxu0 0.0
        %5157 = vmatpush1.msra.mxu0 0.0
        %5158 = vmatprep.mubr.f32.mxu0 0.0
        %5159 = vmatmul.mubr.f32.gmra.mrb[0].mxu0 %v304
        %v5160 = vpop.f32.mrb[0].mxu0
        %v5161 = vadd.f32 0.0, %v5160
        %v5162 = vpop.f32.mrb[0].mxu0
        %5163 = vmatprep.mubr.f32.mxu0 0.0
        %5164 = vmatmul.mubr.f32.gmra.mrb[0].mxu0 %v307
        %v5165 = vpop.f32.mrb[0].mxu0
        %v5166 = vadd.f32 0.0, %v5165
        %v5167 = vpop.f32.mrb[0].mxu0
        %5168 = vmatprep.mubr.f32.mxu0 0.0
        %5169 = vmatmul.mubr.f32.gmra.mrb[0].mxu0 %v310
        %v5170 = vpop.f32.mrb[0].mxu0
        %v5171 = vadd.f32 0.0, %v5170
        %v5172 = vpop.f32.mrb[0].mxu0
        %5173 = vmatprep.mubr.f32.mxu0 0.0
        %5174 = vmatmul.mubr.f32.gmra.mrb[0].mxu0 %v313
        %v5175 = vpop.f32.mrb[0].mxu0
        %v5176 = vadd.f32 0.0, %v5175
        %v5177 = vpop.f32.mrb[0].mxu0
        %5178 = vdwg.mxu0
        %v5180 = vsel %vm403, %v5171, 0
        %v5183 = vsel %vm403, %v5176, 0
        %5185 = vmatprep.subr.mxu0 0.0
        %5186 = vmatpush1.msra.mxu0 %v283
        %5187 = vmatprep.subr.mxu0 0.0
        %5188 = vmatpush1.msra.mxu0 %v284
        %5189 = vmatprep.subr.mxu0 0.0
        %5190 = vmatpush1.msra.mxu0 0.0
        %5191 = vmatprep.subr.mxu0 0.0
        %5192 = vmatpush1.msra.mxu0 0.0
        %5193 = vmatprep.subr.mxu0 0.0
        %5194 = vmatpush1.msra.mxu0 0.0
        %5195 = vmatprep.subr.mxu0 0.0
        %5196 = vmatpush1.msra.mxu0 0.0
        %5197 = vmatprep.subr.mxu0 0.0
        %5198 = vmatpush1.msra.mxu0 0.0
        %5199 = vmatprep.subr.mxu0 0.0
        %5200 = vmatpush1.msra.mxu0 0.0
        %5201 = vmatprep.subr.mxu0 0.0
        %5202 = vmatpush1.msra.mxu0 0.0
        %5203 = vmatprep.subr.mxu0 0.0
        %5204 = vmatpush1.msra.mxu0 0.0
        %5205 = vmatprep.subr.mxu0 0.0
        %5206 = vmatpush1.msra.mxu0 0.0
        %5207 = vmatprep.subr.mxu0 0.0
        %5208 = vmatpush1.msra.mxu0 0.0
        %5209 = vmatprep.subr.mxu0 0.0
        %5210 = vmatpush1.msra.mxu0 0.0
        %5211 = vmatprep.subr.mxu0 0.0
        %5212 = vmatpush1.msra.mxu0 0.0
        %5213 = vmatprep.subr.mxu0 0.0
        %5214 = vmatpush1.msra.mxu0 0.0
        %5215 = vmatprep.subr.mxu0 0.0
        %5216 = vmatpush1.msra.mxu0 0.0
        %5217 = vmatprep.subr.mxu0 0.0
        %5218 = vmatpush1.msra.mxu0 0.0
        %5219 = vmatprep.subr.mxu0 0.0
        %5220 = vmatpush1.msra.mxu0 0.0
        %5221 = vmatprep.subr.mxu0 0.0
        %5222 = vmatpush1.msra.mxu0 0.0
        %5223 = vmatprep.subr.mxu0 0.0
        %5224 = vmatpush1.msra.mxu0 0.0
        %5225 = vmatprep.subr.mxu0 0.0
        %5226 = vmatpush1.msra.mxu0 0.0
        %5227 = vmatprep.subr.mxu0 0.0
        %5228 = vmatpush1.msra.mxu0 0.0
        %5229 = vmatprep.subr.mxu0 0.0
        %5230 = vmatpush1.msra.mxu0 0.0
        %5231 = vmatprep.subr.mxu0 0.0
        %5232 = vmatpush1.msra.mxu0 0.0
        %5233 = vmatprep.subr.mxu0 0.0
        %5234 = vmatpush1.msra.mxu0 0.0
        %5235 = vmatprep.subr.mxu0 0.0
        %5236 = vmatpush1.msra.mxu0 0.0
        %5237 = vmatprep.subr.mxu0 0.0
        %5238 = vmatpush1.msra.mxu0 0.0
        %5239 = vmatprep.subr.mxu0 0.0
        %5240 = vmatpush1.msra.mxu0 0.0
        %5241 = vmatprep.subr.mxu0 0.0
        %5242 = vmatpush1.msra.mxu0 0.0
        %5243 = vmatprep.subr.mxu0 0.0
        %5244 = vmatpush1.msra.mxu0 0.0
        %5245 = vmatprep.subr.mxu0 0.0
        %5246 = vmatpush1.msra.mxu0 0.0
        %5247 = vmatprep.subr.mxu0 0.0
        %5248 = vmatpush1.msra.mxu0 0.0
        %5249 = vmatprep.mubr.f32.mxu0 0.0
        %5250 = vmatmul.mubr.f32.gmra.mrb[0].mxu0 %v5180
        %v5251 = vpop.f32.mrb[0].mxu0
        %v5252 = vadd.f32 0.0, %v5251
        %v5253 = vpop.f32.mrb[0].mxu0
        %5254 = vmatprep.mubr.f32.mxu0 0.0
        %5255 = vmatmul.mubr.f32.gmra.mrb[0].mxu0 %v5183
        %v5256 = vpop.f32.mrb[0].mxu0
        %v5257 = vadd.f32 0.0, %v5256
        %v5258 = vpop.f32.mrb[0].mxu0
        %5259 = vdwg.mxu0
        %v5261 = vsel %vm403, %v5161, 0
        %v5264 = vsel %vm403, %v5166, 0
        %5266 = vmatprep.subr.mxu0 0.0
        %5267 = vmatpush1.msra.mxu0 %v281
        %5268 = vmatprep.subr.mxu0 0.0
        %5269 = vmatpush1.msra.mxu0 %v282
        %5270 = vmatprep.subr.mxu0 0.0
        %5271 = vmatpush1.msra.mxu0 0.0
        %5272 = vmatprep.subr.mxu0 0.0
        %5273 = vmatpush1.msra.mxu0 0.0
        %5274 = vmatprep.subr.mxu0 0.0
        %5275 = vmatpush1.msra.mxu0 0.0
        %5276 = vmatprep.subr.mxu0 0.0
        %5277 = vmatpush1.msra.mxu0 0.0
        %5278 = vmatprep.subr.mxu0 0.0
        %5279 = vmatpush1.msra.mxu0 0.0
        %5280 = vmatprep.subr.mxu0 0.0
        %5281 = vmatpush1.msra.mxu0 0.0
        %5282 = vmatprep.subr.mxu0 0.0
        %5283 = vmatpush1.msra.mxu0 0.0
        %5284 = vmatprep.subr.mxu0 0.0
        %5285 = vmatpush1.msra.mxu0 0.0
        %5286 = vmatprep.subr.mxu0 0.0
        %5287 = vmatpush1.msra.mxu0 0.0
        %5288 = vmatprep.subr.mxu0 0.0
        %5289 = vmatpush1.msra.mxu0 0.0
        %5290 = vmatprep.subr.mxu0 0.0
        %5291 = vmatpush1.msra.mxu0 0.0
        %5292 = vmatprep.subr.mxu0 0.0
        %5293 = vmatpush1.msra.mxu0 0.0
        %5294 = vmatprep.subr.mxu0 0.0
        %5295 = vmatpush1.msra.mxu0 0.0
        %5296 = vmatprep.subr.mxu0 0.0
        %5297 = vmatpush1.msra.mxu0 0.0
        %5298 = vmatprep.subr.mxu0 0.0
        %5299 = vmatpush1.msra.mxu0 0.0
        %5300 = vmatprep.subr.mxu0 0.0
        %5301 = vmatpush1.msra.mxu0 0.0
        %5302 = vmatprep.subr.mxu0 0.0
        %5303 = vmatpush1.msra.mxu0 0.0
        %5304 = vmatprep.subr.mxu0 0.0
        %5305 = vmatpush1.msra.mxu0 0.0
        %5306 = vmatprep.subr.mxu0 0.0
        %5307 = vmatpush1.msra.mxu0 0.0
        %5308 = vmatprep.subr.mxu0 0.0
        %5309 = vmatpush1.msra.mxu0 0.0
        %5310 = vmatprep.subr.mxu0 0.0
        %5311 = vmatpush1.msra.mxu0 0.0
        %5312 = vmatprep.subr.mxu0 0.0
        %5313 = vmatpush1.msra.mxu0 0.0
        %5314 = vmatprep.subr.mxu0 0.0
        %5315 = vmatpush1.msra.mxu0 0.0
        %5316 = vmatprep.subr.mxu0 0.0
        %5317 = vmatpush1.msra.mxu0 0.0
        %5318 = vmatprep.subr.mxu0 0.0
        %5319 = vmatpush1.msra.mxu0 0.0
        %5320 = vmatprep.subr.mxu0 0.0
        %5321 = vmatpush1.msra.mxu0 0.0
        %5322 = vmatprep.subr.mxu0 0.0
        %5323 = vmatpush1.msra.mxu0 0.0
        %5324 = vmatprep.subr.mxu0 0.0
        %5325 = vmatpush1.msra.mxu0 0.0
        %5326 = vmatprep.subr.mxu0 0.0
        %5327 = vmatpush1.msra.mxu0 0.0
        %5328 = vmatprep.subr.mxu0 0.0
        %5329 = vmatpush1.msra.mxu0 0.0
        %5330 = vmatprep.mubr.f32.mxu0 0.0
        %5331 = vmatmul.mubr.f32.gmra.mrb[0].mxu0 %v5261
        %v5332 = vpop.f32.mrb[0].mxu0
        %v5333 = vadd.f32 %v5252, %v5332
        %v5334 = vpop.f32.mrb[0].mxu0
        %5335 = vmatprep.mubr.f32.mxu0 0.0
        %5336 = vmatmul.mubr.f32.gmra.mrb[0].mxu0 %v5264
        %v5337 = vpop.f32.mrb[0].mxu0
        %v5338 = vadd.f32 %v5257, %v5337
        %v5339 = vpop.f32.mrb[0].mxu0
        %5340 = vdwg.mxu0
        %v5341 = vadd.f32 %v5333, %v569
        %v5342 = vadd.f32 %v5338, %v574
        %v5344 = vcombine.high %v5341, %v5341
        %v5346 = vunpack.c.l.s4 1966171168
        %v5347 = vunpack.c.0.s8 %v5346
        %v5348 = vlaneseq
        %v5349 = vshrl.u32 %v5348, 7
        %v5350 = vsub.s32 %v5347, %v5349
        %v5351 = vrot.slane %v5341, %v5350
        %v5353 = vunpack.c.l.s4 1966171168
        %v5354 = vunpack.c.0.s8 %v5353
        %v5355 = vlaneseq
        %v5356 = vshrl.u32 %v5355, 7
        %v5357 = vsub.s32 %v5354, %v5356
        %v5358 = vrot.slane %v5344, %v5357
        %v5359 = vcombine.high %v5351, %v5351
        %v5360 = vcombine.high %v5358, %v5358
        %v5362 = vunpack.c.l.s4 1966171168
        %v5363 = vunpack.c.0.s8 %v5362
        %v5364 = vlaneseq
        %v5365 = vshrl.u32 %v5364, 7
        %v5366 = vsub.s32 %v5363, %v5365
        %v5367 = vrot.slane %v5351, %v5366
        %v5369 = vunpack.c.l.s4 1966171168
        %v5370 = vunpack.c.0.s8 %v5369
        %v5371 = vlaneseq
        %v5372 = vshrl.u32 %v5371, 7
        %v5373 = vsub.s32 %v5370, %v5372
        %v5374 = vrot.slane %v5358, %v5373
        %v5376 = vunpack.c.l.s4 1966171168
        %v5377 = vunpack.c.0.s8 %v5376
        %v5378 = vlaneseq
        %v5379 = vshrl.u32 %v5378, 7
        %v5380 = vsub.s32 %v5377, %v5379
        %v5381 = vrot.slane %v5359, %v5380
        %v5383 = vunpack.c.l.s4 1966171168
        %v5384 = vunpack.c.0.s8 %v5383
        %v5385 = vlaneseq
        %v5386 = vshrl.u32 %v5385, 7
        %v5387 = vsub.s32 %v5384, %v5386
        %v5388 = vrot.slane %v5360, %v5387
        %v5389 = vcombine.high %v5367, %v5367
        %v5390 = vcombine.high %v5374, %v5374
        %v5391 = vcombine.high %v5381, %v5381
        %v5392 = vcombine.high %v5388, %v5388
        %5401 = vst.msk [vmem:[%s272 + $0x18] sm:$0x1] %vm636, %v5367
        %5402 = vst.msk [vmem:[%s272 + $0x38] sm:$0x1] %vm636, %v5381
        %5403 = vst.msk [vmem:[%s272 + $0x58] sm:$0x1] %vm636, %v5389
        %5404 = vst.msk [vmem:[%s272 + $0x78] sm:$0x1] %vm636, %v5391
        %5405 = vst.msk [vmem:[%s272 + $0x98] sm:$0x1] %vm636, %v5374
        %5406 = vst.msk [vmem:[%s272 + $0xb8] sm:$0x1] %vm636, %v5388
        %5407 = vst.msk [vmem:[%s272 + $0xd8] sm:$0x1] %vm636, %v5390
        %5408 = vst.msk [vmem:[%s272 + $0xf8] sm:$0x1] %vm636, %v5392
        %v5410 = vcombine.high %v5342, %v5342
        %v5412 = vunpack.c.l.s4 1966171168
        %v5413 = vunpack.c.0.s8 %v5412
        %v5414 = vlaneseq
        %v5415 = vshrl.u32 %v5414, 7
        %v5416 = vsub.s32 %v5413, %v5415
        %v5417 = vrot.slane %v5342, %v5416
        %v5419 = vunpack.c.l.s4 1966171168
        %v5420 = vunpack.c.0.s8 %v5419
        %v5421 = vlaneseq
        %v5422 = vshrl.u32 %v5421, 7
        %v5423 = vsub.s32 %v5420, %v5422
        %v5424 = vrot.slane %v5410, %v5423
        %v5425 = vcombine.high %v5417, %v5417
        %v5426 = vcombine.high %v5424, %v5424
        %v5428 = vunpack.c.l.s4 1966171168
        %v5429 = vunpack.c.0.s8 %v5428
        %v5430 = vlaneseq
        %v5431 = vshrl.u32 %v5430, 7
        %v5432 = vsub.s32 %v5429, %v5431
        %v5433 = vrot.slane %v5417, %v5432
        %v5435 = vunpack.c.l.s4 1966171168
        %v5436 = vunpack.c.0.s8 %v5435
        %v5437 = vlaneseq
        %v5438 = vshrl.u32 %v5437, 7
        %v5439 = vsub.s32 %v5436, %v5438
        %v5440 = vrot.slane %v5424, %v5439
        %v5442 = vunpack.c.l.s4 1966171168
        %v5443 = vunpack.c.0.s8 %v5442
        %v5444 = vlaneseq
        %v5445 = vshrl.u32 %v5444, 7
        %v5446 = vsub.s32 %v5443, %v5445
        %v5447 = vrot.slane %v5425, %v5446
        %v5449 = vunpack.c.l.s4 1966171168
        %v5450 = vunpack.c.0.s8 %v5449
        %v5451 = vlaneseq
        %v5452 = vshrl.u32 %v5451, 7
        %v5453 = vsub.s32 %v5450, %v5452
        %v5454 = vrot.slane %v5426, %v5453
        %v5455 = vcombine.high %v5433, %v5433
        %v5456 = vcombine.high %v5440, %v5440
        %v5457 = vcombine.high %v5447, %v5447
        %v5458 = vcombine.high %v5454, %v5454
        %5467 = vst.msk [vmem:[%s272 + $0x19] sm:$0x1] %vm636, %v5433
        %5468 = vst.msk [vmem:[%s272 + $0x39] sm:$0x1] %vm636, %v5447
        %5469 = vst.msk [vmem:[%s272 + $0x59] sm:$0x1] %vm636, %v5455
        %5470 = vst.msk [vmem:[%s272 + $0x79] sm:$0x1] %vm636, %v5457
        %5471 = vst.msk [vmem:[%s272 + $0x99] sm:$0x1] %vm636, %v5440
        %5472 = vst.msk [vmem:[%s272 + $0xb9] sm:$0x1] %vm636, %v5454
        %5473 = vst.msk [vmem:[%s272 + $0xd9] sm:$0x1] %vm636, %v5456
        %5474 = vst.msk [vmem:[%s272 + $0xf9] sm:$0x1] %vm636, %v5458
        %v5475 = vld [vmem:[%s246 + $0xd] sm:$0x1]
        %v5476 = vld [vmem:[%s246 + $0x1d] sm:$0x1]
        %v5477 = vld [vmem:[%s246 + $0x2d] sm:$0x1]
        %v5478 = vld [vmem:[%s246 + $0x3d] sm:$0x1]
        %v5483 = vrot.slane %v5476, 7
        %v5484 = vsel %vm294, %v5483, %v5475
        %v5485 = vrot.slane %v5477, 6
        %v5486 = vsel %vm297, %v5485, %v5484
        %v5487 = vrot.slane %v5478, 5
        %v5488 = vsel %vm300, %v5487, %v5486
        %v5489 = vsel %vm315, %v5488, 0
        %5491 = vmatprep.subr.mxu0 0.0
        %5492 = vmatpush1.msra.mxu0 %v5489
        %5493 = vmatprep.subr.mxu0 0.0
        %5494 = vmatpush1.msra.mxu0 0.0
        %5495 = vmatprep.subr.mxu0 0.0
        %5496 = vmatpush1.msra.mxu0 0.0
        %5497 = vmatprep.subr.mxu0 0.0
        %5498 = vmatpush1.msra.mxu0 0.0
        %5499 = vmatprep.subr.mxu0 0.0
        %5500 = vmatpush1.msra.mxu0 0.0
        %5501 = vmatprep.subr.mxu0 0.0
        %5502 = vmatpush1.msra.mxu0 0.0
        %5503 = vmatprep.subr.mxu0 0.0
        %5504 = vmatpush1.msra.mxu0 0.0
        %5505 = vmatprep.subr.mxu0 0.0
        %5506 = vmatpush1.msra.mxu0 0.0
        %5507 = vmatprep.subr.mxu0 0.0
        %5508 = vmatpush1.msra.mxu0 0.0
        %5509 = vmatprep.subr.mxu0 0.0
        %5510 = vmatpush1.msra.mxu0 0.0
        %5511 = vmatprep.subr.mxu0 0.0
        %5512 = vmatpush1.msra.mxu0 0.0
        %5513 = vmatprep.subr.mxu0 0.0
        %5514 = vmatpush1.msra.mxu0 0.0
        %5515 = vmatprep.subr.mxu0 0.0
        %5516 = vmatpush1.msra.mxu0 0.0
        %5517 = vmatprep.subr.mxu0 0.0
        %5518 = vmatpush1.msra.mxu0 0.0
        %5519 = vmatprep.subr.mxu0 0.0
        %5520 = vmatpush1.msra.mxu0 0.0
        %5521 = vmatprep.subr.mxu0 0.0
        %5522 = vmatpush1.msra.mxu0 0.0
        %5523 = vmatprep.subr.mxu0 0.0
        %5524 = vmatpush1.msra.mxu0 0.0
        %5525 = vmatprep.subr.mxu0 0.0
        %5526 = vmatpush1.msra.mxu0 0.0
        %5527 = vmatprep.subr.mxu0 0.0
        %5528 = vmatpush1.msra.mxu0 0.0
        %5529 = vmatprep.subr.mxu0 0.0
        %5530 = vmatpush1.msra.mxu0 0.0
        %5531 = vmatprep.subr.mxu0 0.0
        %5532 = vmatpush1.msra.mxu0 0.0
        %5533 = vmatprep.subr.mxu0 0.0
        %5534 = vmatpush1.msra.mxu0 0.0
        %5535 = vmatprep.subr.mxu0 0.0
        %5536 = vmatpush1.msra.mxu0 0.0
        %5537 = vmatprep.subr.mxu0 0.0
        %5538 = vmatpush1.msra.mxu0 0.0
        %5539 = vmatprep.subr.mxu0 0.0
        %5540 = vmatpush1.msra.mxu0 0.0
        %5541 = vmatprep.subr.mxu0 0.0
        %5542 = vmatpush1.msra.mxu0 0.0
        %5543 = vmatprep.subr.mxu0 0.0
        %5544 = vmatpush1.msra.mxu0 0.0
        %5545 = vmatprep.subr.mxu0 0.0
        %5546 = vmatpush1.msra.mxu0 0.0
        %5547 = vmatprep.subr.mxu0 0.0
        %5548 = vmatpush1.msra.mxu0 0.0
        %5549 = vmatprep.subr.mxu0 0.0
        %5550 = vmatpush1.msra.mxu0 0.0
        %5551 = vmatprep.subr.mxu0 0.0
        %5552 = vmatpush1.msra.mxu0 0.0
        %5553 = vmatprep.subr.mxu0 0.0
        %5554 = vmatpush1.msra.mxu0 0.0
        %5555 = vmatprep.mubr.f32.mxu0 0.0
        %5556 = vmatmul.mubr.f32.gmra.mrb[0].mxu0 %v304
        %v5557 = vpop.f32.mrb[0].mxu0
        %v5558 = vadd.f32 0.0, %v5557
        %v5559 = vpop.f32.mrb[0].mxu0
        %5560 = vmatprep.mubr.f32.mxu0 0.0
        %5561 = vmatmul.mubr.f32.gmra.mrb[0].mxu0 %v307
        %v5562 = vpop.f32.mrb[0].mxu0
        %v5563 = vadd.f32 0.0, %v5562
        %v5564 = vpop.f32.mrb[0].mxu0
        %5565 = vmatprep.mubr.f32.mxu0 0.0
        %5566 = vmatmul.mubr.f32.gmra.mrb[0].mxu0 %v310
        %v5567 = vpop.f32.mrb[0].mxu0
        %v5568 = vadd.f32 0.0, %v5567
        %v5569 = vpop.f32.mrb[0].mxu0
        %5570 = vmatprep.mubr.f32.mxu0 0.0
        %5571 = vmatmul.mubr.f32.gmra.mrb[0].mxu0 %v313
        %v5572 = vpop.f32.mrb[0].mxu0
        %v5573 = vadd.f32 0.0, %v5572
        %v5574 = vpop.f32.mrb[0].mxu0
        %5575 = vdwg.mxu0
        %v5577 = vsel %vm403, %v5568, 0
        %v5580 = vsel %vm403, %v5573, 0
        %5582 = vmatprep.subr.mxu0 0.0
        %5583 = vmatpush1.msra.mxu0 %v283
        %5584 = vmatprep.subr.mxu0 0.0
        %5585 = vmatpush1.msra.mxu0 %v284
        %5586 = vmatprep.subr.mxu0 0.0
        %5587 = vmatpush1.msra.mxu0 0.0
        %5588 = vmatprep.subr.mxu0 0.0
        %5589 = vmatpush1.msra.mxu0 0.0
        %5590 = vmatprep.subr.mxu0 0.0
        %5591 = vmatpush1.msra.mxu0 0.0
        %5592 = vmatprep.subr.mxu0 0.0
        %5593 = vmatpush1.msra.mxu0 0.0
        %5594 = vmatprep.subr.mxu0 0.0
        %5595 = vmatpush1.msra.mxu0 0.0
        %5596 = vmatprep.subr.mxu0 0.0
        %5597 = vmatpush1.msra.mxu0 0.0
        %5598 = vmatprep.subr.mxu0 0.0
        %5599 = vmatpush1.msra.mxu0 0.0
        %5600 = vmatprep.subr.mxu0 0.0
        %5601 = vmatpush1.msra.mxu0 0.0
        %5602 = vmatprep.subr.mxu0 0.0
        %5603 = vmatpush1.msra.mxu0 0.0
        %5604 = vmatprep.subr.mxu0 0.0
        %5605 = vmatpush1.msra.mxu0 0.0
        %5606 = vmatprep.subr.mxu0 0.0
        %5607 = vmatpush1.msra.mxu0 0.0
        %5608 = vmatprep.subr.mxu0 0.0
        %5609 = vmatpush1.msra.mxu0 0.0
        %5610 = vmatprep.subr.mxu0 0.0
        %5611 = vmatpush1.msra.mxu0 0.0
        %5612 = vmatprep.subr.mxu0 0.0
        %5613 = vmatpush1.msra.mxu0 0.0
        %5614 = vmatprep.subr.mxu0 0.0
        %5615 = vmatpush1.msra.mxu0 0.0
        %5616 = vmatprep.subr.mxu0 0.0
        %5617 = vmatpush1.msra.mxu0 0.0
        %5618 = vmatprep.subr.mxu0 0.0
        %5619 = vmatpush1.msra.mxu0 0.0
        %5620 = vmatprep.subr.mxu0 0.0
        %5621 = vmatpush1.msra.mxu0 0.0
        %5622 = vmatprep.subr.mxu0 0.0
        %5623 = vmatpush1.msra.mxu0 0.0
        %5624 = vmatprep.subr.mxu0 0.0
        %5625 = vmatpush1.msra.mxu0 0.0
        %5626 = vmatprep.subr.mxu0 0.0
        %5627 = vmatpush1.msra.mxu0 0.0
        %5628 = vmatprep.subr.mxu0 0.0
        %5629 = vmatpush1.msra.mxu0 0.0
        %5630 = vmatprep.subr.mxu0 0.0
        %5631 = vmatpush1.msra.mxu0 0.0
        %5632 = vmatprep.subr.mxu0 0.0
        %5633 = vmatpush1.msra.mxu0 0.0
        %5634 = vmatprep.subr.mxu0 0.0
        %5635 = vmatpush1.msra.mxu0 0.0
        %5636 = vmatprep.subr.mxu0 0.0
        %5637 = vmatpush1.msra.mxu0 0.0
        %5638 = vmatprep.subr.mxu0 0.0
        %5639 = vmatpush1.msra.mxu0 0.0
        %5640 = vmatprep.subr.mxu0 0.0
        %5641 = vmatpush1.msra.mxu0 0.0
        %5642 = vmatprep.subr.mxu0 0.0
        %5643 = vmatpush1.msra.mxu0 0.0
        %5644 = vmatprep.subr.mxu0 0.0
        %5645 = vmatpush1.msra.mxu0 0.0
        %5646 = vmatprep.mubr.f32.mxu0 0.0
        %5647 = vmatmul.mubr.f32.gmra.mrb[0].mxu0 %v5577
        %v5648 = vpop.f32.mrb[0].mxu0
        %v5649 = vadd.f32 0.0, %v5648
        %v5650 = vpop.f32.mrb[0].mxu0
        %5651 = vmatprep.mubr.f32.mxu0 0.0
        %5652 = vmatmul.mubr.f32.gmra.mrb[0].mxu0 %v5580
        %v5653 = vpop.f32.mrb[0].mxu0
        %v5654 = vadd.f32 0.0, %v5653
        %v5655 = vpop.f32.mrb[0].mxu0
        %5656 = vdwg.mxu0
        %v5658 = vsel %vm403, %v5558, 0
        %v5661 = vsel %vm403, %v5563, 0
        %5663 = vmatprep.subr.mxu0 0.0
        %5664 = vmatpush1.msra.mxu0 %v281
        %5665 = vmatprep.subr.mxu0 0.0
        %5666 = vmatpush1.msra.mxu0 %v282
        %5667 = vmatprep.subr.mxu0 0.0
        %5668 = vmatpush1.msra.mxu0 0.0
        %5669 = vmatprep.subr.mxu0 0.0
        %5670 = vmatpush1.msra.mxu0 0.0
        %5671 = vmatprep.subr.mxu0 0.0
        %5672 = vmatpush1.msra.mxu0 0.0
        %5673 = vmatprep.subr.mxu0 0.0
        %5674 = vmatpush1.msra.mxu0 0.0
        %5675 = vmatprep.subr.mxu0 0.0
        %5676 = vmatpush1.msra.mxu0 0.0
        %5677 = vmatprep.subr.mxu0 0.0
        %5678 = vmatpush1.msra.mxu0 0.0
        %5679 = vmatprep.subr.mxu0 0.0
        %5680 = vmatpush1.msra.mxu0 0.0
        %5681 = vmatprep.subr.mxu0 0.0
        %5682 = vmatpush1.msra.mxu0 0.0
        %5683 = vmatprep.subr.mxu0 0.0
        %5684 = vmatpush1.msra.mxu0 0.0
        %5685 = vmatprep.subr.mxu0 0.0
        %5686 = vmatpush1.msra.mxu0 0.0
        %5687 = vmatprep.subr.mxu0 0.0
        %5688 = vmatpush1.msra.mxu0 0.0
        %5689 = vmatprep.subr.mxu0 0.0
        %5690 = vmatpush1.msra.mxu0 0.0
        %5691 = vmatprep.subr.mxu0 0.0
        %5692 = vmatpush1.msra.mxu0 0.0
        %5693 = vmatprep.subr.mxu0 0.0
        %5694 = vmatpush1.msra.mxu0 0.0
        %5695 = vmatprep.subr.mxu0 0.0
        %5696 = vmatpush1.msra.mxu0 0.0
        %5697 = vmatprep.subr.mxu0 0.0
        %5698 = vmatpush1.msra.mxu0 0.0
        %5699 = vmatprep.subr.mxu0 0.0
        %5700 = vmatpush1.msra.mxu0 0.0
        %5701 = vmatprep.subr.mxu0 0.0
        %5702 = vmatpush1.msra.mxu0 0.0
        %5703 = vmatprep.subr.mxu0 0.0
        %5704 = vmatpush1.msra.mxu0 0.0
        %5705 = vmatprep.subr.mxu0 0.0
        %5706 = vmatpush1.msra.mxu0 0.0
        %5707 = vmatprep.subr.mxu0 0.0
        %5708 = vmatpush1.msra.mxu0 0.0
        %5709 = vmatprep.subr.mxu0 0.0
        %5710 = vmatpush1.msra.mxu0 0.0
        %5711 = vmatprep.subr.mxu0 0.0
        %5712 = vmatpush1.msra.mxu0 0.0
        %5713 = vmatprep.subr.mxu0 0.0
        %5714 = vmatpush1.msra.mxu0 0.0
        %5715 = vmatprep.subr.mxu0 0.0
        %5716 = vmatpush1.msra.mxu0 0.0
        %5717 = vmatprep.subr.mxu0 0.0
        %5718 = vmatpush1.msra.mxu0 0.0
        %5719 = vmatprep.subr.mxu0 0.0
        %5720 = vmatpush1.msra.mxu0 0.0
        %5721 = vmatprep.subr.mxu0 0.0
        %5722 = vmatpush1.msra.mxu0 0.0
        %5723 = vmatprep.subr.mxu0 0.0
        %5724 = vmatpush1.msra.mxu0 0.0
        %5725 = vmatprep.subr.mxu0 0.0
        %5726 = vmatpush1.msra.mxu0 0.0
        %5727 = vmatprep.mubr.f32.mxu0 0.0
        %5728 = vmatmul.mubr.f32.gmra.mrb[0].mxu0 %v5658
        %v5729 = vpop.f32.mrb[0].mxu0
        %v5730 = vadd.f32 %v5649, %v5729
        %v5731 = vpop.f32.mrb[0].mxu0
        %5732 = vmatprep.mubr.f32.mxu0 0.0
        %5733 = vmatmul.mubr.f32.gmra.mrb[0].mxu0 %v5661
        %v5734 = vpop.f32.mrb[0].mxu0
        %v5735 = vadd.f32 %v5654, %v5734
        %v5736 = vpop.f32.mrb[0].mxu0
        %5737 = vdwg.mxu0
        %v5738 = vadd.f32 %v5730, %v569
        %v5739 = vadd.f32 %v5735, %v574
        %v5741 = vcombine.high %v5738, %v5738
        %v5743 = vunpack.c.l.s4 1966171168
        %v5744 = vunpack.c.0.s8 %v5743
        %v5745 = vlaneseq
        %v5746 = vshrl.u32 %v5745, 7
        %v5747 = vsub.s32 %v5744, %v5746
        %v5748 = vrot.slane %v5738, %v5747
        %v5750 = vunpack.c.l.s4 1966171168
        %v5751 = vunpack.c.0.s8 %v5750
        %v5752 = vlaneseq
        %v5753 = vshrl.u32 %v5752, 7
        %v5754 = vsub.s32 %v5751, %v5753
        %v5755 = vrot.slane %v5741, %v5754
        %v5756 = vcombine.high %v5748, %v5748
        %v5757 = vcombine.high %v5755, %v5755
        %v5759 = vunpack.c.l.s4 1966171168
        %v5760 = vunpack.c.0.s8 %v5759
        %v5761 = vlaneseq
        %v5762 = vshrl.u32 %v5761, 7
        %v5763 = vsub.s32 %v5760, %v5762
        %v5764 = vrot.slane %v5748, %v5763
        %v5766 = vunpack.c.l.s4 1966171168
        %v5767 = vunpack.c.0.s8 %v5766
        %v5768 = vlaneseq
        %v5769 = vshrl.u32 %v5768, 7
        %v5770 = vsub.s32 %v5767, %v5769
        %v5771 = vrot.slane %v5755, %v5770
        %v5773 = vunpack.c.l.s4 1966171168
        %v5774 = vunpack.c.0.s8 %v5773
        %v5775 = vlaneseq
        %v5776 = vshrl.u32 %v5775, 7
        %v5777 = vsub.s32 %v5774, %v5776
        %v5778 = vrot.slane %v5756, %v5777
        %v5780 = vunpack.c.l.s4 1966171168
        %v5781 = vunpack.c.0.s8 %v5780
        %v5782 = vlaneseq
        %v5783 = vshrl.u32 %v5782, 7
        %v5784 = vsub.s32 %v5781, %v5783
        %v5785 = vrot.slane %v5757, %v5784
        %v5786 = vcombine.high %v5764, %v5764
        %v5787 = vcombine.high %v5771, %v5771
        %v5788 = vcombine.high %v5778, %v5778
        %v5789 = vcombine.high %v5785, %v5785
        %5798 = vst.msk [vmem:[%s272 + $0x1a] sm:$0x1] %vm636, %v5764
        %5799 = vst.msk [vmem:[%s272 + $0x3a] sm:$0x1] %vm636, %v5778
        %5800 = vst.msk [vmem:[%s272 + $0x5a] sm:$0x1] %vm636, %v5786
        %5801 = vst.msk [vmem:[%s272 + $0x7a] sm:$0x1] %vm636, %v5788
        %5802 = vst.msk [vmem:[%s272 + $0x9a] sm:$0x1] %vm636, %v5771
        %5803 = vst.msk [vmem:[%s272 + $0xba] sm:$0x1] %vm636, %v5785
        %5804 = vst.msk [vmem:[%s272 + $0xda] sm:$0x1] %vm636, %v5787
        %5805 = vst.msk [vmem:[%s272 + $0xfa] sm:$0x1] %vm636, %v5789
        %v5807 = vcombine.high %v5739, %v5739
        %v5809 = vunpack.c.l.s4 1966171168
        %v5810 = vunpack.c.0.s8 %v5809
        %v5811 = vlaneseq
        %v5812 = vshrl.u32 %v5811, 7
        %v5813 = vsub.s32 %v5810, %v5812
        %v5814 = vrot.slane %v5739, %v5813
        %v5816 = vunpack.c.l.s4 1966171168
        %v5817 = vunpack.c.0.s8 %v5816
        %v5818 = vlaneseq
        %v5819 = vshrl.u32 %v5818, 7
        %v5820 = vsub.s32 %v5817, %v5819
        %v5821 = vrot.slane %v5807, %v5820
        %v5822 = vcombine.high %v5814, %v5814
        %v5823 = vcombine.high %v5821, %v5821
        %v5825 = vunpack.c.l.s4 1966171168
        %v5826 = vunpack.c.0.s8 %v5825
        %v5827 = vlaneseq
        %v5828 = vshrl.u32 %v5827, 7
        %v5829 = vsub.s32 %v5826, %v5828
        %v5830 = vrot.slane %v5814, %v5829
        %v5832 = vunpack.c.l.s4 1966171168
        %v5833 = vunpack.c.0.s8 %v5832
        %v5834 = vlaneseq
        %v5835 = vshrl.u32 %v5834, 7
        %v5836 = vsub.s32 %v5833, %v5835
        %v5837 = vrot.slane %v5821, %v5836
        %v5839 = vunpack.c.l.s4 1966171168
        %v5840 = vunpack.c.0.s8 %v5839
        %v5841 = vlaneseq
        %v5842 = vshrl.u32 %v5841, 7
        %v5843 = vsub.s32 %v5840, %v5842
        %v5844 = vrot.slane %v5822, %v5843
        %v5846 = vunpack.c.l.s4 1966171168
        %v5847 = vunpack.c.0.s8 %v5846
        %v5848 = vlaneseq
        %v5849 = vshrl.u32 %v5848, 7
        %v5850 = vsub.s32 %v5847, %v5849
        %v5851 = vrot.slane %v5823, %v5850
        %v5852 = vcombine.high %v5830, %v5830
        %v5853 = vcombine.high %v5837, %v5837
        %v5854 = vcombine.high %v5844, %v5844
        %v5855 = vcombine.high %v5851, %v5851
        %5864 = vst.msk [vmem:[%s272 + $0x1b] sm:$0x1] %vm636, %v5830
        %5865 = vst.msk [vmem:[%s272 + $0x3b] sm:$0x1] %vm636, %v5844
        %5866 = vst.msk [vmem:[%s272 + $0x5b] sm:$0x1] %vm636, %v5852
        %5867 = vst.msk [vmem:[%s272 + $0x7b] sm:$0x1] %vm636, %v5854
        %5868 = vst.msk [vmem:[%s272 + $0x9b] sm:$0x1] %vm636, %v5837
        %5869 = vst.msk [vmem:[%s272 + $0xbb] sm:$0x1] %vm636, %v5851
        %5870 = vst.msk [vmem:[%s272 + $0xdb] sm:$0x1] %vm636, %v5853
        %5871 = vst.msk [vmem:[%s272 + $0xfb] sm:$0x1] %vm636, %v5855
        %v5872 = vld [vmem:[%s246 + $0xe] sm:$0x1]
        %v5873 = vld [vmem:[%s246 + $0x1e] sm:$0x1]
        %v5874 = vld [vmem:[%s246 + $0x2e] sm:$0x1]
        %v5875 = vld [vmem:[%s246 + $0x3e] sm:$0x1]
        %v5880 = vrot.slane %v5873, 7
        %v5881 = vsel %vm294, %v5880, %v5872
        %v5882 = vrot.slane %v5874, 6
        %v5883 = vsel %vm297, %v5882, %v5881
        %v5884 = vrot.slane %v5875, 5
        %v5885 = vsel %vm300, %v5884, %v5883
        %v5886 = vsel %vm315, %v5885, 0
        %5888 = vmatprep.subr.mxu0 0.0
        %5889 = vmatpush1.msra.mxu0 %v5886
        %5890 = vmatprep.subr.mxu0 0.0
        %5891 = vmatpush1.msra.mxu0 0.0
        %5892 = vmatprep.subr.mxu0 0.0
        %5893 = vmatpush1.msra.mxu0 0.0
        %5894 = vmatprep.subr.mxu0 0.0
        %5895 = vmatpush1.msra.mxu0 0.0
        %5896 = vmatprep.subr.mxu0 0.0
        %5897 = vmatpush1.msra.mxu0 0.0
        %5898 = vmatprep.subr.mxu0 0.0
        %5899 = vmatpush1.msra.mxu0 0.0
        %5900 = vmatprep.subr.mxu0 0.0
        %5901 = vmatpush1.msra.mxu0 0.0
        %5902 = vmatprep.subr.mxu0 0.0
        %5903 = vmatpush1.msra.mxu0 0.0
        %5904 = vmatprep.subr.mxu0 0.0
        %5905 = vmatpush1.msra.mxu0 0.0
        %5906 = vmatprep.subr.mxu0 0.0
        %5907 = vmatpush1.msra.mxu0 0.0
        %5908 = vmatprep.subr.mxu0 0.0
        %5909 = vmatpush1.msra.mxu0 0.0
        %5910 = vmatprep.subr.mxu0 0.0
        %5911 = vmatpush1.msra.mxu0 0.0
        %5912 = vmatprep.subr.mxu0 0.0
        %5913 = vmatpush1.msra.mxu0 0.0
        %5914 = vmatprep.subr.mxu0 0.0
        %5915 = vmatpush1.msra.mxu0 0.0
        %5916 = vmatprep.subr.mxu0 0.0
        %5917 = vmatpush1.msra.mxu0 0.0
        %5918 = vmatprep.subr.mxu0 0.0
        %5919 = vmatpush1.msra.mxu0 0.0
        %5920 = vmatprep.subr.mxu0 0.0
        %5921 = vmatpush1.msra.mxu0 0.0
        %5922 = vmatprep.subr.mxu0 0.0
        %5923 = vmatpush1.msra.mxu0 0.0
        %5924 = vmatprep.subr.mxu0 0.0
        %5925 = vmatpush1.msra.mxu0 0.0
        %5926 = vmatprep.subr.mxu0 0.0
        %5927 = vmatpush1.msra.mxu0 0.0
        %5928 = vmatprep.subr.mxu0 0.0
        %5929 = vmatpush1.msra.mxu0 0.0
        %5930 = vmatprep.subr.mxu0 0.0
        %5931 = vmatpush1.msra.mxu0 0.0
        %5932 = vmatprep.subr.mxu0 0.0
        %5933 = vmatpush1.msra.mxu0 0.0
        %5934 = vmatprep.subr.mxu0 0.0
        %5935 = vmatpush1.msra.mxu0 0.0
        %5936 = vmatprep.subr.mxu0 0.0
        %5937 = vmatpush1.msra.mxu0 0.0
        %5938 = vmatprep.subr.mxu0 0.0
        %5939 = vmatpush1.msra.mxu0 0.0
        %5940 = vmatprep.subr.mxu0 0.0
        %5941 = vmatpush1.msra.mxu0 0.0
        %5942 = vmatprep.subr.mxu0 0.0
        %5943 = vmatpush1.msra.mxu0 0.0
        %5944 = vmatprep.subr.mxu0 0.0
        %5945 = vmatpush1.msra.mxu0 0.0
        %5946 = vmatprep.subr.mxu0 0.0
        %5947 = vmatpush1.msra.mxu0 0.0
        %5948 = vmatprep.subr.mxu0 0.0
        %5949 = vmatpush1.msra.mxu0 0.0
        %5950 = vmatprep.subr.mxu0 0.0
        %5951 = vmatpush1.msra.mxu0 0.0
        %5952 = vmatprep.mubr.f32.mxu0 0.0
        %5953 = vmatmul.mubr.f32.gmra.mrb[0].mxu0 %v304
        %v5954 = vpop.f32.mrb[0].mxu0
        %v5955 = vadd.f32 0.0, %v5954
        %v5956 = vpop.f32.mrb[0].mxu0
        %5957 = vmatprep.mubr.f32.mxu0 0.0
        %5958 = vmatmul.mubr.f32.gmra.mrb[0].mxu0 %v307
        %v5959 = vpop.f32.mrb[0].mxu0
        %v5960 = vadd.f32 0.0, %v5959
        %v5961 = vpop.f32.mrb[0].mxu0
        %5962 = vmatprep.mubr.f32.mxu0 0.0
        %5963 = vmatmul.mubr.f32.gmra.mrb[0].mxu0 %v310
        %v5964 = vpop.f32.mrb[0].mxu0
        %v5965 = vadd.f32 0.0, %v5964
        %v5966 = vpop.f32.mrb[0].mxu0
        %5967 = vmatprep.mubr.f32.mxu0 0.0
        %5968 = vmatmul.mubr.f32.gmra.mrb[0].mxu0 %v313
        %v5969 = vpop.f32.mrb[0].mxu0
        %v5970 = vadd.f32 0.0, %v5969
        %v5971 = vpop.f32.mrb[0].mxu0
        %5972 = vdwg.mxu0
        %v5974 = vsel %vm403, %v5965, 0
        %v5977 = vsel %vm403, %v5970, 0
        %5979 = vmatprep.subr.mxu0 0.0
        %5980 = vmatpush1.msra.mxu0 %v283
        %5981 = vmatprep.subr.mxu0 0.0
        %5982 = vmatpush1.msra.mxu0 %v284
        %5983 = vmatprep.subr.mxu0 0.0
        %5984 = vmatpush1.msra.mxu0 0.0
        %5985 = vmatprep.subr.mxu0 0.0
        %5986 = vmatpush1.msra.mxu0 0.0
        %5987 = vmatprep.subr.mxu0 0.0
        %5988 = vmatpush1.msra.mxu0 0.0
        %5989 = vmatprep.subr.mxu0 0.0
        %5990 = vmatpush1.msra.mxu0 0.0
        %5991 = vmatprep.subr.mxu0 0.0
        %5992 = vmatpush1.msra.mxu0 0.0
        %5993 = vmatprep.subr.mxu0 0.0
        %5994 = vmatpush1.msra.mxu0 0.0
        %5995 = vmatprep.subr.mxu0 0.0
        %5996 = vmatpush1.msra.mxu0 0.0
        %5997 = vmatprep.subr.mxu0 0.0
        %5998 = vmatpush1.msra.mxu0 0.0
        %5999 = vmatprep.subr.mxu0 0.0
        %6000 = vmatpush1.msra.mxu0 0.0
        %6001 = vmatprep.subr.mxu0 0.0
        %6002 = vmatpush1.msra.mxu0 0.0
        %6003 = vmatprep.subr.mxu0 0.0
        %6004 = vmatpush1.msra.mxu0 0.0
        %6005 = vmatprep.subr.mxu0 0.0
        %6006 = vmatpush1.msra.mxu0 0.0
        %6007 = vmatprep.subr.mxu0 0.0
        %6008 = vmatpush1.msra.mxu0 0.0
        %6009 = vmatprep.subr.mxu0 0.0
        %6010 = vmatpush1.msra.mxu0 0.0
        %6011 = vmatprep.subr.mxu0 0.0
        %6012 = vmatpush1.msra.mxu0 0.0
        %6013 = vmatprep.subr.mxu0 0.0
        %6014 = vmatpush1.msra.mxu0 0.0
        %6015 = vmatprep.subr.mxu0 0.0
        %6016 = vmatpush1.msra.mxu0 0.0
        %6017 = vmatprep.subr.mxu0 0.0
        %6018 = vmatpush1.msra.mxu0 0.0
        %6019 = vmatprep.subr.mxu0 0.0
        %6020 = vmatpush1.msra.mxu0 0.0
        %6021 = vmatprep.subr.mxu0 0.0
        %6022 = vmatpush1.msra.mxu0 0.0
        %6023 = vmatprep.subr.mxu0 0.0
        %6024 = vmatpush1.msra.mxu0 0.0
        %6025 = vmatprep.subr.mxu0 0.0
        %6026 = vmatpush1.msra.mxu0 0.0
        %6027 = vmatprep.subr.mxu0 0.0
        %6028 = vmatpush1.msra.mxu0 0.0
        %6029 = vmatprep.subr.mxu0 0.0
        %6030 = vmatpush1.msra.mxu0 0.0
        %6031 = vmatprep.subr.mxu0 0.0
        %6032 = vmatpush1.msra.mxu0 0.0
        %6033 = vmatprep.subr.mxu0 0.0
        %6034 = vmatpush1.msra.mxu0 0.0
        %6035 = vmatprep.subr.mxu0 0.0
        %6036 = vmatpush1.msra.mxu0 0.0
        %6037 = vmatprep.subr.mxu0 0.0
        %6038 = vmatpush1.msra.mxu0 0.0
        %6039 = vmatprep.subr.mxu0 0.0
        %6040 = vmatpush1.msra.mxu0 0.0
        %6041 = vmatprep.subr.mxu0 0.0
        %6042 = vmatpush1.msra.mxu0 0.0
        %6043 = vmatprep.mubr.f32.mxu0 0.0
        %6044 = vmatmul.mubr.f32.gmra.mrb[0].mxu0 %v5974
        %v6045 = vpop.f32.mrb[0].mxu0
        %v6046 = vadd.f32 0.0, %v6045
        %v6047 = vpop.f32.mrb[0].mxu0
        %6048 = vmatprep.mubr.f32.mxu0 0.0
        %6049 = vmatmul.mubr.f32.gmra.mrb[0].mxu0 %v5977
        %v6050 = vpop.f32.mrb[0].mxu0
        %v6051 = vadd.f32 0.0, %v6050
        %v6052 = vpop.f32.mrb[0].mxu0
        %6053 = vdwg.mxu0
        %v6055 = vsel %vm403, %v5955, 0
        %v6058 = vsel %vm403, %v5960, 0
        %6060 = vmatprep.subr.mxu0 0.0
        %6061 = vmatpush1.msra.mxu0 %v281
        %6062 = vmatprep.subr.mxu0 0.0
        %6063 = vmatpush1.msra.mxu0 %v282
        %6064 = vmatprep.subr.mxu0 0.0
        %6065 = vmatpush1.msra.mxu0 0.0
        %6066 = vmatprep.subr.mxu0 0.0
        %6067 = vmatpush1.msra.mxu0 0.0
        %6068 = vmatprep.subr.mxu0 0.0
        %6069 = vmatpush1.msra.mxu0 0.0
        %6070 = vmatprep.subr.mxu0 0.0
        %6071 = vmatpush1.msra.mxu0 0.0
        %6072 = vmatprep.subr.mxu0 0.0
        %6073 = vmatpush1.msra.mxu0 0.0
        %6074 = vmatprep.subr.mxu0 0.0
        %6075 = vmatpush1.msra.mxu0 0.0
        %6076 = vmatprep.subr.mxu0 0.0
        %6077 = vmatpush1.msra.mxu0 0.0
        %6078 = vmatprep.subr.mxu0 0.0
        %6079 = vmatpush1.msra.mxu0 0.0
        %6080 = vmatprep.subr.mxu0 0.0
        %6081 = vmatpush1.msra.mxu0 0.0
        %6082 = vmatprep.subr.mxu0 0.0
        %6083 = vmatpush1.msra.mxu0 0.0
        %6084 = vmatprep.subr.mxu0 0.0
        %6085 = vmatpush1.msra.mxu0 0.0
        %6086 = vmatprep.subr.mxu0 0.0
        %6087 = vmatpush1.msra.mxu0 0.0
        %6088 = vmatprep.subr.mxu0 0.0
        %6089 = vmatpush1.msra.mxu0 0.0
        %6090 = vmatprep.subr.mxu0 0.0
        %6091 = vmatpush1.msra.mxu0 0.0
        %6092 = vmatprep.subr.mxu0 0.0
        %6093 = vmatpush1.msra.mxu0 0.0
        %6094 = vmatprep.subr.mxu0 0.0
        %6095 = vmatpush1.msra.mxu0 0.0
        %6096 = vmatprep.subr.mxu0 0.0
        %6097 = vmatpush1.msra.mxu0 0.0
        %6098 = vmatprep.subr.mxu0 0.0
        %6099 = vmatpush1.msra.mxu0 0.0
        %6100 = vmatprep.subr.mxu0 0.0
        %6101 = vmatpush1.msra.mxu0 0.0
        %6102 = vmatprep.subr.mxu0 0.0
        %6103 = vmatpush1.msra.mxu0 0.0
        %6104 = vmatprep.subr.mxu0 0.0
        %6105 = vmatpush1.msra.mxu0 0.0
        %6106 = vmatprep.subr.mxu0 0.0
        %6107 = vmatpush1.msra.mxu0 0.0
        %6108 = vmatprep.subr.mxu0 0.0
        %6109 = vmatpush1.msra.mxu0 0.0
        %6110 = vmatprep.subr.mxu0 0.0
        %6111 = vmatpush1.msra.mxu0 0.0
        %6112 = vmatprep.subr.mxu0 0.0
        %6113 = vmatpush1.msra.mxu0 0.0
        %6114 = vmatprep.subr.mxu0 0.0
        %6115 = vmatpush1.msra.mxu0 0.0
        %6116 = vmatprep.subr.mxu0 0.0
        %6117 = vmatpush1.msra.mxu0 0.0
        %6118 = vmatprep.subr.mxu0 0.0
        %6119 = vmatpush1.msra.mxu0 0.0
        %6120 = vmatprep.subr.mxu0 0.0
        %6121 = vmatpush1.msra.mxu0 0.0
        %6122 = vmatprep.subr.mxu0 0.0
        %6123 = vmatpush1.msra.mxu0 0.0
        %6124 = vmatprep.mubr.f32.mxu0 0.0
        %6125 = vmatmul.mubr.f32.gmra.mrb[0].mxu0 %v6055
        %v6126 = vpop.f32.mrb[0].mxu0
        %v6127 = vadd.f32 %v6046, %v6126
        %v6128 = vpop.f32.mrb[0].mxu0
        %6129 = vmatprep.mubr.f32.mxu0 0.0
        %6130 = vmatmul.mubr.f32.gmra.mrb[0].mxu0 %v6058
        %v6131 = vpop.f32.mrb[0].mxu0
        %v6132 = vadd.f32 %v6051, %v6131
        %v6133 = vpop.f32.mrb[0].mxu0
        %6134 = vdwg.mxu0
        %v6135 = vadd.f32 %v6127, %v569
        %v6136 = vadd.f32 %v6132, %v574
        %v6138 = vcombine.high %v6135, %v6135
        %v6140 = vunpack.c.l.s4 1966171168
        %v6141 = vunpack.c.0.s8 %v6140
        %v6142 = vlaneseq
        %v6143 = vshrl.u32 %v6142, 7
        %v6144 = vsub.s32 %v6141, %v6143
        %v6145 = vrot.slane %v6135, %v6144
        %v6147 = vunpack.c.l.s4 1966171168
        %v6148 = vunpack.c.0.s8 %v6147
        %v6149 = vlaneseq
        %v6150 = vshrl.u32 %v6149, 7
        %v6151 = vsub.s32 %v6148, %v6150
        %v6152 = vrot.slane %v6138, %v6151
        %v6153 = vcombine.high %v6145, %v6145
        %v6154 = vcombine.high %v6152, %v6152
        %v6156 = vunpack.c.l.s4 1966171168
        %v6157 = vunpack.c.0.s8 %v6156
        %v6158 = vlaneseq
        %v6159 = vshrl.u32 %v6158, 7
        %v6160 = vsub.s32 %v6157, %v6159
        %v6161 = vrot.slane %v6145, %v6160
        %v6163 = vunpack.c.l.s4 1966171168
        %v6164 = vunpack.c.0.s8 %v6163
        %v6165 = vlaneseq
        %v6166 = vshrl.u32 %v6165, 7
        %v6167 = vsub.s32 %v6164, %v6166
        %v6168 = vrot.slane %v6152, %v6167
        %v6170 = vunpack.c.l.s4 1966171168
        %v6171 = vunpack.c.0.s8 %v6170
        %v6172 = vlaneseq
        %v6173 = vshrl.u32 %v6172, 7
        %v6174 = vsub.s32 %v6171, %v6173
        %v6175 = vrot.slane %v6153, %v6174
        %v6177 = vunpack.c.l.s4 1966171168
        %v6178 = vunpack.c.0.s8 %v6177
        %v6179 = vlaneseq
        %v6180 = vshrl.u32 %v6179, 7
        %v6181 = vsub.s32 %v6178, %v6180
        %v6182 = vrot.slane %v6154, %v6181
        %v6183 = vcombine.high %v6161, %v6161
        %v6184 = vcombine.high %v6168, %v6168
        %v6185 = vcombine.high %v6175, %v6175
        %v6186 = vcombine.high %v6182, %v6182
        %6195 = vst.msk [vmem:[%s272 + $0x1c] sm:$0x1] %vm636, %v6161
        %6196 = vst.msk [vmem:[%s272 + $0x3c] sm:$0x1] %vm636, %v6175
        %6197 = vst.msk [vmem:[%s272 + $0x5c] sm:$0x1] %vm636, %v6183
        %6198 = vst.msk [vmem:[%s272 + $0x7c] sm:$0x1] %vm636, %v6185
        %6199 = vst.msk [vmem:[%s272 + $0x9c] sm:$0x1] %vm636, %v6168
        %6200 = vst.msk [vmem:[%s272 + $0xbc] sm:$0x1] %vm636, %v6182
        %6201 = vst.msk [vmem:[%s272 + $0xdc] sm:$0x1] %vm636, %v6184
        %6202 = vst.msk [vmem:[%s272 + $0xfc] sm:$0x1] %vm636, %v6186
        %v6204 = vcombine.high %v6136, %v6136
        %v6206 = vunpack.c.l.s4 1966171168
        %v6207 = vunpack.c.0.s8 %v6206
        %v6208 = vlaneseq
        %v6209 = vshrl.u32 %v6208, 7
        %v6210 = vsub.s32 %v6207, %v6209
        %v6211 = vrot.slane %v6136, %v6210
        %v6213 = vunpack.c.l.s4 1966171168
        %v6214 = vunpack.c.0.s8 %v6213
        %v6215 = vlaneseq
        %v6216 = vshrl.u32 %v6215, 7
        %v6217 = vsub.s32 %v6214, %v6216
        %v6218 = vrot.slane %v6204, %v6217
        %v6219 = vcombine.high %v6211, %v6211
        %v6220 = vcombine.high %v6218, %v6218
        %v6222 = vunpack.c.l.s4 1966171168
        %v6223 = vunpack.c.0.s8 %v6222
        %v6224 = vlaneseq
        %v6225 = vshrl.u32 %v6224, 7
        %v6226 = vsub.s32 %v6223, %v6225
        %v6227 = vrot.slane %v6211, %v6226
        %v6229 = vunpack.c.l.s4 1966171168
        %v6230 = vunpack.c.0.s8 %v6229
        %v6231 = vlaneseq
        %v6232 = vshrl.u32 %v6231, 7
        %v6233 = vsub.s32 %v6230, %v6232
        %v6234 = vrot.slane %v6218, %v6233
        %v6236 = vunpack.c.l.s4 1966171168
        %v6237 = vunpack.c.0.s8 %v6236
        %v6238 = vlaneseq
        %v6239 = vshrl.u32 %v6238, 7
        %v6240 = vsub.s32 %v6237, %v6239
        %v6241 = vrot.slane %v6219, %v6240
        %v6243 = vunpack.c.l.s4 1966171168
        %v6244 = vunpack.c.0.s8 %v6243
        %v6245 = vlaneseq
        %v6246 = vshrl.u32 %v6245, 7
        %v6247 = vsub.s32 %v6244, %v6246
        %v6248 = vrot.slane %v6220, %v6247
        %v6249 = vcombine.high %v6227, %v6227
        %v6250 = vcombine.high %v6234, %v6234
        %v6251 = vcombine.high %v6241, %v6241
        %v6252 = vcombine.high %v6248, %v6248
        %6261 = vst.msk [vmem:[%s272 + $0x1d] sm:$0x1] %vm636, %v6227
        %6262 = vst.msk [vmem:[%s272 + $0x3d] sm:$0x1] %vm636, %v6241
        %6263 = vst.msk [vmem:[%s272 + $0x5d] sm:$0x1] %vm636, %v6249
        %6264 = vst.msk [vmem:[%s272 + $0x7d] sm:$0x1] %vm636, %v6251
        %6265 = vst.msk [vmem:[%s272 + $0x9d] sm:$0x1] %vm636, %v6234
        %6266 = vst.msk [vmem:[%s272 + $0xbd] sm:$0x1] %vm636, %v6248
        %6267 = vst.msk [vmem:[%s272 + $0xdd] sm:$0x1] %vm636, %v6250
        %6268 = vst.msk [vmem:[%s272 + $0xfd] sm:$0x1] %vm636, %v6252
        %v6269 = vld [vmem:[%s246 + $0xf] sm:$0x1]
        %v6270 = vld [vmem:[%s246 + $0x1f] sm:$0x1]
        %v6271 = vld [vmem:[%s246 + $0x2f] sm:$0x1]
        %v6272 = vld [vmem:[%s246 + $0x3f] sm:$0x1]
        %v6277 = vrot.slane %v6270, 7
        %v6278 = vsel %vm294, %v6277, %v6269
        %v6279 = vrot.slane %v6271, 6
        %v6280 = vsel %vm297, %v6279, %v6278
        %v6281 = vrot.slane %v6272, 5
        %v6282 = vsel %vm300, %v6281, %v6280
        %v6283 = vsel %vm315, %v6282, 0
        %6285 = vmatprep.subr.mxu0 0.0
        %6286 = vmatpush1.msra.mxu0 %v6283
        %6287 = vmatprep.subr.mxu0 0.0
        %6288 = vmatpush1.msra.mxu0 0.0
        %6289 = vmatprep.subr.mxu0 0.0
        %6290 = vmatpush1.msra.mxu0 0.0
        %6291 = vmatprep.subr.mxu0 0.0
        %6292 = vmatpush1.msra.mxu0 0.0
        %6293 = vmatprep.subr.mxu0 0.0
        %6294 = vmatpush1.msra.mxu0 0.0
        %6295 = vmatprep.subr.mxu0 0.0
        %6296 = vmatpush1.msra.mxu0 0.0
        %6297 = vmatprep.subr.mxu0 0.0
        %6298 = vmatpush1.msra.mxu0 0.0
        %6299 = vmatprep.subr.mxu0 0.0
        %6300 = vmatpush1.msra.mxu0 0.0
        %6301 = vmatprep.subr.mxu0 0.0
        %6302 = vmatpush1.msra.mxu0 0.0
        %6303 = vmatprep.subr.mxu0 0.0
        %6304 = vmatpush1.msra.mxu0 0.0
        %6305 = vmatprep.subr.mxu0 0.0
        %6306 = vmatpush1.msra.mxu0 0.0
        %6307 = vmatprep.subr.mxu0 0.0
        %6308 = vmatpush1.msra.mxu0 0.0
        %6309 = vmatprep.subr.mxu0 0.0
        %6310 = vmatpush1.msra.mxu0 0.0
        %6311 = vmatprep.subr.mxu0 0.0
        %6312 = vmatpush1.msra.mxu0 0.0
        %6313 = vmatprep.subr.mxu0 0.0
        %6314 = vmatpush1.msra.mxu0 0.0
        %6315 = vmatprep.subr.mxu0 0.0
        %6316 = vmatpush1.msra.mxu0 0.0
        %6317 = vmatprep.subr.mxu0 0.0
        %6318 = vmatpush1.msra.mxu0 0.0
        %6319 = vmatprep.subr.mxu0 0.0
        %6320 = vmatpush1.msra.mxu0 0.0
        %6321 = vmatprep.subr.mxu0 0.0
        %6322 = vmatpush1.msra.mxu0 0.0
        %6323 = vmatprep.subr.mxu0 0.0
        %6324 = vmatpush1.msra.mxu0 0.0
        %6325 = vmatprep.subr.mxu0 0.0
        %6326 = vmatpush1.msra.mxu0 0.0
        %6327 = vmatprep.subr.mxu0 0.0
        %6328 = vmatpush1.msra.mxu0 0.0
        %6329 = vmatprep.subr.mxu0 0.0
        %6330 = vmatpush1.msra.mxu0 0.0
        %6331 = vmatprep.subr.mxu0 0.0
        %6332 = vmatpush1.msra.mxu0 0.0
        %6333 = vmatprep.subr.mxu0 0.0
        %6334 = vmatpush1.msra.mxu0 0.0
        %6335 = vmatprep.subr.mxu0 0.0
        %6336 = vmatpush1.msra.mxu0 0.0
        %6337 = vmatprep.subr.mxu0 0.0
        %6338 = vmatpush1.msra.mxu0 0.0
        %6339 = vmatprep.subr.mxu0 0.0
        %6340 = vmatpush1.msra.mxu0 0.0
        %6341 = vmatprep.subr.mxu0 0.0
        %6342 = vmatpush1.msra.mxu0 0.0
        %6343 = vmatprep.subr.mxu0 0.0
        %6344 = vmatpush1.msra.mxu0 0.0
        %6345 = vmatprep.subr.mxu0 0.0
        %6346 = vmatpush1.msra.mxu0 0.0
        %6347 = vmatprep.subr.mxu0 0.0
        %6348 = vmatpush1.msra.mxu0 0.0
        %6349 = vmatprep.mubr.f32.mxu0 0.0
        %6350 = vmatmul.mubr.f32.gmra.mrb[0].mxu0 %v304
        %v6351 = vpop.f32.mrb[0].mxu0
        %v6352 = vadd.f32 0.0, %v6351
        %v6353 = vpop.f32.mrb[0].mxu0
        %6354 = vmatprep.mubr.f32.mxu0 0.0
        %6355 = vmatmul.mubr.f32.gmra.mrb[0].mxu0 %v307
        %v6356 = vpop.f32.mrb[0].mxu0
        %v6357 = vadd.f32 0.0, %v6356
        %v6358 = vpop.f32.mrb[0].mxu0
        %6359 = vmatprep.mubr.f32.mxu0 0.0
        %6360 = vmatmul.mubr.f32.gmra.mrb[0].mxu0 %v310
        %v6361 = vpop.f32.mrb[0].mxu0
        %v6362 = vadd.f32 0.0, %v6361
        %v6363 = vpop.f32.mrb[0].mxu0
        %6364 = vmatprep.mubr.f32.mxu0 0.0
        %6365 = vmatmul.mubr.f32.gmra.mrb[0].mxu0 %v313
        %v6366 = vpop.f32.mrb[0].mxu0
        %v6367 = vadd.f32 0.0, %v6366
        %v6368 = vpop.f32.mrb[0].mxu0
        %6369 = vdwg.mxu0
        %v6371 = vsel %vm403, %v6362, 0
        %v6374 = vsel %vm403, %v6367, 0
        %6376 = vmatprep.subr.mxu0 0.0
        %6377 = vmatpush1.msra.mxu0 %v283
        %6378 = vmatprep.subr.mxu0 0.0
        %6379 = vmatpush1.msra.mxu0 %v284
        %6380 = vmatprep.subr.mxu0 0.0
        %6381 = vmatpush1.msra.mxu0 0.0
        %6382 = vmatprep.subr.mxu0 0.0
        %6383 = vmatpush1.msra.mxu0 0.0
        %6384 = vmatprep.subr.mxu0 0.0
        %6385 = vmatpush1.msra.mxu0 0.0
        %6386 = vmatprep.subr.mxu0 0.0
        %6387 = vmatpush1.msra.mxu0 0.0
        %6388 = vmatprep.subr.mxu0 0.0
        %6389 = vmatpush1.msra.mxu0 0.0
        %6390 = vmatprep.subr.mxu0 0.0
        %6391 = vmatpush1.msra.mxu0 0.0
        %6392 = vmatprep.subr.mxu0 0.0
        %6393 = vmatpush1.msra.mxu0 0.0
        %6394 = vmatprep.subr.mxu0 0.0
        %6395 = vmatpush1.msra.mxu0 0.0
        %6396 = vmatprep.subr.mxu0 0.0
        %6397 = vmatpush1.msra.mxu0 0.0
        %6398 = vmatprep.subr.mxu0 0.0
        %6399 = vmatpush1.msra.mxu0 0.0
        %6400 = vmatprep.subr.mxu0 0.0
        %6401 = vmatpush1.msra.mxu0 0.0
        %6402 = vmatprep.subr.mxu0 0.0
        %6403 = vmatpush1.msra.mxu0 0.0
        %6404 = vmatprep.subr.mxu0 0.0
        %6405 = vmatpush1.msra.mxu0 0.0
        %6406 = vmatprep.subr.mxu0 0.0
        %6407 = vmatpush1.msra.mxu0 0.0
        %6408 = vmatprep.subr.mxu0 0.0
        %6409 = vmatpush1.msra.mxu0 0.0
        %6410 = vmatprep.subr.mxu0 0.0
        %6411 = vmatpush1.msra.mxu0 0.0
        %6412 = vmatprep.subr.mxu0 0.0
        %6413 = vmatpush1.msra.mxu0 0.0
        %6414 = vmatprep.subr.mxu0 0.0
        %6415 = vmatpush1.msra.mxu0 0.0
        %6416 = vmatprep.subr.mxu0 0.0
        %6417 = vmatpush1.msra.mxu0 0.0
        %6418 = vmatprep.subr.mxu0 0.0
        %6419 = vmatpush1.msra.mxu0 0.0
        %6420 = vmatprep.subr.mxu0 0.0
        %6421 = vmatpush1.msra.mxu0 0.0
        %6422 = vmatprep.subr.mxu0 0.0
        %6423 = vmatpush1.msra.mxu0 0.0
        %6424 = vmatprep.subr.mxu0 0.0
        %6425 = vmatpush1.msra.mxu0 0.0
        %6426 = vmatprep.subr.mxu0 0.0
        %6427 = vmatpush1.msra.mxu0 0.0
        %6428 = vmatprep.subr.mxu0 0.0
        %6429 = vmatpush1.msra.mxu0 0.0
        %6430 = vmatprep.subr.mxu0 0.0
        %6431 = vmatpush1.msra.mxu0 0.0
        %6432 = vmatprep.subr.mxu0 0.0
        %6433 = vmatpush1.msra.mxu0 0.0
        %6434 = vmatprep.subr.mxu0 0.0
        %6435 = vmatpush1.msra.mxu0 0.0
        %6436 = vmatprep.subr.mxu0 0.0
        %6437 = vmatpush1.msra.mxu0 0.0
        %6438 = vmatprep.subr.mxu0 0.0
        %6439 = vmatpush1.msra.mxu0 0.0
        %6440 = vmatprep.mubr.f32.mxu0 0.0
        %6441 = vmatmul.mubr.f32.gmra.mrb[0].mxu0 %v6371
        %v6442 = vpop.f32.mrb[0].mxu0
        %v6443 = vadd.f32 0.0, %v6442
        %v6444 = vpop.f32.mrb[0].mxu0
        %6445 = vmatprep.mubr.f32.mxu0 0.0
        %6446 = vmatmul.mubr.f32.gmra.mrb[0].mxu0 %v6374
        %v6447 = vpop.f32.mrb[0].mxu0
        %v6448 = vadd.f32 0.0, %v6447
        %v6449 = vpop.f32.mrb[0].mxu0
        %6450 = vdwg.mxu0
        %v6452 = vsel %vm403, %v6352, 0
        %v6455 = vsel %vm403, %v6357, 0
        %6457 = vmatprep.subr.mxu0 0.0
        %6458 = vmatpush1.msra.mxu0 %v281
        %6459 = vmatprep.subr.mxu0 0.0
        %6460 = vmatpush1.msra.mxu0 %v282
        %6461 = vmatprep.subr.mxu0 0.0
        %6462 = vmatpush1.msra.mxu0 0.0
        %6463 = vmatprep.subr.mxu0 0.0
        %6464 = vmatpush1.msra.mxu0 0.0
        %6465 = vmatprep.subr.mxu0 0.0
        %6466 = vmatpush1.msra.mxu0 0.0
        %6467 = vmatprep.subr.mxu0 0.0
        %6468 = vmatpush1.msra.mxu0 0.0
        %6469 = vmatprep.subr.mxu0 0.0
        %6470 = vmatpush1.msra.mxu0 0.0
        %6471 = vmatprep.subr.mxu0 0.0
        %6472 = vmatpush1.msra.mxu0 0.0
        %6473 = vmatprep.subr.mxu0 0.0
        %6474 = vmatpush1.msra.mxu0 0.0
        %6475 = vmatprep.subr.mxu0 0.0
        %6476 = vmatpush1.msra.mxu0 0.0
        %6477 = vmatprep.subr.mxu0 0.0
        %6478 = vmatpush1.msra.mxu0 0.0
        %6479 = vmatprep.subr.mxu0 0.0
        %6480 = vmatpush1.msra.mxu0 0.0
        %6481 = vmatprep.subr.mxu0 0.0
        %6482 = vmatpush1.msra.mxu0 0.0
        %6483 = vmatprep.subr.mxu0 0.0
        %6484 = vmatpush1.msra.mxu0 0.0
        %6485 = vmatprep.subr.mxu0 0.0
        %6486 = vmatpush1.msra.mxu0 0.0
        %6487 = vmatprep.subr.mxu0 0.0
        %6488 = vmatpush1.msra.mxu0 0.0
        %6489 = vmatprep.subr.mxu0 0.0
        %6490 = vmatpush1.msra.mxu0 0.0
        %6491 = vmatprep.subr.mxu0 0.0
        %6492 = vmatpush1.msra.mxu0 0.0
        %6493 = vmatprep.subr.mxu0 0.0
        %6494 = vmatpush1.msra.mxu0 0.0
        %6495 = vmatprep.subr.mxu0 0.0
        %6496 = vmatpush1.msra.mxu0 0.0
        %6497 = vmatprep.subr.mxu0 0.0
        %6498 = vmatpush1.msra.mxu0 0.0
        %6499 = vmatprep.subr.mxu0 0.0
        %6500 = vmatpush1.msra.mxu0 0.0
        %6501 = vmatprep.subr.mxu0 0.0
        %6502 = vmatpush1.msra.mxu0 0.0
        %6503 = vmatprep.subr.mxu0 0.0
        %6504 = vmatpush1.msra.mxu0 0.0
        %6505 = vmatprep.subr.mxu0 0.0
        %6506 = vmatpush1.msra.mxu0 0.0
        %6507 = vmatprep.subr.mxu0 0.0
        %6508 = vmatpush1.msra.mxu0 0.0
        %6509 = vmatprep.subr.mxu0 0.0
        %6510 = vmatpush1.msra.mxu0 0.0
        %6511 = vmatprep.subr.mxu0 0.0
        %6512 = vmatpush1.msra.mxu0 0.0
        %6513 = vmatprep.subr.mxu0 0.0
        %6514 = vmatpush1.msra.mxu0 0.0
        %6515 = vmatprep.subr.mxu0 0.0
        %6516 = vmatpush1.msra.mxu0 0.0
        %6517 = vmatprep.subr.mxu0 0.0
        %6518 = vmatpush1.msra.mxu0 0.0
        %6519 = vmatprep.subr.mxu0 0.0
        %6520 = vmatpush1.msra.mxu0 0.0
        %6521 = vmatprep.mubr.f32.mxu0 0.0
        %6522 = vmatmul.mubr.f32.gmra.mrb[0].mxu0 %v6452
        %v6523 = vpop.f32.mrb[0].mxu0
        %v6524 = vadd.f32 %v6443, %v6523
        %v6525 = vpop.f32.mrb[0].mxu0
        %6526 = vmatprep.mubr.f32.mxu0 0.0
        %6527 = vmatmul.mubr.f32.gmra.mrb[0].mxu0 %v6455
        %v6528 = vpop.f32.mrb[0].mxu0
        %v6529 = vadd.f32 %v6448, %v6528
        %v6530 = vpop.f32.mrb[0].mxu0
        %6531 = vdwg.mxu0
        %v6532 = vadd.f32 %v6524, %v569
        %v6533 = vadd.f32 %v6529, %v574
        %v6535 = vcombine.high %v6532, %v6532
        %v6537 = vunpack.c.l.s4 1966171168
        %v6538 = vunpack.c.0.s8 %v6537
        %v6539 = vlaneseq
        %v6540 = vshrl.u32 %v6539, 7
        %v6541 = vsub.s32 %v6538, %v6540
        %v6542 = vrot.slane %v6532, %v6541
        %v6544 = vunpack.c.l.s4 1966171168
        %v6545 = vunpack.c.0.s8 %v6544
        %v6546 = vlaneseq
        %v6547 = vshrl.u32 %v6546, 7
        %v6548 = vsub.s32 %v6545, %v6547
        %v6549 = vrot.slane %v6535, %v6548
        %v6550 = vcombine.high %v6542, %v6542
        %v6551 = vcombine.high %v6549, %v6549
        %v6553 = vunpack.c.l.s4 1966171168
        %v6554 = vunpack.c.0.s8 %v6553
        %v6555 = vlaneseq
        %v6556 = vshrl.u32 %v6555, 7
        %v6557 = vsub.s32 %v6554, %v6556
        %v6558 = vrot.slane %v6542, %v6557
        %v6560 = vunpack.c.l.s4 1966171168
        %v6561 = vunpack.c.0.s8 %v6560
        %v6562 = vlaneseq
        %v6563 = vshrl.u32 %v6562, 7
        %v6564 = vsub.s32 %v6561, %v6563
        %v6565 = vrot.slane %v6549, %v6564
        %v6567 = vunpack.c.l.s4 1966171168
        %v6568 = vunpack.c.0.s8 %v6567
        %v6569 = vlaneseq
        %v6570 = vshrl.u32 %v6569, 7
        %v6571 = vsub.s32 %v6568, %v6570
        %v6572 = vrot.slane %v6550, %v6571
        %v6574 = vunpack.c.l.s4 1966171168
        %v6575 = vunpack.c.0.s8 %v6574
        %v6576 = vlaneseq
        %v6577 = vshrl.u32 %v6576, 7
        %v6578 = vsub.s32 %v6575, %v6577
        %v6579 = vrot.slane %v6551, %v6578
        %v6580 = vcombine.high %v6558, %v6558
        %v6581 = vcombine.high %v6565, %v6565
        %v6582 = vcombine.high %v6572, %v6572
        %v6583 = vcombine.high %v6579, %v6579
        %6592 = vst.msk [vmem:[%s272 + $0x1e] sm:$0x1] %vm636, %v6558
        %6593 = vst.msk [vmem:[%s272 + $0x3e] sm:$0x1] %vm636, %v6572
        %6594 = vst.msk [vmem:[%s272 + $0x5e] sm:$0x1] %vm636, %v6580
        %6595 = vst.msk [vmem:[%s272 + $0x7e] sm:$0x1] %vm636, %v6582
        %6596 = vst.msk [vmem:[%s272 + $0x9e] sm:$0x1] %vm636, %v6565
        %6597 = vst.msk [vmem:[%s272 + $0xbe] sm:$0x1] %vm636, %v6579
        %6598 = vst.msk [vmem:[%s272 + $0xde] sm:$0x1] %vm636, %v6581
        %6599 = vst.msk [vmem:[%s272 + $0xfe] sm:$0x1] %vm636, %v6583
        %v6601 = vcombine.high %v6533, %v6533
        %v6603 = vunpack.c.l.s4 1966171168
        %v6604 = vunpack.c.0.s8 %v6603
        %v6605 = vlaneseq
        %v6606 = vshrl.u32 %v6605, 7
        %v6607 = vsub.s32 %v6604, %v6606
        %v6608 = vrot.slane %v6533, %v6607
        %v6610 = vunpack.c.l.s4 1966171168
        %v6611 = vunpack.c.0.s8 %v6610
        %v6612 = vlaneseq
        %v6613 = vshrl.u32 %v6612, 7
        %v6614 = vsub.s32 %v6611, %v6613
        %v6615 = vrot.slane %v6601, %v6614
        %v6616 = vcombine.high %v6608, %v6608
        %v6617 = vcombine.high %v6615, %v6615
        %v6619 = vunpack.c.l.s4 1966171168
        %v6620 = vunpack.c.0.s8 %v6619
        %v6621 = vlaneseq
        %v6622 = vshrl.u32 %v6621, 7
        %v6623 = vsub.s32 %v6620, %v6622
        %v6624 = vrot.slane %v6608, %v6623
        %v6626 = vunpack.c.l.s4 1966171168
        %v6627 = vunpack.c.0.s8 %v6626
        %v6628 = vlaneseq
        %v6629 = vshrl.u32 %v6628, 7
        %v6630 = vsub.s32 %v6627, %v6629
        %v6631 = vrot.slane %v6615, %v6630
        %v6633 = vunpack.c.l.s4 1966171168
        %v6634 = vunpack.c.0.s8 %v6633
        %v6635 = vlaneseq
        %v6636 = vshrl.u32 %v6635, 7
        %v6637 = vsub.s32 %v6634, %v6636
        %v6638 = vrot.slane %v6616, %v6637
        %v6640 = vunpack.c.l.s4 1966171168
        %v6641 = vunpack.c.0.s8 %v6640
        %v6642 = vlaneseq
        %v6643 = vshrl.u32 %v6642, 7
        %v6644 = vsub.s32 %v6641, %v6643
        %v6645 = vrot.slane %v6617, %v6644
        %v6646 = vcombine.high %v6624, %v6624
        %v6647 = vcombine.high %v6631, %v6631
        %v6648 = vcombine.high %v6638, %v6638
        %v6649 = vcombine.high %v6645, %v6645
        %6658 = vst.msk [vmem:[%s272 + $0x1f] sm:$0x1] %vm636, %v6624
        %6659 = vst.msk [vmem:[%s272 + $0x3f] sm:$0x1] %vm636, %v6638
        %6660 = vst.msk [vmem:[%s272 + $0x5f] sm:$0x1] %vm636, %v6646
        %6661 = vst.msk [vmem:[%s272 + $0x7f] sm:$0x1] %vm636, %v6648
        %6662 = vst.msk [vmem:[%s272 + $0x9f] sm:$0x1] %vm636, %v6631
        %6663 = vst.msk [vmem:[%s272 + $0xbf] sm:$0x1] %vm636, %v6645
        %6664 = vst.msk [vmem:[%s272 + $0xdf] sm:$0x1] %vm636, %v6647
        %6665 = vst.msk [vmem:[%s272 + $0xff] sm:$0x1] %vm636, %v6649
        %s6666 = sand.u32 %s167, 1
        %s6667 = scalar_lea.sflag [#allocation4], %s6666
        %s6668 = sand.u32 %s167, 1
        %s6669 = smul.addr %s6668, 256
        %s6670 = scalar_lea.vmem [#allocation5], %s6669
        // Predicated region
        $region45: #{tpu_custom_call.1} parent=39 // pred_check
          %p6671 = pneg %p177
        $region46: #{tpu_custom_call.1} parent=39 // pred_check_branch
          %6673 = sbr.rel (%p6671) target = $region48
        $region47: #{tpu_custom_call.1} parent=39 // pred_region
          %s6674 = smul.u32 4, %s28
          %s6676 = ssub.s32 4096, 4096
          %6677 = vsyncadd %s6667, %s6676
          %s6678 = sadd.s32 %s29, %s6674
          %s6679 = smul.addr %s27, 32
          %s6680 = sadd.s32 %s6678, %s6679
          %s6681 = smul.addr %s6680, 128
          %s6682 = scalar_lea.hbm %s5, %s6681
          %s6683 = sshll.u32 %s6670, 4
          %s6684 = int_to_ptr.vmem [resolvable:$true] %s6683
          %6689 = dma.vmem_to_hbm [thread:$0]  %s6684, 4096, %s6682, %s6667, 128, 128, 8
        $region48: #{tpu_custom_call.1} parent=39 // pred_fallthru
          _
      $region40: #{tpu_custom_call.1} parent=5 // pred_fallthru
        _
      %p6690 = scmp.le.s32.totalorder 2, %s17
      // Predicated region
      $region49: #{tpu_custom_call.1} parent=5 // pred_check
        %p6691 = pneg %p6690
      $region50: #{tpu_custom_call.1} parent=5 // pred_check_branch
        %6693 = sbr.rel (%p6691) target = $region52
      $region51: #{tpu_custom_call.1} parent=5 // pred_region
        %s6694 = ssub.s32 %s17, 2
        // Predicated region
        $region53: #{tpu_custom_call.1} parent=51 // pred_check
          %p6695 = pneg %p183
        $region54: #{tpu_custom_call.1} parent=51 // pred_check_branch
          %6697 = sbr.rel (%p6695) target = $region56
        $region55: #{tpu_custom_call.1} parent=51 // pred_region
          %s6698 = sand.u32 %s168, 1
          %s6699 = scalar_lea.sflag [#allocation4], %s6698
          %s6700 = sand.u32 %s168, 1
          %s6701 = smul.addr %s6700, 256
          %s6702 = scalar_lea.vmem [#allocation5], %s6701
          %6703 = dma.done %s6699, 4096
        $region56: #{tpu_custom_call.1} parent=51 // pred_fallthru
          _
      $region52: #{tpu_custom_call.1} parent=5 // pred_fallthru
        _
    $region6: #{tpu_custom_call.1} parent=1 // loop_footer
      %s21 = sadd.s32 1, %s17
    $region7: #{tpu_custom_call.1} parent=1 // loop_footer_branch
      %16 = sbr.rel target = $region3
    $region8: #{tpu_custom_call.1} parent=1 // loop_exit
      _
    %6704 = vsyncpa [#allocation3], 1
    %s6705 = scalar_lea.sflag [#allocation3], 1
    %6706 = vsyncpa %s6705, 1
    %6707 = vsyncpa [#allocation4], 1
    %s6708 = scalar_lea.sflag [#allocation4], 1
    %6709 = vsyncpa %s6708, 1

</llo_original>
